<compile_context>
chip_gen: v7x
topology: tpu7x:2x2x1
jax: 0.10.0
libtpu: 0.0.40
codegen_flags: <defaults>
</compile_context>

<pallas_src>
import jax
import jax.numpy as jnp
from jax import lax
from jax.experimental import pallas as pl
from jax.experimental.pallas import tpu as pltpu

NUM_HEADS = 8
EMBED = 128
HEAD_DIM = EMBED // NUM_HEADS
LN_EPS = 1e-5


# --------------------------------------------------------------------------
# Fused kernel factory (static batch-block / spatial sizes captured).
# Grid = (N // BB,); each grid step processes BB samples entirely in VMEM.
# --------------------------------------------------------------------------
def _make_kernel(BB, H, W, num_classes):
    H1, W1 = H // 2, W // 2          # after pool 1
    H2, W2 = H1 // 2, W1 // 2        # after pool 2
    H3, W3 = H2 // 2, W2 // 2        # after pool 3
    S = H3 * W3                      # attention sequence length (spatial tokens)

    def conv_bn_relu_pool(pad_ref, x, w_ref, t_ref, Hc, Wc, Cin, Cout):
        # ---- in-VMEM zero-halo padding (per batch block) ----
        pad_ref[...] = jnp.zeros_like(pad_ref)
        pad_ref[:, 1:Hc + 1, 1:Wc + 1, :] = x
        # ---- im2col: 9 shifted windows concatenated on the channel axis,
        #      then ONE (BB*Hc*Wc, 9*Cin) x (9*Cin, Cout) MXU matmul ----
        taps = [pad_ref[:, dy:dy + Hc, dx:dx + Wc, :]
                for dy in range(3) for dx in range(3)]
        patches = jnp.concatenate(taps, axis=-1).reshape(BB * Hc * Wc, 9 * Cin)
        y = jnp.dot(patches, w_ref[...], preferred_element_type=jnp.float32)
        # BN scale is pre-folded into w; only per-channel shift remains. ReLU.
        y = jnp.maximum(y + t_ref[...], 0.0)
        # ---- 2x2 max pool: two stages of (leading-dim reshape + VPU max) ----
        y = y.reshape(BB * (Hc // 2), 2, Wc, Cout)
        y = jnp.max(y, axis=1)                       # pool adjacent rows
        y = y.reshape(BB * (Hc // 2), Wc // 2, 2, Cout)
        y = jnp.max(y, axis=2)                       # pool adjacent cols
        return y.reshape(BB, Hc // 2, Wc // 2, Cout)

    def kernel(x_ref,
               w0_ref, t0_ref,
               w1_ref, t1_ref,
               w2_ref, t2_ref,
               wqkv_ref, bqkv_ref, wo_ref, bo_ref,
               lng_ref, lnb_ref,
               w3_ref, b3_ref, w4_ref, b4_ref,
               o_ref,
               p0_ref, p1_ref, p2_ref):
        # ---------------- CNN feature extractor ----------------
        x = x_ref[...]                                           # (BB, H, W, 1)
        x = conv_bn_relu_pool(p0_ref, x, w0_ref, t0_ref, H, W, 1, 32)
        x = conv_bn_relu_pool(p1_ref, x, w1_ref, t1_ref, H1, W1, 32, 64)
        x = conv_bn_relu_pool(p2_ref, x, w2_ref, t2_ref, H2, W2, 64, 128)

        # ---------------- multi-head self-attention over spatial tokens ------
        # row-major (h, w) flatten == torch reshape(B,C,HW).permute(0,2,1)
        f = x.reshape(BB * S, EMBED)                             # (BB*S, 128)
        qkv = jnp.dot(f, wqkv_ref[...],
                      preferred_element_type=jnp.float32) + bqkv_ref[...]
        q = qkv[:, 0 * EMBED:1 * EMBED].reshape(BB, S, EMBED)
        k = qkv[:, 1 * EMBED:2 * EMBED].reshape(BB, S, EMBED)
        v = qkv[:, 2 * EMBED:3 * EMBED].reshape(BB, S, EMBED)

        inv_sqrt_d = 1.0 / (HEAD_DIM ** 0.5)
        heads = []
        for h in range(NUM_HEADS):                               # unrolled, tiny
            lo, hi = h * HEAD_DIM, (h + 1) * HEAD_DIM
            qh, kh, vh = q[:, :, lo:hi], k[:, :, lo:hi], v[:, :, lo:hi]
            s = lax.dot_general(qh, kh, (((2,), (2,)), ((0,), (0,))),
                                preferred_element_type=jnp.float32) * inv_sqrt_d
            s = s - jnp.max(s, axis=-1, keepdims=True)
            p = jnp.exp(s)
            p = p / jnp.sum(p, axis=-1, keepdims=True)
            heads.append(lax.dot_general(p, vh, (((2,), (1,)), ((0,), (0,))),
                                         preferred_element_type=jnp.float32))
        attn = jnp.concatenate(heads, axis=-1).reshape(BB * S, EMBED)
        attn = jnp.dot(attn, wo_ref[...],
                       preferred_element_type=jnp.float32) + bo_ref[...]

        # ---------------- residual + LayerNorm(128) ----------------
        r = attn + f
        mu = jnp.mean(r, axis=-1, keepdims=True)
        xc = r - mu
        var = jnp.mean(xc * xc, axis=-1, keepdims=True)
        r = xc * lax.rsqrt(var + LN_EPS) * lng_ref[...] + lnb_ref[...]

        # ---------------- classifier head ----------------
        pooled = jnp.mean(r.reshape(BB, S, EMBED), axis=1)       # GAP -> (BB, 128)
        h1 = jnp.maximum(
            jnp.dot(pooled, w3_ref[...],
                    preferred_element_type=jnp.float32) + b3_ref[...], 0.0)
        # Dropout(p=0.5) is identity at inference time.
        out = jnp.dot(h1, w4_ref[...],
                      preferred_element_type=jnp.float32) + b4_ref[...]
        o_ref[...] = out.reshape(BB, 1, num_classes)

    return kernel


# --------------------------------------------------------------------------
# Wrapper: one fused pallas_call, gridded over batch blocks (megacore-parallel).
# --------------------------------------------------------------------------
def attention_cnn_forward(x_nchw, params):
    N, Cin, H, W = x_nchw.shape
    assert Cin == 1 and H % 8 == 0 and W % 8 == 0
    num_classes = params["fc2_w"].shape[1]
    x = jnp.transpose(x_nchw, (0, 2, 3, 1)).astype(jnp.float32)  # NHWC

    # Batch block: largest divisor of N that is <= 8 (amortizes per-step
    # overhead & widens matmul M dims; falls back to 1 for awkward N).
    BB = 1
    for cand in range(min(N, 8), 0, -1):
        if N % cand == 0:
            BB = cand
            break

    weights = [
        params["conv0_w"], params["conv0_shift"],
        params["conv1_w"], params["conv1_shift"],
        params["conv2_w"], params["conv2_shift"],
        params["attn_wqkv"], params["attn_bqkv"],
        params["attn_wo"], params["attn_bo"],
        params["ln_g"], params["ln_b"],
        params["fc1_w"], params["fc1_b"],
        params["fc2_w"], params["fc2_b"],
    ]

    H1, W1 = H // 2, W // 2
    H2, W2 = H1 // 2, W1 // 2

    in_specs = [pl.BlockSpec((BB, H, W, 1), lambda b: (b, 0, 0, 0))]
    in_specs += [pl.BlockSpec(w.shape, lambda b: (0, 0)) for w in weights]
    out_specs = pl.BlockSpec((BB, 1, num_classes), lambda b: (b, 0, 0))

    out = pl.pallas_call(
        _make_kernel(BB, H, W, num_classes),
        out_shape=jax.ShapeDtypeStruct((N, 1, num_classes), jnp.float32),
        grid_spec=pltpu.PrefetchScalarGridSpec(
            num_scalar_prefetch=0,
            grid=(N // BB,),
            in_specs=in_specs,
            out_specs=out_specs,
            scratch_shapes=[
                pltpu.VMEM((BB, H + 2, W + 2, 1), jnp.float32),    # padded L0 in
                pltpu.VMEM((BB, H1 + 2, W1 + 2, 32), jnp.float32),  # padded L1 in
                pltpu.VMEM((BB, H2 + 2, W2 + 2, 64), jnp.float32),  # padded L2 in
            ]),
        compiler_params=pltpu.CompilerParams(
            dimension_semantics=("parallel",)),                    # shard blocks
    )(x, *weights)
    return out.reshape(N, num_classes)


# --------------------------------------------------------------------------
# Deterministic synthetic parameters (inference mode: BN folded into conv).
# --------------------------------------------------------------------------
def init_params(key, num_classes=50):
    eps = 1e-5
    p = {}
    cins, couts = [1, 32, 64], [32, 64, 128]
    for i, (ci, co) in enumerate(zip(cins, couts)):
        key, kw, kb, kg, kbe = jax.random.split(key, 5)
        w = 0.1 * jax.random.normal(kw, (3, 3, ci, co), jnp.float32)   # HWIO
        conv_b = 0.01 * jax.random.normal(kb, (co,), jnp.float32)
        gamma = 1.0 + 0.01 * jax.random.normal(kg, (co,), jnp.float32)
        beta = 0.01 * jax.random.normal(kbe, (co,), jnp.float32)
        mean = jnp.zeros((co,), jnp.float32)
        var = jnp.ones((co,), jnp.float32)
        scale = gamma / jnp.sqrt(var + eps)               # eval-mode BN
        shift = (conv_b - mean) * scale + beta
        # BN scale folded into the conv weight; tap-major (dy, dx, cin) rows.
        p[f"conv{i}_w"] = (w * scale).reshape(9 * ci, co)
        p[f"conv{i}_shift"] = shift.reshape(1, co)
    E = EMBED
    key, kqkv, kbqkv, kwo, kbo = jax.random.split(key, 5)
    p["attn_wqkv"] = (E ** -0.5) * jax.random.normal(kqkv, (E, 3 * E), jnp.float32)
    p["attn_bqkv"] = 0.01 * jax.random.normal(kbqkv, (1, 3 * E), jnp.float32)
    p["attn_wo"] = (E ** -0.5) * jax.random.normal(kwo, (E, E), jnp.float32)
    p["attn_bo"] = 0.01 * jax.random.normal(kbo, (1, E), jnp.float32)
    p["ln_g"] = jnp.ones((1, E), jnp.float32)
    p["ln_b"] = jnp.zeros((1, E), jnp.float32)
    key, k1w, k1b, k2w, k2b = jax.random.split(key, 5)
    p["fc1_w"] = 0.1 * jax.random.normal(k1w, (E, 256), jnp.float32)
    p["fc1_b"] = 0.01 * jax.random.normal(k1b, (1, 256), jnp.float32)
    p["fc2_w"] = 0.1 * jax.random.normal(k2w, (256, num_classes), jnp.float32)
    p["fc2_b"] = 0.01 * jax.random.normal(k2b, (1, num_classes), jnp.float32)
    return p


if __name__ == "__main__":
    key = jax.random.PRNGKey(0)
    kx, kp = jax.random.split(key)
    # AttentionCNN expects 1-channel images; 16x16 -> 8 -> 4 -> 2 after pools,
    # giving 4 spatial tokens of dim 128 for the attention block.
    x = jax.random.normal(kx, (2, 1, 16, 16), jnp.float32)   # NCHW like PyTorch
    params = init_params(kp, num_classes=50)

    fwd = jax.jit(attention_cnn_forward)
    out = jax.block_until_ready(fwd(x, params))
    assert out.shape == (2, 50), out.shape
    print("KERNEL_OK")
</pallas_src>

<mosaic_0001>
module attributes {stable_mosaic.version = 11 : i64} {
  func.func @kernel(%arg0: i32, %arg1: memref<2x16x16x1xf32, #tpu.memory_space<vmem>>, %arg2: memref<9x32xf32, #tpu.memory_space<vmem>>, %arg3: memref<1x32xf32, #tpu.memory_space<vmem>>, %arg4: memref<288x64xf32, #tpu.memory_space<vmem>>, %arg5: memref<1x64xf32, #tpu.memory_space<vmem>>, %arg6: memref<576x128xf32, #tpu.memory_space<vmem>>, %arg7: memref<1x128xf32, #tpu.memory_space<vmem>>, %arg8: memref<128x384xf32, #tpu.memory_space<vmem>>, %arg9: memref<1x384xf32, #tpu.memory_space<vmem>>, %arg10: memref<128x128xf32, #tpu.memory_space<vmem>>, %arg11: memref<1x128xf32, #tpu.memory_space<vmem>>, %arg12: memref<1x128xf32, #tpu.memory_space<vmem>>, %arg13: memref<1x128xf32, #tpu.memory_space<vmem>>, %arg14: memref<128x256xf32, #tpu.memory_space<vmem>>, %arg15: memref<1x256xf32, #tpu.memory_space<vmem>>, %arg16: memref<256x50xf32, #tpu.memory_space<vmem>>, %arg17: memref<1x50xf32, #tpu.memory_space<vmem>>, %arg18: memref<2x1x50xf32, #tpu.memory_space<vmem>>, %arg19: memref<2x18x18x1xf32, #tpu.memory_space<vmem>>, %arg20: memref<2x10x10x32xf32, #tpu.memory_space<vmem>>, %arg21: memref<2x6x6x64xf32, #tpu.memory_space<vmem>>) attributes {dimension_semantics = [#tpu.dimension_semantics<parallel>], iteration_bounds = array<i64: 1>, scalar_prefetch = 0 : i64, scratch_operands = 3 : i64, tpu.core_type = #tpu.core_type<tc>, window_params = [{transform_indices = @transform_0, window_bounds = array<i64: 2, 16, 16, 1>}, {pipeline_mode = #tpu.pipeline_mode<synchronous>, transform_indices = @transform_1, window_bounds = array<i64: 9, 32>}, {pipeline_mode = #tpu.pipeline_mode<synchronous>, transform_indices = @transform_2, window_bounds = array<i64: 1, 32>}, {pipeline_mode = #tpu.pipeline_mode<synchronous>, transform_indices = @transform_3, window_bounds = array<i64: 288, 64>}, {pipeline_mode = #tpu.pipeline_mode<synchronous>, transform_indices = @transform_4, window_bounds = array<i64: 1, 64>}, {pipeline_mode = #tpu.pipeline_mode<synchronous>, transform_indices = @transform_5, window_bounds = array<i64: 576, 128>}, {pipeline_mode = #tpu.pipeline_mode<synchronous>, transform_indices = @transform_6, window_bounds = array<i64: 1, 128>}, {pipeline_mode = #tpu.pipeline_mode<synchronous>, transform_indices = @transform_7, window_bounds = array<i64: 128, 384>}, {pipeline_mode = #tpu.pipeline_mode<synchronous>, transform_indices = @transform_8, window_bounds = array<i64: 1, 384>}, {pipeline_mode = #tpu.pipeline_mode<synchronous>, transform_indices = @transform_9, window_bounds = array<i64: 128, 128>}, {pipeline_mode = #tpu.pipeline_mode<synchronous>, transform_indices = @transform_10, window_bounds = array<i64: 1, 128>}, {pipeline_mode = #tpu.pipeline_mode<synchronous>, transform_indices = @transform_11, window_bounds = array<i64: 1, 128>}, {pipeline_mode = #tpu.pipeline_mode<synchronous>, transform_indices = @transform_12, window_bounds = array<i64: 1, 128>}, {pipeline_mode = #tpu.pipeline_mode<synchronous>, transform_indices = @transform_13, window_bounds = array<i64: 128, 256>}, {pipeline_mode = #tpu.pipeline_mode<synchronous>, transform_indices = @transform_14, window_bounds = array<i64: 1, 256>}, {pipeline_mode = #tpu.pipeline_mode<synchronous>, transform_indices = @transform_15, window_bounds = array<i64: 256, 50>}, {pipeline_mode = #tpu.pipeline_mode<synchronous>, transform_indices = @transform_16, window_bounds = array<i64: 1, 50>}, {transform_indices = @transform_17, window_bounds = array<i64: 2, 1, 50>}]} {
    %c0 = arith.constant 0 : index
    %c0_0 = arith.constant 0 : index
    %c0_1 = arith.constant 0 : index
    %c0_2 = arith.constant 0 : index
    %0 = vector.load %arg1[%c0, %c0_0, %c0_1, %c0_2] : memref<2x16x16x1xf32, #tpu.memory_space<vmem>>, vector<2x16x16x1xf32>
    %cst = arith.constant 0.000000e+00 : f32
    %1 = vector.broadcast %cst : f32 to vector<2x18x18x1xf32>
    %c0_3 = arith.constant 0 : index
    %c0_4 = arith.constant 0 : index
    %c0_5 = arith.constant 0 : index
    %c0_6 = arith.constant 0 : index
    %2 = vector.load %arg19[%c0_3, %c0_4, %c0_5, %c0_6] : memref<2x18x18x1xf32, #tpu.memory_space<vmem>>, vector<2x18x18x1xf32>
    tpu.vector_store %arg19[%c0_3, %c0_4, %c0_5, %c0_6], %1 {strides = array<i32>} : memref<2x18x18x1xf32, #tpu.memory_space<vmem>>, vector<2x18x18x1xf32>,
    %c0_7 = arith.constant 0 : index
    %c1 = arith.constant 1 : index
    %c1_8 = arith.constant 1 : index
    %c0_9 = arith.constant 0 : index
    %3 = vector.load %arg19[%c0_7, %c1, %c1_8, %c0_9] : memref<2x18x18x1xf32, #tpu.memory_space<vmem>>, vector<2x16x16x1xf32>
    tpu.vector_store %arg19[%c0_7, %c1, %c1_8, %c0_9], %0 {strides = array<i32>} : memref<2x18x18x1xf32, #tpu.memory_space<vmem>>, vector<2x16x16x1xf32>,
    %c0_10 = arith.constant 0 : index
    %c0_11 = arith.constant 0 : index
    %c0_12 = arith.constant 0 : index
    %c0_13 = arith.constant 0 : index
    %4 = vector.load %arg19[%c0_10, %c0_11, %c0_12, %c0_13] : memref<2x18x18x1xf32, #tpu.memory_space<vmem>>, vector<2x16x16x1xf32>
    %c0_14 = arith.constant 0 : index
    %c0_15 = arith.constant 0 : index
    %c1_16 = arith.constant 1 : index
    %c0_17 = arith.constant 0 : index
    %5 = vector.load %arg19[%c0_14, %c0_15, %c1_16, %c0_17] : memref<2x18x18x1xf32, #tpu.memory_space<vmem>>, vector<2x16x16x1xf32>
    %c0_18 = arith.constant 0 : index
    %c0_19 = arith.constant 0 : index
    %c2 = arith.constant 2 : index
    %c0_20 = arith.constant 0 : index
    %6 = vector.load %arg19[%c0_18, %c0_19, %c2, %c0_20] : memref<2x18x18x1xf32, #tpu.memory_space<vmem>>, vector<2x16x16x1xf32>
    %c0_21 = arith.constant 0 : index
    %c1_22 = arith.constant 1 : index
    %c0_23 = arith.constant 0 : index
    %c0_24 = arith.constant 0 : index
    %7 = vector.load %arg19[%c0_21, %c1_22, %c0_23, %c0_24] : memref<2x18x18x1xf32, #tpu.memory_space<vmem>>, vector<2x16x16x1xf32>
    %c0_25 = arith.constant 0 : index
    %c1_26 = arith.constant 1 : index
    %c1_27 = arith.constant 1 : index
    %c0_28 = arith.constant 0 : index
    %8 = vector.load %arg19[%c0_25, %c1_26, %c1_27, %c0_28] : memref<2x18x18x1xf32, #tpu.memory_space<vmem>>, vector<2x16x16x1xf32>
    %c0_29 = arith.constant 0 : index
    %c1_30 = arith.constant 1 : index
    %c2_31 = arith.constant 2 : index
    %c0_32 = arith.constant 0 : index
    %9 = vector.load %arg19[%c0_29, %c1_30, %c2_31, %c0_32] : memref<2x18x18x1xf32, #tpu.memory_space<vmem>>, vector<2x16x16x1xf32>
    %c0_33 = arith.constant 0 : index
    %c2_34 = arith.constant 2 : index
    %c0_35 = arith.constant 0 : index
    %c0_36 = arith.constant 0 : index
    %10 = vector.load %arg19[%c0_33, %c2_34, %c0_35, %c0_36] : memref<2x18x18x1xf32, #tpu.memory_space<vmem>>, vector<2x16x16x1xf32>
    %c0_37 = arith.constant 0 : index
    %c2_38 = arith.constant 2 : index
    %c1_39 = arith.constant 1 : index
    %c0_40 = arith.constant 0 : index
    %11 = vector.load %arg19[%c0_37, %c2_38, %c1_39, %c0_40] : memref<2x18x18x1xf32, #tpu.memory_space<vmem>>, vector<2x16x16x1xf32>
    %c0_41 = arith.constant 0 : index
    %c2_42 = arith.constant 2 : index
    %c2_43 = arith.constant 2 : index
    %c0_44 = arith.constant 0 : index
    %12 = vector.load %arg19[%c0_41, %c2_42, %c2_43, %c0_44] : memref<2x18x18x1xf32, #tpu.memory_space<vmem>>, vector<2x16x16x1xf32>
    %13 = tpu.concatenate %4, %5, %6, %7, %8, %9, %10, %11, %12 in 3 : vector<2x16x16x1xf32>, vector<2x16x16x1xf32>, vector<2x16x16x1xf32>, vector<2x16x16x1xf32>, vector<2x16x16x1xf32>, vector<2x16x16x1xf32>, vector<2x16x16x1xf32>, vector<2x16x16x1xf32>, vector<2x16x16x1xf32> -> vector<2x16x16x9xf32>
    %14 = vector.shape_cast %13 : vector<2x16x16x9xf32> to vector<512x9xf32>
    %c0_45 = arith.constant 0 : index
    %c0_46 = arith.constant 0 : index
    %15 = vector.load %arg2[%c0_45, %c0_46] : memref<9x32xf32, #tpu.memory_space<vmem>>, vector<9x32xf32>
    %cst_47 = arith.constant dense<0.000000e+00> : vector<512x32xf32>
    %16 = tpu.matmul %14, %15, %cst_47 {dimension_numbers = #tpu.dot_dimension_numbers<[1], [0], [0], [1], [0, 0, 1, 1], [], []>} : vector<512x9xf32>, vector<9x32xf32>, vector<512x32xf32> -> vector<512x32xf32>
    %c0_48 = arith.constant 0 : index
    %c0_49 = arith.constant 0 : index
    %17 = vector.load %arg3[%c0_48, %c0_49] : memref<1x32xf32, #tpu.memory_space<vmem>>, vector<1x32xf32>
    %18 = vector.broadcast %17 : vector<1x32xf32> to vector<512x32xf32>
    %19 = arith.addf %16, %18 : vector<512x32xf32>
    %cst_50 = arith.constant 0.000000e+00 : f32
    %20 = vector.broadcast %cst_50 : f32 to vector<512x32xf32>
    %21 = arith.maximumf %19, %20 : vector<512x32xf32>
    %22 = vector.shape_cast %21 : vector<512x32xf32> to vector<16x2x16x32xf32>
    %cst_51 = arith.constant dense<0xFF800000> : vector<16x16x32xf32>
    %23 = vector.multi_reduction <maximumf>, %22, %cst_51 [1] : vector<16x2x16x32xf32> to vector<16x16x32xf32>
    %24 = vector.shape_cast %23 : vector<16x16x32xf32> to vector<16x8x2x32xf32>
    %cst_52 = arith.constant dense<0xFF800000> : vector<16x8x32xf32>
    %25 = vector.multi_reduction <maximumf>, %24, %cst_52 [2] : vector<16x8x2x32xf32> to vector<16x8x32xf32>
    %26 = vector.shape_cast %25 : vector<16x8x32xf32> to vector<2x8x8x32xf32>
    %cst_53 = arith.constant 0.000000e+00 : f32
    %27 = vector.broadcast %cst_53 : f32 to vector<2x10x10x32xf32>
    %c0_54 = arith.constant 0 : index
    %c0_55 = arith.constant 0 : index
    %c0_56 = arith.constant 0 : index
    %c0_57 = arith.constant 0 : index
    %28 = vector.load %arg20[%c0_54, %c0_55, %c0_56, %c0_57] : memref<2x10x10x32xf32, #tpu.memory_space<vmem>>, vector<2x10x10x32xf32>
    tpu.vector_store %arg20[%c0_54, %c0_55, %c0_56, %c0_57], %27 {strides = array<i32>} : memref<2x10x10x32xf32, #tpu.memory_space<vmem>>, vector<2x10x10x32xf32>,
    %c0_58 = arith.constant 0 : index
    %c1_59 = arith.constant 1 : index
    %c1_60 = arith.constant 1 : index
    %c0_61 = arith.constant 0 : index
    %29 = vector.load %arg20[%c0_58, %c1_59, %c1_60, %c0_61] : memref<2x10x10x32xf32, #tpu.memory_space<vmem>>, vector<2x8x8x32xf32>
    tpu.vector_store %arg20[%c0_58, %c1_59, %c1_60, %c0_61], %26 {strides = array<i32>} : memref<2x10x10x32xf32, #tpu.memory_space<vmem>>, vector<2x8x8x32xf32>,
    %c0_62 = arith.constant 0 : index
    %c0_63 = arith.constant 0 : index
    %c0_64 = arith.constant 0 : index
    %c0_65 = arith.constant 0 : index
    %30 = vector.load %arg20[%c0_62, %c0_63, %c0_64, %c0_65] : memref<2x10x10x32xf32, #tpu.memory_space<vmem>>, vector<2x8x8x32xf32>
    %c0_66 = arith.constant 0 : index
    %c0_67 = arith.constant 0 : index
    %c1_68 = arith.constant 1 : index
    %c0_69 = arith.constant 0 : index
    %31 = vector.load %arg20[%c0_66, %c0_67, %c1_68, %c0_69] : memref<2x10x10x32xf32, #tpu.memory_space<vmem>>, vector<2x8x8x32xf32>
    %c0_70 = arith.constant 0 : index
    %c0_71 = arith.constant 0 : index
    %c2_72 = arith.constant 2 : index
    %c0_73 = arith.constant 0 : index
    %32 = vector.load %arg20[%c0_70, %c0_71, %c2_72, %c0_73] : memref<2x10x10x32xf32, #tpu.memory_space<vmem>>, vector<2x8x8x32xf32>
    %c0_74 = arith.constant 0 : index
    %c1_75 = arith.constant 1 : index
    %c0_76 = arith.constant 0 : index
    %c0_77 = arith.constant 0 : index
    %33 = vector.load %arg20[%c0_74, %c1_75, %c0_76, %c0_77] : memref<2x10x10x32xf32, #tpu.memory_space<vmem>>, vector<2x8x8x32xf32>
    %c0_78 = arith.constant 0 : index
    %c1_79 = arith.constant 1 : index
    %c1_80 = arith.constant 1 : index
    %c0_81 = arith.constant 0 : index
    %34 = vector.load %arg20[%c0_78, %c1_79, %c1_80, %c0_81] : memref<2x10x10x32xf32, #tpu.memory_space<vmem>>, vector<2x8x8x32xf32>
    %c0_82 = arith.constant 0 : index
    %c1_83 = arith.constant 1 : index
    %c2_84 = arith.constant 2 : index
    %c0_85 = arith.constant 0 : index
    %35 = vector.load %arg20[%c0_82, %c1_83, %c2_84, %c0_85] : memref<2x10x10x32xf32, #tpu.memory_space<vmem>>, vector<2x8x8x32xf32>
    %c0_86 = arith.constant 0 : index
    %c2_87 = arith.constant 2 : index
    %c0_88 = arith.constant 0 : index
    %c0_89 = arith.constant 0 : index
    %36 = vector.load %arg20[%c0_86, %c2_87, %c0_88, %c0_89] : memref<2x10x10x32xf32, #tpu.memory_space<vmem>>, vector<2x8x8x32xf32>
    %c0_90 = arith.constant 0 : index
    %c2_91 = arith.constant 2 : index
    %c1_92 = arith.constant 1 : index
    %c0_93 = arith.constant 0 : index
    %37 = vector.load %arg20[%c0_90, %c2_91, %c1_92, %c0_93] : memref<2x10x10x32xf32, #tpu.memory_space<vmem>>, vector<2x8x8x32xf32>
    %c0_94 = arith.constant 0 : index
    %c2_95 = arith.constant 2 : index
    %c2_96 = arith.constant 2 : index
    %c0_97 = arith.constant 0 : index
    %38 = vector.load %arg20[%c0_94, %c2_95, %c2_96, %c0_97] : memref<2x10x10x32xf32, #tpu.memory_space<vmem>>, vector<2x8x8x32xf32>
    %39 = tpu.concatenate %30, %31, %32, %33, %34, %35, %36, %37, %38 in 3 : vector<2x8x8x32xf32>, vector<2x8x8x32xf32>, vector<2x8x8x32xf32>, vector<2x8x8x32xf32>, vector<2x8x8x32xf32>, vector<2x8x8x32xf32>, vector<2x8x8x32xf32>, vector<2x8x8x32xf32>, vector<2x8x8x32xf32> -> vector<2x8x8x288xf32>
    %40 = vector.shape_cast %39 : vector<2x8x8x288xf32> to vector<128x288xf32>
    %c0_98 = arith.constant 0 : index
    %c0_99 = arith.constant 0 : index
    %41 = vector.load %arg4[%c0_98, %c0_99] : memref<288x64xf32, #tpu.memory_space<vmem>>, vector<288x64xf32>
    %cst_100 = arith.constant dense<0.000000e+00> : vector<128x64xf32>
    %42 = tpu.matmul %40, %41, %cst_100 {dimension_numbers = #tpu.dot_dimension_numbers<[1], [0], [0], [1], [0, 0, 1, 1], [], []>} : vector<128x288xf32>, vector<288x64xf32>, vector<128x64xf32> -> vector<128x64xf32>
    %c0_101 = arith.constant 0 : index
    %c0_102 = arith.constant 0 : index
    %43 = vector.load %arg5[%c0_101, %c0_102] : memref<1x64xf32, #tpu.memory_space<vmem>>, vector<1x64xf32>
    %44 = vector.broadcast %43 : vector<1x64xf32> to vector<128x64xf32>
    %45 = arith.addf %42, %44 : vector<128x64xf32>
    %cst_103 = arith.constant 0.000000e+00 : f32
    %46 = vector.broadcast %cst_103 : f32 to vector<128x64xf32>
    %47 = arith.maximumf %45, %46 : vector<128x64xf32>
    %48 = vector.shape_cast %47 : vector<128x64xf32> to vector<8x2x8x64xf32>
    %cst_104 = arith.constant dense<0xFF800000> : vector<8x8x64xf32>
    %49 = vector.multi_reduction <maximumf>, %48, %cst_104 [1] : vector<8x2x8x64xf32> to vector<8x8x64xf32>
    %50 = vector.shape_cast %49 : vector<8x8x64xf32> to vector<8x4x2x64xf32>
    %cst_105 = arith.constant dense<0xFF800000> : vector<8x4x64xf32>
    %51 = vector.multi_reduction <maximumf>, %50, %cst_105 [2] : vector<8x4x2x64xf32> to vector<8x4x64xf32>
    %52 = vector.shape_cast %51 : vector<8x4x64xf32> to vector<2x4x4x64xf32>
    %cst_106 = arith.constant 0.000000e+00 : f32
    %53 = vector.broadcast %cst_106 : f32 to vector<2x6x6x64xf32>
    %c0_107 = arith.constant 0 : index
    %c0_108 = arith.constant 0 : index
    %c0_109 = arith.constant 0 : index
    %c0_110 = arith.constant 0 : index
    %54 = vector.load %arg21[%c0_107, %c0_108, %c0_109, %c0_110] : memref<2x6x6x64xf32, #tpu.memory_space<vmem>>, vector<2x6x6x64xf32>
    tpu.vector_store %arg21[%c0_107, %c0_108, %c0_109, %c0_110], %53 {strides = array<i32>} : memref<2x6x6x64xf32, #tpu.memory_space<vmem>>, vector<2x6x6x64xf32>,
    %c0_111 = arith.constant 0 : index
    %c1_112 = arith.constant 1 : index
    %c1_113 = arith.constant 1 : index
    %c0_114 = arith.constant 0 : index
    %55 = vector.load %arg21[%c0_111, %c1_112, %c1_113, %c0_114] : memref<2x6x6x64xf32, #tpu.memory_space<vmem>>, vector<2x4x4x64xf32>
    tpu.vector_store %arg21[%c0_111, %c1_112, %c1_113, %c0_114], %52 {strides = array<i32>} : memref<2x6x6x64xf32, #tpu.memory_space<vmem>>, vector<2x4x4x64xf32>,
    %c0_115 = arith.constant 0 : index
    %c0_116 = arith.constant 0 : index
    %c0_117 = arith.constant 0 : index
    %c0_118 = arith.constant 0 : index
    %56 = vector.load %arg21[%c0_115, %c0_116, %c0_117, %c0_118] : memref<2x6x6x64xf32, #tpu.memory_space<vmem>>, vector<2x4x4x64xf32>
    %c0_119 = arith.constant 0 : index
    %c0_120 = arith.constant 0 : index
    %c1_121 = arith.constant 1 : index
    %c0_122 = arith.constant 0 : index
    %57 = vector.load %arg21[%c0_119, %c0_120, %c1_121, %c0_122] : memref<2x6x6x64xf32, #tpu.memory_space<vmem>>, vector<2x4x4x64xf32>
    %c0_123 = arith.constant 0 : index
    %c0_124 = arith.constant 0 : index
    %c2_125 = arith.constant 2 : index
    %c0_126 = arith.constant 0 : index
    %58 = vector.load %arg21[%c0_123, %c0_124, %c2_125, %c0_126] : memref<2x6x6x64xf32, #tpu.memory_space<vmem>>, vector<2x4x4x64xf32>
    %c0_127 = arith.constant 0 : index
    %c1_128 = arith.constant 1 : index
    %c0_129 = arith.constant 0 : index
    %c0_130 = arith.constant 0 : index
    %59 = vector.load %arg21[%c0_127, %c1_128, %c0_129, %c0_130] : memref<2x6x6x64xf32, #tpu.memory_space<vmem>>, vector<2x4x4x64xf32>
    %c0_131 = arith.constant 0 : index
    %c1_132 = arith.constant 1 : index
    %c1_133 = arith.constant 1 : index
    %c0_134 = arith.constant 0 : index
    %60 = vector.load %arg21[%c0_131, %c1_132, %c1_133, %c0_134] : memref<2x6x6x64xf32, #tpu.memory_space<vmem>>, vector<2x4x4x64xf32>
    %c0_135 = arith.constant 0 : index
    %c1_136 = arith.constant 1 : index
    %c2_137 = arith.constant 2 : index
    %c0_138 = arith.constant 0 : index
    %61 = vector.load %arg21[%c0_135, %c1_136, %c2_137, %c0_138] : memref<2x6x6x64xf32, #tpu.memory_space<vmem>>, vector<2x4x4x64xf32>
    %c0_139 = arith.constant 0 : index
    %c2_140 = arith.constant 2 : index
    %c0_141 = arith.constant 0 : index
    %c0_142 = arith.constant 0 : index
    %62 = vector.load %arg21[%c0_139, %c2_140, %c0_141, %c0_142] : memref<2x6x6x64xf32, #tpu.memory_space<vmem>>, vector<2x4x4x64xf32>
    %c0_143 = arith.constant 0 : index
    %c2_144 = arith.constant 2 : index
    %c1_145 = arith.constant 1 : index
    %c0_146 = arith.constant 0 : index
    %63 = vector.load %arg21[%c0_143, %c2_144, %c1_145, %c0_146] : memref<2x6x6x64xf32, #tpu.memory_space<vmem>>, vector<2x4x4x64xf32>
    %c0_147 = arith.constant 0 : index
    %c2_148 = arith.constant 2 : index
    %c2_149 = arith.constant 2 : index
    %c0_150 = arith.constant 0 : index
    %64 = vector.load %arg21[%c0_147, %c2_148, %c2_149, %c0_150] : memref<2x6x6x64xf32, #tpu.memory_space<vmem>>, vector<2x4x4x64xf32>
    %65 = tpu.concatenate %56, %57, %58, %59, %60, %61, %62, %63, %64 in 3 : vector<2x4x4x64xf32>, vector<2x4x4x64xf32>, vector<2x4x4x64xf32>, vector<2x4x4x64xf32>, vector<2x4x4x64xf32>, vector<2x4x4x64xf32>, vector<2x4x4x64xf32>, vector<2x4x4x64xf32>, vector<2x4x4x64xf32> -> vector<2x4x4x576xf32>
    %66 = vector.shape_cast %65 : vector<2x4x4x576xf32> to vector<32x576xf32>
    %c0_151 = arith.constant 0 : index
    %c0_152 = arith.constant 0 : index
    %67 = vector.load %arg6[%c0_151, %c0_152] : memref<576x128xf32, #tpu.memory_space<vmem>>, vector<576x128xf32>
    %cst_153 = arith.constant dense<0.000000e+00> : vector<32x128xf32>
    %68 = tpu.matmul %66, %67, %cst_153 {dimension_numbers = #tpu.dot_dimension_numbers<[1], [0], [0], [1], [0, 0, 1, 1], [], []>} : vector<32x576xf32>, vector<576x128xf32>, vector<32x128xf32> -> vector<32x128xf32>
    %c0_154 = arith.constant 0 : index
    %c0_155 = arith.constant 0 : index
    %69 = vector.load %arg7[%c0_154, %c0_155] : memref<1x128xf32, #tpu.memory_space<vmem>>, vector<1x128xf32>
    %70 = vector.broadcast %69 : vector<1x128xf32> to vector<32x128xf32>
    %71 = arith.addf %68, %70 : vector<32x128xf32>
    %cst_156 = arith.constant 0.000000e+00 : f32
    %72 = vector.broadcast %cst_156 : f32 to vector<32x128xf32>
    %73 = arith.maximumf %71, %72 : vector<32x128xf32>
    %74 = vector.shape_cast %73 : vector<32x128xf32> to vector<4x2x4x128xf32>
    %cst_157 = arith.constant dense<0xFF800000> : vector<4x4x128xf32>
    %75 = vector.multi_reduction <maximumf>, %74, %cst_157 [1] : vector<4x2x4x128xf32> to vector<4x4x128xf32>
    %76 = vector.shape_cast %75 : vector<4x4x128xf32> to vector<4x2x2x128xf32>
    %cst_158 = arith.constant dense<0xFF800000> : vector<4x2x128xf32>
    %77 = vector.multi_reduction <maximumf>, %76, %cst_158 [2] : vector<4x2x2x128xf32> to vector<4x2x128xf32>
    %78 = vector.shape_cast %77 : vector<4x2x128xf32> to vector<2x2x2x128xf32>
    %79 = vector.shape_cast %78 : vector<2x2x2x128xf32> to vector<8x128xf32>
    %c0_159 = arith.constant 0 : index
    %c0_160 = arith.constant 0 : index
    %80 = vector.load %arg8[%c0_159, %c0_160] : memref<128x384xf32, #tpu.memory_space<vmem>>, vector<128x384xf32>
    %cst_161 = arith.constant dense<0.000000e+00> : vector<8x384xf32>
    %81 = tpu.matmul %79, %80, %cst_161 {dimension_numbers = #tpu.dot_dimension_numbers<[1], [0], [0], [1], [0, 0, 1, 1], [], []>} : vector<8x128xf32>, vector<128x384xf32>, vector<8x384xf32> -> vector<8x384xf32>
    %c0_162 = arith.constant 0 : index
    %c0_163 = arith.constant 0 : index
    %82 = vector.load %arg9[%c0_162, %c0_163] : memref<1x384xf32, #tpu.memory_space<vmem>>, vector<1x384xf32>
    %83 = vector.broadcast %82 : vector<1x384xf32> to vector<8x384xf32>
    %84 = arith.addf %81, %83 : vector<8x384xf32>
    %85 = vector.extract_strided_slice %84 {offsets = [0, 0], sizes = [8, 128], strides = [1, 1]} : vector<8x384xf32> to vector<8x128xf32>
    %86 = vector.shape_cast %85 : vector<8x128xf32> to vector<2x4x128xf32>
    %87 = vector.extract_strided_slice %84 {offsets = [0, 128], sizes = [8, 128], strides = [1, 1]} : vector<8x384xf32> to vector<8x128xf32>
    %88 = vector.shape_cast %87 : vector<8x128xf32> to vector<2x4x128xf32>
    %89 = vector.extract_strided_slice %84 {offsets = [0, 256], sizes = [8, 128], strides = [1, 1]} : vector<8x384xf32> to vector<8x128xf32>
    %90 = vector.shape_cast %89 : vector<8x128xf32> to vector<2x4x128xf32>
    %91 = vector.extract_strided_slice %86 {offsets = [0, 0, 0], sizes = [2, 4, 16], strides = [1, 1, 1]} : vector<2x4x128xf32> to vector<2x4x16xf32>
    %92 = vector.extract_strided_slice %88 {offsets = [0, 0, 0], sizes = [2, 4, 16], strides = [1, 1, 1]} : vector<2x4x128xf32> to vector<2x4x16xf32>
    %93 = vector.extract_strided_slice %90 {offsets = [0, 0, 0], sizes = [2, 4, 16], strides = [1, 1, 1]} : vector<2x4x128xf32> to vector<2x4x16xf32>
    %cst_164 = arith.constant dense<0.000000e+00> : vector<2x4x4xf32>
    %94 = tpu.matmul %91, %92, %cst_164 {dimension_numbers = #tpu.dot_dimension_numbers<[2], [2], [1], [1], [0, 0, 0, 1, 1, 1], [0], [0]>} : vector<2x4x16xf32>, vector<2x4x16xf32>, vector<2x4x4xf32> -> vector<2x4x4xf32>
    %cst_165 = arith.constant 2.500000e-01 : f32
    %95 = vector.broadcast %cst_165 : f32 to vector<2x4x4xf32>
    %96 = arith.mulf %94, %95 : vector<2x4x4xf32>
    %cst_166 = arith.constant dense<0xFF800000> : vector<2x4xf32>
    %97 = vector.multi_reduction <maximumf>, %96, %cst_166 [2] : vector<2x4x4xf32> to vector<2x4xf32>
    %98 = vector.shape_cast %97 : vector<2x4xf32> to vector<2x4x1xf32>
    %99 = vector.broadcast %98 : vector<2x4x1xf32> to vector<2x4x4xf32>
    %100 = arith.subf %96, %99 : vector<2x4x4xf32>
    %101 = math.exp %100 : vector<2x4x4xf32>
    %cst_167 = arith.constant dense<0.000000e+00> : vector<2x4xf32>
    %102 = vector.multi_reduction <add>, %101, %cst_167 [2] : vector<2x4x4xf32> to vector<2x4xf32>
    %103 = vector.shape_cast %102 : vector<2x4xf32> to vector<2x4x1xf32>
    %104 = vector.broadcast %103 : vector<2x4x1xf32> to vector<2x4x4xf32>
    %105 = arith.divf %101, %104 : vector<2x4x4xf32>
    %cst_168 = arith.constant dense<0.000000e+00> : vector<2x4x16xf32>
    %106 = tpu.matmul %105, %93, %cst_168 {dimension_numbers = #tpu.dot_dimension_numbers<[2], [1], [1], [2], [0, 0, 0, 1, 1, 2], [0], [0]>} : vector<2x4x4xf32>, vector<2x4x16xf32>, vector<2x4x16xf32> -> vector<2x4x16xf32>
    %107 = vector.extract_strided_slice %86 {offsets = [0, 0, 16], sizes = [2, 4, 16], strides = [1, 1, 1]} : vector<2x4x128xf32> to vector<2x4x16xf32>
    %108 = vector.extract_strided_slice %88 {offsets = [0, 0, 16], sizes = [2, 4, 16], strides = [1, 1, 1]} : vector<2x4x128xf32> to vector<2x4x16xf32>
    %109 = vector.extract_strided_slice %90 {offsets = [0, 0, 16], sizes = [2, 4, 16], strides = [1, 1, 1]} : vector<2x4x128xf32> to vector<2x4x16xf32>
    %cst_169 = arith.constant dense<0.000000e+00> : vector<2x4x4xf32>
    %110 = tpu.matmul %107, %108, %cst_169 {dimension_numbers = #tpu.dot_dimension_numbers<[2], [2], [1], [1], [0, 0, 0, 1, 1, 1], [0], [0]>} : vector<2x4x16xf32>, vector<2x4x16xf32>, vector<2x4x4xf32> -> vector<2x4x4xf32>
    %cst_170 = arith.constant 2.500000e-01 : f32
    %111 = vector.broadcast %cst_170 : f32 to vector<2x4x4xf32>
    %112 = arith.mulf %110, %111 : vector<2x4x4xf32>
    %cst_171 = arith.constant dense<0xFF800000> : vector<2x4xf32>
    %113 = vector.multi_reduction <maximumf>, %112, %cst_171 [2] : vector<2x4x4xf32> to vector<2x4xf32>
    %114 = vector.shape_cast %113 : vector<2x4xf32> to vector<2x4x1xf32>
    %115 = vector.broadcast %114 : vector<2x4x1xf32> to vector<2x4x4xf32>
    %116 = arith.subf %112, %115 : vector<2x4x4xf32>
    %117 = math.exp %116 : vector<2x4x4xf32>
    %cst_172 = arith.constant dense<0.000000e+00> : vector<2x4xf32>
    %118 = vector.multi_reduction <add>, %117, %cst_172 [2] : vector<2x4x4xf32> to vector<2x4xf32>
    %119 = vector.shape_cast %118 : vector<2x4xf32> to vector<2x4x1xf32>
    %120 = vector.broadcast %119 : vector<2x4x1xf32> to vector<2x4x4xf32>
    %121 = arith.divf %117, %120 : vector<2x4x4xf32>
    %cst_173 = arith.constant dense<0.000000e+00> : vector<2x4x16xf32>
    %122 = tpu.matmul %121, %109, %cst_173 {dimension_numbers = #tpu.dot_dimension_numbers<[2], [1], [1], [2], [0, 0, 0, 1, 1, 2], [0], [0]>} : vector<2x4x4xf32>, vector<2x4x16xf32>, vector<2x4x16xf32> -> vector<2x4x16xf32>
    %123 = vector.extract_strided_slice %86 {offsets = [0, 0, 32], sizes = [2, 4, 16], strides = [1, 1, 1]} : vector<2x4x128xf32> to vector<2x4x16xf32>
    %124 = vector.extract_strided_slice %88 {offsets = [0, 0, 32], sizes = [2, 4, 16], strides = [1, 1, 1]} : vector<2x4x128xf32> to vector<2x4x16xf32>
    %125 = vector.extract_strided_slice %90 {offsets = [0, 0, 32], sizes = [2, 4, 16], strides = [1, 1, 1]} : vector<2x4x128xf32> to vector<2x4x16xf32>
    %cst_174 = arith.constant dense<0.000000e+00> : vector<2x4x4xf32>
    %126 = tpu.matmul %123, %124, %cst_174 {dimension_numbers = #tpu.dot_dimension_numbers<[2], [2], [1], [1], [0, 0, 0, 1, 1, 1], [0], [0]>} : vector<2x4x16xf32>, vector<2x4x16xf32>, vector<2x4x4xf32> -> vector<2x4x4xf32>
    %cst_175 = arith.constant 2.500000e-01 : f32
    %127 = vector.broadcast %cst_175 : f32 to vector<2x4x4xf32>
    %128 = arith.mulf %126, %127 : vector<2x4x4xf32>
    %cst_176 = arith.constant dense<0xFF800000> : vector<2x4xf32>
    %129 = vector.multi_reduction <maximumf>, %128, %cst_176 [2] : vector<2x4x4xf32> to vector<2x4xf32>
    %130 = vector.shape_cast %129 : vector<2x4xf32> to vector<2x4x1xf32>
    %131 = vector.broadcast %130 : vector<2x4x1xf32> to vector<2x4x4xf32>
    %132 = arith.subf %128, %131 : vector<2x4x4xf32>
    %133 = math.exp %132 : vector<2x4x4xf32>
    %cst_177 = arith.constant dense<0.000000e+00> : vector<2x4xf32>
    %134 = vector.multi_reduction <add>, %133, %cst_177 [2] : vector<2x4x4xf32> to vector<2x4xf32>
    %135 = vector.shape_cast %134 : vector<2x4xf32> to vector<2x4x1xf32>
    %136 = vector.broadcast %135 : vector<2x4x1xf32> to vector<2x4x4xf32>
    %137 = arith.divf %133, %136 : vector<2x4x4xf32>
    %cst_178 = arith.constant dense<0.000000e+00> : vector<2x4x16xf32>
    %138 = tpu.matmul %137, %125, %cst_178 {dimension_numbers = #tpu.dot_dimension_numbers<[2], [1], [1], [2], [0, 0, 0, 1, 1, 2], [0], [0]>} : vector<2x4x4xf32>, vector<2x4x16xf32>, vector<2x4x16xf32> -> vector<2x4x16xf32>
    %139 = vector.extract_strided_slice %86 {offsets = [0, 0, 48], sizes = [2, 4, 16], strides = [1, 1, 1]} : vector<2x4x128xf32> to vector<2x4x16xf32>
    %140 = vector.extract_strided_slice %88 {offsets = [0, 0, 48], sizes = [2, 4, 16], strides = [1, 1, 1]} : vector<2x4x128xf32> to vector<2x4x16xf32>
    %141 = vector.extract_strided_slice %90 {offsets = [0, 0, 48], sizes = [2, 4, 16], strides = [1, 1, 1]} : vector<2x4x128xf32> to vector<2x4x16xf32>
    %cst_179 = arith.constant dense<0.000000e+00> : vector<2x4x4xf32>
    %142 = tpu.matmul %139, %140, %cst_179 {dimension_numbers = #tpu.dot_dimension_numbers<[2], [2], [1], [1], [0, 0, 0, 1, 1, 1], [0], [0]>} : vector<2x4x16xf32>, vector<2x4x16xf32>, vector<2x4x4xf32> -> vector<2x4x4xf32>
    %cst_180 = arith.constant 2.500000e-01 : f32
    %143 = vector.broadcast %cst_180 : f32 to vector<2x4x4xf32>
    %144 = arith.mulf %142, %143 : vector<2x4x4xf32>
    %cst_181 = arith.constant dense<0xFF800000> : vector<2x4xf32>
    %145 = vector.multi_reduction <maximumf>, %144, %cst_181 [2] : vector<2x4x4xf32> to vector<2x4xf32>
    %146 = vector.shape_cast %145 : vector<2x4xf32> to vector<2x4x1xf32>
    %147 = vector.broadcast %146 : vector<2x4x1xf32> to vector<2x4x4xf32>
    %148 = arith.subf %144, %147 : vector<2x4x4xf32>
    %149 = math.exp %148 : vector<2x4x4xf32>
    %cst_182 = arith.constant dense<0.000000e+00> : vector<2x4xf32>
    %150 = vector.multi_reduction <add>, %149, %cst_182 [2] : vector<2x4x4xf32> to vector<2x4xf32>
    %151 = vector.shape_cast %150 : vector<2x4xf32> to vector<2x4x1xf32>
    %152 = vector.broadcast %151 : vector<2x4x1xf32> to vector<2x4x4xf32>
    %153 = arith.divf %149, %152 : vector<2x4x4xf32>
    %cst_183 = arith.constant dense<0.000000e+00> : vector<2x4x16xf32>
    %154 = tpu.matmul %153, %141, %cst_183 {dimension_numbers = #tpu.dot_dimension_numbers<[2], [1], [1], [2], [0, 0, 0, 1, 1, 2], [0], [0]>} : vector<2x4x4xf32>, vector<2x4x16xf32>, vector<2x4x16xf32> -> vector<2x4x16xf32>
    %155 = vector.extract_strided_slice %86 {offsets = [0, 0, 64], sizes = [2, 4, 16], strides = [1, 1, 1]} : vector<2x4x128xf32> to vector<2x4x16xf32>
    %156 = vector.extract_strided_slice %88 {offsets = [0, 0, 64], sizes = [2, 4, 16], strides = [1, 1, 1]} : vector<2x4x128xf32> to vector<2x4x16xf32>
    %157 = vector.extract_strided_slice %90 {offsets = [0, 0, 64], sizes = [2, 4, 16], strides = [1, 1, 1]} : vector<2x4x128xf32> to vector<2x4x16xf32>
    %cst_184 = arith.constant dense<0.000000e+00> : vector<2x4x4xf32>
    %158 = tpu.matmul %155, %156, %cst_184 {dimension_numbers = #tpu.dot_dimension_numbers<[2], [2], [1], [1], [0, 0, 0, 1, 1, 1], [0], [0]>} : vector<2x4x16xf32>, vector<2x4x16xf32>, vector<2x4x4xf32> -> vector<2x4x4xf32>
    %cst_185 = arith.constant 2.500000e-01 : f32
    %159 = vector.broadcast %cst_185 : f32 to vector<2x4x4xf32>
    %160 = arith.mulf %158, %159 : vector<2x4x4xf32>
    %cst_186 = arith.constant dense<0xFF800000> : vector<2x4xf32>
    %161 = vector.multi_reduction <maximumf>, %160, %cst_186 [2] : vector<2x4x4xf32> to vector<2x4xf32>
    %162 = vector.shape_cast %161 : vector<2x4xf32> to vector<2x4x1xf32>
    %163 = vector.broadcast %162 : vector<2x4x1xf32> to vector<2x4x4xf32>
    %164 = arith.subf %160, %163 : vector<2x4x4xf32>
    %165 = math.exp %164 : vector<2x4x4xf32>
    %cst_187 = arith.constant dense<0.000000e+00> : vector<2x4xf32>
    %166 = vector.multi_reduction <add>, %165, %cst_187 [2] : vector<2x4x4xf32> to vector<2x4xf32>
    %167 = vector.shape_cast %166 : vector<2x4xf32> to vector<2x4x1xf32>
    %168 = vector.broadcast %167 : vector<2x4x1xf32> to vector<2x4x4xf32>
    %169 = arith.divf %165, %168 : vector<2x4x4xf32>
    %cst_188 = arith.constant dense<0.000000e+00> : vector<2x4x16xf32>
    %170 = tpu.matmul %169, %157, %cst_188 {dimension_numbers = #tpu.dot_dimension_numbers<[2], [1], [1], [2], [0, 0, 0, 1, 1, 2], [0], [0]>} : vector<2x4x4xf32>, vector<2x4x16xf32>, vector<2x4x16xf32> -> vector<2x4x16xf32>
    %171 = vector.extract_strided_slice %86 {offsets = [0, 0, 80], sizes = [2, 4, 16], strides = [1, 1, 1]} : vector<2x4x128xf32> to vector<2x4x16xf32>
    %172 = vector.extract_strided_slice %88 {offsets = [0, 0, 80], sizes = [2, 4, 16], strides = [1, 1, 1]} : vector<2x4x128xf32> to vector<2x4x16xf32>
    %173 = vector.extract_strided_slice %90 {offsets = [0, 0, 80], sizes = [2, 4, 16], strides = [1, 1, 1]} : vector<2x4x128xf32> to vector<2x4x16xf32>
    %cst_189 = arith.constant dense<0.000000e+00> : vector<2x4x4xf32>
    %174 = tpu.matmul %171, %172, %cst_189 {dimension_numbers = #tpu.dot_dimension_numbers<[2], [2], [1], [1], [0, 0, 0, 1, 1, 1], [0], [0]>} : vector<2x4x16xf32>, vector<2x4x16xf32>, vector<2x4x4xf32> -> vector<2x4x4xf32>
    %cst_190 = arith.constant 2.500000e-01 : f32
    %175 = vector.broadcast %cst_190 : f32 to vector<2x4x4xf32>
    %176 = arith.mulf %174, %175 : vector<2x4x4xf32>
    %cst_191 = arith.constant dense<0xFF800000> : vector<2x4xf32>
    %177 = vector.multi_reduction <maximumf>, %176, %cst_191 [2] : vector<2x4x4xf32> to vector<2x4xf32>
    %178 = vector.shape_cast %177 : vector<2x4xf32> to vector<2x4x1xf32>
    %179 = vector.broadcast %178 : vector<2x4x1xf32> to vector<2x4x4xf32>
    %180 = arith.subf %176, %179 : vector<2x4x4xf32>
    %181 = math.exp %180 : vector<2x4x4xf32>
    %cst_192 = arith.constant dense<0.000000e+00> : vector<2x4xf32>
    %182 = vector.multi_reduction <add>, %181, %cst_192 [2] : vector<2x4x4xf32> to vector<2x4xf32>
    %183 = vector.shape_cast %182 : vector<2x4xf32> to vector<2x4x1xf32>
    %184 = vector.broadcast %183 : vector<2x4x1xf32> to vector<2x4x4xf32>
    %185 = arith.divf %181, %184 : vector<2x4x4xf32>
    %cst_193 = arith.constant dense<0.000000e+00> : vector<2x4x16xf32>
    %186 = tpu.matmul %185, %173, %cst_193 {dimension_numbers = #tpu.dot_dimension_numbers<[2], [1], [1], [2], [0, 0, 0, 1, 1, 2], [0], [0]>} : vector<2x4x4xf32>, vector<2x4x16xf32>, vector<2x4x16xf32> -> vector<2x4x16xf32>
    %187 = vector.extract_strided_slice %86 {offsets = [0, 0, 96], sizes = [2, 4, 16], strides = [1, 1, 1]} : vector<2x4x128xf32> to vector<2x4x16xf32>
    %188 = vector.extract_strided_slice %88 {offsets = [0, 0, 96], sizes = [2, 4, 16], strides = [1, 1, 1]} : vector<2x4x128xf32> to vector<2x4x16xf32>
    %189 = vector.extract_strided_slice %90 {offsets = [0, 0, 96], sizes = [2, 4, 16], strides = [1, 1, 1]} : vector<2x4x128xf32> to vector<2x4x16xf32>
    %cst_194 = arith.constant dense<0.000000e+00> : vector<2x4x4xf32>
    %190 = tpu.matmul %187, %188, %cst_194 {dimension_numbers = #tpu.dot_dimension_numbers<[2], [2], [1], [1], [0, 0, 0, 1, 1, 1], [0], [0]>} : vector<2x4x16xf32>, vector<2x4x16xf32>, vector<2x4x4xf32> -> vector<2x4x4xf32>
    %cst_195 = arith.constant 2.500000e-01 : f32
    %191 = vector.broadcast %cst_195 : f32 to vector<2x4x4xf32>
    %192 = arith.mulf %190, %191 : vector<2x4x4xf32>
    %cst_196 = arith.constant dense<0xFF800000> : vector<2x4xf32>
    %193 = vector.multi_reduction <maximumf>, %192, %cst_196 [2] : vector<2x4x4xf32> to vector<2x4xf32>
    %194 = vector.shape_cast %193 : vector<2x4xf32> to vector<2x4x1xf32>
    %195 = vector.broadcast %194 : vector<2x4x1xf32> to vector<2x4x4xf32>
    %196 = arith.subf %192, %195 : vector<2x4x4xf32>
    %197 = math.exp %196 : vector<2x4x4xf32>
    %cst_197 = arith.constant dense<0.000000e+00> : vector<2x4xf32>
    %198 = vector.multi_reduction <add>, %197, %cst_197 [2] : vector<2x4x4xf32> to vector<2x4xf32>
    %199 = vector.shape_cast %198 : vector<2x4xf32> to vector<2x4x1xf32>
    %200 = vector.broadcast %199 : vector<2x4x1xf32> to vector<2x4x4xf32>
    %201 = arith.divf %197, %200 : vector<2x4x4xf32>
    %cst_198 = arith.constant dense<0.000000e+00> : vector<2x4x16xf32>
    %202 = tpu.matmul %201, %189, %cst_198 {dimension_numbers = #tpu.dot_dimension_numbers<[2], [1], [1], [2], [0, 0, 0, 1, 1, 2], [0], [0]>} : vector<2x4x4xf32>, vector<2x4x16xf32>, vector<2x4x16xf32> -> vector<2x4x16xf32>
    %203 = vector.extract_strided_slice %86 {offsets = [0, 0, 112], sizes = [2, 4, 16], strides = [1, 1, 1]} : vector<2x4x128xf32> to vector<2x4x16xf32>
    %204 = vector.extract_strided_slice %88 {offsets = [0, 0, 112], sizes = [2, 4, 16], strides = [1, 1, 1]} : vector<2x4x128xf32> to vector<2x4x16xf32>
    %205 = vector.extract_strided_slice %90 {offsets = [0, 0, 112], sizes = [2, 4, 16], strides = [1, 1, 1]} : vector<2x4x128xf32> to vector<2x4x16xf32>
    %cst_199 = arith.constant dense<0.000000e+00> : vector<2x4x4xf32>
    %206 = tpu.matmul %203, %204, %cst_199 {dimension_numbers = #tpu.dot_dimension_numbers<[2], [2], [1], [1], [0, 0, 0, 1, 1, 1], [0], [0]>} : vector<2x4x16xf32>, vector<2x4x16xf32>, vector<2x4x4xf32> -> vector<2x4x4xf32>
    %cst_200 = arith.constant 2.500000e-01 : f32
    %207 = vector.broadcast %cst_200 : f32 to vector<2x4x4xf32>
    %208 = arith.mulf %206, %207 : vector<2x4x4xf32>
    %cst_201 = arith.constant dense<0xFF800000> : vector<2x4xf32>
    %209 = vector.multi_reduction <maximumf>, %208, %cst_201 [2] : vector<2x4x4xf32> to vector<2x4xf32>
    %210 = vector.shape_cast %209 : vector<2x4xf32> to vector<2x4x1xf32>
    %211 = vector.broadcast %210 : vector<2x4x1xf32> to vector<2x4x4xf32>
    %212 = arith.subf %208, %211 : vector<2x4x4xf32>
    %213 = math.exp %212 : vector<2x4x4xf32>
    %cst_202 = arith.constant dense<0.000000e+00> : vector<2x4xf32>
    %214 = vector.multi_reduction <add>, %213, %cst_202 [2] : vector<2x4x4xf32> to vector<2x4xf32>
    %215 = vector.shape_cast %214 : vector<2x4xf32> to vector<2x4x1xf32>
    %216 = vector.broadcast %215 : vector<2x4x1xf32> to vector<2x4x4xf32>
    %217 = arith.divf %213, %216 : vector<2x4x4xf32>
    %cst_203 = arith.constant dense<0.000000e+00> : vector<2x4x16xf32>
    %218 = tpu.matmul %217, %205, %cst_203 {dimension_numbers = #tpu.dot_dimension_numbers<[2], [1], [1], [2], [0, 0, 0, 1, 1, 2], [0], [0]>} : vector<2x4x4xf32>, vector<2x4x16xf32>, vector<2x4x16xf32> -> vector<2x4x16xf32>
    %219 = tpu.concatenate %106, %122, %138, %154, %170, %186, %202, %218 in 2 : vector<2x4x16xf32>, vector<2x4x16xf32>, vector<2x4x16xf32>, vector<2x4x16xf32>, vector<2x4x16xf32>, vector<2x4x16xf32>, vector<2x4x16xf32>, vector<2x4x16xf32> -> vector<2x4x128xf32>
    %220 = vector.shape_cast %219 : vector<2x4x128xf32> to vector<8x128xf32>
    %c0_204 = arith.constant 0 : index
    %c0_205 = arith.constant 0 : index
    %221 = vector.load %arg10[%c0_204, %c0_205] : memref<128x128xf32, #tpu.memory_space<vmem>>, vector<128x128xf32>
    %cst_206 = arith.constant dense<0.000000e+00> : vector<8x128xf32>
    %222 = tpu.matmul %220, %221, %cst_206 {dimension_numbers = #tpu.dot_dimension_numbers<[1], [0], [0], [1], [0, 0, 1, 1], [], []>} : vector<8x128xf32>, vector<128x128xf32>, vector<8x128xf32> -> vector<8x128xf32>
    %c0_207 = arith.constant 0 : index
    %c0_208 = arith.constant 0 : index
    %223 = vector.load %arg11[%c0_207, %c0_208] : memref<1x128xf32, #tpu.memory_space<vmem>>, vector<1x128xf32>
    %224 = vector.broadcast %223 : vector<1x128xf32> to vector<8x128xf32>
    %225 = arith.addf %222, %224 : vector<8x128xf32>
    %226 = arith.addf %225, %79 : vector<8x128xf32>
    %cst_209 = arith.constant dense<0.000000e+00> : vector<8xf32>
    %227 = vector.multi_reduction <add>, %226, %cst_209 [1] : vector<8x128xf32> to vector<8xf32>
    %228 = vector.shape_cast %227 : vector<8xf32> to vector<8x1xf32>
    %cst_210 = arith.constant 1.280000e+02 : f32
    %229 = vector.broadcast %cst_210 : f32 to vector<8x1xf32>
    %230 = arith.divf %228, %229 : vector<8x1xf32>
    %231 = vector.broadcast %230 : vector<8x1xf32> to vector<8x128xf32>
    %232 = arith.subf %226, %231 : vector<8x128xf32>
    %233 = arith.mulf %232, %232 : vector<8x128xf32>
    %cst_211 = arith.constant dense<0.000000e+00> : vector<8xf32>
    %234 = vector.multi_reduction <add>, %233, %cst_211 [1] : vector<8x128xf32> to vector<8xf32>
    %235 = vector.shape_cast %234 : vector<8xf32> to vector<8x1xf32>
    %cst_212 = arith.constant 1.280000e+02 : f32
    %236 = vector.broadcast %cst_212 : f32 to vector<8x1xf32>
    %237 = arith.divf %235, %236 : vector<8x1xf32>
    %cst_213 = arith.constant 9.99999974E-6 : f32
    %238 = vector.broadcast %cst_213 : f32 to vector<8x1xf32>
    %239 = arith.addf %237, %238 : vector<8x1xf32>
    %240 = math.rsqrt %239 : vector<8x1xf32>
    %241 = vector.broadcast %240 : vector<8x1xf32> to vector<8x128xf32>
    %242 = arith.mulf %232, %241 : vector<8x128xf32>
    %c0_214 = arith.constant 0 : index
    %c0_215 = arith.constant 0 : index
    %243 = vector.load %arg12[%c0_214, %c0_215] : memref<1x128xf32, #tpu.memory_space<vmem>>, vector<1x128xf32>
    %244 = vector.broadcast %243 : vector<1x128xf32> to vector<8x128xf32>
    %245 = arith.mulf %242, %244 : vector<8x128xf32>
    %c0_216 = arith.constant 0 : index
    %c0_217 = arith.constant 0 : index
    %246 = vector.load %arg13[%c0_216, %c0_217] : memref<1x128xf32, #tpu.memory_space<vmem>>, vector<1x128xf32>
    %247 = vector.broadcast %246 : vector<1x128xf32> to vector<8x128xf32>
    %248 = arith.addf %245, %247 : vector<8x128xf32>
    %249 = vector.shape_cast %248 : vector<8x128xf32> to vector<2x4x128xf32>
    %cst_218 = arith.constant dense<0.000000e+00> : vector<2x128xf32>
    %250 = vector.multi_reduction <add>, %249, %cst_218 [1] : vector<2x4x128xf32> to vector<2x128xf32>
    %cst_219 = arith.constant 4.000000e+00 : f32
    %251 = vector.broadcast %cst_219 : f32 to vector<2x128xf32>
    %252 = arith.divf %250, %251 : vector<2x128xf32>
    %c0_220 = arith.constant 0 : index
    %c0_221 = arith.constant 0 : index
    %253 = vector.load %arg14[%c0_220, %c0_221] : memref<128x256xf32, #tpu.memory_space<vmem>>, vector<128x256xf32>
    %cst_222 = arith.constant dense<0.000000e+00> : vector<2x256xf32>
    %254 = tpu.matmul %252, %253, %cst_222 {dimension_numbers = #tpu.dot_dimension_numbers<[1], [0], [0], [1], [0, 0, 1, 1], [], []>} : vector<2x128xf32>, vector<128x256xf32>, vector<2x256xf32> -> vector<2x256xf32>
    %c0_223 = arith.constant 0 : index
    %c0_224 = arith.constant 0 : index
    %255 = vector.load %arg15[%c0_223, %c0_224] : memref<1x256xf32, #tpu.memory_space<vmem>>, vector<1x256xf32>
    %256 = vector.broadcast %255 : vector<1x256xf32> to vector<2x256xf32>
    %257 = arith.addf %254, %256 : vector<2x256xf32>
    %cst_225 = arith.constant 0.000000e+00 : f32
    %258 = vector.broadcast %cst_225 : f32 to vector<2x256xf32>
    %259 = arith.maximumf %257, %258 : vector<2x256xf32>
    %c0_226 = arith.constant 0 : index
    %c0_227 = arith.constant 0 : index
    %260 = vector.load %arg16[%c0_226, %c0_227] : memref<256x50xf32, #tpu.memory_space<vmem>>, vector<256x50xf32>
    %cst_228 = arith.constant dense<0.000000e+00> : vector<2x50xf32>
    %261 = tpu.matmul %259, %260, %cst_228 {dimension_numbers = #tpu.dot_dimension_numbers<[1], [0], [0], [1], [0, 0, 1, 1], [], []>} : vector<2x256xf32>, vector<256x50xf32>, vector<2x50xf32> -> vector<2x50xf32>
    %c0_229 = arith.constant 0 : index
    %c0_230 = arith.constant 0 : index
    %262 = vector.load %arg17[%c0_229, %c0_230] : memref<1x50xf32, #tpu.memory_space<vmem>>, vector<1x50xf32>
    %263 = vector.broadcast %262 : vector<1x50xf32> to vector<2x50xf32>
    %264 = arith.addf %261, %263 : vector<2x50xf32>
    %265 = vector.shape_cast %264 : vector<2x50xf32> to vector<2x1x50xf32>
    %c0_231 = arith.constant 0 : index
    %c0_232 = arith.constant 0 : index
    %c0_233 = arith.constant 0 : index
    %266 = vector.load %arg18[%c0_231, %c0_232, %c0_233] : memref<2x1x50xf32, #tpu.memory_space<vmem>>, vector<2x1x50xf32>
    tpu.vector_store %arg18[%c0_231, %c0_232, %c0_233], %265 {strides = array<i32>} : memref<2x1x50xf32, #tpu.memory_space<vmem>>, vector<2x1x50xf32>,
    return
  }
  func.func @transform_0(%arg0: i32) -> (i32, i32, i32, i32) {
    %c0_i32 = arith.constant 0 : i32
    %c0_i32_0 = arith.constant 0 : i32
    %c0_i32_1 = arith.constant 0 : i32
    %c0_i32_2 = arith.constant 0 : i32
    return %arg0, %c0_i32, %c0_i32_0, %c0_i32_1 : i32, i32, i32, i32
  }
  func.func @transform_1(%arg0: i32) -> (i32, i32) {
    %c0_i32 = arith.constant 0 : i32
    %c0_i32_0 = arith.constant 0 : i32
    %c0_i32_1 = arith.constant 0 : i32
    return %c0_i32, %c0_i32_0 : i32, i32
  }
  func.func @transform_2(%arg0: i32) -> (i32, i32) {
    %c0_i32 = arith.constant 0 : i32
    %c0_i32_0 = arith.constant 0 : i32
    %c0_i32_1 = arith.constant 0 : i32
    return %c0_i32, %c0_i32_0 : i32, i32
  }
  func.func @transform_3(%arg0: i32) -> (i32, i32) {
    %c0_i32 = arith.constant 0 : i32
    %c0_i32_0 = arith.constant 0 : i32
    %c0_i32_1 = arith.constant 0 : i32
    return %c0_i32, %c0_i32_0 : i32, i32
  }
  func.func @transform_4(%arg0: i32) -> (i32, i32) {
    %c0_i32 = arith.constant 0 : i32
    %c0_i32_0 = arith.constant 0 : i32
    %c0_i32_1 = arith.constant 0 : i32
    return %c0_i32, %c0_i32_0 : i32, i32
  }
  func.func @transform_5(%arg0: i32) -> (i32, i32) {
    %c0_i32 = arith.constant 0 : i32
    %c0_i32_0 = arith.constant 0 : i32
    %c0_i32_1 = arith.constant 0 : i32
    return %c0_i32, %c0_i32_0 : i32, i32
  }
  func.func @transform_6(%arg0: i32) -> (i32, i32) {
    %c0_i32 = arith.constant 0 : i32
    %c0_i32_0 = arith.constant 0 : i32
    %c0_i32_1 = arith.constant 0 : i32
    return %c0_i32, %c0_i32_0 : i32, i32
  }
  func.func @transform_7(%arg0: i32) -> (i32, i32) {
    %c0_i32 = arith.constant 0 : i32
    %c0_i32_0 = arith.constant 0 : i32
    %c0_i32_1 = arith.constant 0 : i32
    return %c0_i32, %c0_i32_0 : i32, i32
  }
  func.func @transform_8(%arg0: i32) -> (i32, i32) {
    %c0_i32 = arith.constant 0 : i32
    %c0_i32_0 = arith.constant 0 : i32
    %c0_i32_1 = arith.constant 0 : i32
    return %c0_i32, %c0_i32_0 : i32, i32
  }
  func.func @transform_9(%arg0: i32) -> (i32, i32) {
    %c0_i32 = arith.constant 0 : i32
    %c0_i32_0 = arith.constant 0 : i32
    %c0_i32_1 = arith.constant 0 : i32
    return %c0_i32, %c0_i32_0 : i32, i32
  }
  func.func @transform_10(%arg0: i32) -> (i32, i32) {
    %c0_i32 = arith.constant 0 : i32
    %c0_i32_0 = arith.constant 0 : i32
    %c0_i32_1 = arith.constant 0 : i32
    return %c0_i32, %c0_i32_0 : i32, i32
  }
  func.func @transform_11(%arg0: i32) -> (i32, i32) {
    %c0_i32 = arith.constant 0 : i32
    %c0_i32_0 = arith.constant 0 : i32
    %c0_i32_1 = arith.constant 0 : i32
    return %c0_i32, %c0_i32_0 : i32, i32
  }
  func.func @transform_12(%arg0: i32) -> (i32, i32) {
    %c0_i32 = arith.constant 0 : i32
    %c0_i32_0 = arith.constant 0 : i32
    %c0_i32_1 = arith.constant 0 : i32
    return %c0_i32, %c0_i32_0 : i32, i32
  }
  func.func @transform_13(%arg0: i32) -> (i32, i32) {
    %c0_i32 = arith.constant 0 : i32
    %c0_i32_0 = arith.constant 0 : i32
    %c0_i32_1 = arith.constant 0 : i32
    return %c0_i32, %c0_i32_0 : i32, i32
  }
  func.func @transform_14(%arg0: i32) -> (i32, i32) {
    %c0_i32 = arith.constant 0 : i32
    %c0_i32_0 = arith.constant 0 : i32
    %c0_i32_1 = arith.constant 0 : i32
    return %c0_i32, %c0_i32_0 : i32, i32
  }
  func.func @transform_15(%arg0: i32) -> (i32, i32) {
    %c0_i32 = arith.constant 0 : i32
    %c0_i32_0 = arith.constant 0 : i32
    %c0_i32_1 = arith.constant 0 : i32
    return %c0_i32, %c0_i32_0 : i32, i32
  }
  func.func @transform_16(%arg0: i32) -> (i32, i32) {
    %c0_i32 = arith.constant 0 : i32
    %c0_i32_0 = arith.constant 0 : i32
    %c0_i32_1 = arith.constant 0 : i32
    return %c0_i32, %c0_i32_0 : i32, i32
  }
  func.func @transform_17(%arg0: i32) -> (i32, i32, i32) {
    %c0_i32 = arith.constant 0 : i32
    %c0_i32_0 = arith.constant 0 : i32
    %c0_i32_1 = arith.constant 0 : i32
    return %arg0, %c0_i32, %c0_i32_0 : i32, i32, i32
  }
}

</mosaic_0001>

<llo_original>
// kernel: attention_cnn_forward.1
$region0: #{attention_cnn_forward.1}
  #allocation0 [shape = 'u32[]', space=smem, size = 0x4, offset = 0x4, fixed_abs, tag = 'smem constant byte address 0x4 - core index']
  #allocation1 [shape = 'u32[144,128]{1,0:T(1,128)}', space=vmem, size = 0x12000, scoped, tag = 'internal scratch']
  #allocation2 [shape = 'f32[2,18,18,1]{3,2,1,0:T(8,128)}', space=vmem, size = 0x6c000, scoped, tag = 'scratch operand']
  #allocation3 [shape = 'f32[2,10,10,32]{3,2,1,0:T(8,128)}', space=vmem, size = 0x28000, scoped, tag = 'scratch operand']
  #allocation4 [shape = 'f32[2,6,6,64]{3,2,1,0:T(8,128)}', space=vmem, size = 0xc000, scoped, tag = 'scratch operand']
  %s0 = inlined_call_operand.vmem [shape: f32[2,16,16,1], index: 0, kind: input, shape index: {}]
  %s1 = inlined_call_operand.hbm [shape: f32[9,32], index: 1, kind: input, shape index: {}]
  %s2 = inlined_call_operand.hbm [shape: f32[1,32], index: 2, kind: input, shape index: {}]
  %s3 = inlined_call_operand.vmem [shape: f32[288,64], index: 3, kind: input, shape index: {}]
  %s4 = inlined_call_operand.vmem [shape: f32[1,64], index: 4, kind: input, shape index: {}]
  %s5 = inlined_call_operand.vmem [shape: f32[576,128], index: 5, kind: input, shape index: {}]
  %s6 = inlined_call_operand.vmem [shape: f32[1,128], index: 6, kind: input, shape index: {}]
  %s7 = inlined_call_operand.vmem [shape: f32[128,384], index: 7, kind: input, shape index: {}]
  %s8 = inlined_call_operand.hbm [shape: f32[1,384], index: 8, kind: input, shape index: {}]
  %s9 = inlined_call_operand.hbm [shape: f32[128,128], index: 9, kind: input, shape index: {}]
  %s10 = inlined_call_operand.hbm [shape: f32[1,128], index: 10, kind: input, shape index: {}]
  %s11 = inlined_call_operand.vmem [shape: f32[1,128], index: 11, kind: input, shape index: {}]
  %s12 = inlined_call_operand.vmem [shape: f32[1,128], index: 12, kind: input, shape index: {}]
  %s13 = inlined_call_operand.vmem [shape: f32[128,256], index: 13, kind: input, shape index: {}]
  %s14 = inlined_call_operand.vmem [shape: f32[1,256], index: 14, kind: input, shape index: {}]
  %s15 = inlined_call_operand.vmem [shape: f32[256,50], index: 15, kind: input, shape index: {}]
  %s16 = inlined_call_operand.vmem [shape: f32[1,50], index: 16, kind: input, shape index: {}]
  %s17 = inlined_call_operand.hbm [shape: f32[2,1,50], index: 17, kind: output, shape index: {}]
  %s18 = sld [smem:[#allocation0]]
  $region98: #{attention_cnn_forward.1} parent=0
    _
  %s20 = ssub.s32 1, %s18
  %s21 = scalar_select 0, %s20, %s18
  $region1: #{attention_cnn_forward.1} parent=0
    #allocation5 [shape = 'u8[8192]{0}', space=vmem, size = 0x2000, scoped, tag = 'input window, operand 1, single buffered']
    #allocation6 [shape = 's32[1]{0}', space=sflag, size = 0x4, scoped, tag = 'scoped memory for attention_cnn_forward.1']
    #allocation7 [shape = 's32[1]{0}', space=sflag, size = 0x4, scoped, tag = 'scoped memory for attention_cnn_forward.1']
    #allocation8 [shape = 'u8[512]{0}', space=vmem, size = 0x400, scoped, tag = 'input window, operand 2, single buffered']
    #allocation9 [shape = 's32[1]{0}', space=sflag, size = 0x4, scoped, tag = 'scoped memory for attention_cnn_forward.1']
    #allocation10 [shape = 'u8[1536]{0}', space=vmem, size = 0x800, scoped, tag = 'input window, operand 8, single buffered']
    #allocation11 [shape = 'u8[65536]{0}', space=vmem, size = 0x10000, scoped, tag = 'input window, operand 9, single buffered']
    #allocation12 [shape = 's32[1]{0}', space=sflag, size = 0x4, scoped, tag = 'scoped memory for attention_cnn_forward.1']
    #allocation13 [shape = 'u8[512]{0}', space=vmem, size = 0x400, scoped, tag = 'input window, operand 10, single buffered']
    #allocation14 [shape = 'u8[1024]{0}', space=vmem, size = 0x400, scoped, tag = 'output window, operand 0, single buffered']
    %22 = vsyncpa [#allocation6], 0
    %23 = vsyncpa [#allocation9], 0
    %24 = vsyncpa [#allocation12], 0
    %25 = vsyncpa [#allocation7], 0
    // Predicated region
    $region2: #{attention_cnn_forward.1} parent=1 // pred_check
      _
    $region3: #{attention_cnn_forward.1} parent=1 // pred_check_branch
      %27 = sbr.rel (0) target = $region5
    $region4: #{attention_cnn_forward.1} parent=1 // pred_region
      _
    $region5: #{attention_cnn_forward.1} parent=1 // pred_fallthru
      _
    // Predicated region
    $region6: #{attention_cnn_forward.1} parent=1 // pred_check
      _
    $region7: #{attention_cnn_forward.1} parent=1 // pred_check_branch
      %29 = sbr.rel (0) target = $region9
    $region8: #{attention_cnn_forward.1} parent=1 // pred_region
      %s31 = ssub.s32 256, 256
      %32 = vsyncadd [#allocation6], %s31
      %s33 = sshll.u32 [#allocation5], 4
      %s34 = int_to_ptr.vmem [resolvable:$true] %s33
      %39 = dma.hbm_to_vmem [thread:$0]  %s1, 256, %s34, [#allocation6], 128, 128, 8
    $region9: #{attention_cnn_forward.1} parent=1 // pred_fallthru
      _
    // Predicated region
    $region10: #{attention_cnn_forward.1} parent=1 // pred_check
      _
    $region11: #{attention_cnn_forward.1} parent=1 // pred_check_branch
      %41 = sbr.rel (0) target = $region13
    $region12: #{attention_cnn_forward.1} parent=1 // pred_region
      %s43 = ssub.s32 16, 16
      %44 = vsyncadd [#allocation9], %s43
      %s46 = sshll.u32 [#allocation8], 4
      %s47 = int_to_ptr.vmem [resolvable:$true] %s46
      %49 = dma.hbm_to_vmem [thread:$0]  %s2, 16, %s47, [#allocation9]
    $region13: #{attention_cnn_forward.1} parent=1 // pred_fallthru
      _
    // Predicated region
    $region14: #{attention_cnn_forward.1} parent=1 // pred_check
      _
    $region15: #{attention_cnn_forward.1} parent=1 // pred_check_branch
      %51 = sbr.rel (0) target = $region17
    $region16: #{attention_cnn_forward.1} parent=1 // pred_region
      _
    $region17: #{attention_cnn_forward.1} parent=1 // pred_fallthru
      _
    // Predicated region
    $region18: #{attention_cnn_forward.1} parent=1 // pred_check
      _
    $region19: #{attention_cnn_forward.1} parent=1 // pred_check_branch
      %53 = sbr.rel (0) target = $region21
    $region20: #{attention_cnn_forward.1} parent=1 // pred_region
      _
    $region21: #{attention_cnn_forward.1} parent=1 // pred_fallthru
      _
    // Predicated region
    $region22: #{attention_cnn_forward.1} parent=1 // pred_check
      _
    $region23: #{attention_cnn_forward.1} parent=1 // pred_check_branch
      %55 = sbr.rel (0) target = $region25
    $region24: #{attention_cnn_forward.1} parent=1 // pred_region
      _
    $region25: #{attention_cnn_forward.1} parent=1 // pred_fallthru
      _
    // Predicated region
    $region26: #{attention_cnn_forward.1} parent=1 // pred_check
      _
    $region27: #{attention_cnn_forward.1} parent=1 // pred_check_branch
      %57 = sbr.rel (0) target = $region29
    $region28: #{attention_cnn_forward.1} parent=1 // pred_region
      _
    $region29: #{attention_cnn_forward.1} parent=1 // pred_fallthru
      _
    // Predicated region
    $region30: #{attention_cnn_forward.1} parent=1 // pred_check
      _
    $region31: #{attention_cnn_forward.1} parent=1 // pred_check_branch
      %59 = sbr.rel (0) target = $region33
    $region32: #{attention_cnn_forward.1} parent=1 // pred_region
      _
    $region33: #{attention_cnn_forward.1} parent=1 // pred_fallthru
      _
    // Predicated region
    $region34: #{attention_cnn_forward.1} parent=1 // pred_check
      _
    $region35: #{attention_cnn_forward.1} parent=1 // pred_check_branch
      %61 = sbr.rel (0) target = $region37
    $region36: #{attention_cnn_forward.1} parent=1 // pred_region
      %s63 = ssub.s32 48, 48
      %64 = vsyncadd [#allocation9], %s63
      %s66 = sshll.u32 [#allocation10], 4
      %s67 = int_to_ptr.vmem [resolvable:$true] %s66
      %69 = dma.hbm_to_vmem [thread:$0]  %s8, 48, %s67, [#allocation9]
    $region37: #{attention_cnn_forward.1} parent=1 // pred_fallthru
      _
    // Predicated region
    $region38: #{attention_cnn_forward.1} parent=1 // pred_check
      _
    $region39: #{attention_cnn_forward.1} parent=1 // pred_check_branch
      %71 = sbr.rel (0) target = $region41
    $region40: #{attention_cnn_forward.1} parent=1 // pred_region
      %s73 = ssub.s32 2048, 2048
      %74 = vsyncadd [#allocation12], %s73
      %s75 = sshll.u32 [#allocation11], 4
      %s76 = int_to_ptr.vmem [resolvable:$true] %s75
      %81 = dma.hbm_to_vmem [thread:$0]  %s9, 2048, %s76, [#allocation12], 128, 128, 8
    $region41: #{attention_cnn_forward.1} parent=1 // pred_fallthru
      _
    // Predicated region
    $region42: #{attention_cnn_forward.1} parent=1 // pred_check
      _
    $region43: #{attention_cnn_forward.1} parent=1 // pred_check_branch
      %83 = sbr.rel (0) target = $region45
    $region44: #{attention_cnn_forward.1} parent=1 // pred_region
      %s85 = ssub.s32 16, 16
      %86 = vsyncadd [#allocation12], %s85
      %s88 = sshll.u32 [#allocation13], 4
      %s89 = int_to_ptr.vmem [resolvable:$true] %s88
      %91 = dma.hbm_to_vmem [thread:$0]  %s10, 16, %s89, [#allocation12]
    $region45: #{attention_cnn_forward.1} parent=1 // pred_fallthru
      _
    // Predicated region
    $region46: #{attention_cnn_forward.1} parent=1 // pred_check
      _
    $region47: #{attention_cnn_forward.1} parent=1 // pred_check_branch
      %93 = sbr.rel (0) target = $region49
    $region48: #{attention_cnn_forward.1} parent=1 // pred_region
      _
    $region49: #{attention_cnn_forward.1} parent=1 // pred_fallthru
      _
    // Predicated region
    $region50: #{attention_cnn_forward.1} parent=1 // pred_check
      _
    $region51: #{attention_cnn_forward.1} parent=1 // pred_check_branch
      %95 = sbr.rel (0) target = $region53
    $region52: #{attention_cnn_forward.1} parent=1 // pred_region
      _
    $region53: #{attention_cnn_forward.1} parent=1 // pred_fallthru
      _
    // Predicated region
    $region54: #{attention_cnn_forward.1} parent=1 // pred_check
      _
    $region55: #{attention_cnn_forward.1} parent=1 // pred_check_branch
      %97 = sbr.rel (0) target = $region57
    $region56: #{attention_cnn_forward.1} parent=1 // pred_region
      _
    $region57: #{attention_cnn_forward.1} parent=1 // pred_fallthru
      _
    // Predicated region
    $region58: #{attention_cnn_forward.1} parent=1 // pred_check
      _
    $region59: #{attention_cnn_forward.1} parent=1 // pred_check_branch
      %99 = sbr.rel (0) target = $region61
    $region60: #{attention_cnn_forward.1} parent=1 // pred_region
      _
    $region61: #{attention_cnn_forward.1} parent=1 // pred_fallthru
      _
    // Predicated region
    $region62: #{attention_cnn_forward.1} parent=1 // pred_check
      _
    $region63: #{attention_cnn_forward.1} parent=1 // pred_check_branch
      %101 = sbr.rel (0) target = $region65
    $region64: #{attention_cnn_forward.1} parent=1 // pred_region
      _
    $region65: #{attention_cnn_forward.1} parent=1 // pred_fallthru
      _
    // Predicated region
    $region66: #{attention_cnn_forward.1} parent=1 // pred_check
      _
    $region67: #{attention_cnn_forward.1} parent=1 // pred_check_branch
      %103 = sbr.rel (0) target = $region69
    $region68: #{attention_cnn_forward.1} parent=1 // pred_region
      _
    $region69: #{attention_cnn_forward.1} parent=1 // pred_fallthru
      _
    // Predicated region
    $region70: #{attention_cnn_forward.1} parent=1 // pred_check
      _
    $region71: #{attention_cnn_forward.1} parent=1 // pred_check_branch
      %105 = sbr.rel (0) target = $region73
    $region72: #{attention_cnn_forward.1} parent=1 // pred_region
      %106 = dma.done [#allocation6], 256
    $region73: #{attention_cnn_forward.1} parent=1 // pred_fallthru
      _
    // Predicated region
    $region74: #{attention_cnn_forward.1} parent=1 // pred_check
      _
    $region75: #{attention_cnn_forward.1} parent=1 // pred_check_branch
      %108 = sbr.rel (0) target = $region77
    $region76: #{attention_cnn_forward.1} parent=1 // pred_region
      %109 = dma.done [#allocation9], 16
    $region77: #{attention_cnn_forward.1} parent=1 // pred_fallthru
      _
    // Predicated region
    $region78: #{attention_cnn_forward.1} parent=1 // pred_check
      _
    $region79: #{attention_cnn_forward.1} parent=1 // pred_check_branch
      %111 = sbr.rel (0) target = $region81
    $region80: #{attention_cnn_forward.1} parent=1 // pred_region
      %112 = dma.done [#allocation9], 48
    $region81: #{attention_cnn_forward.1} parent=1 // pred_fallthru
      _
    // Predicated region
    $region82: #{attention_cnn_forward.1} parent=1 // pred_check
      _
    $region83: #{attention_cnn_forward.1} parent=1 // pred_check_branch
      %114 = sbr.rel (0) target = $region85
    $region84: #{attention_cnn_forward.1} parent=1 // pred_region
      %115 = dma.done [#allocation12], 2048
    $region85: #{attention_cnn_forward.1} parent=1 // pred_fallthru
      _
    // Predicated region
    $region86: #{attention_cnn_forward.1} parent=1 // pred_check
      _
    $region87: #{attention_cnn_forward.1} parent=1 // pred_check_branch
      %117 = sbr.rel (0) target = $region89
    $region88: #{attention_cnn_forward.1} parent=1 // pred_region
      %118 = dma.done [#allocation12], 16
    $region89: #{attention_cnn_forward.1} parent=1 // pred_fallthru
      _
    %v119 = vld [vmem:[%s0] sm:$0xff]
    %v120 = vld [vmem:[%s0 + $0x8] sm:$0xff]
    %v121 = vld [vmem:[%s0 + $0x10] sm:$0xff]
    %v122 = vld [vmem:[%s0 + $0x18] sm:$0xff]
    %v123 = vld [vmem:[%s0 + $0x20] sm:$0xff]
    %v124 = vld [vmem:[%s0 + $0x28] sm:$0xff]
    %v125 = vld [vmem:[%s0 + $0x30] sm:$0xff]
    %v126 = vld [vmem:[%s0 + $0x38] sm:$0xff]
    %v127 = vld [vmem:[%s0 + $0x40] sm:$0xff]
    %v128 = vld [vmem:[%s0 + $0x48] sm:$0xff]
    %v129 = vld [vmem:[%s0 + $0x50] sm:$0xff]
    %v130 = vld [vmem:[%s0 + $0x58] sm:$0xff]
    %v131 = vld [vmem:[%s0 + $0x60] sm:$0xff]
    %v132 = vld [vmem:[%s0 + $0x68] sm:$0xff]
    %v133 = vld [vmem:[%s0 + $0x70] sm:$0xff]
    %v134 = vld [vmem:[%s0 + $0x78] sm:$0xff]
    %v135 = vld [vmem:[%s0 + $0x80] sm:$0xff]
    %v136 = vld [vmem:[%s0 + $0x88] sm:$0xff]
    %v137 = vld [vmem:[%s0 + $0x90] sm:$0xff]
    %v138 = vld [vmem:[%s0 + $0x98] sm:$0xff]
    %v139 = vld [vmem:[%s0 + $0xa0] sm:$0xff]
    %v140 = vld [vmem:[%s0 + $0xa8] sm:$0xff]
    %v141 = vld [vmem:[%s0 + $0xb0] sm:$0xff]
    %v142 = vld [vmem:[%s0 + $0xb8] sm:$0xff]
    %v143 = vld [vmem:[%s0 + $0xc0] sm:$0xff]
    %v144 = vld [vmem:[%s0 + $0xc8] sm:$0xff]
    %v145 = vld [vmem:[%s0 + $0xd0] sm:$0xff]
    %v146 = vld [vmem:[%s0 + $0xd8] sm:$0xff]
    %v147 = vld [vmem:[%s0 + $0xe0] sm:$0xff]
    %v148 = vld [vmem:[%s0 + $0xe8] sm:$0xff]
    %v149 = vld [vmem:[%s0 + $0xf0] sm:$0xff]
    %v150 = vld [vmem:[%s0 + $0xf8] sm:$0xff]
    %v151 = vld [vmem:[%s0 + $0x100] sm:$0xff]
    %v152 = vld [vmem:[%s0 + $0x108] sm:$0xff]
    %v153 = vld [vmem:[%s0 + $0x110] sm:$0xff]
    %v154 = vld [vmem:[%s0 + $0x118] sm:$0xff]
    %v155 = vld [vmem:[%s0 + $0x120] sm:$0xff]
    %v156 = vld [vmem:[%s0 + $0x128] sm:$0xff]
    %v157 = vld [vmem:[%s0 + $0x130] sm:$0xff]
    %v158 = vld [vmem:[%s0 + $0x138] sm:$0xff]
    %v159 = vld [vmem:[%s0 + $0x140] sm:$0xff]
    %v160 = vld [vmem:[%s0 + $0x148] sm:$0xff]
    %v161 = vld [vmem:[%s0 + $0x150] sm:$0xff]
    %v162 = vld [vmem:[%s0 + $0x158] sm:$0xff]
    %v163 = vld [vmem:[%s0 + $0x160] sm:$0xff]
    %v164 = vld [vmem:[%s0 + $0x168] sm:$0xff]
    %v165 = vld [vmem:[%s0 + $0x170] sm:$0xff]
    %v166 = vld [vmem:[%s0 + $0x178] sm:$0xff]
    %v167 = vld [vmem:[%s0 + $0x180] sm:$0xff]
    %v168 = vld [vmem:[%s0 + $0x188] sm:$0xff]
    %v169 = vld [vmem:[%s0 + $0x190] sm:$0xff]
    %v170 = vld [vmem:[%s0 + $0x198] sm:$0xff]
    %v171 = vld [vmem:[%s0 + $0x1a0] sm:$0xff]
    %v172 = vld [vmem:[%s0 + $0x1a8] sm:$0xff]
    %v173 = vld [vmem:[%s0 + $0x1b0] sm:$0xff]
    %v174 = vld [vmem:[%s0 + $0x1b8] sm:$0xff]
    %v175 = vld [vmem:[%s0 + $0x1c0] sm:$0xff]
    %v176 = vld [vmem:[%s0 + $0x1c8] sm:$0xff]
    %v177 = vld [vmem:[%s0 + $0x1d0] sm:$0xff]
    %v178 = vld [vmem:[%s0 + $0x1d8] sm:$0xff]
    %v179 = vld [vmem:[%s0 + $0x1e0] sm:$0xff]
    %v180 = vld [vmem:[%s0 + $0x1e8] sm:$0xff]
    %v181 = vld [vmem:[%s0 + $0x1f0] sm:$0xff]
    %v182 = vld [vmem:[%s0 + $0x1f8] sm:$0xff]
    %vm183 = vcmask 7168
    %184 = vst.msk [vmem:[#allocation2] sm:$0xff] %vm183, 0.0
    %185 = vst.msk [vmem:[#allocation2 + $0x8] sm:$0xff] %vm183, 0.0
    %vm186 = vcmask 1024
    %187 = vst.msk [vmem:[#allocation2 + $0x10] sm:$0x3] %vm186, 0.0
    %188 = vst.msk [vmem:[#allocation2 + $0x18] sm:$0xff] %vm183, 0.0
    %189 = vst.msk [vmem:[#allocation2 + $0x20] sm:$0xff] %vm183, 0.0
    %190 = vst.msk [vmem:[#allocation2 + $0x28] sm:$0x3] %vm186, 0.0
    %191 = vst.msk [vmem:[#allocation2 + $0x30] sm:$0xff] %vm183, 0.0
    %192 = vst.msk [vmem:[#allocation2 + $0x38] sm:$0xff] %vm183, 0.0
    %193 = vst.msk [vmem:[#allocation2 + $0x40] sm:$0x3] %vm186, 0.0
    %194 = vst.msk [vmem:[#allocation2 + $0x48] sm:$0xff] %vm183, 0.0
    %195 = vst.msk [vmem:[#allocation2 + $0x50] sm:$0xff] %vm183, 0.0
    %196 = vst.msk [vmem:[#allocation2 + $0x58] sm:$0x3] %vm186, 0.0
    %197 = vst.msk [vmem:[#allocation2 + $0x60] sm:$0xff] %vm183, 0.0
    %198 = vst.msk [vmem:[#allocation2 + $0x68] sm:$0xff] %vm183, 0.0
    %199 = vst.msk [vmem:[#allocation2 + $0x70] sm:$0x3] %vm186, 0.0
    %200 = vst.msk [vmem:[#allocation2 + $0x78] sm:$0xff] %vm183, 0.0
    %201 = vst.msk [vmem:[#allocation2 + $0x80] sm:$0xff] %vm183, 0.0
    %202 = vst.msk [vmem:[#allocation2 + $0x88] sm:$0x3] %vm186, 0.0
    %203 = vst.msk [vmem:[#allocation2 + $0x90] sm:$0xff] %vm183, 0.0
    %204 = vst.msk [vmem:[#allocation2 + $0x98] sm:$0xff] %vm183, 0.0
    %205 = vst.msk [vmem:[#allocation2 + $0xa0] sm:$0x3] %vm186, 0.0
    %206 = vst.msk [vmem:[#allocation2 + $0xa8] sm:$0xff] %vm183, 0.0
    %207 = vst.msk [vmem:[#allocation2 + $0xb0] sm:$0xff] %vm183, 0.0
    %208 = vst.msk [vmem:[#allocation2 + $0xb8] sm:$0x3] %vm186, 0.0
    %209 = vst.msk [vmem:[#allocation2 + $0xc0] sm:$0xff] %vm183, 0.0
    %210 = vst.msk [vmem:[#allocation2 + $0xc8] sm:$0xff] %vm183, 0.0
    %211 = vst.msk [vmem:[#allocation2 + $0xd0] sm:$0x3] %vm186, 0.0
    %212 = vst.msk [vmem:[#allocation2 + $0xd8] sm:$0xff] %vm183, 0.0
    %213 = vst.msk [vmem:[#allocation2 + $0xe0] sm:$0xff] %vm183, 0.0
    %214 = vst.msk [vmem:[#allocation2 + $0xe8] sm:$0x3] %vm186, 0.0
    %215 = vst.msk [vmem:[#allocation2 + $0xf0] sm:$0xff] %vm183, 0.0
    %216 = vst.msk [vmem:[#allocation2 + $0xf8] sm:$0xff] %vm183, 0.0
    %217 = vst.msk [vmem:[#allocation2 + $0x100] sm:$0x3] %vm186, 0.0
    %218 = vst.msk [vmem:[#allocation2 + $0x108] sm:$0xff] %vm183, 0.0
    %219 = vst.msk [vmem:[#allocation2 + $0x110] sm:$0xff] %vm183, 0.0
    %220 = vst.msk [vmem:[#allocation2 + $0x118] sm:$0x3] %vm186, 0.0
    %221 = vst.msk [vmem:[#allocation2 + $0x120] sm:$0xff] %vm183, 0.0
    %222 = vst.msk [vmem:[#allocation2 + $0x128] sm:$0xff] %vm183, 0.0
    %223 = vst.msk [vmem:[#allocation2 + $0x130] sm:$0x3] %vm186, 0.0
    %224 = vst.msk [vmem:[#allocation2 + $0x138] sm:$0xff] %vm183, 0.0
    %225 = vst.msk [vmem:[#allocation2 + $0x140] sm:$0xff] %vm183, 0.0
    %226 = vst.msk [vmem:[#allocation2 + $0x148] sm:$0x3] %vm186, 0.0
    %227 = vst.msk [vmem:[#allocation2 + $0x150] sm:$0xff] %vm183, 0.0
    %228 = vst.msk [vmem:[#allocation2 + $0x158] sm:$0xff] %vm183, 0.0
    %229 = vst.msk [vmem:[#allocation2 + $0x160] sm:$0x3] %vm186, 0.0
    %230 = vst.msk [vmem:[#allocation2 + $0x168] sm:$0xff] %vm183, 0.0
    %231 = vst.msk [vmem:[#allocation2 + $0x170] sm:$0xff] %vm183, 0.0
    %232 = vst.msk [vmem:[#allocation2 + $0x178] sm:$0x3] %vm186, 0.0
    %233 = vst.msk [vmem:[#allocation2 + $0x180] sm:$0xff] %vm183, 0.0
    %234 = vst.msk [vmem:[#allocation2 + $0x188] sm:$0xff] %vm183, 0.0
    %235 = vst.msk [vmem:[#allocation2 + $0x190] sm:$0x3] %vm186, 0.0
    %236 = vst.msk [vmem:[#allocation2 + $0x198] sm:$0xff] %vm183, 0.0
    %237 = vst.msk [vmem:[#allocation2 + $0x1a0] sm:$0xff] %vm183, 0.0
    %238 = vst.msk [vmem:[#allocation2 + $0x1a8] sm:$0x3] %vm186, 0.0
    %239 = vst.msk [vmem:[#allocation2 + $0x1b0] sm:$0xff] %vm183, 0.0
    %240 = vst.msk [vmem:[#allocation2 + $0x1b8] sm:$0xff] %vm183, 0.0
    %241 = vst.msk [vmem:[#allocation2 + $0x1c0] sm:$0x3] %vm186, 0.0
    %242 = vst.msk [vmem:[#allocation2 + $0x1c8] sm:$0xff] %vm183, 0.0
    %243 = vst.msk [vmem:[#allocation2 + $0x1d0] sm:$0xff] %vm183, 0.0
    %244 = vst.msk [vmem:[#allocation2 + $0x1d8] sm:$0x3] %vm186, 0.0
    %245 = vst.msk [vmem:[#allocation2 + $0x1e0] sm:$0xff] %vm183, 0.0
    %246 = vst.msk [vmem:[#allocation2 + $0x1e8] sm:$0xff] %vm183, 0.0
    %247 = vst.msk [vmem:[#allocation2 + $0x1f0] sm:$0x3] %vm186, 0.0
    %248 = vst.msk [vmem:[#allocation2 + $0x1f8] sm:$0xff] %vm183, 0.0
    %249 = vst.msk [vmem:[#allocation2 + $0x200] sm:$0xff] %vm183, 0.0
    %250 = vst.msk [vmem:[#allocation2 + $0x208] sm:$0x3] %vm186, 0.0
    %251 = vst.msk [vmem:[#allocation2 + $0x210] sm:$0xff] %vm183, 0.0
    %252 = vst.msk [vmem:[#allocation2 + $0x218] sm:$0xff] %vm183, 0.0
    %253 = vst.msk [vmem:[#allocation2 + $0x220] sm:$0x3] %vm186, 0.0
    %254 = vst.msk [vmem:[#allocation2 + $0x228] sm:$0xff] %vm183, 0.0
    %255 = vst.msk [vmem:[#allocation2 + $0x230] sm:$0xff] %vm183, 0.0
    %256 = vst.msk [vmem:[#allocation2 + $0x238] sm:$0x3] %vm186, 0.0
    %257 = vst.msk [vmem:[#allocation2 + $0x240] sm:$0xff] %vm183, 0.0
    %258 = vst.msk [vmem:[#allocation2 + $0x248] sm:$0xff] %vm183, 0.0
    %259 = vst.msk [vmem:[#allocation2 + $0x250] sm:$0x3] %vm186, 0.0
    %260 = vst.msk [vmem:[#allocation2 + $0x258] sm:$0xff] %vm183, 0.0
    %261 = vst.msk [vmem:[#allocation2 + $0x260] sm:$0xff] %vm183, 0.0
    %262 = vst.msk [vmem:[#allocation2 + $0x268] sm:$0x3] %vm186, 0.0
    %263 = vst.msk [vmem:[#allocation2 + $0x270] sm:$0xff] %vm183, 0.0
    %264 = vst.msk [vmem:[#allocation2 + $0x278] sm:$0xff] %vm183, 0.0
    %265 = vst.msk [vmem:[#allocation2 + $0x280] sm:$0x3] %vm186, 0.0
    %266 = vst.msk [vmem:[#allocation2 + $0x288] sm:$0xff] %vm183, 0.0
    %267 = vst.msk [vmem:[#allocation2 + $0x290] sm:$0xff] %vm183, 0.0
    %268 = vst.msk [vmem:[#allocation2 + $0x298] sm:$0x3] %vm186, 0.0
    %269 = vst.msk [vmem:[#allocation2 + $0x2a0] sm:$0xff] %vm183, 0.0
    %270 = vst.msk [vmem:[#allocation2 + $0x2a8] sm:$0xff] %vm183, 0.0
    %271 = vst.msk [vmem:[#allocation2 + $0x2b0] sm:$0x3] %vm186, 0.0
    %272 = vst.msk [vmem:[#allocation2 + $0x2b8] sm:$0xff] %vm183, 0.0
    %273 = vst.msk [vmem:[#allocation2 + $0x2c0] sm:$0xff] %vm183, 0.0
    %274 = vst.msk [vmem:[#allocation2 + $0x2c8] sm:$0x3] %vm186, 0.0
    %275 = vst.msk [vmem:[#allocation2 + $0x2d0] sm:$0xff] %vm183, 0.0
    %276 = vst.msk [vmem:[#allocation2 + $0x2d8] sm:$0xff] %vm183, 0.0
    %277 = vst.msk [vmem:[#allocation2 + $0x2e0] sm:$0x3] %vm186, 0.0
    %278 = vst.msk [vmem:[#allocation2 + $0x2e8] sm:$0xff] %vm183, 0.0
    %279 = vst.msk [vmem:[#allocation2 + $0x2f0] sm:$0xff] %vm183, 0.0
    %280 = vst.msk [vmem:[#allocation2 + $0x2f8] sm:$0x3] %vm186, 0.0
    %281 = vst.msk [vmem:[#allocation2 + $0x300] sm:$0xff] %vm183, 0.0
    %282 = vst.msk [vmem:[#allocation2 + $0x308] sm:$0xff] %vm183, 0.0
    %283 = vst.msk [vmem:[#allocation2 + $0x310] sm:$0x3] %vm186, 0.0
    %284 = vst.msk [vmem:[#allocation2 + $0x318] sm:$0xff] %vm183, 0.0
    %285 = vst.msk [vmem:[#allocation2 + $0x320] sm:$0xff] %vm183, 0.0
    %286 = vst.msk [vmem:[#allocation2 + $0x328] sm:$0x3] %vm186, 0.0
    %287 = vst.msk [vmem:[#allocation2 + $0x330] sm:$0xff] %vm183, 0.0
    %288 = vst.msk [vmem:[#allocation2 + $0x338] sm:$0xff] %vm183, 0.0
    %289 = vst.msk [vmem:[#allocation2 + $0x340] sm:$0x3] %vm186, 0.0
    %290 = vst.msk [vmem:[#allocation2 + $0x348] sm:$0xff] %vm183, 0.0
    %291 = vst.msk [vmem:[#allocation2 + $0x350] sm:$0xff] %vm183, 0.0
    %292 = vst.msk [vmem:[#allocation2 + $0x358] sm:$0x3] %vm186, 0.0
    %s293 = scalar_lea.vmem [#allocation2], 24
    %294 = vst.msk [vmem:[%s293 + $0x1] sm:$0xff] %vm183, %v119
    %295 = vst.msk [vmem:[%s293 + $0x9] sm:$0xff] %vm183, %v120
    %296 = vst.msk [vmem:[%s293 + $0x19] sm:$0xff] %vm183, %v121
    %297 = vst.msk [vmem:[%s293 + $0x21] sm:$0xff] %vm183, %v122
    %298 = vst.msk [vmem:[%s293 + $0x31] sm:$0xff] %vm183, %v123
    %299 = vst.msk [vmem:[%s293 + $0x39] sm:$0xff] %vm183, %v124
    %300 = vst.msk [vmem:[%s293 + $0x49] sm:$0xff] %vm183, %v125
    %301 = vst.msk [vmem:[%s293 + $0x51] sm:$0xff] %vm183, %v126
    %302 = vst.msk [vmem:[%s293 + $0x61] sm:$0xff] %vm183, %v127
    %303 = vst.msk [vmem:[%s293 + $0x69] sm:$0xff] %vm183, %v128
    %304 = vst.msk [vmem:[%s293 + $0x79] sm:$0xff] %vm183, %v129
    %305 = vst.msk [vmem:[%s293 + $0x81] sm:$0xff] %vm183, %v130
    %306 = vst.msk [vmem:[%s293 + $0x91] sm:$0xff] %vm183, %v131
    %307 = vst.msk [vmem:[%s293 + $0x99] sm:$0xff] %vm183, %v132
    %308 = vst.msk [vmem:[%s293 + $0xa9] sm:$0xff] %vm183, %v133
    %309 = vst.msk [vmem:[%s293 + $0xb1] sm:$0xff] %vm183, %v134
    %310 = vst.msk [vmem:[%s293 + $0xc1] sm:$0xff] %vm183, %v135
    %311 = vst.msk [vmem:[%s293 + $0xc9] sm:$0xff] %vm183, %v136
    %312 = vst.msk [vmem:[%s293 + $0xd9] sm:$0xff] %vm183, %v137
    %313 = vst.msk [vmem:[%s293 + $0xe1] sm:$0xff] %vm183, %v138
    %314 = vst.msk [vmem:[%s293 + $0xf1] sm:$0xff] %vm183, %v139
    %315 = vst.msk [vmem:[%s293 + $0xf9] sm:$0xff] %vm183, %v140
    %316 = vst.msk [vmem:[%s293 + $0x109] sm:$0xff] %vm183, %v141
    %317 = vst.msk [vmem:[%s293 + $0x111] sm:$0xff] %vm183, %v142
    %318 = vst.msk [vmem:[%s293 + $0x121] sm:$0xff] %vm183, %v143
    %319 = vst.msk [vmem:[%s293 + $0x129] sm:$0xff] %vm183, %v144
    %320 = vst.msk [vmem:[%s293 + $0x139] sm:$0xff] %vm183, %v145
    %321 = vst.msk [vmem:[%s293 + $0x141] sm:$0xff] %vm183, %v146
    %322 = vst.msk [vmem:[%s293 + $0x151] sm:$0xff] %vm183, %v147
    %323 = vst.msk [vmem:[%s293 + $0x159] sm:$0xff] %vm183, %v148
    %324 = vst.msk [vmem:[%s293 + $0x169] sm:$0xff] %vm183, %v149
    %325 = vst.msk [vmem:[%s293 + $0x171] sm:$0xff] %vm183, %v150
    %326 = vst.msk [vmem:[%s293 + $0x1b1] sm:$0xff] %vm183, %v151
    %327 = vst.msk [vmem:[%s293 + $0x1b9] sm:$0xff] %vm183, %v152
    %328 = vst.msk [vmem:[%s293 + $0x1c9] sm:$0xff] %vm183, %v153
    %329 = vst.msk [vmem:[%s293 + $0x1d1] sm:$0xff] %vm183, %v154
    %330 = vst.msk [vmem:[%s293 + $0x1e1] sm:$0xff] %vm183, %v155
    %331 = vst.msk [vmem:[%s293 + $0x1e9] sm:$0xff] %vm183, %v156
    %332 = vst.msk [vmem:[%s293 + $0x1f9] sm:$0xff] %vm183, %v157
    %333 = vst.msk [vmem:[%s293 + $0x201] sm:$0xff] %vm183, %v158
    %334 = vst.msk [vmem:[%s293 + $0x211] sm:$0xff] %vm183, %v159
    %335 = vst.msk [vmem:[%s293 + $0x219] sm:$0xff] %vm183, %v160
    %336 = vst.msk [vmem:[%s293 + $0x229] sm:$0xff] %vm183, %v161
    %337 = vst.msk [vmem:[%s293 + $0x231] sm:$0xff] %vm183, %v162
    %338 = vst.msk [vmem:[%s293 + $0x241] sm:$0xff] %vm183, %v163
    %339 = vst.msk [vmem:[%s293 + $0x249] sm:$0xff] %vm183, %v164
    %340 = vst.msk [vmem:[%s293 + $0x259] sm:$0xff] %vm183, %v165
    %341 = vst.msk [vmem:[%s293 + $0x261] sm:$0xff] %vm183, %v166
    %342 = vst.msk [vmem:[%s293 + $0x271] sm:$0xff] %vm183, %v167
    %343 = vst.msk [vmem:[%s293 + $0x279] sm:$0xff] %vm183, %v168
    %344 = vst.msk [vmem:[%s293 + $0x289] sm:$0xff] %vm183, %v169
    %345 = vst.msk [vmem:[%s293 + $0x291] sm:$0xff] %vm183, %v170
    %346 = vst.msk [vmem:[%s293 + $0x2a1] sm:$0xff] %vm183, %v171
    %347 = vst.msk [vmem:[%s293 + $0x2a9] sm:$0xff] %vm183, %v172
    %348 = vst.msk [vmem:[%s293 + $0x2b9] sm:$0xff] %vm183, %v173
    %349 = vst.msk [vmem:[%s293 + $0x2c1] sm:$0xff] %vm183, %v174
    %350 = vst.msk [vmem:[%s293 + $0x2d1] sm:$0xff] %vm183, %v175
    %351 = vst.msk [vmem:[%s293 + $0x2d9] sm:$0xff] %vm183, %v176
    %352 = vst.msk [vmem:[%s293 + $0x2e9] sm:$0xff] %vm183, %v177
    %353 = vst.msk [vmem:[%s293 + $0x2f1] sm:$0xff] %vm183, %v178
    %354 = vst.msk [vmem:[%s293 + $0x301] sm:$0xff] %vm183, %v179
    %355 = vst.msk [vmem:[%s293 + $0x309] sm:$0xff] %vm183, %v180
    %356 = vst.msk [vmem:[%s293 + $0x319] sm:$0xff] %vm183, %v181
    %357 = vst.msk [vmem:[%s293 + $0x321] sm:$0xff] %vm183, %v182
    %v358 = vld [vmem:[#allocation2] sm:$0xff]
    %v359 = vld [vmem:[#allocation2 + $0x8] sm:$0xff]
    %v360 = vld [vmem:[#allocation2 + $0x18] sm:$0xff]
    %v361 = vld [vmem:[#allocation2 + $0x20] sm:$0xff]
    %v362 = vld [vmem:[#allocation2 + $0x30] sm:$0xff]
    %v363 = vld [vmem:[#allocation2 + $0x38] sm:$0xff]
    %v364 = vld [vmem:[#allocation2 + $0x48] sm:$0xff]
    %v365 = vld [vmem:[#allocation2 + $0x50] sm:$0xff]
    %v366 = vld [vmem:[#allocation2 + $0x60] sm:$0xff]
    %v367 = vld [vmem:[#allocation2 + $0x68] sm:$0xff]
    %v368 = vld [vmem:[#allocation2 + $0x78] sm:$0xff]
    %v369 = vld [vmem:[#allocation2 + $0x80] sm:$0xff]
    %v370 = vld [vmem:[#allocation2 + $0x90] sm:$0xff]
    %v371 = vld [vmem:[#allocation2 + $0x98] sm:$0xff]
    %v372 = vld [vmem:[#allocation2 + $0xa8] sm:$0xff]
    %v373 = vld [vmem:[#allocation2 + $0xb0] sm:$0xff]
    %v374 = vld [vmem:[#allocation2 + $0xc0] sm:$0xff]
    %v375 = vld [vmem:[#allocation2 + $0xc8] sm:$0xff]
    %v376 = vld [vmem:[#allocation2 + $0xd8] sm:$0xff]
    %v377 = vld [vmem:[#allocation2 + $0xe0] sm:$0xff]
    %v378 = vld [vmem:[#allocation2 + $0xf0] sm:$0xff]
    %v379 = vld [vmem:[#allocation2 + $0xf8] sm:$0xff]
    %v380 = vld [vmem:[#allocation2 + $0x108] sm:$0xff]
    %v381 = vld [vmem:[#allocation2 + $0x110] sm:$0xff]
    %v382 = vld [vmem:[#allocation2 + $0x120] sm:$0xff]
    %v383 = vld [vmem:[#allocation2 + $0x128] sm:$0xff]
    %v384 = vld [vmem:[#allocation2 + $0x138] sm:$0xff]
    %v385 = vld [vmem:[#allocation2 + $0x140] sm:$0xff]
    %v386 = vld [vmem:[#allocation2 + $0x150] sm:$0xff]
    %v387 = vld [vmem:[#allocation2 + $0x158] sm:$0xff]
    %v388 = vld [vmem:[#allocation2 + $0x168] sm:$0xff]
    %v389 = vld [vmem:[#allocation2 + $0x170] sm:$0xff]
    %v390 = vld [vmem:[#allocation2 + $0x1b0] sm:$0xff]
    %v391 = vld [vmem:[#allocation2 + $0x1b8] sm:$0xff]
    %v392 = vld [vmem:[#allocation2 + $0x1c8] sm:$0xff]
    %v393 = vld [vmem:[#allocation2 + $0x1d0] sm:$0xff]
    %v394 = vld [vmem:[#allocation2 + $0x1e0] sm:$0xff]
    %v395 = vld [vmem:[#allocation2 + $0x1e8] sm:$0xff]
    %v396 = vld [vmem:[#allocation2 + $0x1f8] sm:$0xff]
    %v397 = vld [vmem:[#allocation2 + $0x200] sm:$0xff]
    %v398 = vld [vmem:[#allocation2 + $0x210] sm:$0xff]
    %v399 = vld [vmem:[#allocation2 + $0x218] sm:$0xff]
    %v400 = vld [vmem:[#allocation2 + $0x228] sm:$0xff]
    %v401 = vld [vmem:[#allocation2 + $0x230] sm:$0xff]
    %v402 = vld [vmem:[#allocation2 + $0x240] sm:$0xff]
    %v403 = vld [vmem:[#allocation2 + $0x248] sm:$0xff]
    %v404 = vld [vmem:[#allocation2 + $0x258] sm:$0xff]
    %v405 = vld [vmem:[#allocation2 + $0x260] sm:$0xff]
    %v406 = vld [vmem:[#allocation2 + $0x270] sm:$0xff]
    %v407 = vld [vmem:[#allocation2 + $0x278] sm:$0xff]
    %v408 = vld [vmem:[#allocation2 + $0x288] sm:$0xff]
    %v409 = vld [vmem:[#allocation2 + $0x290] sm:$0xff]
    %v410 = vld [vmem:[#allocation2 + $0x2a0] sm:$0xff]
    %v411 = vld [vmem:[#allocation2 + $0x2a8] sm:$0xff]
    %v412 = vld [vmem:[#allocation2 + $0x2b8] sm:$0xff]
    %v413 = vld [vmem:[#allocation2 + $0x2c0] sm:$0xff]
    %v414 = vld [vmem:[#allocation2 + $0x2d0] sm:$0xff]
    %v415 = vld [vmem:[#allocation2 + $0x2d8] sm:$0xff]
    %v416 = vld [vmem:[#allocation2 + $0x2e8] sm:$0xff]
    %v417 = vld [vmem:[#allocation2 + $0x2f0] sm:$0xff]
    %v418 = vld [vmem:[#allocation2 + $0x300] sm:$0xff]
    %v419 = vld [vmem:[#allocation2 + $0x308] sm:$0xff]
    %v420 = vld [vmem:[#allocation2 + $0x318] sm:$0xff]
    %v421 = vld [vmem:[#allocation2 + $0x320] sm:$0xff]
    %v422 = vld [vmem:[#allocation2 + $0x1] sm:$0xff]
    %v423 = vld [vmem:[#allocation2 + $0x9] sm:$0xff]
    %v424 = vld [vmem:[#allocation2 + $0x19] sm:$0xff]
    %v425 = vld [vmem:[#allocation2 + $0x21] sm:$0xff]
    %v426 = vld [vmem:[#allocation2 + $0x31] sm:$0xff]
    %v427 = vld [vmem:[#allocation2 + $0x39] sm:$0xff]
    %v428 = vld [vmem:[#allocation2 + $0x49] sm:$0xff]
    %v429 = vld [vmem:[#allocation2 + $0x51] sm:$0xff]
    %v430 = vld [vmem:[#allocation2 + $0x61] sm:$0xff]
    %v431 = vld [vmem:[#allocation2 + $0x69] sm:$0xff]
    %v432 = vld [vmem:[#allocation2 + $0x79] sm:$0xff]
    %v433 = vld [vmem:[#allocation2 + $0x81] sm:$0xff]
    %v434 = vld [vmem:[#allocation2 + $0x91] sm:$0xff]
    %v435 = vld [vmem:[#allocation2 + $0x99] sm:$0xff]
    %v436 = vld [vmem:[#allocation2 + $0xa9] sm:$0xff]
    %v437 = vld [vmem:[#allocation2 + $0xb1] sm:$0xff]
    %v438 = vld [vmem:[#allocation2 + $0xc1] sm:$0xff]
    %v439 = vld [vmem:[#allocation2 + $0xc9] sm:$0xff]
    %v440 = vld [vmem:[#allocation2 + $0xd9] sm:$0xff]
    %v441 = vld [vmem:[#allocation2 + $0xe1] sm:$0xff]
    %v442 = vld [vmem:[#allocation2 + $0xf1] sm:$0xff]
    %v443 = vld [vmem:[#allocation2 + $0xf9] sm:$0xff]
    %v444 = vld [vmem:[#allocation2 + $0x109] sm:$0xff]
    %v445 = vld [vmem:[#allocation2 + $0x111] sm:$0xff]
    %v446 = vld [vmem:[#allocation2 + $0x121] sm:$0xff]
    %v447 = vld [vmem:[#allocation2 + $0x129] sm:$0xff]
    %v448 = vld [vmem:[#allocation2 + $0x139] sm:$0xff]
    %v449 = vld [vmem:[#allocation2 + $0x141] sm:$0xff]
    %v450 = vld [vmem:[#allocation2 + $0x151] sm:$0xff]
    %v451 = vld [vmem:[#allocation2 + $0x159] sm:$0xff]
    %v452 = vld [vmem:[#allocation2 + $0x169] sm:$0xff]
    %v453 = vld [vmem:[#allocation2 + $0x171] sm:$0xff]
    %v454 = vld [vmem:[#allocation2 + $0x1b1] sm:$0xff]
    %v455 = vld [vmem:[#allocation2 + $0x1b9] sm:$0xff]
    %v456 = vld [vmem:[#allocation2 + $0x1c9] sm:$0xff]
    %v457 = vld [vmem:[#allocation2 + $0x1d1] sm:$0xff]
    %v458 = vld [vmem:[#allocation2 + $0x1e1] sm:$0xff]
    %v459 = vld [vmem:[#allocation2 + $0x1e9] sm:$0xff]
    %v460 = vld [vmem:[#allocation2 + $0x1f9] sm:$0xff]
    %v461 = vld [vmem:[#allocation2 + $0x201] sm:$0xff]
    %v462 = vld [vmem:[#allocation2 + $0x211] sm:$0xff]
    %v463 = vld [vmem:[#allocation2 + $0x219] sm:$0xff]
    %v464 = vld [vmem:[#allocation2 + $0x229] sm:$0xff]
    %v465 = vld [vmem:[#allocation2 + $0x231] sm:$0xff]
    %v466 = vld [vmem:[#allocation2 + $0x241] sm:$0xff]
    %v467 = vld [vmem:[#allocation2 + $0x249] sm:$0xff]
    %v468 = vld [vmem:[#allocation2 + $0x259] sm:$0xff]
    %v469 = vld [vmem:[#allocation2 + $0x261] sm:$0xff]
    %v470 = vld [vmem:[#allocation2 + $0x271] sm:$0xff]
    %v471 = vld [vmem:[#allocation2 + $0x279] sm:$0xff]
    %v472 = vld [vmem:[#allocation2 + $0x289] sm:$0xff]
    %v473 = vld [vmem:[#allocation2 + $0x291] sm:$0xff]
    %v474 = vld [vmem:[#allocation2 + $0x2a1] sm:$0xff]
    %v475 = vld [vmem:[#allocation2 + $0x2a9] sm:$0xff]
    %v476 = vld [vmem:[#allocation2 + $0x2b9] sm:$0xff]
    %v477 = vld [vmem:[#allocation2 + $0x2c1] sm:$0xff]
    %v478 = vld [vmem:[#allocation2 + $0x2d1] sm:$0xff]
    %v479 = vld [vmem:[#allocation2 + $0x2d9] sm:$0xff]
    %v480 = vld [vmem:[#allocation2 + $0x2e9] sm:$0xff]
    %v481 = vld [vmem:[#allocation2 + $0x2f1] sm:$0xff]
    %v482 = vld [vmem:[#allocation2 + $0x301] sm:$0xff]
    %v483 = vld [vmem:[#allocation2 + $0x309] sm:$0xff]
    %v484 = vld [vmem:[#allocation2 + $0x319] sm:$0xff]
    %v485 = vld [vmem:[#allocation2 + $0x321] sm:$0xff]
    %v486 = vld [vmem:[#allocation2 + $0x2] sm:$0xff]
    %v487 = vld [vmem:[#allocation2 + $0xa] sm:$0xff]
    %v488 = vld [vmem:[#allocation2 + $0x1a] sm:$0xff]
    %v489 = vld [vmem:[#allocation2 + $0x22] sm:$0xff]
    %v490 = vld [vmem:[#allocation2 + $0x32] sm:$0xff]
    %v491 = vld [vmem:[#allocation2 + $0x3a] sm:$0xff]
    %v492 = vld [vmem:[#allocation2 + $0x4a] sm:$0xff]
    %v493 = vld [vmem:[#allocation2 + $0x52] sm:$0xff]
    %v494 = vld [vmem:[#allocation2 + $0x62] sm:$0xff]
    %v495 = vld [vmem:[#allocation2 + $0x6a] sm:$0xff]
    %v496 = vld [vmem:[#allocation2 + $0x7a] sm:$0xff]
    %v497 = vld [vmem:[#allocation2 + $0x82] sm:$0xff]
    %v498 = vld [vmem:[#allocation2 + $0x92] sm:$0xff]
    %v499 = vld [vmem:[#allocation2 + $0x9a] sm:$0xff]
    %v500 = vld [vmem:[#allocation2 + $0xaa] sm:$0xff]
    %v501 = vld [vmem:[#allocation2 + $0xb2] sm:$0xff]
    %v502 = vld [vmem:[#allocation2 + $0xc2] sm:$0xff]
    %v503 = vld [vmem:[#allocation2 + $0xca] sm:$0xff]
    %v504 = vld [vmem:[#allocation2 + $0xda] sm:$0xff]
    %v505 = vld [vmem:[#allocation2 + $0xe2] sm:$0xff]
    %v506 = vld [vmem:[#allocation2 + $0xf2] sm:$0xff]
    %v507 = vld [vmem:[#allocation2 + $0xfa] sm:$0xff]
    %v508 = vld [vmem:[#allocation2 + $0x10a] sm:$0xff]
    %v509 = vld [vmem:[#allocation2 + $0x112] sm:$0xff]
    %v510 = vld [vmem:[#allocation2 + $0x122] sm:$0xff]
    %v511 = vld [vmem:[#allocation2 + $0x12a] sm:$0xff]
    %v512 = vld [vmem:[#allocation2 + $0x13a] sm:$0xff]
    %v513 = vld [vmem:[#allocation2 + $0x142] sm:$0xff]
    %v514 = vld [vmem:[#allocation2 + $0x152] sm:$0xff]
    %v515 = vld [vmem:[#allocation2 + $0x15a] sm:$0xff]
    %v516 = vld [vmem:[#allocation2 + $0x16a] sm:$0xff]
    %v517 = vld [vmem:[#allocation2 + $0x172] sm:$0xff]
    %v518 = vld [vmem:[#allocation2 + $0x1b2] sm:$0xff]
    %v519 = vld [vmem:[#allocation2 + $0x1ba] sm:$0xff]
    %v520 = vld [vmem:[#allocation2 + $0x1ca] sm:$0xff]
    %v521 = vld [vmem:[#allocation2 + $0x1d2] sm:$0xff]
    %v522 = vld [vmem:[#allocation2 + $0x1e2] sm:$0xff]
    %v523 = vld [vmem:[#allocation2 + $0x1ea] sm:$0xff]
    %v524 = vld [vmem:[#allocation2 + $0x1fa] sm:$0xff]
    %v525 = vld [vmem:[#allocation2 + $0x202] sm:$0xff]
    %v526 = vld [vmem:[#allocation2 + $0x212] sm:$0xff]
    %v527 = vld [vmem:[#allocation2 + $0x21a] sm:$0xff]
    %v528 = vld [vmem:[#allocation2 + $0x22a] sm:$0xff]
    %v529 = vld [vmem:[#allocation2 + $0x232] sm:$0xff]
    %v530 = vld [vmem:[#allocation2 + $0x242] sm:$0xff]
    %v531 = vld [vmem:[#allocation2 + $0x24a] sm:$0xff]
    %v532 = vld [vmem:[#allocation2 + $0x25a] sm:$0xff]
    %v533 = vld [vmem:[#allocation2 + $0x262] sm:$0xff]
    %v534 = vld [vmem:[#allocation2 + $0x272] sm:$0xff]
    %v535 = vld [vmem:[#allocation2 + $0x27a] sm:$0xff]
    %v536 = vld [vmem:[#allocation2 + $0x28a] sm:$0xff]
    %v537 = vld [vmem:[#allocation2 + $0x292] sm:$0xff]
    %v538 = vld [vmem:[#allocation2 + $0x2a2] sm:$0xff]
    %v539 = vld [vmem:[#allocation2 + $0x2aa] sm:$0xff]
    %v540 = vld [vmem:[#allocation2 + $0x2ba] sm:$0xff]
    %v541 = vld [vmem:[#allocation2 + $0x2c2] sm:$0xff]
    %v542 = vld [vmem:[#allocation2 + $0x2d2] sm:$0xff]
    %v543 = vld [vmem:[#allocation2 + $0x2da] sm:$0xff]
    %v544 = vld [vmem:[#allocation2 + $0x2ea] sm:$0xff]
    %v545 = vld [vmem:[#allocation2 + $0x2f2] sm:$0xff]
    %v546 = vld [vmem:[#allocation2 + $0x302] sm:$0xff]
    %v547 = vld [vmem:[#allocation2 + $0x30a] sm:$0xff]
    %v548 = vld [vmem:[#allocation2 + $0x31a] sm:$0xff]
    %v549 = vld [vmem:[#allocation2 + $0x322] sm:$0xff]
    %v550 = vld [vmem:[%s293] sm:$0xff]
    %v551 = vld [vmem:[%s293 + $0x8] sm:$0xff]
    %v552 = vld [vmem:[%s293 + $0x18] sm:$0xff]
    %v553 = vld [vmem:[%s293 + $0x20] sm:$0xff]
    %v554 = vld [vmem:[%s293 + $0x30] sm:$0xff]
    %v555 = vld [vmem:[%s293 + $0x38] sm:$0xff]
    %v556 = vld [vmem:[%s293 + $0x48] sm:$0xff]
    %v557 = vld [vmem:[%s293 + $0x50] sm:$0xff]
    %v558 = vld [vmem:[%s293 + $0x60] sm:$0xff]
    %v559 = vld [vmem:[%s293 + $0x68] sm:$0xff]
    %v560 = vld [vmem:[%s293 + $0x78] sm:$0xff]
    %v561 = vld [vmem:[%s293 + $0x80] sm:$0xff]
    %v562 = vld [vmem:[%s293 + $0x90] sm:$0xff]
    %v563 = vld [vmem:[%s293 + $0x98] sm:$0xff]
    %v564 = vld [vmem:[%s293 + $0xa8] sm:$0xff]
    %v565 = vld [vmem:[%s293 + $0xb0] sm:$0xff]
    %v566 = vld [vmem:[%s293 + $0xc0] sm:$0xff]
    %v567 = vld [vmem:[%s293 + $0xc8] sm:$0xff]
    %v568 = vld [vmem:[%s293 + $0xd8] sm:$0xff]
    %v569 = vld [vmem:[%s293 + $0xe0] sm:$0xff]
    %v570 = vld [vmem:[%s293 + $0xf0] sm:$0xff]
    %v571 = vld [vmem:[%s293 + $0xf8] sm:$0xff]
    %v572 = vld [vmem:[%s293 + $0x108] sm:$0xff]
    %v573 = vld [vmem:[%s293 + $0x110] sm:$0xff]
    %v574 = vld [vmem:[%s293 + $0x120] sm:$0xff]
    %v575 = vld [vmem:[%s293 + $0x128] sm:$0xff]
    %v576 = vld [vmem:[%s293 + $0x138] sm:$0xff]
    %v577 = vld [vmem:[%s293 + $0x140] sm:$0xff]
    %v578 = vld [vmem:[%s293 + $0x150] sm:$0xff]
    %v579 = vld [vmem:[%s293 + $0x158] sm:$0xff]
    %v580 = vld [vmem:[%s293 + $0x168] sm:$0xff]
    %v581 = vld [vmem:[%s293 + $0x170] sm:$0xff]
    %v582 = vld [vmem:[%s293 + $0x1b0] sm:$0xff]
    %v583 = vld [vmem:[%s293 + $0x1b8] sm:$0xff]
    %v584 = vld [vmem:[%s293 + $0x1c8] sm:$0xff]
    %v585 = vld [vmem:[%s293 + $0x1d0] sm:$0xff]
    %v586 = vld [vmem:[%s293 + $0x1e0] sm:$0xff]
    %v587 = vld [vmem:[%s293 + $0x1e8] sm:$0xff]
    %v588 = vld [vmem:[%s293 + $0x1f8] sm:$0xff]
    %v589 = vld [vmem:[%s293 + $0x200] sm:$0xff]
    %v590 = vld [vmem:[%s293 + $0x210] sm:$0xff]
    %v591 = vld [vmem:[%s293 + $0x218] sm:$0xff]
    %v592 = vld [vmem:[%s293 + $0x228] sm:$0xff]
    %v593 = vld [vmem:[%s293 + $0x230] sm:$0xff]
    %v594 = vld [vmem:[%s293 + $0x240] sm:$0xff]
    %v595 = vld [vmem:[%s293 + $0x248] sm:$0xff]
    %v596 = vld [vmem:[%s293 + $0x258] sm:$0xff]
    %v597 = vld [vmem:[%s293 + $0x260] sm:$0xff]
    %v598 = vld [vmem:[%s293 + $0x270] sm:$0xff]
    %v599 = vld [vmem:[%s293 + $0x278] sm:$0xff]
    %v600 = vld [vmem:[%s293 + $0x288] sm:$0xff]
    %v601 = vld [vmem:[%s293 + $0x290] sm:$0xff]
    %v602 = vld [vmem:[%s293 + $0x2a0] sm:$0xff]
    %v603 = vld [vmem:[%s293 + $0x2a8] sm:$0xff]
    %v604 = vld [vmem:[%s293 + $0x2b8] sm:$0xff]
    %v605 = vld [vmem:[%s293 + $0x2c0] sm:$0xff]
    %v606 = vld [vmem:[%s293 + $0x2d0] sm:$0xff]
    %v607 = vld [vmem:[%s293 + $0x2d8] sm:$0xff]
    %v608 = vld [vmem:[%s293 + $0x2e8] sm:$0xff]
    %v609 = vld [vmem:[%s293 + $0x2f0] sm:$0xff]
    %v610 = vld [vmem:[%s293 + $0x300] sm:$0xff]
    %v611 = vld [vmem:[%s293 + $0x308] sm:$0xff]
    %v612 = vld [vmem:[%s293 + $0x318] sm:$0xff]
    %v613 = vld [vmem:[%s293 + $0x320] sm:$0xff]
    %v614 = vld [vmem:[%s293 + $0x1] sm:$0xff]
    %v615 = vld [vmem:[%s293 + $0x9] sm:$0xff]
    %v616 = vld [vmem:[%s293 + $0x19] sm:$0xff]
    %v617 = vld [vmem:[%s293 + $0x21] sm:$0xff]
    %v618 = vld [vmem:[%s293 + $0x31] sm:$0xff]
    %v619 = vld [vmem:[%s293 + $0x39] sm:$0xff]
    %v620 = vld [vmem:[%s293 + $0x49] sm:$0xff]
    %v621 = vld [vmem:[%s293 + $0x51] sm:$0xff]
    %v622 = vld [vmem:[%s293 + $0x61] sm:$0xff]
    %v623 = vld [vmem:[%s293 + $0x69] sm:$0xff]
    %v624 = vld [vmem:[%s293 + $0x79] sm:$0xff]
    %v625 = vld [vmem:[%s293 + $0x81] sm:$0xff]
    %v626 = vld [vmem:[%s293 + $0x91] sm:$0xff]
    %v627 = vld [vmem:[%s293 + $0x99] sm:$0xff]
    %v628 = vld [vmem:[%s293 + $0xa9] sm:$0xff]
    %v629 = vld [vmem:[%s293 + $0xb1] sm:$0xff]
    %v630 = vld [vmem:[%s293 + $0xc1] sm:$0xff]
    %v631 = vld [vmem:[%s293 + $0xc9] sm:$0xff]
    %v632 = vld [vmem:[%s293 + $0xd9] sm:$0xff]
    %v633 = vld [vmem:[%s293 + $0xe1] sm:$0xff]
    %v634 = vld [vmem:[%s293 + $0xf1] sm:$0xff]
    %v635 = vld [vmem:[%s293 + $0xf9] sm:$0xff]
    %v636 = vld [vmem:[%s293 + $0x109] sm:$0xff]
    %v637 = vld [vmem:[%s293 + $0x111] sm:$0xff]
    %v638 = vld [vmem:[%s293 + $0x121] sm:$0xff]
    %v639 = vld [vmem:[%s293 + $0x129] sm:$0xff]
    %v640 = vld [vmem:[%s293 + $0x139] sm:$0xff]
    %v641 = vld [vmem:[%s293 + $0x141] sm:$0xff]
    %v642 = vld [vmem:[%s293 + $0x151] sm:$0xff]
    %v643 = vld [vmem:[%s293 + $0x159] sm:$0xff]
    %v644 = vld [vmem:[%s293 + $0x169] sm:$0xff]
    %v645 = vld [vmem:[%s293 + $0x171] sm:$0xff]
    %v646 = vld [vmem:[%s293 + $0x1b1] sm:$0xff]
    %v647 = vld [vmem:[%s293 + $0x1b9] sm:$0xff]
    %v648 = vld [vmem:[%s293 + $0x1c9] sm:$0xff]
    %v649 = vld [vmem:[%s293 + $0x1d1] sm:$0xff]
    %v650 = vld [vmem:[%s293 + $0x1e1] sm:$0xff]
    %v651 = vld [vmem:[%s293 + $0x1e9] sm:$0xff]
    %v652 = vld [vmem:[%s293 + $0x1f9] sm:$0xff]
    %v653 = vld [vmem:[%s293 + $0x201] sm:$0xff]
    %v654 = vld [vmem:[%s293 + $0x211] sm:$0xff]
    %v655 = vld [vmem:[%s293 + $0x219] sm:$0xff]
    %v656 = vld [vmem:[%s293 + $0x229] sm:$0xff]
    %v657 = vld [vmem:[%s293 + $0x231] sm:$0xff]
    %v658 = vld [vmem:[%s293 + $0x241] sm:$0xff]
    %v659 = vld [vmem:[%s293 + $0x249] sm:$0xff]
    %v660 = vld [vmem:[%s293 + $0x259] sm:$0xff]
    %v661 = vld [vmem:[%s293 + $0x261] sm:$0xff]
    %v662 = vld [vmem:[%s293 + $0x271] sm:$0xff]
    %v663 = vld [vmem:[%s293 + $0x279] sm:$0xff]
    %v664 = vld [vmem:[%s293 + $0x289] sm:$0xff]
    %v665 = vld [vmem:[%s293 + $0x291] sm:$0xff]
    %v666 = vld [vmem:[%s293 + $0x2a1] sm:$0xff]
    %v667 = vld [vmem:[%s293 + $0x2a9] sm:$0xff]
    %v668 = vld [vmem:[%s293 + $0x2b9] sm:$0xff]
    %v669 = vld [vmem:[%s293 + $0x2c1] sm:$0xff]
    %v670 = vld [vmem:[%s293 + $0x2d1] sm:$0xff]
    %v671 = vld [vmem:[%s293 + $0x2d9] sm:$0xff]
    %v672 = vld [vmem:[%s293 + $0x2e9] sm:$0xff]
    %v673 = vld [vmem:[%s293 + $0x2f1] sm:$0xff]
    %v674 = vld [vmem:[%s293 + $0x301] sm:$0xff]
    %v675 = vld [vmem:[%s293 + $0x309] sm:$0xff]
    %v676 = vld [vmem:[%s293 + $0x319] sm:$0xff]
    %v677 = vld [vmem:[%s293 + $0x321] sm:$0xff]
    %v678 = vld [vmem:[%s293 + $0x2] sm:$0xff]
    %v679 = vld [vmem:[%s293 + $0xa] sm:$0xff]
    %v680 = vld [vmem:[%s293 + $0x1a] sm:$0xff]
    %v681 = vld [vmem:[%s293 + $0x22] sm:$0xff]
    %v682 = vld [vmem:[%s293 + $0x32] sm:$0xff]
    %v683 = vld [vmem:[%s293 + $0x3a] sm:$0xff]
    %v684 = vld [vmem:[%s293 + $0x4a] sm:$0xff]
    %v685 = vld [vmem:[%s293 + $0x52] sm:$0xff]
    %v686 = vld [vmem:[%s293 + $0x62] sm:$0xff]
    %v687 = vld [vmem:[%s293 + $0x6a] sm:$0xff]
    %v688 = vld [vmem:[%s293 + $0x7a] sm:$0xff]
    %v689 = vld [vmem:[%s293 + $0x82] sm:$0xff]
    %v690 = vld [vmem:[%s293 + $0x92] sm:$0xff]
    %v691 = vld [vmem:[%s293 + $0x9a] sm:$0xff]
    %v692 = vld [vmem:[%s293 + $0xaa] sm:$0xff]
    %v693 = vld [vmem:[%s293 + $0xb2] sm:$0xff]
    %v694 = vld [vmem:[%s293 + $0xc2] sm:$0xff]
    %v695 = vld [vmem:[%s293 + $0xca] sm:$0xff]
    %v696 = vld [vmem:[%s293 + $0xda] sm:$0xff]
    %v697 = vld [vmem:[%s293 + $0xe2] sm:$0xff]
    %v698 = vld [vmem:[%s293 + $0xf2] sm:$0xff]
    %v699 = vld [vmem:[%s293 + $0xfa] sm:$0xff]
    %v700 = vld [vmem:[%s293 + $0x10a] sm:$0xff]
    %v701 = vld [vmem:[%s293 + $0x112] sm:$0xff]
    %v702 = vld [vmem:[%s293 + $0x122] sm:$0xff]
    %v703 = vld [vmem:[%s293 + $0x12a] sm:$0xff]
    %v704 = vld [vmem:[%s293 + $0x13a] sm:$0xff]
    %v705 = vld [vmem:[%s293 + $0x142] sm:$0xff]
    %v706 = vld [vmem:[%s293 + $0x152] sm:$0xff]
    %v707 = vld [vmem:[%s293 + $0x15a] sm:$0xff]
    %v708 = vld [vmem:[%s293 + $0x16a] sm:$0xff]
    %v709 = vld [vmem:[%s293 + $0x172] sm:$0xff]
    %v710 = vld [vmem:[%s293 + $0x1b2] sm:$0xff]
    %v711 = vld [vmem:[%s293 + $0x1ba] sm:$0xff]
    %v712 = vld [vmem:[%s293 + $0x1ca] sm:$0xff]
    %v713 = vld [vmem:[%s293 + $0x1d2] sm:$0xff]
    %v714 = vld [vmem:[%s293 + $0x1e2] sm:$0xff]
    %v715 = vld [vmem:[%s293 + $0x1ea] sm:$0xff]
    %v716 = vld [vmem:[%s293 + $0x1fa] sm:$0xff]
    %v717 = vld [vmem:[%s293 + $0x202] sm:$0xff]
    %v718 = vld [vmem:[%s293 + $0x212] sm:$0xff]
    %v719 = vld [vmem:[%s293 + $0x21a] sm:$0xff]
    %v720 = vld [vmem:[%s293 + $0x22a] sm:$0xff]
    %v721 = vld [vmem:[%s293 + $0x232] sm:$0xff]
    %v722 = vld [vmem:[%s293 + $0x242] sm:$0xff]
    %v723 = vld [vmem:[%s293 + $0x24a] sm:$0xff]
    %v724 = vld [vmem:[%s293 + $0x25a] sm:$0xff]
    %v725 = vld [vmem:[%s293 + $0x262] sm:$0xff]
    %v726 = vld [vmem:[%s293 + $0x272] sm:$0xff]
    %v727 = vld [vmem:[%s293 + $0x27a] sm:$0xff]
    %v728 = vld [vmem:[%s293 + $0x28a] sm:$0xff]
    %v729 = vld [vmem:[%s293 + $0x292] sm:$0xff]
    %v730 = vld [vmem:[%s293 + $0x2a2] sm:$0xff]
    %v731 = vld [vmem:[%s293 + $0x2aa] sm:$0xff]
    %v732 = vld [vmem:[%s293 + $0x2ba] sm:$0xff]
    %v733 = vld [vmem:[%s293 + $0x2c2] sm:$0xff]
    %v734 = vld [vmem:[%s293 + $0x2d2] sm:$0xff]
    %v735 = vld [vmem:[%s293 + $0x2da] sm:$0xff]
    %v736 = vld [vmem:[%s293 + $0x2ea] sm:$0xff]
    %v737 = vld [vmem:[%s293 + $0x2f2] sm:$0xff]
    %v738 = vld [vmem:[%s293 + $0x302] sm:$0xff]
    %v739 = vld [vmem:[%s293 + $0x30a] sm:$0xff]
    %v740 = vld [vmem:[%s293 + $0x31a] sm:$0xff]
    %v741 = vld [vmem:[%s293 + $0x322] sm:$0xff]
    %s742 = scalar_lea.vmem [#allocation2], 48
    %v743 = vld [vmem:[%s742] sm:$0xff]
    %v744 = vld [vmem:[%s742 + $0x8] sm:$0xff]
    %v745 = vld [vmem:[%s742 + $0x18] sm:$0xff]
    %v746 = vld [vmem:[%s742 + $0x20] sm:$0xff]
    %v747 = vld [vmem:[%s742 + $0x30] sm:$0xff]
    %v748 = vld [vmem:[%s742 + $0x38] sm:$0xff]
    %v749 = vld [vmem:[%s742 + $0x48] sm:$0xff]
    %v750 = vld [vmem:[%s742 + $0x50] sm:$0xff]
    %v751 = vld [vmem:[%s742 + $0x60] sm:$0xff]
    %v752 = vld [vmem:[%s742 + $0x68] sm:$0xff]
    %v753 = vld [vmem:[%s742 + $0x78] sm:$0xff]
    %v754 = vld [vmem:[%s742 + $0x80] sm:$0xff]
    %v755 = vld [vmem:[%s742 + $0x90] sm:$0xff]
    %v756 = vld [vmem:[%s742 + $0x98] sm:$0xff]
    %v757 = vld [vmem:[%s742 + $0xa8] sm:$0xff]
    %v758 = vld [vmem:[%s742 + $0xb0] sm:$0xff]
    %v759 = vld [vmem:[%s742 + $0xc0] sm:$0xff]
    %v760 = vld [vmem:[%s742 + $0xc8] sm:$0xff]
    %v761 = vld [vmem:[%s742 + $0xd8] sm:$0xff]
    %v762 = vld [vmem:[%s742 + $0xe0] sm:$0xff]
    %v763 = vld [vmem:[%s742 + $0xf0] sm:$0xff]
    %v764 = vld [vmem:[%s742 + $0xf8] sm:$0xff]
    %v765 = vld [vmem:[%s742 + $0x108] sm:$0xff]
    %v766 = vld [vmem:[%s742 + $0x110] sm:$0xff]
    %v767 = vld [vmem:[%s742 + $0x120] sm:$0xff]
    %v768 = vld [vmem:[%s742 + $0x128] sm:$0xff]
    %v769 = vld [vmem:[%s742 + $0x138] sm:$0xff]
    %v770 = vld [vmem:[%s742 + $0x140] sm:$0xff]
    %v771 = vld [vmem:[%s742 + $0x150] sm:$0xff]
    %v772 = vld [vmem:[%s742 + $0x158] sm:$0xff]
    %v773 = vld [vmem:[%s742 + $0x168] sm:$0xff]
    %v774 = vld [vmem:[%s742 + $0x170] sm:$0xff]
    %v775 = vld [vmem:[%s742 + $0x1b0] sm:$0xff]
    %v776 = vld [vmem:[%s742 + $0x1b8] sm:$0xff]
    %v777 = vld [vmem:[%s742 + $0x1c8] sm:$0xff]
    %v778 = vld [vmem:[%s742 + $0x1d0] sm:$0xff]
    %v779 = vld [vmem:[%s742 + $0x1e0] sm:$0xff]
    %v780 = vld [vmem:[%s742 + $0x1e8] sm:$0xff]
    %v781 = vld [vmem:[%s742 + $0x1f8] sm:$0xff]
    %v782 = vld [vmem:[%s742 + $0x200] sm:$0xff]
    %v783 = vld [vmem:[%s742 + $0x210] sm:$0xff]
    %v784 = vld [vmem:[%s742 + $0x218] sm:$0xff]
    %v785 = vld [vmem:[%s742 + $0x228] sm:$0xff]
    %v786 = vld [vmem:[%s742 + $0x230] sm:$0xff]
    %v787 = vld [vmem:[%s742 + $0x240] sm:$0xff]
    %v788 = vld [vmem:[%s742 + $0x248] sm:$0xff]
    %v789 = vld [vmem:[%s742 + $0x258] sm:$0xff]
    %v790 = vld [vmem:[%s742 + $0x260] sm:$0xff]
    %v791 = vld [vmem:[%s742 + $0x270] sm:$0xff]
    %v792 = vld [vmem:[%s742 + $0x278] sm:$0xff]
    %v793 = vld [vmem:[%s742 + $0x288] sm:$0xff]
    %v794 = vld [vmem:[%s742 + $0x290] sm:$0xff]
    %v795 = vld [vmem:[%s742 + $0x2a0] sm:$0xff]
    %v796 = vld [vmem:[%s742 + $0x2a8] sm:$0xff]
    %v797 = vld [vmem:[%s742 + $0x2b8] sm:$0xff]
    %v798 = vld [vmem:[%s742 + $0x2c0] sm:$0xff]
    %v799 = vld [vmem:[%s742 + $0x2d0] sm:$0xff]
    %v800 = vld [vmem:[%s742 + $0x2d8] sm:$0xff]
    %v801 = vld [vmem:[%s742 + $0x2e8] sm:$0xff]
    %v802 = vld [vmem:[%s742 + $0x2f0] sm:$0xff]
    %v803 = vld [vmem:[%s742 + $0x300] sm:$0xff]
    %v804 = vld [vmem:[%s742 + $0x308] sm:$0xff]
    %v805 = vld [vmem:[%s742 + $0x318] sm:$0xff]
    %v806 = vld [vmem:[%s742 + $0x320] sm:$0xff]
    %v807 = vld [vmem:[%s742 + $0x1] sm:$0xff]
    %v808 = vld [vmem:[%s742 + $0x9] sm:$0xff]
    %v809 = vld [vmem:[%s742 + $0x19] sm:$0xff]
    %v810 = vld [vmem:[%s742 + $0x21] sm:$0xff]
    %v811 = vld [vmem:[%s742 + $0x31] sm:$0xff]
    %v812 = vld [vmem:[%s742 + $0x39] sm:$0xff]
    %v813 = vld [vmem:[%s742 + $0x49] sm:$0xff]
    %v814 = vld [vmem:[%s742 + $0x51] sm:$0xff]
    %v815 = vld [vmem:[%s742 + $0x61] sm:$0xff]
    %v816 = vld [vmem:[%s742 + $0x69] sm:$0xff]
    %v817 = vld [vmem:[%s742 + $0x79] sm:$0xff]
    %v818 = vld [vmem:[%s742 + $0x81] sm:$0xff]
    %v819 = vld [vmem:[%s742 + $0x91] sm:$0xff]
    %v820 = vld [vmem:[%s742 + $0x99] sm:$0xff]
    %v821 = vld [vmem:[%s742 + $0xa9] sm:$0xff]
    %v822 = vld [vmem:[%s742 + $0xb1] sm:$0xff]
    %v823 = vld [vmem:[%s742 + $0xc1] sm:$0xff]
    %v824 = vld [vmem:[%s742 + $0xc9] sm:$0xff]
    %v825 = vld [vmem:[%s742 + $0xd9] sm:$0xff]
    %v826 = vld [vmem:[%s742 + $0xe1] sm:$0xff]
    %v827 = vld [vmem:[%s742 + $0xf1] sm:$0xff]
    %v828 = vld [vmem:[%s742 + $0xf9] sm:$0xff]
    %v829 = vld [vmem:[%s742 + $0x109] sm:$0xff]
    %v830 = vld [vmem:[%s742 + $0x111] sm:$0xff]
    %v831 = vld [vmem:[%s742 + $0x121] sm:$0xff]
    %v832 = vld [vmem:[%s742 + $0x129] sm:$0xff]
    %v833 = vld [vmem:[%s742 + $0x139] sm:$0xff]
    %v834 = vld [vmem:[%s742 + $0x141] sm:$0xff]
    %v835 = vld [vmem:[%s742 + $0x151] sm:$0xff]
    %v836 = vld [vmem:[%s742 + $0x159] sm:$0xff]
    %v837 = vld [vmem:[%s742 + $0x169] sm:$0xff]
    %v838 = vld [vmem:[%s742 + $0x171] sm:$0xff]
    %v839 = vld [vmem:[%s742 + $0x1b1] sm:$0xff]
    %v840 = vld [vmem:[%s742 + $0x1b9] sm:$0xff]
    %v841 = vld [vmem:[%s742 + $0x1c9] sm:$0xff]
    %v842 = vld [vmem:[%s742 + $0x1d1] sm:$0xff]
    %v843 = vld [vmem:[%s742 + $0x1e1] sm:$0xff]
    %v844 = vld [vmem:[%s742 + $0x1e9] sm:$0xff]
    %v845 = vld [vmem:[%s742 + $0x1f9] sm:$0xff]
    %v846 = vld [vmem:[%s742 + $0x201] sm:$0xff]
    %v847 = vld [vmem:[%s742 + $0x211] sm:$0xff]
    %v848 = vld [vmem:[%s742 + $0x219] sm:$0xff]
    %v849 = vld [vmem:[%s742 + $0x229] sm:$0xff]
    %v850 = vld [vmem:[%s742 + $0x231] sm:$0xff]
    %v851 = vld [vmem:[%s742 + $0x241] sm:$0xff]
    %v852 = vld [vmem:[%s742 + $0x249] sm:$0xff]
    %v853 = vld [vmem:[%s742 + $0x259] sm:$0xff]
    %v854 = vld [vmem:[%s742 + $0x261] sm:$0xff]
    %v855 = vld [vmem:[%s742 + $0x271] sm:$0xff]
    %v856 = vld [vmem:[%s742 + $0x279] sm:$0xff]
    %v857 = vld [vmem:[%s742 + $0x289] sm:$0xff]
    %v858 = vld [vmem:[%s742 + $0x291] sm:$0xff]
    %v859 = vld [vmem:[%s742 + $0x2a1] sm:$0xff]
    %v860 = vld [vmem:[%s742 + $0x2a9] sm:$0xff]
    %v861 = vld [vmem:[%s742 + $0x2b9] sm:$0xff]
    %v862 = vld [vmem:[%s742 + $0x2c1] sm:$0xff]
    %v863 = vld [vmem:[%s742 + $0x2d1] sm:$0xff]
    %v864 = vld [vmem:[%s742 + $0x2d9] sm:$0xff]
    %v865 = vld [vmem:[%s742 + $0x2e9] sm:$0xff]
    %v866 = vld [vmem:[%s742 + $0x2f1] sm:$0xff]
    %v867 = vld [vmem:[%s742 + $0x301] sm:$0xff]
    %v868 = vld [vmem:[%s742 + $0x309] sm:$0xff]
    %v869 = vld [vmem:[%s742 + $0x319] sm:$0xff]
    %v870 = vld [vmem:[%s742 + $0x321] sm:$0xff]
    %v871 = vld [vmem:[%s742 + $0x2] sm:$0xff]
    %v872 = vld [vmem:[%s742 + $0xa] sm:$0xff]
    %v873 = vld [vmem:[%s742 + $0x1a] sm:$0xff]
    %v874 = vld [vmem:[%s742 + $0x22] sm:$0xff]
    %v875 = vld [vmem:[%s742 + $0x32] sm:$0xff]
    %v876 = vld [vmem:[%s742 + $0x3a] sm:$0xff]
    %v877 = vld [vmem:[%s742 + $0x4a] sm:$0xff]
    %v878 = vld [vmem:[%s742 + $0x52] sm:$0xff]
    %v879 = vld [vmem:[%s742 + $0x62] sm:$0xff]
    %v880 = vld [vmem:[%s742 + $0x6a] sm:$0xff]
    %v881 = vld [vmem:[%s742 + $0x7a] sm:$0xff]
    %v882 = vld [vmem:[%s742 + $0x82] sm:$0xff]
    %v883 = vld [vmem:[%s742 + $0x92] sm:$0xff]
    %v884 = vld [vmem:[%s742 + $0x9a] sm:$0xff]
    %v885 = vld [vmem:[%s742 + $0xaa] sm:$0xff]
    %v886 = vld [vmem:[%s742 + $0xb2] sm:$0xff]
    %v887 = vld [vmem:[%s742 + $0xc2] sm:$0xff]
    %v888 = vld [vmem:[%s742 + $0xca] sm:$0xff]
    %v889 = vld [vmem:[%s742 + $0xda] sm:$0xff]
    %v890 = vld [vmem:[%s742 + $0xe2] sm:$0xff]
    %v891 = vld [vmem:[%s742 + $0xf2] sm:$0xff]
    %v892 = vld [vmem:[%s742 + $0xfa] sm:$0xff]
    %v893 = vld [vmem:[%s742 + $0x10a] sm:$0xff]
    %v894 = vld [vmem:[%s742 + $0x112] sm:$0xff]
    %v895 = vld [vmem:[%s742 + $0x122] sm:$0xff]
    %v896 = vld [vmem:[%s742 + $0x12a] sm:$0xff]
    %v897 = vld [vmem:[%s742 + $0x13a] sm:$0xff]
    %v898 = vld [vmem:[%s742 + $0x142] sm:$0xff]
    %v899 = vld [vmem:[%s742 + $0x152] sm:$0xff]
    %v900 = vld [vmem:[%s742 + $0x15a] sm:$0xff]
    %v901 = vld [vmem:[%s742 + $0x16a] sm:$0xff]
    %v902 = vld [vmem:[%s742 + $0x172] sm:$0xff]
    %v903 = vld [vmem:[%s742 + $0x1b2] sm:$0xff]
    %v904 = vld [vmem:[%s742 + $0x1ba] sm:$0xff]
    %v905 = vld [vmem:[%s742 + $0x1ca] sm:$0xff]
    %v906 = vld [vmem:[%s742 + $0x1d2] sm:$0xff]
    %v907 = vld [vmem:[%s742 + $0x1e2] sm:$0xff]
    %v908 = vld [vmem:[%s742 + $0x1ea] sm:$0xff]
    %v909 = vld [vmem:[%s742 + $0x1fa] sm:$0xff]
    %v910 = vld [vmem:[%s742 + $0x202] sm:$0xff]
    %v911 = vld [vmem:[%s742 + $0x212] sm:$0xff]
    %v912 = vld [vmem:[%s742 + $0x21a] sm:$0xff]
    %v913 = vld [vmem:[%s742 + $0x22a] sm:$0xff]
    %v914 = vld [vmem:[%s742 + $0x232] sm:$0xff]
    %v915 = vld [vmem:[%s742 + $0x242] sm:$0xff]
    %v916 = vld [vmem:[%s742 + $0x24a] sm:$0xff]
    %v917 = vld [vmem:[%s742 + $0x25a] sm:$0xff]
    %v918 = vld [vmem:[%s742 + $0x262] sm:$0xff]
    %v919 = vld [vmem:[%s742 + $0x272] sm:$0xff]
    %v920 = vld [vmem:[%s742 + $0x27a] sm:$0xff]
    %v921 = vld [vmem:[%s742 + $0x28a] sm:$0xff]
    %v922 = vld [vmem:[%s742 + $0x292] sm:$0xff]
    %v923 = vld [vmem:[%s742 + $0x2a2] sm:$0xff]
    %v924 = vld [vmem:[%s742 + $0x2aa] sm:$0xff]
    %v925 = vld [vmem:[%s742 + $0x2ba] sm:$0xff]
    %v926 = vld [vmem:[%s742 + $0x2c2] sm:$0xff]
    %v927 = vld [vmem:[%s742 + $0x2d2] sm:$0xff]
    %v928 = vld [vmem:[%s742 + $0x2da] sm:$0xff]
    %v929 = vld [vmem:[%s742 + $0x2ea] sm:$0xff]
    %v930 = vld [vmem:[%s742 + $0x2f2] sm:$0xff]
    %v931 = vld [vmem:[%s742 + $0x302] sm:$0xff]
    %v932 = vld [vmem:[%s742 + $0x30a] sm:$0xff]
    %v933 = vld [vmem:[%s742 + $0x31a] sm:$0xff]
    %v934 = vld [vmem:[%s742 + $0x322] sm:$0xff]
    %999 = vrot.lane.b32.xlu0 %v422, 1
    %v1000 = vpop.permute.xlu0 %999
    %1001 = vrot.lane.b32.xlu0 %v423, 1
    %v1002 = vpop.permute.xlu0 %1001
    %1003 = vrot.lane.b32.xlu0 %v424, 1
    %v1004 = vpop.permute.xlu0 %1003
    %1005 = vrot.lane.b32.xlu0 %v425, 1
    %v1006 = vpop.permute.xlu0 %1005
    %1007 = vrot.lane.b32.xlu0 %v426, 1
    %v1008 = vpop.permute.xlu0 %1007
    %1009 = vrot.lane.b32.xlu0 %v427, 1
    %v1010 = vpop.permute.xlu0 %1009
    %1011 = vrot.lane.b32.xlu0 %v428, 1
    %v1012 = vpop.permute.xlu0 %1011
    %1013 = vrot.lane.b32.xlu0 %v429, 1
    %v1014 = vpop.permute.xlu0 %1013
    %1015 = vrot.lane.b32.xlu0 %v430, 1
    %v1016 = vpop.permute.xlu0 %1015
    %1017 = vrot.lane.b32.xlu0 %v431, 1
    %v1018 = vpop.permute.xlu0 %1017
    %1019 = vrot.lane.b32.xlu0 %v432, 1
    %v1020 = vpop.permute.xlu0 %1019
    %1021 = vrot.lane.b32.xlu0 %v433, 1
    %v1022 = vpop.permute.xlu0 %1021
    %1023 = vrot.lane.b32.xlu0 %v434, 1
    %v1024 = vpop.permute.xlu0 %1023
    %1025 = vrot.lane.b32.xlu0 %v435, 1
    %v1026 = vpop.permute.xlu0 %1025
    %1027 = vrot.lane.b32.xlu0 %v436, 1
    %v1028 = vpop.permute.xlu0 %1027
    %1029 = vrot.lane.b32.xlu0 %v437, 1
    %v1030 = vpop.permute.xlu0 %1029
    %1031 = vrot.lane.b32.xlu0 %v438, 1
    %v1032 = vpop.permute.xlu0 %1031
    %1033 = vrot.lane.b32.xlu0 %v439, 1
    %v1034 = vpop.permute.xlu0 %1033
    %1035 = vrot.lane.b32.xlu0 %v440, 1
    %v1036 = vpop.permute.xlu0 %1035
    %1037 = vrot.lane.b32.xlu0 %v441, 1
    %v1038 = vpop.permute.xlu0 %1037
    %1039 = vrot.lane.b32.xlu0 %v442, 1
    %v1040 = vpop.permute.xlu0 %1039
    %1041 = vrot.lane.b32.xlu0 %v443, 1
    %v1042 = vpop.permute.xlu0 %1041
    %1043 = vrot.lane.b32.xlu0 %v444, 1
    %v1044 = vpop.permute.xlu0 %1043
    %1045 = vrot.lane.b32.xlu0 %v445, 1
    %v1046 = vpop.permute.xlu0 %1045
    %1047 = vrot.lane.b32.xlu0 %v446, 1
    %v1048 = vpop.permute.xlu0 %1047
    %1049 = vrot.lane.b32.xlu0 %v447, 1
    %v1050 = vpop.permute.xlu0 %1049
    %1051 = vrot.lane.b32.xlu0 %v448, 1
    %v1052 = vpop.permute.xlu0 %1051
    %1053 = vrot.lane.b32.xlu0 %v449, 1
    %v1054 = vpop.permute.xlu0 %1053
    %1055 = vrot.lane.b32.xlu0 %v450, 1
    %v1056 = vpop.permute.xlu0 %1055
    %1057 = vrot.lane.b32.xlu0 %v451, 1
    %v1058 = vpop.permute.xlu0 %1057
    %1059 = vrot.lane.b32.xlu0 %v452, 1
    %v1060 = vpop.permute.xlu0 %1059
    %1061 = vrot.lane.b32.xlu0 %v453, 1
    %v1062 = vpop.permute.xlu0 %1061
    %1063 = vrot.lane.b32.xlu0 %v454, 1
    %v1064 = vpop.permute.xlu0 %1063
    %1065 = vrot.lane.b32.xlu0 %v455, 1
    %v1066 = vpop.permute.xlu0 %1065
    %1067 = vrot.lane.b32.xlu0 %v456, 1
    %v1068 = vpop.permute.xlu0 %1067
    %1069 = vrot.lane.b32.xlu0 %v457, 1
    %v1070 = vpop.permute.xlu0 %1069
    %1071 = vrot.lane.b32.xlu0 %v458, 1
    %v1072 = vpop.permute.xlu0 %1071
    %1073 = vrot.lane.b32.xlu0 %v459, 1
    %v1074 = vpop.permute.xlu0 %1073
    %1075 = vrot.lane.b32.xlu0 %v460, 1
    %v1076 = vpop.permute.xlu0 %1075
    %1077 = vrot.lane.b32.xlu0 %v461, 1
    %v1078 = vpop.permute.xlu0 %1077
    %1079 = vrot.lane.b32.xlu0 %v462, 1
    %v1080 = vpop.permute.xlu0 %1079
    %1081 = vrot.lane.b32.xlu0 %v463, 1
    %v1082 = vpop.permute.xlu0 %1081
    %1083 = vrot.lane.b32.xlu0 %v464, 1
    %v1084 = vpop.permute.xlu0 %1083
    %1085 = vrot.lane.b32.xlu0 %v465, 1
    %v1086 = vpop.permute.xlu0 %1085
    %1087 = vrot.lane.b32.xlu0 %v466, 1
    %v1088 = vpop.permute.xlu0 %1087
    %1089 = vrot.lane.b32.xlu0 %v467, 1
    %v1090 = vpop.permute.xlu0 %1089
    %1091 = vrot.lane.b32.xlu0 %v468, 1
    %v1092 = vpop.permute.xlu0 %1091
    %1093 = vrot.lane.b32.xlu0 %v469, 1
    %v1094 = vpop.permute.xlu0 %1093
    %1095 = vrot.lane.b32.xlu0 %v470, 1
    %v1096 = vpop.permute.xlu0 %1095
    %1097 = vrot.lane.b32.xlu0 %v471, 1
    %v1098 = vpop.permute.xlu0 %1097
    %1099 = vrot.lane.b32.xlu0 %v472, 1
    %v1100 = vpop.permute.xlu0 %1099
    %1101 = vrot.lane.b32.xlu0 %v473, 1
    %v1102 = vpop.permute.xlu0 %1101
    %1103 = vrot.lane.b32.xlu0 %v474, 1
    %v1104 = vpop.permute.xlu0 %1103
    %1105 = vrot.lane.b32.xlu0 %v475, 1
    %v1106 = vpop.permute.xlu0 %1105
    %1107 = vrot.lane.b32.xlu0 %v476, 1
    %v1108 = vpop.permute.xlu0 %1107
    %1109 = vrot.lane.b32.xlu0 %v477, 1
    %v1110 = vpop.permute.xlu0 %1109
    %1111 = vrot.lane.b32.xlu0 %v478, 1
    %v1112 = vpop.permute.xlu0 %1111
    %1113 = vrot.lane.b32.xlu0 %v479, 1
    %v1114 = vpop.permute.xlu0 %1113
    %1115 = vrot.lane.b32.xlu0 %v480, 1
    %v1116 = vpop.permute.xlu0 %1115
    %1117 = vrot.lane.b32.xlu0 %v481, 1
    %v1118 = vpop.permute.xlu0 %1117
    %1119 = vrot.lane.b32.xlu0 %v482, 1
    %v1120 = vpop.permute.xlu0 %1119
    %1121 = vrot.lane.b32.xlu0 %v483, 1
    %v1122 = vpop.permute.xlu0 %1121
    %1123 = vrot.lane.b32.xlu0 %v484, 1
    %v1124 = vpop.permute.xlu0 %1123
    %1125 = vrot.lane.b32.xlu0 %v485, 1
    %v1126 = vpop.permute.xlu0 %1125
    %1255 = vrot.lane.b32.xlu0 %v486, 2
    %v1256 = vpop.permute.xlu0 %1255
    %1257 = vrot.lane.b32.xlu0 %v487, 2
    %v1258 = vpop.permute.xlu0 %1257
    %1259 = vrot.lane.b32.xlu0 %v488, 2
    %v1260 = vpop.permute.xlu0 %1259
    %1261 = vrot.lane.b32.xlu0 %v489, 2
    %v1262 = vpop.permute.xlu0 %1261
    %1263 = vrot.lane.b32.xlu0 %v490, 2
    %v1264 = vpop.permute.xlu0 %1263
    %1265 = vrot.lane.b32.xlu0 %v491, 2
    %v1266 = vpop.permute.xlu0 %1265
    %1267 = vrot.lane.b32.xlu0 %v492, 2
    %v1268 = vpop.permute.xlu0 %1267
    %1269 = vrot.lane.b32.xlu0 %v493, 2
    %v1270 = vpop.permute.xlu0 %1269
    %1271 = vrot.lane.b32.xlu0 %v494, 2
    %v1272 = vpop.permute.xlu0 %1271
    %1273 = vrot.lane.b32.xlu0 %v495, 2
    %v1274 = vpop.permute.xlu0 %1273
    %1275 = vrot.lane.b32.xlu0 %v496, 2
    %v1276 = vpop.permute.xlu0 %1275
    %1277 = vrot.lane.b32.xlu0 %v497, 2
    %v1278 = vpop.permute.xlu0 %1277
    %1279 = vrot.lane.b32.xlu0 %v498, 2
    %v1280 = vpop.permute.xlu0 %1279
    %1281 = vrot.lane.b32.xlu0 %v499, 2
    %v1282 = vpop.permute.xlu0 %1281
    %1283 = vrot.lane.b32.xlu0 %v500, 2
    %v1284 = vpop.permute.xlu0 %1283
    %1285 = vrot.lane.b32.xlu0 %v501, 2
    %v1286 = vpop.permute.xlu0 %1285
    %1287 = vrot.lane.b32.xlu0 %v502, 2
    %v1288 = vpop.permute.xlu0 %1287
    %1289 = vrot.lane.b32.xlu0 %v503, 2
    %v1290 = vpop.permute.xlu0 %1289
    %1291 = vrot.lane.b32.xlu0 %v504, 2
    %v1292 = vpop.permute.xlu0 %1291
    %1293 = vrot.lane.b32.xlu0 %v505, 2
    %v1294 = vpop.permute.xlu0 %1293
    %1295 = vrot.lane.b32.xlu0 %v506, 2
    %v1296 = vpop.permute.xlu0 %1295
    %1297 = vrot.lane.b32.xlu0 %v507, 2
    %v1298 = vpop.permute.xlu0 %1297
    %1299 = vrot.lane.b32.xlu0 %v508, 2
    %v1300 = vpop.permute.xlu0 %1299
    %1301 = vrot.lane.b32.xlu0 %v509, 2
    %v1302 = vpop.permute.xlu0 %1301
    %1303 = vrot.lane.b32.xlu0 %v510, 2
    %v1304 = vpop.permute.xlu0 %1303
    %1305 = vrot.lane.b32.xlu0 %v511, 2
    %v1306 = vpop.permute.xlu0 %1305
    %1307 = vrot.lane.b32.xlu0 %v512, 2
    %v1308 = vpop.permute.xlu0 %1307
    %1309 = vrot.lane.b32.xlu0 %v513, 2
    %v1310 = vpop.permute.xlu0 %1309
    %1311 = vrot.lane.b32.xlu0 %v514, 2
    %v1312 = vpop.permute.xlu0 %1311
    %1313 = vrot.lane.b32.xlu0 %v515, 2
    %v1314 = vpop.permute.xlu0 %1313
    %1315 = vrot.lane.b32.xlu0 %v516, 2
    %v1316 = vpop.permute.xlu0 %1315
    %1317 = vrot.lane.b32.xlu0 %v517, 2
    %v1318 = vpop.permute.xlu0 %1317
    %1319 = vrot.lane.b32.xlu0 %v518, 2
    %v1320 = vpop.permute.xlu0 %1319
    %1321 = vrot.lane.b32.xlu0 %v519, 2
    %v1322 = vpop.permute.xlu0 %1321
    %1323 = vrot.lane.b32.xlu0 %v520, 2
    %v1324 = vpop.permute.xlu0 %1323
    %1325 = vrot.lane.b32.xlu0 %v521, 2
    %v1326 = vpop.permute.xlu0 %1325
    %1327 = vrot.lane.b32.xlu0 %v522, 2
    %v1328 = vpop.permute.xlu0 %1327
    %1329 = vrot.lane.b32.xlu0 %v523, 2
    %v1330 = vpop.permute.xlu0 %1329
    %1331 = vrot.lane.b32.xlu0 %v524, 2
    %v1332 = vpop.permute.xlu0 %1331
    %1333 = vrot.lane.b32.xlu0 %v525, 2
    %v1334 = vpop.permute.xlu0 %1333
    %1335 = vrot.lane.b32.xlu0 %v526, 2
    %v1336 = vpop.permute.xlu0 %1335
    %1337 = vrot.lane.b32.xlu0 %v527, 2
    %v1338 = vpop.permute.xlu0 %1337
    %1339 = vrot.lane.b32.xlu0 %v528, 2
    %v1340 = vpop.permute.xlu0 %1339
    %1341 = vrot.lane.b32.xlu0 %v529, 2
    %v1342 = vpop.permute.xlu0 %1341
    %1343 = vrot.lane.b32.xlu0 %v530, 2
    %v1344 = vpop.permute.xlu0 %1343
    %1345 = vrot.lane.b32.xlu0 %v531, 2
    %v1346 = vpop.permute.xlu0 %1345
    %1347 = vrot.lane.b32.xlu0 %v532, 2
    %v1348 = vpop.permute.xlu0 %1347
    %1349 = vrot.lane.b32.xlu0 %v533, 2
    %v1350 = vpop.permute.xlu0 %1349
    %1351 = vrot.lane.b32.xlu0 %v534, 2
    %v1352 = vpop.permute.xlu0 %1351
    %1353 = vrot.lane.b32.xlu0 %v535, 2
    %v1354 = vpop.permute.xlu0 %1353
    %1355 = vrot.lane.b32.xlu0 %v536, 2
    %v1356 = vpop.permute.xlu0 %1355
    %1357 = vrot.lane.b32.xlu0 %v537, 2
    %v1358 = vpop.permute.xlu0 %1357
    %1359 = vrot.lane.b32.xlu0 %v538, 2
    %v1360 = vpop.permute.xlu0 %1359
    %1361 = vrot.lane.b32.xlu0 %v539, 2
    %v1362 = vpop.permute.xlu0 %1361
    %1363 = vrot.lane.b32.xlu0 %v540, 2
    %v1364 = vpop.permute.xlu0 %1363
    %1365 = vrot.lane.b32.xlu0 %v541, 2
    %v1366 = vpop.permute.xlu0 %1365
    %1367 = vrot.lane.b32.xlu0 %v542, 2
    %v1368 = vpop.permute.xlu0 %1367
    %1369 = vrot.lane.b32.xlu0 %v543, 2
    %v1370 = vpop.permute.xlu0 %1369
    %1371 = vrot.lane.b32.xlu0 %v544, 2
    %v1372 = vpop.permute.xlu0 %1371
    %1373 = vrot.lane.b32.xlu0 %v545, 2
    %v1374 = vpop.permute.xlu0 %1373
    %1375 = vrot.lane.b32.xlu0 %v546, 2
    %v1376 = vpop.permute.xlu0 %1375
    %1377 = vrot.lane.b32.xlu0 %v547, 2
    %v1378 = vpop.permute.xlu0 %1377
    %1379 = vrot.lane.b32.xlu0 %v548, 2
    %v1380 = vpop.permute.xlu0 %1379
    %1381 = vrot.lane.b32.xlu0 %v549, 2
    %v1382 = vpop.permute.xlu0 %1381
    %1511 = vrot.lane.b32.xlu0 %v550, 3
    %v1512 = vpop.permute.xlu0 %1511
    %1513 = vrot.lane.b32.xlu0 %v551, 3
    %v1514 = vpop.permute.xlu0 %1513
    %1515 = vrot.lane.b32.xlu0 %v552, 3
    %v1516 = vpop.permute.xlu0 %1515
    %1517 = vrot.lane.b32.xlu0 %v553, 3
    %v1518 = vpop.permute.xlu0 %1517
    %1519 = vrot.lane.b32.xlu0 %v554, 3
    %v1520 = vpop.permute.xlu0 %1519
    %1521 = vrot.lane.b32.xlu0 %v555, 3
    %v1522 = vpop.permute.xlu0 %1521
    %1523 = vrot.lane.b32.xlu0 %v556, 3
    %v1524 = vpop.permute.xlu0 %1523
    %1525 = vrot.lane.b32.xlu0 %v557, 3
    %v1526 = vpop.permute.xlu0 %1525
    %1527 = vrot.lane.b32.xlu0 %v558, 3
    %v1528 = vpop.permute.xlu0 %1527
    %1529 = vrot.lane.b32.xlu0 %v559, 3
    %v1530 = vpop.permute.xlu0 %1529
    %1531 = vrot.lane.b32.xlu0 %v560, 3
    %v1532 = vpop.permute.xlu0 %1531
    %1533 = vrot.lane.b32.xlu0 %v561, 3
    %v1534 = vpop.permute.xlu0 %1533
    %1535 = vrot.lane.b32.xlu0 %v562, 3
    %v1536 = vpop.permute.xlu0 %1535
    %1537 = vrot.lane.b32.xlu0 %v563, 3
    %v1538 = vpop.permute.xlu0 %1537
    %1539 = vrot.lane.b32.xlu0 %v564, 3
    %v1540 = vpop.permute.xlu0 %1539
    %1541 = vrot.lane.b32.xlu0 %v565, 3
    %v1542 = vpop.permute.xlu0 %1541
    %1543 = vrot.lane.b32.xlu0 %v566, 3
    %v1544 = vpop.permute.xlu0 %1543
    %1545 = vrot.lane.b32.xlu0 %v567, 3
    %v1546 = vpop.permute.xlu0 %1545
    %1547 = vrot.lane.b32.xlu0 %v568, 3
    %v1548 = vpop.permute.xlu0 %1547
    %1549 = vrot.lane.b32.xlu0 %v569, 3
    %v1550 = vpop.permute.xlu0 %1549
    %1551 = vrot.lane.b32.xlu0 %v570, 3
    %v1552 = vpop.permute.xlu0 %1551
    %1553 = vrot.lane.b32.xlu0 %v571, 3
    %v1554 = vpop.permute.xlu0 %1553
    %1555 = vrot.lane.b32.xlu0 %v572, 3
    %v1556 = vpop.permute.xlu0 %1555
    %1557 = vrot.lane.b32.xlu0 %v573, 3
    %v1558 = vpop.permute.xlu0 %1557
    %1559 = vrot.lane.b32.xlu0 %v574, 3
    %v1560 = vpop.permute.xlu0 %1559
    %1561 = vrot.lane.b32.xlu0 %v575, 3
    %v1562 = vpop.permute.xlu0 %1561
    %1563 = vrot.lane.b32.xlu0 %v576, 3
    %v1564 = vpop.permute.xlu0 %1563
    %1565 = vrot.lane.b32.xlu0 %v577, 3
    %v1566 = vpop.permute.xlu0 %1565
    %1567 = vrot.lane.b32.xlu0 %v578, 3
    %v1568 = vpop.permute.xlu0 %1567
    %1569 = vrot.lane.b32.xlu0 %v579, 3
    %v1570 = vpop.permute.xlu0 %1569
    %1571 = vrot.lane.b32.xlu0 %v580, 3
    %v1572 = vpop.permute.xlu0 %1571
    %1573 = vrot.lane.b32.xlu0 %v581, 3
    %v1574 = vpop.permute.xlu0 %1573
    %1575 = vrot.lane.b32.xlu0 %v582, 3
    %v1576 = vpop.permute.xlu0 %1575
    %1577 = vrot.lane.b32.xlu0 %v583, 3
    %v1578 = vpop.permute.xlu0 %1577
    %1579 = vrot.lane.b32.xlu0 %v584, 3
    %v1580 = vpop.permute.xlu0 %1579
    %1581 = vrot.lane.b32.xlu0 %v585, 3
    %v1582 = vpop.permute.xlu0 %1581
    %1583 = vrot.lane.b32.xlu0 %v586, 3
    %v1584 = vpop.permute.xlu0 %1583
    %1585 = vrot.lane.b32.xlu0 %v587, 3
    %v1586 = vpop.permute.xlu0 %1585
    %1587 = vrot.lane.b32.xlu0 %v588, 3
    %v1588 = vpop.permute.xlu0 %1587
    %1589 = vrot.lane.b32.xlu0 %v589, 3
    %v1590 = vpop.permute.xlu0 %1589
    %1591 = vrot.lane.b32.xlu0 %v590, 3
    %v1592 = vpop.permute.xlu0 %1591
    %1593 = vrot.lane.b32.xlu0 %v591, 3
    %v1594 = vpop.permute.xlu0 %1593
    %1595 = vrot.lane.b32.xlu0 %v592, 3
    %v1596 = vpop.permute.xlu0 %1595
    %1597 = vrot.lane.b32.xlu0 %v593, 3
    %v1598 = vpop.permute.xlu0 %1597
    %1599 = vrot.lane.b32.xlu0 %v594, 3
    %v1600 = vpop.permute.xlu0 %1599
    %1601 = vrot.lane.b32.xlu0 %v595, 3
    %v1602 = vpop.permute.xlu0 %1601
    %1603 = vrot.lane.b32.xlu0 %v596, 3
    %v1604 = vpop.permute.xlu0 %1603
    %1605 = vrot.lane.b32.xlu0 %v597, 3
    %v1606 = vpop.permute.xlu0 %1605
    %1607 = vrot.lane.b32.xlu0 %v598, 3
    %v1608 = vpop.permute.xlu0 %1607
    %1609 = vrot.lane.b32.xlu0 %v599, 3
    %v1610 = vpop.permute.xlu0 %1609
    %1611 = vrot.lane.b32.xlu0 %v600, 3
    %v1612 = vpop.permute.xlu0 %1611
    %1613 = vrot.lane.b32.xlu0 %v601, 3
    %v1614 = vpop.permute.xlu0 %1613
    %1615 = vrot.lane.b32.xlu0 %v602, 3
    %v1616 = vpop.permute.xlu0 %1615
    %1617 = vrot.lane.b32.xlu0 %v603, 3
    %v1618 = vpop.permute.xlu0 %1617
    %1619 = vrot.lane.b32.xlu0 %v604, 3
    %v1620 = vpop.permute.xlu0 %1619
    %1621 = vrot.lane.b32.xlu0 %v605, 3
    %v1622 = vpop.permute.xlu0 %1621
    %1623 = vrot.lane.b32.xlu0 %v606, 3
    %v1624 = vpop.permute.xlu0 %1623
    %1625 = vrot.lane.b32.xlu0 %v607, 3
    %v1626 = vpop.permute.xlu0 %1625
    %1627 = vrot.lane.b32.xlu0 %v608, 3
    %v1628 = vpop.permute.xlu0 %1627
    %1629 = vrot.lane.b32.xlu0 %v609, 3
    %v1630 = vpop.permute.xlu0 %1629
    %1631 = vrot.lane.b32.xlu0 %v610, 3
    %v1632 = vpop.permute.xlu0 %1631
    %1633 = vrot.lane.b32.xlu0 %v611, 3
    %v1634 = vpop.permute.xlu0 %1633
    %1635 = vrot.lane.b32.xlu0 %v612, 3
    %v1636 = vpop.permute.xlu0 %1635
    %1637 = vrot.lane.b32.xlu0 %v613, 3
    %v1638 = vpop.permute.xlu0 %1637
    %1767 = vrot.lane.b32.xlu0 %v614, 4
    %v1768 = vpop.permute.xlu0 %1767
    %1769 = vrot.lane.b32.xlu0 %v615, 4
    %v1770 = vpop.permute.xlu0 %1769
    %1771 = vrot.lane.b32.xlu0 %v616, 4
    %v1772 = vpop.permute.xlu0 %1771
    %1773 = vrot.lane.b32.xlu0 %v617, 4
    %v1774 = vpop.permute.xlu0 %1773
    %1775 = vrot.lane.b32.xlu0 %v618, 4
    %v1776 = vpop.permute.xlu0 %1775
    %1777 = vrot.lane.b32.xlu0 %v619, 4
    %v1778 = vpop.permute.xlu0 %1777
    %1779 = vrot.lane.b32.xlu0 %v620, 4
    %v1780 = vpop.permute.xlu0 %1779
    %1781 = vrot.lane.b32.xlu0 %v621, 4
    %v1782 = vpop.permute.xlu0 %1781
    %1783 = vrot.lane.b32.xlu0 %v622, 4
    %v1784 = vpop.permute.xlu0 %1783
    %1785 = vrot.lane.b32.xlu0 %v623, 4
    %v1786 = vpop.permute.xlu0 %1785
    %1787 = vrot.lane.b32.xlu0 %v624, 4
    %v1788 = vpop.permute.xlu0 %1787
    %1789 = vrot.lane.b32.xlu0 %v625, 4
    %v1790 = vpop.permute.xlu0 %1789
    %1791 = vrot.lane.b32.xlu0 %v626, 4
    %v1792 = vpop.permute.xlu0 %1791
    %1793 = vrot.lane.b32.xlu0 %v627, 4
    %v1794 = vpop.permute.xlu0 %1793
    %1795 = vrot.lane.b32.xlu0 %v628, 4
    %v1796 = vpop.permute.xlu0 %1795
    %1797 = vrot.lane.b32.xlu0 %v629, 4
    %v1798 = vpop.permute.xlu0 %1797
    %1799 = vrot.lane.b32.xlu0 %v630, 4
    %v1800 = vpop.permute.xlu0 %1799
    %1801 = vrot.lane.b32.xlu0 %v631, 4
    %v1802 = vpop.permute.xlu0 %1801
    %1803 = vrot.lane.b32.xlu0 %v632, 4
    %v1804 = vpop.permute.xlu0 %1803
    %1805 = vrot.lane.b32.xlu0 %v633, 4
    %v1806 = vpop.permute.xlu0 %1805
    %1807 = vrot.lane.b32.xlu0 %v634, 4
    %v1808 = vpop.permute.xlu0 %1807
    %1809 = vrot.lane.b32.xlu0 %v635, 4
    %v1810 = vpop.permute.xlu0 %1809
    %1811 = vrot.lane.b32.xlu0 %v636, 4
    %v1812 = vpop.permute.xlu0 %1811
    %1813 = vrot.lane.b32.xlu0 %v637, 4
    %v1814 = vpop.permute.xlu0 %1813
    %1815 = vrot.lane.b32.xlu0 %v638, 4
    %v1816 = vpop.permute.xlu0 %1815
    %1817 = vrot.lane.b32.xlu0 %v639, 4
    %v1818 = vpop.permute.xlu0 %1817
    %1819 = vrot.lane.b32.xlu0 %v640, 4
    %v1820 = vpop.permute.xlu0 %1819
    %1821 = vrot.lane.b32.xlu0 %v641, 4
    %v1822 = vpop.permute.xlu0 %1821
    %1823 = vrot.lane.b32.xlu0 %v642, 4
    %v1824 = vpop.permute.xlu0 %1823
    %1825 = vrot.lane.b32.xlu0 %v643, 4
    %v1826 = vpop.permute.xlu0 %1825
    %1827 = vrot.lane.b32.xlu0 %v644, 4
    %v1828 = vpop.permute.xlu0 %1827
    %1829 = vrot.lane.b32.xlu0 %v645, 4
    %v1830 = vpop.permute.xlu0 %1829
    %1831 = vrot.lane.b32.xlu0 %v646, 4
    %v1832 = vpop.permute.xlu0 %1831
    %1833 = vrot.lane.b32.xlu0 %v647, 4
    %v1834 = vpop.permute.xlu0 %1833
    %1835 = vrot.lane.b32.xlu0 %v648, 4
    %v1836 = vpop.permute.xlu0 %1835
    %1837 = vrot.lane.b32.xlu0 %v649, 4
    %v1838 = vpop.permute.xlu0 %1837
    %1839 = vrot.lane.b32.xlu0 %v650, 4
    %v1840 = vpop.permute.xlu0 %1839
    %1841 = vrot.lane.b32.xlu0 %v651, 4
    %v1842 = vpop.permute.xlu0 %1841
    %1843 = vrot.lane.b32.xlu0 %v652, 4
    %v1844 = vpop.permute.xlu0 %1843
    %1845 = vrot.lane.b32.xlu0 %v653, 4
    %v1846 = vpop.permute.xlu0 %1845
    %1847 = vrot.lane.b32.xlu0 %v654, 4
    %v1848 = vpop.permute.xlu0 %1847
    %1849 = vrot.lane.b32.xlu0 %v655, 4
    %v1850 = vpop.permute.xlu0 %1849
    %1851 = vrot.lane.b32.xlu0 %v656, 4
    %v1852 = vpop.permute.xlu0 %1851
    %1853 = vrot.lane.b32.xlu0 %v657, 4
    %v1854 = vpop.permute.xlu0 %1853
    %1855 = vrot.lane.b32.xlu0 %v658, 4
    %v1856 = vpop.permute.xlu0 %1855
    %1857 = vrot.lane.b32.xlu0 %v659, 4
    %v1858 = vpop.permute.xlu0 %1857
    %1859 = vrot.lane.b32.xlu0 %v660, 4
    %v1860 = vpop.permute.xlu0 %1859
    %1861 = vrot.lane.b32.xlu0 %v661, 4
    %v1862 = vpop.permute.xlu0 %1861
    %1863 = vrot.lane.b32.xlu0 %v662, 4
    %v1864 = vpop.permute.xlu0 %1863
    %1865 = vrot.lane.b32.xlu0 %v663, 4
    %v1866 = vpop.permute.xlu0 %1865
    %1867 = vrot.lane.b32.xlu0 %v664, 4
    %v1868 = vpop.permute.xlu0 %1867
    %1869 = vrot.lane.b32.xlu0 %v665, 4
    %v1870 = vpop.permute.xlu0 %1869
    %1871 = vrot.lane.b32.xlu0 %v666, 4
    %v1872 = vpop.permute.xlu0 %1871
    %1873 = vrot.lane.b32.xlu0 %v667, 4
    %v1874 = vpop.permute.xlu0 %1873
    %1875 = vrot.lane.b32.xlu0 %v668, 4
    %v1876 = vpop.permute.xlu0 %1875
    %1877 = vrot.lane.b32.xlu0 %v669, 4
    %v1878 = vpop.permute.xlu0 %1877
    %1879 = vrot.lane.b32.xlu0 %v670, 4
    %v1880 = vpop.permute.xlu0 %1879
    %1881 = vrot.lane.b32.xlu0 %v671, 4
    %v1882 = vpop.permute.xlu0 %1881
    %1883 = vrot.lane.b32.xlu0 %v672, 4
    %v1884 = vpop.permute.xlu0 %1883
    %1885 = vrot.lane.b32.xlu0 %v673, 4
    %v1886 = vpop.permute.xlu0 %1885
    %1887 = vrot.lane.b32.xlu0 %v674, 4
    %v1888 = vpop.permute.xlu0 %1887
    %1889 = vrot.lane.b32.xlu0 %v675, 4
    %v1890 = vpop.permute.xlu0 %1889
    %1891 = vrot.lane.b32.xlu0 %v676, 4
    %v1892 = vpop.permute.xlu0 %1891
    %1893 = vrot.lane.b32.xlu0 %v677, 4
    %v1894 = vpop.permute.xlu0 %1893
    %2023 = vrot.lane.b32.xlu0 %v678, 5
    %v2024 = vpop.permute.xlu0 %2023
    %2025 = vrot.lane.b32.xlu0 %v679, 5
    %v2026 = vpop.permute.xlu0 %2025
    %2027 = vrot.lane.b32.xlu0 %v680, 5
    %v2028 = vpop.permute.xlu0 %2027
    %2029 = vrot.lane.b32.xlu0 %v681, 5
    %v2030 = vpop.permute.xlu0 %2029
    %2031 = vrot.lane.b32.xlu0 %v682, 5
    %v2032 = vpop.permute.xlu0 %2031
    %2033 = vrot.lane.b32.xlu0 %v683, 5
    %v2034 = vpop.permute.xlu0 %2033
    %2035 = vrot.lane.b32.xlu0 %v684, 5
    %v2036 = vpop.permute.xlu0 %2035
    %2037 = vrot.lane.b32.xlu0 %v685, 5
    %v2038 = vpop.permute.xlu0 %2037
    %2039 = vrot.lane.b32.xlu0 %v686, 5
    %v2040 = vpop.permute.xlu0 %2039
    %2041 = vrot.lane.b32.xlu0 %v687, 5
    %v2042 = vpop.permute.xlu0 %2041
    %2043 = vrot.lane.b32.xlu0 %v688, 5
    %v2044 = vpop.permute.xlu0 %2043
    %2045 = vrot.lane.b32.xlu0 %v689, 5
    %v2046 = vpop.permute.xlu0 %2045
    %2047 = vrot.lane.b32.xlu0 %v690, 5
    %v2048 = vpop.permute.xlu0 %2047
    %2049 = vrot.lane.b32.xlu0 %v691, 5
    %v2050 = vpop.permute.xlu0 %2049
    %2051 = vrot.lane.b32.xlu0 %v692, 5
    %v2052 = vpop.permute.xlu0 %2051
    %2053 = vrot.lane.b32.xlu0 %v693, 5
    %v2054 = vpop.permute.xlu0 %2053
    %2055 = vrot.lane.b32.xlu0 %v694, 5
    %v2056 = vpop.permute.xlu0 %2055
    %2057 = vrot.lane.b32.xlu0 %v695, 5
    %v2058 = vpop.permute.xlu0 %2057
    %2059 = vrot.lane.b32.xlu0 %v696, 5
    %v2060 = vpop.permute.xlu0 %2059
    %2061 = vrot.lane.b32.xlu0 %v697, 5
    %v2062 = vpop.permute.xlu0 %2061
    %2063 = vrot.lane.b32.xlu0 %v698, 5
    %v2064 = vpop.permute.xlu0 %2063
    %2065 = vrot.lane.b32.xlu0 %v699, 5
    %v2066 = vpop.permute.xlu0 %2065
    %2067 = vrot.lane.b32.xlu0 %v700, 5
    %v2068 = vpop.permute.xlu0 %2067
    %2069 = vrot.lane.b32.xlu0 %v701, 5
    %v2070 = vpop.permute.xlu0 %2069
    %2071 = vrot.lane.b32.xlu0 %v702, 5
    %v2072 = vpop.permute.xlu0 %2071
    %2073 = vrot.lane.b32.xlu0 %v703, 5
    %v2074 = vpop.permute.xlu0 %2073
    %2075 = vrot.lane.b32.xlu0 %v704, 5
    %v2076 = vpop.permute.xlu0 %2075
    %2077 = vrot.lane.b32.xlu0 %v705, 5
    %v2078 = vpop.permute.xlu0 %2077
    %2079 = vrot.lane.b32.xlu0 %v706, 5
    %v2080 = vpop.permute.xlu0 %2079
    %2081 = vrot.lane.b32.xlu0 %v707, 5
    %v2082 = vpop.permute.xlu0 %2081
    %2083 = vrot.lane.b32.xlu0 %v708, 5
    %v2084 = vpop.permute.xlu0 %2083
    %2085 = vrot.lane.b32.xlu0 %v709, 5
    %v2086 = vpop.permute.xlu0 %2085
    %2087 = vrot.lane.b32.xlu0 %v710, 5
    %v2088 = vpop.permute.xlu0 %2087
    %2089 = vrot.lane.b32.xlu0 %v711, 5
    %v2090 = vpop.permute.xlu0 %2089
    %2091 = vrot.lane.b32.xlu0 %v712, 5
    %v2092 = vpop.permute.xlu0 %2091
    %2093 = vrot.lane.b32.xlu0 %v713, 5
    %v2094 = vpop.permute.xlu0 %2093
    %2095 = vrot.lane.b32.xlu0 %v714, 5
    %v2096 = vpop.permute.xlu0 %2095
    %2097 = vrot.lane.b32.xlu0 %v715, 5
    %v2098 = vpop.permute.xlu0 %2097
    %2099 = vrot.lane.b32.xlu0 %v716, 5
    %v2100 = vpop.permute.xlu0 %2099
    %2101 = vrot.lane.b32.xlu0 %v717, 5
    %v2102 = vpop.permute.xlu0 %2101
    %2103 = vrot.lane.b32.xlu0 %v718, 5
    %v2104 = vpop.permute.xlu0 %2103
    %2105 = vrot.lane.b32.xlu0 %v719, 5
    %v2106 = vpop.permute.xlu0 %2105
    %2107 = vrot.lane.b32.xlu0 %v720, 5
    %v2108 = vpop.permute.xlu0 %2107
    %2109 = vrot.lane.b32.xlu0 %v721, 5
    %v2110 = vpop.permute.xlu0 %2109
    %2111 = vrot.lane.b32.xlu0 %v722, 5
    %v2112 = vpop.permute.xlu0 %2111
    %2113 = vrot.lane.b32.xlu0 %v723, 5
    %v2114 = vpop.permute.xlu0 %2113
    %2115 = vrot.lane.b32.xlu0 %v724, 5
    %v2116 = vpop.permute.xlu0 %2115
    %2117 = vrot.lane.b32.xlu0 %v725, 5
    %v2118 = vpop.permute.xlu0 %2117
    %2119 = vrot.lane.b32.xlu0 %v726, 5
    %v2120 = vpop.permute.xlu0 %2119
    %2121 = vrot.lane.b32.xlu0 %v727, 5
    %v2122 = vpop.permute.xlu0 %2121
    %2123 = vrot.lane.b32.xlu0 %v728, 5
    %v2124 = vpop.permute.xlu0 %2123
    %2125 = vrot.lane.b32.xlu0 %v729, 5
    %v2126 = vpop.permute.xlu0 %2125
    %2127 = vrot.lane.b32.xlu0 %v730, 5
    %v2128 = vpop.permute.xlu0 %2127
    %2129 = vrot.lane.b32.xlu0 %v731, 5
    %v2130 = vpop.permute.xlu0 %2129
    %2131 = vrot.lane.b32.xlu0 %v732, 5
    %v2132 = vpop.permute.xlu0 %2131
    %2133 = vrot.lane.b32.xlu0 %v733, 5
    %v2134 = vpop.permute.xlu0 %2133
    %2135 = vrot.lane.b32.xlu0 %v734, 5
    %v2136 = vpop.permute.xlu0 %2135
    %2137 = vrot.lane.b32.xlu0 %v735, 5
    %v2138 = vpop.permute.xlu0 %2137
    %2139 = vrot.lane.b32.xlu0 %v736, 5
    %v2140 = vpop.permute.xlu0 %2139
    %2141 = vrot.lane.b32.xlu0 %v737, 5
    %v2142 = vpop.permute.xlu0 %2141
    %2143 = vrot.lane.b32.xlu0 %v738, 5
    %v2144 = vpop.permute.xlu0 %2143
    %2145 = vrot.lane.b32.xlu0 %v739, 5
    %v2146 = vpop.permute.xlu0 %2145
    %2147 = vrot.lane.b32.xlu0 %v740, 5
    %v2148 = vpop.permute.xlu0 %2147
    %2149 = vrot.lane.b32.xlu0 %v741, 5
    %v2150 = vpop.permute.xlu0 %2149
    %2279 = vrot.lane.b32.xlu0 %v743, 6
    %v2280 = vpop.permute.xlu0 %2279
    %2281 = vrot.lane.b32.xlu0 %v744, 6
    %v2282 = vpop.permute.xlu0 %2281
    %2283 = vrot.lane.b32.xlu0 %v745, 6
    %v2284 = vpop.permute.xlu0 %2283
    %2285 = vrot.lane.b32.xlu0 %v746, 6
    %v2286 = vpop.permute.xlu0 %2285
    %2287 = vrot.lane.b32.xlu0 %v747, 6
    %v2288 = vpop.permute.xlu0 %2287
    %2289 = vrot.lane.b32.xlu0 %v748, 6
    %v2290 = vpop.permute.xlu0 %2289
    %2291 = vrot.lane.b32.xlu0 %v749, 6
    %v2292 = vpop.permute.xlu0 %2291
    %2293 = vrot.lane.b32.xlu0 %v750, 6
    %v2294 = vpop.permute.xlu0 %2293
    %2295 = vrot.lane.b32.xlu0 %v751, 6
    %v2296 = vpop.permute.xlu0 %2295
    %2297 = vrot.lane.b32.xlu0 %v752, 6
    %v2298 = vpop.permute.xlu0 %2297
    %2299 = vrot.lane.b32.xlu0 %v753, 6
    %v2300 = vpop.permute.xlu0 %2299
    %2301 = vrot.lane.b32.xlu0 %v754, 6
    %v2302 = vpop.permute.xlu0 %2301
    %2303 = vrot.lane.b32.xlu0 %v755, 6
    %v2304 = vpop.permute.xlu0 %2303
    %2305 = vrot.lane.b32.xlu0 %v756, 6
    %v2306 = vpop.permute.xlu0 %2305
    %2307 = vrot.lane.b32.xlu0 %v757, 6
    %v2308 = vpop.permute.xlu0 %2307
    %2309 = vrot.lane.b32.xlu0 %v758, 6
    %v2310 = vpop.permute.xlu0 %2309
    %2311 = vrot.lane.b32.xlu0 %v759, 6
    %v2312 = vpop.permute.xlu0 %2311
    %2313 = vrot.lane.b32.xlu0 %v760, 6
    %v2314 = vpop.permute.xlu0 %2313
    %2315 = vrot.lane.b32.xlu0 %v761, 6
    %v2316 = vpop.permute.xlu0 %2315
    %2317 = vrot.lane.b32.xlu0 %v762, 6
    %v2318 = vpop.permute.xlu0 %2317
    %2319 = vrot.lane.b32.xlu0 %v763, 6
    %v2320 = vpop.permute.xlu0 %2319
    %2321 = vrot.lane.b32.xlu0 %v764, 6
    %v2322 = vpop.permute.xlu0 %2321
    %2323 = vrot.lane.b32.xlu0 %v765, 6
    %v2324 = vpop.permute.xlu0 %2323
    %2325 = vrot.lane.b32.xlu0 %v766, 6
    %v2326 = vpop.permute.xlu0 %2325
    %2327 = vrot.lane.b32.xlu0 %v767, 6
    %v2328 = vpop.permute.xlu0 %2327
    %2329 = vrot.lane.b32.xlu0 %v768, 6
    %v2330 = vpop.permute.xlu0 %2329
    %2331 = vrot.lane.b32.xlu0 %v769, 6
    %v2332 = vpop.permute.xlu0 %2331
    %2333 = vrot.lane.b32.xlu0 %v770, 6
    %v2334 = vpop.permute.xlu0 %2333
    %2335 = vrot.lane.b32.xlu0 %v771, 6
    %v2336 = vpop.permute.xlu0 %2335
    %2337 = vrot.lane.b32.xlu0 %v772, 6
    %v2338 = vpop.permute.xlu0 %2337
    %2339 = vrot.lane.b32.xlu0 %v773, 6
    %v2340 = vpop.permute.xlu0 %2339
    %2341 = vrot.lane.b32.xlu0 %v774, 6
    %v2342 = vpop.permute.xlu0 %2341
    %2343 = vrot.lane.b32.xlu0 %v775, 6
    %v2344 = vpop.permute.xlu0 %2343
    %2345 = vrot.lane.b32.xlu0 %v776, 6
    %v2346 = vpop.permute.xlu0 %2345
    %2347 = vrot.lane.b32.xlu0 %v777, 6
    %v2348 = vpop.permute.xlu0 %2347
    %2349 = vrot.lane.b32.xlu0 %v778, 6
    %v2350 = vpop.permute.xlu0 %2349
    %2351 = vrot.lane.b32.xlu0 %v779, 6
    %v2352 = vpop.permute.xlu0 %2351
    %2353 = vrot.lane.b32.xlu0 %v780, 6
    %v2354 = vpop.permute.xlu0 %2353
    %2355 = vrot.lane.b32.xlu0 %v781, 6
    %v2356 = vpop.permute.xlu0 %2355
    %2357 = vrot.lane.b32.xlu0 %v782, 6
    %v2358 = vpop.permute.xlu0 %2357
    %2359 = vrot.lane.b32.xlu0 %v783, 6
    %v2360 = vpop.permute.xlu0 %2359
    %2361 = vrot.lane.b32.xlu0 %v784, 6
    %v2362 = vpop.permute.xlu0 %2361
    %2363 = vrot.lane.b32.xlu0 %v785, 6
    %v2364 = vpop.permute.xlu0 %2363
    %2365 = vrot.lane.b32.xlu0 %v786, 6
    %v2366 = vpop.permute.xlu0 %2365
    %2367 = vrot.lane.b32.xlu0 %v787, 6
    %v2368 = vpop.permute.xlu0 %2367
    %2369 = vrot.lane.b32.xlu0 %v788, 6
    %v2370 = vpop.permute.xlu0 %2369
    %2371 = vrot.lane.b32.xlu0 %v789, 6
    %v2372 = vpop.permute.xlu0 %2371
    %2373 = vrot.lane.b32.xlu0 %v790, 6
    %v2374 = vpop.permute.xlu0 %2373
    %2375 = vrot.lane.b32.xlu0 %v791, 6
    %v2376 = vpop.permute.xlu0 %2375
    %2377 = vrot.lane.b32.xlu0 %v792, 6
    %v2378 = vpop.permute.xlu0 %2377
    %2379 = vrot.lane.b32.xlu0 %v793, 6
    %v2380 = vpop.permute.xlu0 %2379
    %2381 = vrot.lane.b32.xlu0 %v794, 6
    %v2382 = vpop.permute.xlu0 %2381
    %2383 = vrot.lane.b32.xlu0 %v795, 6
    %v2384 = vpop.permute.xlu0 %2383
    %2385 = vrot.lane.b32.xlu0 %v796, 6
    %v2386 = vpop.permute.xlu0 %2385
    %2387 = vrot.lane.b32.xlu0 %v797, 6
    %v2388 = vpop.permute.xlu0 %2387
    %2389 = vrot.lane.b32.xlu0 %v798, 6
    %v2390 = vpop.permute.xlu0 %2389
    %2391 = vrot.lane.b32.xlu0 %v799, 6
    %v2392 = vpop.permute.xlu0 %2391
    %2393 = vrot.lane.b32.xlu0 %v800, 6
    %v2394 = vpop.permute.xlu0 %2393
    %2395 = vrot.lane.b32.xlu0 %v801, 6
    %v2396 = vpop.permute.xlu0 %2395
    %2397 = vrot.lane.b32.xlu0 %v802, 6
    %v2398 = vpop.permute.xlu0 %2397
    %2399 = vrot.lane.b32.xlu0 %v803, 6
    %v2400 = vpop.permute.xlu0 %2399
    %2401 = vrot.lane.b32.xlu0 %v804, 6
    %v2402 = vpop.permute.xlu0 %2401
    %2403 = vrot.lane.b32.xlu0 %v805, 6
    %v2404 = vpop.permute.xlu0 %2403
    %2405 = vrot.lane.b32.xlu0 %v806, 6
    %v2406 = vpop.permute.xlu0 %2405
    %2535 = vrot.lane.b32.xlu0 %v807, 7
    %v2536 = vpop.permute.xlu0 %2535
    %2537 = vrot.lane.b32.xlu0 %v808, 7
    %v2538 = vpop.permute.xlu0 %2537
    %2539 = vrot.lane.b32.xlu0 %v809, 7
    %v2540 = vpop.permute.xlu0 %2539
    %2541 = vrot.lane.b32.xlu0 %v810, 7
    %v2542 = vpop.permute.xlu0 %2541
    %2543 = vrot.lane.b32.xlu0 %v811, 7
    %v2544 = vpop.permute.xlu0 %2543
    %2545 = vrot.lane.b32.xlu0 %v812, 7
    %v2546 = vpop.permute.xlu0 %2545
    %2547 = vrot.lane.b32.xlu0 %v813, 7
    %v2548 = vpop.permute.xlu0 %2547
    %2549 = vrot.lane.b32.xlu0 %v814, 7
    %v2550 = vpop.permute.xlu0 %2549
    %2551 = vrot.lane.b32.xlu0 %v815, 7
    %v2552 = vpop.permute.xlu0 %2551
    %2553 = vrot.lane.b32.xlu0 %v816, 7
    %v2554 = vpop.permute.xlu0 %2553
    %2555 = vrot.lane.b32.xlu0 %v817, 7
    %v2556 = vpop.permute.xlu0 %2555
    %2557 = vrot.lane.b32.xlu0 %v818, 7
    %v2558 = vpop.permute.xlu0 %2557
    %2559 = vrot.lane.b32.xlu0 %v819, 7
    %v2560 = vpop.permute.xlu0 %2559
    %2561 = vrot.lane.b32.xlu0 %v820, 7
    %v2562 = vpop.permute.xlu0 %2561
    %2563 = vrot.lane.b32.xlu0 %v821, 7
    %v2564 = vpop.permute.xlu0 %2563
    %2565 = vrot.lane.b32.xlu0 %v822, 7
    %v2566 = vpop.permute.xlu0 %2565
    %2567 = vrot.lane.b32.xlu0 %v823, 7
    %v2568 = vpop.permute.xlu0 %2567
    %2569 = vrot.lane.b32.xlu0 %v824, 7
    %v2570 = vpop.permute.xlu0 %2569
    %2571 = vrot.lane.b32.xlu0 %v825, 7
    %v2572 = vpop.permute.xlu0 %2571
    %2573 = vrot.lane.b32.xlu0 %v826, 7
    %v2574 = vpop.permute.xlu0 %2573
    %2575 = vrot.lane.b32.xlu0 %v827, 7
    %v2576 = vpop.permute.xlu0 %2575
    %2577 = vrot.lane.b32.xlu0 %v828, 7
    %v2578 = vpop.permute.xlu0 %2577
    %2579 = vrot.lane.b32.xlu0 %v829, 7
    %v2580 = vpop.permute.xlu0 %2579
    %2581 = vrot.lane.b32.xlu0 %v830, 7
    %v2582 = vpop.permute.xlu0 %2581
    %2583 = vrot.lane.b32.xlu0 %v831, 7
    %v2584 = vpop.permute.xlu0 %2583
    %2585 = vrot.lane.b32.xlu0 %v832, 7
    %v2586 = vpop.permute.xlu0 %2585
    %2587 = vrot.lane.b32.xlu0 %v833, 7
    %v2588 = vpop.permute.xlu0 %2587
    %2589 = vrot.lane.b32.xlu0 %v834, 7
    %v2590 = vpop.permute.xlu0 %2589
    %2591 = vrot.lane.b32.xlu0 %v835, 7
    %v2592 = vpop.permute.xlu0 %2591
    %2593 = vrot.lane.b32.xlu0 %v836, 7
    %v2594 = vpop.permute.xlu0 %2593
    %2595 = vrot.lane.b32.xlu0 %v837, 7
    %v2596 = vpop.permute.xlu0 %2595
    %2597 = vrot.lane.b32.xlu0 %v838, 7
    %v2598 = vpop.permute.xlu0 %2597
    %2599 = vrot.lane.b32.xlu0 %v839, 7
    %v2600 = vpop.permute.xlu0 %2599
    %2601 = vrot.lane.b32.xlu0 %v840, 7
    %v2602 = vpop.permute.xlu0 %2601
    %2603 = vrot.lane.b32.xlu0 %v841, 7
    %v2604 = vpop.permute.xlu0 %2603
    %2605 = vrot.lane.b32.xlu0 %v842, 7
    %v2606 = vpop.permute.xlu0 %2605
    %2607 = vrot.lane.b32.xlu0 %v843, 7
    %v2608 = vpop.permute.xlu0 %2607
    %2609 = vrot.lane.b32.xlu0 %v844, 7
    %v2610 = vpop.permute.xlu0 %2609
    %2611 = vrot.lane.b32.xlu0 %v845, 7
    %v2612 = vpop.permute.xlu0 %2611
    %2613 = vrot.lane.b32.xlu0 %v846, 7
    %v2614 = vpop.permute.xlu0 %2613
    %2615 = vrot.lane.b32.xlu0 %v847, 7
    %v2616 = vpop.permute.xlu0 %2615
    %2617 = vrot.lane.b32.xlu0 %v848, 7
    %v2618 = vpop.permute.xlu0 %2617
    %2619 = vrot.lane.b32.xlu0 %v849, 7
    %v2620 = vpop.permute.xlu0 %2619
    %2621 = vrot.lane.b32.xlu0 %v850, 7
    %v2622 = vpop.permute.xlu0 %2621
    %2623 = vrot.lane.b32.xlu0 %v851, 7
    %v2624 = vpop.permute.xlu0 %2623
    %2625 = vrot.lane.b32.xlu0 %v852, 7
    %v2626 = vpop.permute.xlu0 %2625
    %2627 = vrot.lane.b32.xlu0 %v853, 7
    %v2628 = vpop.permute.xlu0 %2627
    %2629 = vrot.lane.b32.xlu0 %v854, 7
    %v2630 = vpop.permute.xlu0 %2629
    %2631 = vrot.lane.b32.xlu0 %v855, 7
    %v2632 = vpop.permute.xlu0 %2631
    %2633 = vrot.lane.b32.xlu0 %v856, 7
    %v2634 = vpop.permute.xlu0 %2633
    %2635 = vrot.lane.b32.xlu0 %v857, 7
    %v2636 = vpop.permute.xlu0 %2635
    %2637 = vrot.lane.b32.xlu0 %v858, 7
    %v2638 = vpop.permute.xlu0 %2637
    %2639 = vrot.lane.b32.xlu0 %v859, 7
    %v2640 = vpop.permute.xlu0 %2639
    %2641 = vrot.lane.b32.xlu0 %v860, 7
    %v2642 = vpop.permute.xlu0 %2641
    %2643 = vrot.lane.b32.xlu0 %v861, 7
    %v2644 = vpop.permute.xlu0 %2643
    %2645 = vrot.lane.b32.xlu0 %v862, 7
    %v2646 = vpop.permute.xlu0 %2645
    %2647 = vrot.lane.b32.xlu0 %v863, 7
    %v2648 = vpop.permute.xlu0 %2647
    %2649 = vrot.lane.b32.xlu0 %v864, 7
    %v2650 = vpop.permute.xlu0 %2649
    %2651 = vrot.lane.b32.xlu0 %v865, 7
    %v2652 = vpop.permute.xlu0 %2651
    %2653 = vrot.lane.b32.xlu0 %v866, 7
    %v2654 = vpop.permute.xlu0 %2653
    %2655 = vrot.lane.b32.xlu0 %v867, 7
    %v2656 = vpop.permute.xlu0 %2655
    %2657 = vrot.lane.b32.xlu0 %v868, 7
    %v2658 = vpop.permute.xlu0 %2657
    %2659 = vrot.lane.b32.xlu0 %v869, 7
    %v2660 = vpop.permute.xlu0 %2659
    %2661 = vrot.lane.b32.xlu0 %v870, 7
    %v2662 = vpop.permute.xlu0 %2661
    %2791 = vrot.lane.b32.xlu0 %v871, 8
    %v2792 = vpop.permute.xlu0 %2791
    %2793 = vrot.lane.b32.xlu0 %v872, 8
    %v2794 = vpop.permute.xlu0 %2793
    %2795 = vrot.lane.b32.xlu0 %v873, 8
    %v2796 = vpop.permute.xlu0 %2795
    %2797 = vrot.lane.b32.xlu0 %v874, 8
    %v2798 = vpop.permute.xlu0 %2797
    %2799 = vrot.lane.b32.xlu0 %v875, 8
    %v2800 = vpop.permute.xlu0 %2799
    %2801 = vrot.lane.b32.xlu0 %v876, 8
    %v2802 = vpop.permute.xlu0 %2801
    %2803 = vrot.lane.b32.xlu0 %v877, 8
    %v2804 = vpop.permute.xlu0 %2803
    %2805 = vrot.lane.b32.xlu0 %v878, 8
    %v2806 = vpop.permute.xlu0 %2805
    %2807 = vrot.lane.b32.xlu0 %v879, 8
    %v2808 = vpop.permute.xlu0 %2807
    %2809 = vrot.lane.b32.xlu0 %v880, 8
    %v2810 = vpop.permute.xlu0 %2809
    %2811 = vrot.lane.b32.xlu0 %v881, 8
    %v2812 = vpop.permute.xlu0 %2811
    %2813 = vrot.lane.b32.xlu0 %v882, 8
    %v2814 = vpop.permute.xlu0 %2813
    %2815 = vrot.lane.b32.xlu0 %v883, 8
    %v2816 = vpop.permute.xlu0 %2815
    %2817 = vrot.lane.b32.xlu0 %v884, 8
    %v2818 = vpop.permute.xlu0 %2817
    %2819 = vrot.lane.b32.xlu0 %v885, 8
    %v2820 = vpop.permute.xlu0 %2819
    %2821 = vrot.lane.b32.xlu0 %v886, 8
    %v2822 = vpop.permute.xlu0 %2821
    %2823 = vrot.lane.b32.xlu0 %v887, 8
    %v2824 = vpop.permute.xlu0 %2823
    %2825 = vrot.lane.b32.xlu0 %v888, 8
    %v2826 = vpop.permute.xlu0 %2825
    %2827 = vrot.lane.b32.xlu0 %v889, 8
    %v2828 = vpop.permute.xlu0 %2827
    %2829 = vrot.lane.b32.xlu0 %v890, 8
    %v2830 = vpop.permute.xlu0 %2829
    %2831 = vrot.lane.b32.xlu0 %v891, 8
    %v2832 = vpop.permute.xlu0 %2831
    %2833 = vrot.lane.b32.xlu0 %v892, 8
    %v2834 = vpop.permute.xlu0 %2833
    %2835 = vrot.lane.b32.xlu0 %v893, 8
    %v2836 = vpop.permute.xlu0 %2835
    %2837 = vrot.lane.b32.xlu0 %v894, 8
    %v2838 = vpop.permute.xlu0 %2837
    %2839 = vrot.lane.b32.xlu0 %v895, 8
    %v2840 = vpop.permute.xlu0 %2839
    %2841 = vrot.lane.b32.xlu0 %v896, 8
    %v2842 = vpop.permute.xlu0 %2841
    %2843 = vrot.lane.b32.xlu0 %v897, 8
    %v2844 = vpop.permute.xlu0 %2843
    %2845 = vrot.lane.b32.xlu0 %v898, 8
    %v2846 = vpop.permute.xlu0 %2845
    %2847 = vrot.lane.b32.xlu0 %v899, 8
    %v2848 = vpop.permute.xlu0 %2847
    %2849 = vrot.lane.b32.xlu0 %v900, 8
    %v2850 = vpop.permute.xlu0 %2849
    %2851 = vrot.lane.b32.xlu0 %v901, 8
    %v2852 = vpop.permute.xlu0 %2851
    %2853 = vrot.lane.b32.xlu0 %v902, 8
    %v2854 = vpop.permute.xlu0 %2853
    %2855 = vrot.lane.b32.xlu0 %v903, 8
    %v2856 = vpop.permute.xlu0 %2855
    %2857 = vrot.lane.b32.xlu0 %v904, 8
    %v2858 = vpop.permute.xlu0 %2857
    %2859 = vrot.lane.b32.xlu0 %v905, 8
    %v2860 = vpop.permute.xlu0 %2859
    %2861 = vrot.lane.b32.xlu0 %v906, 8
    %v2862 = vpop.permute.xlu0 %2861
    %2863 = vrot.lane.b32.xlu0 %v907, 8
    %v2864 = vpop.permute.xlu0 %2863
    %2865 = vrot.lane.b32.xlu0 %v908, 8
    %v2866 = vpop.permute.xlu0 %2865
    %2867 = vrot.lane.b32.xlu0 %v909, 8
    %v2868 = vpop.permute.xlu0 %2867
    %2869 = vrot.lane.b32.xlu0 %v910, 8
    %v2870 = vpop.permute.xlu0 %2869
    %2871 = vrot.lane.b32.xlu0 %v911, 8
    %v2872 = vpop.permute.xlu0 %2871
    %2873 = vrot.lane.b32.xlu0 %v912, 8
    %v2874 = vpop.permute.xlu0 %2873
    %2875 = vrot.lane.b32.xlu0 %v913, 8
    %v2876 = vpop.permute.xlu0 %2875
    %2877 = vrot.lane.b32.xlu0 %v914, 8
    %v2878 = vpop.permute.xlu0 %2877
    %2879 = vrot.lane.b32.xlu0 %v915, 8
    %v2880 = vpop.permute.xlu0 %2879
    %2881 = vrot.lane.b32.xlu0 %v916, 8
    %v2882 = vpop.permute.xlu0 %2881
    %2883 = vrot.lane.b32.xlu0 %v917, 8
    %v2884 = vpop.permute.xlu0 %2883
    %2885 = vrot.lane.b32.xlu0 %v918, 8
    %v2886 = vpop.permute.xlu0 %2885
    %2887 = vrot.lane.b32.xlu0 %v919, 8
    %v2888 = vpop.permute.xlu0 %2887
    %2889 = vrot.lane.b32.xlu0 %v920, 8
    %v2890 = vpop.permute.xlu0 %2889
    %2891 = vrot.lane.b32.xlu0 %v921, 8
    %v2892 = vpop.permute.xlu0 %2891
    %2893 = vrot.lane.b32.xlu0 %v922, 8
    %v2894 = vpop.permute.xlu0 %2893
    %2895 = vrot.lane.b32.xlu0 %v923, 8
    %v2896 = vpop.permute.xlu0 %2895
    %2897 = vrot.lane.b32.xlu0 %v924, 8
    %v2898 = vpop.permute.xlu0 %2897
    %2899 = vrot.lane.b32.xlu0 %v925, 8
    %v2900 = vpop.permute.xlu0 %2899
    %2901 = vrot.lane.b32.xlu0 %v926, 8
    %v2902 = vpop.permute.xlu0 %2901
    %2903 = vrot.lane.b32.xlu0 %v927, 8
    %v2904 = vpop.permute.xlu0 %2903
    %2905 = vrot.lane.b32.xlu0 %v928, 8
    %v2906 = vpop.permute.xlu0 %2905
    %2907 = vrot.lane.b32.xlu0 %v929, 8
    %v2908 = vpop.permute.xlu0 %2907
    %2909 = vrot.lane.b32.xlu0 %v930, 8
    %v2910 = vpop.permute.xlu0 %2909
    %2911 = vrot.lane.b32.xlu0 %v931, 8
    %v2912 = vpop.permute.xlu0 %2911
    %2913 = vrot.lane.b32.xlu0 %v932, 8
    %v2914 = vpop.permute.xlu0 %2913
    %2915 = vrot.lane.b32.xlu0 %v933, 8
    %v2916 = vpop.permute.xlu0 %2915
    %2917 = vrot.lane.b32.xlu0 %v934, 8
    %v2918 = vpop.permute.xlu0 %2917
    %v2983 = vsel %vm183, %v358, %v1000
    %v2984 = vsel %vm183, %v359, %v1002
    %v2985 = vsel %vm183, %v360, %v1004
    %v2986 = vsel %vm183, %v361, %v1006
    %v2987 = vsel %vm183, %v362, %v1008
    %v2988 = vsel %vm183, %v363, %v1010
    %v2989 = vsel %vm183, %v364, %v1012
    %v2990 = vsel %vm183, %v365, %v1014
    %v2991 = vsel %vm183, %v366, %v1016
    %v2992 = vsel %vm183, %v367, %v1018
    %v2993 = vsel %vm183, %v368, %v1020
    %v2994 = vsel %vm183, %v369, %v1022
    %v2995 = vsel %vm183, %v370, %v1024
    %v2996 = vsel %vm183, %v371, %v1026
    %v2997 = vsel %vm183, %v372, %v1028
    %v2998 = vsel %vm183, %v373, %v1030
    %v2999 = vsel %vm183, %v374, %v1032
    %v3000 = vsel %vm183, %v375, %v1034
    %v3001 = vsel %vm183, %v376, %v1036
    %v3002 = vsel %vm183, %v377, %v1038
    %v3003 = vsel %vm183, %v378, %v1040
    %v3004 = vsel %vm183, %v379, %v1042
    %v3005 = vsel %vm183, %v380, %v1044
    %v3006 = vsel %vm183, %v381, %v1046
    %v3007 = vsel %vm183, %v382, %v1048
    %v3008 = vsel %vm183, %v383, %v1050
    %v3009 = vsel %vm183, %v384, %v1052
    %v3010 = vsel %vm183, %v385, %v1054
    %v3011 = vsel %vm183, %v386, %v1056
    %v3012 = vsel %vm183, %v387, %v1058
    %v3013 = vsel %vm183, %v388, %v1060
    %v3014 = vsel %vm183, %v389, %v1062
    %v3015 = vsel %vm183, %v390, %v1064
    %v3016 = vsel %vm183, %v391, %v1066
    %v3017 = vsel %vm183, %v392, %v1068
    %v3018 = vsel %vm183, %v393, %v1070
    %v3019 = vsel %vm183, %v394, %v1072
    %v3020 = vsel %vm183, %v395, %v1074
    %v3021 = vsel %vm183, %v396, %v1076
    %v3022 = vsel %vm183, %v397, %v1078
    %v3023 = vsel %vm183, %v398, %v1080
    %v3024 = vsel %vm183, %v399, %v1082
    %v3025 = vsel %vm183, %v400, %v1084
    %v3026 = vsel %vm183, %v401, %v1086
    %v3027 = vsel %vm183, %v402, %v1088
    %v3028 = vsel %vm183, %v403, %v1090
    %v3029 = vsel %vm183, %v404, %v1092
    %v3030 = vsel %vm183, %v405, %v1094
    %v3031 = vsel %vm183, %v406, %v1096
    %v3032 = vsel %vm183, %v407, %v1098
    %v3033 = vsel %vm183, %v408, %v1100
    %v3034 = vsel %vm183, %v409, %v1102
    %v3035 = vsel %vm183, %v410, %v1104
    %v3036 = vsel %vm183, %v411, %v1106
    %v3037 = vsel %vm183, %v412, %v1108
    %v3038 = vsel %vm183, %v413, %v1110
    %v3039 = vsel %vm183, %v414, %v1112
    %v3040 = vsel %vm183, %v415, %v1114
    %v3041 = vsel %vm183, %v416, %v1116
    %v3042 = vsel %vm183, %v417, %v1118
    %v3043 = vsel %vm183, %v418, %v1120
    %v3044 = vsel %vm183, %v419, %v1122
    %v3045 = vsel %vm183, %v420, %v1124
    %v3046 = vsel %vm183, %v421, %v1126
    %vm3047 = vcmask 15360
    %v3048 = vsel %vm3047, %v2983, %v1256
    %v3049 = vsel %vm3047, %v2984, %v1258
    %v3050 = vsel %vm3047, %v2985, %v1260
    %v3051 = vsel %vm3047, %v2986, %v1262
    %v3052 = vsel %vm3047, %v2987, %v1264
    %v3053 = vsel %vm3047, %v2988, %v1266
    %v3054 = vsel %vm3047, %v2989, %v1268
    %v3055 = vsel %vm3047, %v2990, %v1270
    %v3056 = vsel %vm3047, %v2991, %v1272
    %v3057 = vsel %vm3047, %v2992, %v1274
    %v3058 = vsel %vm3047, %v2993, %v1276
    %v3059 = vsel %vm3047, %v2994, %v1278
    %v3060 = vsel %vm3047, %v2995, %v1280
    %v3061 = vsel %vm3047, %v2996, %v1282
    %v3062 = vsel %vm3047, %v2997, %v1284
    %v3063 = vsel %vm3047, %v2998, %v1286
    %v3064 = vsel %vm3047, %v2999, %v1288
    %v3065 = vsel %vm3047, %v3000, %v1290
    %v3066 = vsel %vm3047, %v3001, %v1292
    %v3067 = vsel %vm3047, %v3002, %v1294
    %v3068 = vsel %vm3047, %v3003, %v1296
    %v3069 = vsel %vm3047, %v3004, %v1298
    %v3070 = vsel %vm3047, %v3005, %v1300
    %v3071 = vsel %vm3047, %v3006, %v1302
    %v3072 = vsel %vm3047, %v3007, %v1304
    %v3073 = vsel %vm3047, %v3008, %v1306
    %v3074 = vsel %vm3047, %v3009, %v1308
    %v3075 = vsel %vm3047, %v3010, %v1310
    %v3076 = vsel %vm3047, %v3011, %v1312
    %v3077 = vsel %vm3047, %v3012, %v1314
    %v3078 = vsel %vm3047, %v3013, %v1316
    %v3079 = vsel %vm3047, %v3014, %v1318
    %v3080 = vsel %vm3047, %v3015, %v1320
    %v3081 = vsel %vm3047, %v3016, %v1322
    %v3082 = vsel %vm3047, %v3017, %v1324
    %v3083 = vsel %vm3047, %v3018, %v1326
    %v3084 = vsel %vm3047, %v3019, %v1328
    %v3085 = vsel %vm3047, %v3020, %v1330
    %v3086 = vsel %vm3047, %v3021, %v1332
    %v3087 = vsel %vm3047, %v3022, %v1334
    %v3088 = vsel %vm3047, %v3023, %v1336
    %v3089 = vsel %vm3047, %v3024, %v1338
    %v3090 = vsel %vm3047, %v3025, %v1340
    %v3091 = vsel %vm3047, %v3026, %v1342
    %v3092 = vsel %vm3047, %v3027, %v1344
    %v3093 = vsel %vm3047, %v3028, %v1346
    %v3094 = vsel %vm3047, %v3029, %v1348
    %v3095 = vsel %vm3047, %v3030, %v1350
    %v3096 = vsel %vm3047, %v3031, %v1352
    %v3097 = vsel %vm3047, %v3032, %v1354
    %v3098 = vsel %vm3047, %v3033, %v1356
    %v3099 = vsel %vm3047, %v3034, %v1358
    %v3100 = vsel %vm3047, %v3035, %v1360
    %v3101 = vsel %vm3047, %v3036, %v1362
    %v3102 = vsel %vm3047, %v3037, %v1364
    %v3103 = vsel %vm3047, %v3038, %v1366
    %v3104 = vsel %vm3047, %v3039, %v1368
    %v3105 = vsel %vm3047, %v3040, %v1370
    %v3106 = vsel %vm3047, %v3041, %v1372
    %v3107 = vsel %vm3047, %v3042, %v1374
    %v3108 = vsel %vm3047, %v3043, %v1376
    %v3109 = vsel %vm3047, %v3044, %v1378
    %v3110 = vsel %vm3047, %v3045, %v1380
    %v3111 = vsel %vm3047, %v3046, %v1382
    %vm3112 = vcmask 23552
    %v3113 = vsel %vm3112, %v3048, %v1512
    %v3114 = vsel %vm3112, %v3049, %v1514
    %v3115 = vsel %vm3112, %v3050, %v1516
    %v3116 = vsel %vm3112, %v3051, %v1518
    %v3117 = vsel %vm3112, %v3052, %v1520
    %v3118 = vsel %vm3112, %v3053, %v1522
    %v3119 = vsel %vm3112, %v3054, %v1524
    %v3120 = vsel %vm3112, %v3055, %v1526
    %v3121 = vsel %vm3112, %v3056, %v1528
    %v3122 = vsel %vm3112, %v3057, %v1530
    %v3123 = vsel %vm3112, %v3058, %v1532
    %v3124 = vsel %vm3112, %v3059, %v1534
    %v3125 = vsel %vm3112, %v3060, %v1536
    %v3126 = vsel %vm3112, %v3061, %v1538
    %v3127 = vsel %vm3112, %v3062, %v1540
    %v3128 = vsel %vm3112, %v3063, %v1542
    %v3129 = vsel %vm3112, %v3064, %v1544
    %v3130 = vsel %vm3112, %v3065, %v1546
    %v3131 = vsel %vm3112, %v3066, %v1548
    %v3132 = vsel %vm3112, %v3067, %v1550
    %v3133 = vsel %vm3112, %v3068, %v1552
    %v3134 = vsel %vm3112, %v3069, %v1554
    %v3135 = vsel %vm3112, %v3070, %v1556
    %v3136 = vsel %vm3112, %v3071, %v1558
    %v3137 = vsel %vm3112, %v3072, %v1560
    %v3138 = vsel %vm3112, %v3073, %v1562
    %v3139 = vsel %vm3112, %v3074, %v1564
    %v3140 = vsel %vm3112, %v3075, %v1566
    %v3141 = vsel %vm3112, %v3076, %v1568
    %v3142 = vsel %vm3112, %v3077, %v1570
    %v3143 = vsel %vm3112, %v3078, %v1572
    %v3144 = vsel %vm3112, %v3079, %v1574
    %v3145 = vsel %vm3112, %v3080, %v1576
    %v3146 = vsel %vm3112, %v3081, %v1578
    %v3147 = vsel %vm3112, %v3082, %v1580
    %v3148 = vsel %vm3112, %v3083, %v1582
    %v3149 = vsel %vm3112, %v3084, %v1584
    %v3150 = vsel %vm3112, %v3085, %v1586
    %v3151 = vsel %vm3112, %v3086, %v1588
    %v3152 = vsel %vm3112, %v3087, %v1590
    %v3153 = vsel %vm3112, %v3088, %v1592
    %v3154 = vsel %vm3112, %v3089, %v1594
    %v3155 = vsel %vm3112, %v3090, %v1596
    %v3156 = vsel %vm3112, %v3091, %v1598
    %v3157 = vsel %vm3112, %v3092, %v1600
    %v3158 = vsel %vm3112, %v3093, %v1602
    %v3159 = vsel %vm3112, %v3094, %v1604
    %v3160 = vsel %vm3112, %v3095, %v1606
    %v3161 = vsel %vm3112, %v3096, %v1608
    %v3162 = vsel %vm3112, %v3097, %v1610
    %v3163 = vsel %vm3112, %v3098, %v1612
    %v3164 = vsel %vm3112, %v3099, %v1614
    %v3165 = vsel %vm3112, %v3100, %v1616
    %v3166 = vsel %vm3112, %v3101, %v1618
    %v3167 = vsel %vm3112, %v3102, %v1620
    %v3168 = vsel %vm3112, %v3103, %v1622
    %v3169 = vsel %vm3112, %v3104, %v1624
    %v3170 = vsel %vm3112, %v3105, %v1626
    %v3171 = vsel %vm3112, %v3106, %v1628
    %v3172 = vsel %vm3112, %v3107, %v1630
    %v3173 = vsel %vm3112, %v3108, %v1632
    %v3174 = vsel %vm3112, %v3109, %v1634
    %v3175 = vsel %vm3112, %v3110, %v1636
    %v3176 = vsel %vm3112, %v3111, %v1638
    %vm3177 = vcmask 31744
    %v3178 = vsel %vm3177, %v3113, %v1768
    %v3179 = vsel %vm3177, %v3114, %v1770
    %v3180 = vsel %vm3177, %v3115, %v1772
    %v3181 = vsel %vm3177, %v3116, %v1774
    %v3182 = vsel %vm3177, %v3117, %v1776
    %v3183 = vsel %vm3177, %v3118, %v1778
    %v3184 = vsel %vm3177, %v3119, %v1780
    %v3185 = vsel %vm3177, %v3120, %v1782
    %v3186 = vsel %vm3177, %v3121, %v1784
    %v3187 = vsel %vm3177, %v3122, %v1786
    %v3188 = vsel %vm3177, %v3123, %v1788
    %v3189 = vsel %vm3177, %v3124, %v1790
    %v3190 = vsel %vm3177, %v3125, %v1792
    %v3191 = vsel %vm3177, %v3126, %v1794
    %v3192 = vsel %vm3177, %v3127, %v1796
    %v3193 = vsel %vm3177, %v3128, %v1798
    %v3194 = vsel %vm3177, %v3129, %v1800
    %v3195 = vsel %vm3177, %v3130, %v1802
    %v3196 = vsel %vm3177, %v3131, %v1804
    %v3197 = vsel %vm3177, %v3132, %v1806
    %v3198 = vsel %vm3177, %v3133, %v1808
    %v3199 = vsel %vm3177, %v3134, %v1810
    %v3200 = vsel %vm3177, %v3135, %v1812
    %v3201 = vsel %vm3177, %v3136, %v1814
    %v3202 = vsel %vm3177, %v3137, %v1816
    %v3203 = vsel %vm3177, %v3138, %v1818
    %v3204 = vsel %vm3177, %v3139, %v1820
    %v3205 = vsel %vm3177, %v3140, %v1822
    %v3206 = vsel %vm3177, %v3141, %v1824
    %v3207 = vsel %vm3177, %v3142, %v1826
    %v3208 = vsel %vm3177, %v3143, %v1828
    %v3209 = vsel %vm3177, %v3144, %v1830
    %v3210 = vsel %vm3177, %v3145, %v1832
    %v3211 = vsel %vm3177, %v3146, %v1834
    %v3212 = vsel %vm3177, %v3147, %v1836
    %v3213 = vsel %vm3177, %v3148, %v1838
    %v3214 = vsel %vm3177, %v3149, %v1840
    %v3215 = vsel %vm3177, %v3150, %v1842
    %v3216 = vsel %vm3177, %v3151, %v1844
    %v3217 = vsel %vm3177, %v3152, %v1846
    %v3218 = vsel %vm3177, %v3153, %v1848
    %v3219 = vsel %vm3177, %v3154, %v1850
    %v3220 = vsel %vm3177, %v3155, %v1852
    %v3221 = vsel %vm3177, %v3156, %v1854
    %v3222 = vsel %vm3177, %v3157, %v1856
    %v3223 = vsel %vm3177, %v3158, %v1858
    %v3224 = vsel %vm3177, %v3159, %v1860
    %v3225 = vsel %vm3177, %v3160, %v1862
    %v3226 = vsel %vm3177, %v3161, %v1864
    %v3227 = vsel %vm3177, %v3162, %v1866
    %v3228 = vsel %vm3177, %v3163, %v1868
    %v3229 = vsel %vm3177, %v3164, %v1870
    %v3230 = vsel %vm3177, %v3165, %v1872
    %v3231 = vsel %vm3177, %v3166, %v1874
    %v3232 = vsel %vm3177, %v3167, %v1876
    %v3233 = vsel %vm3177, %v3168, %v1878
    %v3234 = vsel %vm3177, %v3169, %v1880
    %v3235 = vsel %vm3177, %v3170, %v1882
    %v3236 = vsel %vm3177, %v3171, %v1884
    %v3237 = vsel %vm3177, %v3172, %v1886
    %v3238 = vsel %vm3177, %v3173, %v1888
    %v3239 = vsel %vm3177, %v3174, %v1890
    %v3240 = vsel %vm3177, %v3175, %v1892
    %v3241 = vsel %vm3177, %v3176, %v1894
    %vm3242 = vcmask 39936
    %v3243 = vsel %vm3242, %v3178, %v2024
    %v3244 = vsel %vm3242, %v3179, %v2026
    %v3245 = vsel %vm3242, %v3180, %v2028
    %v3246 = vsel %vm3242, %v3181, %v2030
    %v3247 = vsel %vm3242, %v3182, %v2032
    %v3248 = vsel %vm3242, %v3183, %v2034
    %v3249 = vsel %vm3242, %v3184, %v2036
    %v3250 = vsel %vm3242, %v3185, %v2038
    %v3251 = vsel %vm3242, %v3186, %v2040
    %v3252 = vsel %vm3242, %v3187, %v2042
    %v3253 = vsel %vm3242, %v3188, %v2044
    %v3254 = vsel %vm3242, %v3189, %v2046
    %v3255 = vsel %vm3242, %v3190, %v2048
    %v3256 = vsel %vm3242, %v3191, %v2050
    %v3257 = vsel %vm3242, %v3192, %v2052
    %v3258 = vsel %vm3242, %v3193, %v2054
    %v3259 = vsel %vm3242, %v3194, %v2056
    %v3260 = vsel %vm3242, %v3195, %v2058
    %v3261 = vsel %vm3242, %v3196, %v2060
    %v3262 = vsel %vm3242, %v3197, %v2062
    %v3263 = vsel %vm3242, %v3198, %v2064
    %v3264 = vsel %vm3242, %v3199, %v2066
    %v3265 = vsel %vm3242, %v3200, %v2068
    %v3266 = vsel %vm3242, %v3201, %v2070
    %v3267 = vsel %vm3242, %v3202, %v2072
    %v3268 = vsel %vm3242, %v3203, %v2074
    %v3269 = vsel %vm3242, %v3204, %v2076
    %v3270 = vsel %vm3242, %v3205, %v2078
    %v3271 = vsel %vm3242, %v3206, %v2080
    %v3272 = vsel %vm3242, %v3207, %v2082
    %v3273 = vsel %vm3242, %v3208, %v2084
    %v3274 = vsel %vm3242, %v3209, %v2086
    %v3275 = vsel %vm3242, %v3210, %v2088
    %v3276 = vsel %vm3242, %v3211, %v2090
    %v3277 = vsel %vm3242, %v3212, %v2092
    %v3278 = vsel %vm3242, %v3213, %v2094
    %v3279 = vsel %vm3242, %v3214, %v2096
    %v3280 = vsel %vm3242, %v3215, %v2098
    %v3281 = vsel %vm3242, %v3216, %v2100
    %v3282 = vsel %vm3242, %v3217, %v2102
    %v3283 = vsel %vm3242, %v3218, %v2104
    %v3284 = vsel %vm3242, %v3219, %v2106
    %v3285 = vsel %vm3242, %v3220, %v2108
    %v3286 = vsel %vm3242, %v3221, %v2110
    %v3287 = vsel %vm3242, %v3222, %v2112
    %v3288 = vsel %vm3242, %v3223, %v2114
    %v3289 = vsel %vm3242, %v3224, %v2116
    %v3290 = vsel %vm3242, %v3225, %v2118
    %v3291 = vsel %vm3242, %v3226, %v2120
    %v3292 = vsel %vm3242, %v3227, %v2122
    %v3293 = vsel %vm3242, %v3228, %v2124
    %v3294 = vsel %vm3242, %v3229, %v2126
    %v3295 = vsel %vm3242, %v3230, %v2128
    %v3296 = vsel %vm3242, %v3231, %v2130
    %v3297 = vsel %vm3242, %v3232, %v2132
    %v3298 = vsel %vm3242, %v3233, %v2134
    %v3299 = vsel %vm3242, %v3234, %v2136
    %v3300 = vsel %vm3242, %v3235, %v2138
    %v3301 = vsel %vm3242, %v3236, %v2140
    %v3302 = vsel %vm3242, %v3237, %v2142
    %v3303 = vsel %vm3242, %v3238, %v2144
    %v3304 = vsel %vm3242, %v3239, %v2146
    %v3305 = vsel %vm3242, %v3240, %v2148
    %v3306 = vsel %vm3242, %v3241, %v2150
    %vm3307 = vcmask 48128
    %v3308 = vsel %vm3307, %v3243, %v2280
    %v3309 = vsel %vm3307, %v3244, %v2282
    %v3310 = vsel %vm3307, %v3245, %v2284
    %v3311 = vsel %vm3307, %v3246, %v2286
    %v3312 = vsel %vm3307, %v3247, %v2288
    %v3313 = vsel %vm3307, %v3248, %v2290
    %v3314 = vsel %vm3307, %v3249, %v2292
    %v3315 = vsel %vm3307, %v3250, %v2294
    %v3316 = vsel %vm3307, %v3251, %v2296
    %v3317 = vsel %vm3307, %v3252, %v2298
    %v3318 = vsel %vm3307, %v3253, %v2300
    %v3319 = vsel %vm3307, %v3254, %v2302
    %v3320 = vsel %vm3307, %v3255, %v2304
    %v3321 = vsel %vm3307, %v3256, %v2306
    %v3322 = vsel %vm3307, %v3257, %v2308
    %v3323 = vsel %vm3307, %v3258, %v2310
    %v3324 = vsel %vm3307, %v3259, %v2312
    %v3325 = vsel %vm3307, %v3260, %v2314
    %v3326 = vsel %vm3307, %v3261, %v2316
    %v3327 = vsel %vm3307, %v3262, %v2318
    %v3328 = vsel %vm3307, %v3263, %v2320
    %v3329 = vsel %vm3307, %v3264, %v2322
    %v3330 = vsel %vm3307, %v3265, %v2324
    %v3331 = vsel %vm3307, %v3266, %v2326
    %v3332 = vsel %vm3307, %v3267, %v2328
    %v3333 = vsel %vm3307, %v3268, %v2330
    %v3334 = vsel %vm3307, %v3269, %v2332
    %v3335 = vsel %vm3307, %v3270, %v2334
    %v3336 = vsel %vm3307, %v3271, %v2336
    %v3337 = vsel %vm3307, %v3272, %v2338
    %v3338 = vsel %vm3307, %v3273, %v2340
    %v3339 = vsel %vm3307, %v3274, %v2342
    %v3340 = vsel %vm3307, %v3275, %v2344
    %v3341 = vsel %vm3307, %v3276, %v2346
    %v3342 = vsel %vm3307, %v3277, %v2348
    %v3343 = vsel %vm3307, %v3278, %v2350
    %v3344 = vsel %vm3307, %v3279, %v2352
    %v3345 = vsel %vm3307, %v3280, %v2354
    %v3346 = vsel %vm3307, %v3281, %v2356
    %v3347 = vsel %vm3307, %v3282, %v2358
    %v3348 = vsel %vm3307, %v3283, %v2360
    %v3349 = vsel %vm3307, %v3284, %v2362
    %v3350 = vsel %vm3307, %v3285, %v2364
    %v3351 = vsel %vm3307, %v3286, %v2366
    %v3352 = vsel %vm3307, %v3287, %v2368
    %v3353 = vsel %vm3307, %v3288, %v2370
    %v3354 = vsel %vm3307, %v3289, %v2372
    %v3355 = vsel %vm3307, %v3290, %v2374
    %v3356 = vsel %vm3307, %v3291, %v2376
    %v3357 = vsel %vm3307, %v3292, %v2378
    %v3358 = vsel %vm3307, %v3293, %v2380
    %v3359 = vsel %vm3307, %v3294, %v2382
    %v3360 = vsel %vm3307, %v3295, %v2384
    %v3361 = vsel %vm3307, %v3296, %v2386
    %v3362 = vsel %vm3307, %v3297, %v2388
    %v3363 = vsel %vm3307, %v3298, %v2390
    %v3364 = vsel %vm3307, %v3299, %v2392
    %v3365 = vsel %vm3307, %v3300, %v2394
    %v3366 = vsel %vm3307, %v3301, %v2396
    %v3367 = vsel %vm3307, %v3302, %v2398
    %v3368 = vsel %vm3307, %v3303, %v2400
    %v3369 = vsel %vm3307, %v3304, %v2402
    %v3370 = vsel %vm3307, %v3305, %v2404
    %v3371 = vsel %vm3307, %v3306, %v2406
    %vm3372 = vcmask 56320
    %v3373 = vsel %vm3372, %v3308, %v2536
    %v3374 = vsel %vm3372, %v3309, %v2538
    %v3375 = vsel %vm3372, %v3310, %v2540
    %v3376 = vsel %vm3372, %v3311, %v2542
    %v3377 = vsel %vm3372, %v3312, %v2544
    %v3378 = vsel %vm3372, %v3313, %v2546
    %v3379 = vsel %vm3372, %v3314, %v2548
    %v3380 = vsel %vm3372, %v3315, %v2550
    %v3381 = vsel %vm3372, %v3316, %v2552
    %v3382 = vsel %vm3372, %v3317, %v2554
    %v3383 = vsel %vm3372, %v3318, %v2556
    %v3384 = vsel %vm3372, %v3319, %v2558
    %v3385 = vsel %vm3372, %v3320, %v2560
    %v3386 = vsel %vm3372, %v3321, %v2562
    %v3387 = vsel %vm3372, %v3322, %v2564
    %v3388 = vsel %vm3372, %v3323, %v2566
    %v3389 = vsel %vm3372, %v3324, %v2568
    %v3390 = vsel %vm3372, %v3325, %v2570
    %v3391 = vsel %vm3372, %v3326, %v2572
    %v3392 = vsel %vm3372, %v3327, %v2574
    %v3393 = vsel %vm3372, %v3328, %v2576
    %v3394 = vsel %vm3372, %v3329, %v2578
    %v3395 = vsel %vm3372, %v3330, %v2580
    %v3396 = vsel %vm3372, %v3331, %v2582
    %v3397 = vsel %vm3372, %v3332, %v2584
    %v3398 = vsel %vm3372, %v3333, %v2586
    %v3399 = vsel %vm3372, %v3334, %v2588
    %v3400 = vsel %vm3372, %v3335, %v2590
    %v3401 = vsel %vm3372, %v3336, %v2592
    %v3402 = vsel %vm3372, %v3337, %v2594
    %v3403 = vsel %vm3372, %v3338, %v2596
    %v3404 = vsel %vm3372, %v3339, %v2598
    %v3405 = vsel %vm3372, %v3340, %v2600
    %v3406 = vsel %vm3372, %v3341, %v2602
    %v3407 = vsel %vm3372, %v3342, %v2604
    %v3408 = vsel %vm3372, %v3343, %v2606
    %v3409 = vsel %vm3372, %v3344, %v2608
    %v3410 = vsel %vm3372, %v3345, %v2610
    %v3411 = vsel %vm3372, %v3346, %v2612
    %v3412 = vsel %vm3372, %v3347, %v2614
    %v3413 = vsel %vm3372, %v3348, %v2616
    %v3414 = vsel %vm3372, %v3349, %v2618
    %v3415 = vsel %vm3372, %v3350, %v2620
    %v3416 = vsel %vm3372, %v3351, %v2622
    %v3417 = vsel %vm3372, %v3352, %v2624
    %v3418 = vsel %vm3372, %v3353, %v2626
    %v3419 = vsel %vm3372, %v3354, %v2628
    %v3420 = vsel %vm3372, %v3355, %v2630
    %v3421 = vsel %vm3372, %v3356, %v2632
    %v3422 = vsel %vm3372, %v3357, %v2634
    %v3423 = vsel %vm3372, %v3358, %v2636
    %v3424 = vsel %vm3372, %v3359, %v2638
    %v3425 = vsel %vm3372, %v3360, %v2640
    %v3426 = vsel %vm3372, %v3361, %v2642
    %v3427 = vsel %vm3372, %v3362, %v2644
    %v3428 = vsel %vm3372, %v3363, %v2646
    %v3429 = vsel %vm3372, %v3364, %v2648
    %v3430 = vsel %vm3372, %v3365, %v2650
    %v3431 = vsel %vm3372, %v3366, %v2652
    %v3432 = vsel %vm3372, %v3367, %v2654
    %v3433 = vsel %vm3372, %v3368, %v2656
    %v3434 = vsel %vm3372, %v3369, %v2658
    %v3435 = vsel %vm3372, %v3370, %v2660
    %v3436 = vsel %vm3372, %v3371, %v2662
    %vm3437 = vcmask 64512
    %v3438 = vsel %vm3437, %v3373, %v2792
    %v3439 = vsel %vm3437, %v3374, %v2794
    %v3440 = vsel %vm3437, %v3375, %v2796
    %v3441 = vsel %vm3437, %v3376, %v2798
    %v3442 = vsel %vm3437, %v3377, %v2800
    %v3443 = vsel %vm3437, %v3378, %v2802
    %v3444 = vsel %vm3437, %v3379, %v2804
    %v3445 = vsel %vm3437, %v3380, %v2806
    %v3446 = vsel %vm3437, %v3381, %v2808
    %v3447 = vsel %vm3437, %v3382, %v2810
    %v3448 = vsel %vm3437, %v3383, %v2812
    %v3449 = vsel %vm3437, %v3384, %v2814
    %v3450 = vsel %vm3437, %v3385, %v2816
    %v3451 = vsel %vm3437, %v3386, %v2818
    %v3452 = vsel %vm3437, %v3387, %v2820
    %v3453 = vsel %vm3437, %v3388, %v2822
    %v3454 = vsel %vm3437, %v3389, %v2824
    %v3455 = vsel %vm3437, %v3390, %v2826
    %v3456 = vsel %vm3437, %v3391, %v2828
    %v3457 = vsel %vm3437, %v3392, %v2830
    %v3458 = vsel %vm3437, %v3393, %v2832
    %v3459 = vsel %vm3437, %v3394, %v2834
    %v3460 = vsel %vm3437, %v3395, %v2836
    %v3461 = vsel %vm3437, %v3396, %v2838
    %v3462 = vsel %vm3437, %v3397, %v2840
    %v3463 = vsel %vm3437, %v3398, %v2842
    %v3464 = vsel %vm3437, %v3399, %v2844
    %v3465 = vsel %vm3437, %v3400, %v2846
    %v3466 = vsel %vm3437, %v3401, %v2848
    %v3467 = vsel %vm3437, %v3402, %v2850
    %v3468 = vsel %vm3437, %v3403, %v2852
    %v3469 = vsel %vm3437, %v3404, %v2854
    %v3470 = vsel %vm3437, %v3405, %v2856
    %v3471 = vsel %vm3437, %v3406, %v2858
    %v3472 = vsel %vm3437, %v3407, %v2860
    %v3473 = vsel %vm3437, %v3408, %v2862
    %v3474 = vsel %vm3437, %v3409, %v2864
    %v3475 = vsel %vm3437, %v3410, %v2866
    %v3476 = vsel %vm3437, %v3411, %v2868
    %v3477 = vsel %vm3437, %v3412, %v2870
    %v3478 = vsel %vm3437, %v3413, %v2872
    %v3479 = vsel %vm3437, %v3414, %v2874
    %v3480 = vsel %vm3437, %v3415, %v2876
    %v3481 = vsel %vm3437, %v3416, %v2878
    %v3482 = vsel %vm3437, %v3417, %v2880
    %v3483 = vsel %vm3437, %v3418, %v2882
    %v3484 = vsel %vm3437, %v3419, %v2884
    %v3485 = vsel %vm3437, %v3420, %v2886
    %v3486 = vsel %vm3437, %v3421, %v2888
    %v3487 = vsel %vm3437, %v3422, %v2890
    %v3488 = vsel %vm3437, %v3423, %v2892
    %v3489 = vsel %vm3437, %v3424, %v2894
    %v3490 = vsel %vm3437, %v3425, %v2896
    %v3491 = vsel %vm3437, %v3426, %v2898
    %v3492 = vsel %vm3437, %v3427, %v2900
    %v3493 = vsel %vm3437, %v3428, %v2902
    %v3494 = vsel %vm3437, %v3429, %v2904
    %v3495 = vsel %vm3437, %v3430, %v2906
    %v3496 = vsel %vm3437, %v3431, %v2908
    %v3497 = vsel %vm3437, %v3432, %v2910
    %v3498 = vsel %vm3437, %v3433, %v2912
    %v3499 = vsel %vm3437, %v3434, %v2914
    %v3500 = vsel %vm3437, %v3435, %v2916
    %v3501 = vsel %vm3437, %v3436, %v2918
    %v3502 = vld [vmem:[#allocation5] sm:$0xff]
    %v3503 = vld [vmem:[#allocation5 + $0x8] sm:$0x1]
    %v3504 = vld [vmem:[#allocation8] sm:$0x1]
    %v3506 = vlaneseq
    %v3507 = vshrl.u32 %v3506, 7
    %v3508 = vsub.s32 0, %v3507
    %v3509 = vrot.slane %v3504, %v3508
    %vm3511 = vcmask 72704
    %v3513 = vsel %vm3511, %v3438, 0
    %v3516 = vsel %vm3511, %v3439, 0
    %v3519 = vsel %vm3511, %v3440, 0
    %v3522 = vsel %vm3511, %v3441, 0
    %v3525 = vsel %vm3511, %v3442, 0
    %v3528 = vsel %vm3511, %v3443, 0
    %v3531 = vsel %vm3511, %v3444, 0
    %v3534 = vsel %vm3511, %v3445, 0
    %v3537 = vsel %vm3511, %v3446, 0
    %v3540 = vsel %vm3511, %v3447, 0
    %v3543 = vsel %vm3511, %v3448, 0
    %v3546 = vsel %vm3511, %v3449, 0
    %v3549 = vsel %vm3511, %v3450, 0
    %v3552 = vsel %vm3511, %v3451, 0
    %v3555 = vsel %vm3511, %v3452, 0
    %v3558 = vsel %vm3511, %v3453, 0
    %v3561 = vsel %vm3511, %v3454, 0
    %v3564 = vsel %vm3511, %v3455, 0
    %v3567 = vsel %vm3511, %v3456, 0
    %v3570 = vsel %vm3511, %v3457, 0
    %v3573 = vsel %vm3511, %v3458, 0
    %v3576 = vsel %vm3511, %v3459, 0
    %v3579 = vsel %vm3511, %v3460, 0
    %v3582 = vsel %vm3511, %v3461, 0
    %v3585 = vsel %vm3511, %v3462, 0
    %v3588 = vsel %vm3511, %v3463, 0
    %v3591 = vsel %vm3511, %v3464, 0
    %v3594 = vsel %vm3511, %v3465, 0
    %v3597 = vsel %vm3511, %v3466, 0
    %v3600 = vsel %vm3511, %v3467, 0
    %v3603 = vsel %vm3511, %v3468, 0
    %v3606 = vsel %vm3511, %v3469, 0
    %v3609 = vsel %vm3511, %v3470, 0
    %v3612 = vsel %vm3511, %v3471, 0
    %v3615 = vsel %vm3511, %v3472, 0
    %v3618 = vsel %vm3511, %v3473, 0
    %v3621 = vsel %vm3511, %v3474, 0
    %v3624 = vsel %vm3511, %v3475, 0
    %v3627 = vsel %vm3511, %v3476, 0
    %v3630 = vsel %vm3511, %v3477, 0
    %v3633 = vsel %vm3511, %v3478, 0
    %v3636 = vsel %vm3511, %v3479, 0
    %v3639 = vsel %vm3511, %v3480, 0
    %v3642 = vsel %vm3511, %v3481, 0
    %v3645 = vsel %vm3511, %v3482, 0
    %v3648 = vsel %vm3511, %v3483, 0
    %v3651 = vsel %vm3511, %v3484, 0
    %v3654 = vsel %vm3511, %v3485, 0
    %v3657 = vsel %vm3511, %v3486, 0
    %v3660 = vsel %vm3511, %v3487, 0
    %v3663 = vsel %vm3511, %v3488, 0
    %v3666 = vsel %vm3511, %v3489, 0
    %v3669 = vsel %vm3511, %v3490, 0
    %v3672 = vsel %vm3511, %v3491, 0
    %v3675 = vsel %vm3511, %v3492, 0
    %v3678 = vsel %vm3511, %v3493, 0
    %v3681 = vsel %vm3511, %v3494, 0
    %v3684 = vsel %vm3511, %v3495, 0
    %v3687 = vsel %vm3511, %v3496, 0
    %v3690 = vsel %vm3511, %v3497, 0
    %v3693 = vsel %vm3511, %v3498, 0
    %v3696 = vsel %vm3511, %v3499, 0
    %v3699 = vsel %vm3511, %v3500, 0
    %v3702 = vsel %vm3511, %v3501, 0
    %vm3704 = vcmask 1040384
    %v3706 = vsel %vm3704, %v3503, 0
    %3708 = vmatprep.subr.mxu0 0.0
    %3709 = vmatpush1.msra.mxu0 %v3502
    %3710 = vmatprep.subr.mxu0 0.0
    %3711 = vmatpush1.msra.mxu0 %v3706
    %3712 = vmatprep.subr.mxu0 0.0
    %3713 = vmatpush1.msra.mxu0 0.0
    %3714 = vmatprep.subr.mxu0 0.0
    %3715 = vmatpush1.msra.mxu0 0.0
    %3716 = vmatprep.subr.mxu0 0.0
    %3717 = vmatpush1.msra.mxu0 0.0
    %3718 = vmatprep.subr.mxu0 0.0
    %3719 = vmatpush1.msra.mxu0 0.0
    %3720 = vmatprep.subr.mxu0 0.0
    %3721 = vmatpush1.msra.mxu0 0.0
    %3722 = vmatprep.subr.mxu0 0.0
    %3723 = vmatpush1.msra.mxu0 0.0
    %3724 = vmatprep.subr.mxu0 0.0
    %3725 = vmatpush1.msra.mxu0 0.0
    %3726 = vmatprep.subr.mxu0 0.0
    %3727 = vmatpush1.msra.mxu0 0.0
    %3728 = vmatprep.subr.mxu0 0.0
    %3729 = vmatpush1.msra.mxu0 0.0
    %3730 = vmatprep.subr.mxu0 0.0
    %3731 = vmatpush1.msra.mxu0 0.0
    %3732 = vmatprep.subr.mxu0 0.0
    %3733 = vmatpush1.msra.mxu0 0.0
    %3734 = vmatprep.subr.mxu0 0.0
    %3735 = vmatpush1.msra.mxu0 0.0
    %3736 = vmatprep.subr.mxu0 0.0
    %3737 = vmatpush1.msra.mxu0 0.0
    %3738 = vmatprep.subr.mxu0 0.0
    %3739 = vmatpush1.msra.mxu0 0.0
    %3740 = vmatprep.subr.mxu0 0.0
    %3741 = vmatpush1.msra.mxu0 0.0
    %3742 = vmatprep.subr.mxu0 0.0
    %3743 = vmatpush1.msra.mxu0 0.0
    %3744 = vmatprep.subr.mxu0 0.0
    %3745 = vmatpush1.msra.mxu0 0.0
    %3746 = vmatprep.subr.mxu0 0.0
    %3747 = vmatpush1.msra.mxu0 0.0
    %3748 = vmatprep.subr.mxu0 0.0
    %3749 = vmatpush1.msra.mxu0 0.0
    %3750 = vmatprep.subr.mxu0 0.0
    %3751 = vmatpush1.msra.mxu0 0.0
    %3752 = vmatprep.subr.mxu0 0.0
    %3753 = vmatpush1.msra.mxu0 0.0
    %3754 = vmatprep.subr.mxu0 0.0
    %3755 = vmatpush1.msra.mxu0 0.0
    %3756 = vmatprep.subr.mxu0 0.0
    %3757 = vmatpush1.msra.mxu0 0.0
    %3758 = vmatprep.subr.mxu0 0.0
    %3759 = vmatpush1.msra.mxu0 0.0
    %3760 = vmatprep.subr.mxu0 0.0
    %3761 = vmatpush1.msra.mxu0 0.0
    %3762 = vmatprep.subr.mxu0 0.0
    %3763 = vmatpush1.msra.mxu0 0.0
    %3764 = vmatprep.subr.mxu0 0.0
    %3765 = vmatpush1.msra.mxu0 0.0
    %3766 = vmatprep.subr.mxu0 0.0
    %3767 = vmatpush1.msra.mxu0 0.0
    %3768 = vmatprep.subr.mxu0 0.0
    %3769 = vmatpush1.msra.mxu0 0.0
    %3770 = vmatprep.subr.mxu0 0.0
    %3771 = vmatpush1.msra.mxu0 0.0
    %3772 = vmatprep.mubr.f32.mxu0 0.0
    %3773 = vmatmul.mubr.f32.gmra.mrb[0].mxu0 %v3513
    %v3774 = vpop.f32.mrb[0].mxu0
    %v3775 = vadd.f32 %v3509, %v3774
    %v3776 = vpop.f32.mrb[0].mxu0
    %3777 = vmatprep.mubr.f32.mxu0 0.0
    %3778 = vmatmul.mubr.f32.gmra.mrb[0].mxu0 %v3516
    %v3779 = vpop.f32.mrb[0].mxu0
    %v3780 = vadd.f32 %v3509, %v3779
    %v3781 = vpop.f32.mrb[0].mxu0
    %3782 = vmatprep.mubr.f32.mxu0 0.0
    %3783 = vmatmul.mubr.f32.gmra.mrb[0].mxu0 %v3519
    %v3784 = vpop.f32.mrb[0].mxu0
    %v3785 = vadd.f32 %v3509, %v3784
    %v3786 = vpop.f32.mrb[0].mxu0
    %3787 = vmatprep.mubr.f32.mxu0 0.0
    %3788 = vmatmul.mubr.f32.gmra.mrb[0].mxu0 %v3522
    %v3789 = vpop.f32.mrb[0].mxu0
    %v3790 = vadd.f32 %v3509, %v3789
    %v3791 = vpop.f32.mrb[0].mxu0
    %3792 = vmatprep.mubr.f32.mxu0 0.0
    %3793 = vmatmul.mubr.f32.gmra.mrb[0].mxu0 %v3525
    %v3794 = vpop.f32.mrb[0].mxu0
    %v3795 = vadd.f32 %v3509, %v3794
    %v3796 = vpop.f32.mrb[0].mxu0
    %3797 = vmatprep.mubr.f32.mxu0 0.0
    %3798 = vmatmul.mubr.f32.gmra.mrb[0].mxu0 %v3528
    %v3799 = vpop.f32.mrb[0].mxu0
    %v3800 = vadd.f32 %v3509, %v3799
    %v3801 = vpop.f32.mrb[0].mxu0
    %3802 = vmatprep.mubr.f32.mxu0 0.0
    %3803 = vmatmul.mubr.f32.gmra.mrb[0].mxu0 %v3531
    %v3804 = vpop.f32.mrb[0].mxu0
    %v3805 = vadd.f32 %v3509, %v3804
    %v3806 = vpop.f32.mrb[0].mxu0
    %3807 = vmatprep.mubr.f32.mxu0 0.0
    %3808 = vmatmul.mubr.f32.gmra.mrb[0].mxu0 %v3534
    %v3809 = vpop.f32.mrb[0].mxu0
    %v3810 = vadd.f32 %v3509, %v3809
    %v3811 = vpop.f32.mrb[0].mxu0
    %3812 = vmatprep.mubr.f32.mxu0 0.0
    %3813 = vmatmul.mubr.f32.gmra.mrb[0].mxu0 %v3537
    %v3814 = vpop.f32.mrb[0].mxu0
    %v3815 = vadd.f32 %v3509, %v3814
    %v3816 = vpop.f32.mrb[0].mxu0
    %3817 = vmatprep.mubr.f32.mxu0 0.0
    %3818 = vmatmul.mubr.f32.gmra.mrb[0].mxu0 %v3540
    %v3819 = vpop.f32.mrb[0].mxu0
    %v3820 = vadd.f32 %v3509, %v3819
    %v3821 = vpop.f32.mrb[0].mxu0
    %3822 = vmatprep.mubr.f32.mxu0 0.0
    %3823 = vmatmul.mubr.f32.gmra.mrb[0].mxu0 %v3543
    %v3824 = vpop.f32.mrb[0].mxu0
    %v3825 = vadd.f32 %v3509, %v3824
    %v3826 = vpop.f32.mrb[0].mxu0
    %3827 = vmatprep.mubr.f32.mxu0 0.0
    %3828 = vmatmul.mubr.f32.gmra.mrb[0].mxu0 %v3546
    %v3829 = vpop.f32.mrb[0].mxu0
    %v3830 = vadd.f32 %v3509, %v3829
    %v3831 = vpop.f32.mrb[0].mxu0
    %3832 = vmatprep.mubr.f32.mxu0 0.0
    %3833 = vmatmul.mubr.f32.gmra.mrb[0].mxu0 %v3549
    %v3834 = vpop.f32.mrb[0].mxu0
    %v3835 = vadd.f32 %v3509, %v3834
    %v3836 = vpop.f32.mrb[0].mxu0
    %3837 = vmatprep.mubr.f32.mxu0 0.0
    %3838 = vmatmul.mubr.f32.gmra.mrb[0].mxu0 %v3552
    %v3839 = vpop.f32.mrb[0].mxu0
    %v3840 = vadd.f32 %v3509, %v3839
    %v3841 = vpop.f32.mrb[0].mxu0
    %3842 = vmatprep.mubr.f32.mxu0 0.0
    %3843 = vmatmul.mubr.f32.gmra.mrb[0].mxu0 %v3555
    %v3844 = vpop.f32.mrb[0].mxu0
    %v3845 = vadd.f32 %v3509, %v3844
    %v3846 = vpop.f32.mrb[0].mxu0
    %3847 = vmatprep.mubr.f32.mxu0 0.0
    %3848 = vmatmul.mubr.f32.gmra.mrb[0].mxu0 %v3558
    %v3849 = vpop.f32.mrb[0].mxu0
    %v3850 = vadd.f32 %v3509, %v3849
    %v3851 = vpop.f32.mrb[0].mxu0
    %3852 = vmatprep.mubr.f32.mxu0 0.0
    %3853 = vmatmul.mubr.f32.gmra.mrb[0].mxu0 %v3561
    %v3854 = vpop.f32.mrb[0].mxu0
    %v3855 = vadd.f32 %v3509, %v3854
    %v3856 = vpop.f32.mrb[0].mxu0
    %3857 = vmatprep.mubr.f32.mxu0 0.0
    %3858 = vmatmul.mubr.f32.gmra.mrb[0].mxu0 %v3564
    %v3859 = vpop.f32.mrb[0].mxu0
    %v3860 = vadd.f32 %v3509, %v3859
    %v3861 = vpop.f32.mrb[0].mxu0
    %3862 = vmatprep.mubr.f32.mxu0 0.0
    %3863 = vmatmul.mubr.f32.gmra.mrb[0].mxu0 %v3567
    %v3864 = vpop.f32.mrb[0].mxu0
    %v3865 = vadd.f32 %v3509, %v3864
    %v3866 = vpop.f32.mrb[0].mxu0
    %3867 = vmatprep.mubr.f32.mxu0 0.0
    %3868 = vmatmul.mubr.f32.gmra.mrb[0].mxu0 %v3570
    %v3869 = vpop.f32.mrb[0].mxu0
    %v3870 = vadd.f32 %v3509, %v3869
    %v3871 = vpop.f32.mrb[0].mxu0
    %3872 = vmatprep.mubr.f32.mxu0 0.0
    %3873 = vmatmul.mubr.f32.gmra.mrb[0].mxu0 %v3573
    %v3874 = vpop.f32.mrb[0].mxu0
    %v3875 = vadd.f32 %v3509, %v3874
    %v3876 = vpop.f32.mrb[0].mxu0
    %3877 = vmatprep.mubr.f32.mxu0 0.0
    %3878 = vmatmul.mubr.f32.gmra.mrb[0].mxu0 %v3576
    %v3879 = vpop.f32.mrb[0].mxu0
    %v3880 = vadd.f32 %v3509, %v3879
    %v3881 = vpop.f32.mrb[0].mxu0
    %3882 = vmatprep.mubr.f32.mxu0 0.0
    %3883 = vmatmul.mubr.f32.gmra.mrb[0].mxu0 %v3579
    %v3884 = vpop.f32.mrb[0].mxu0
    %v3885 = vadd.f32 %v3509, %v3884
    %v3886 = vpop.f32.mrb[0].mxu0
    %3887 = vmatprep.mubr.f32.mxu0 0.0
    %3888 = vmatmul.mubr.f32.gmra.mrb[0].mxu0 %v3582
    %v3889 = vpop.f32.mrb[0].mxu0
    %v3890 = vadd.f32 %v3509, %v3889
    %v3891 = vpop.f32.mrb[0].mxu0
    %3892 = vmatprep.mubr.f32.mxu0 0.0
    %3893 = vmatmul.mubr.f32.gmra.mrb[0].mxu0 %v3585
    %v3894 = vpop.f32.mrb[0].mxu0
    %v3895 = vadd.f32 %v3509, %v3894
    %v3896 = vpop.f32.mrb[0].mxu0
    %3897 = vmatprep.mubr.f32.mxu0 0.0
    %3898 = vmatmul.mubr.f32.gmra.mrb[0].mxu0 %v3588
    %v3899 = vpop.f32.mrb[0].mxu0
    %v3900 = vadd.f32 %v3509, %v3899
    %v3901 = vpop.f32.mrb[0].mxu0
    %3902 = vmatprep.mubr.f32.mxu0 0.0
    %3903 = vmatmul.mubr.f32.gmra.mrb[0].mxu0 %v3591
    %v3904 = vpop.f32.mrb[0].mxu0
    %v3905 = vadd.f32 %v3509, %v3904
    %v3906 = vpop.f32.mrb[0].mxu0
    %3907 = vmatprep.mubr.f32.mxu0 0.0
    %3908 = vmatmul.mubr.f32.gmra.mrb[0].mxu0 %v3594
    %v3909 = vpop.f32.mrb[0].mxu0
    %v3910 = vadd.f32 %v3509, %v3909
    %v3911 = vpop.f32.mrb[0].mxu0
    %3912 = vmatprep.mubr.f32.mxu0 0.0
    %3913 = vmatmul.mubr.f32.gmra.mrb[0].mxu0 %v3597
    %v3914 = vpop.f32.mrb[0].mxu0
    %v3915 = vadd.f32 %v3509, %v3914
    %v3916 = vpop.f32.mrb[0].mxu0
    %3917 = vmatprep.mubr.f32.mxu0 0.0
    %3918 = vmatmul.mubr.f32.gmra.mrb[0].mxu0 %v3600
    %v3919 = vpop.f32.mrb[0].mxu0
    %v3920 = vadd.f32 %v3509, %v3919
    %v3921 = vpop.f32.mrb[0].mxu0
    %3922 = vmatprep.mubr.f32.mxu0 0.0
    %3923 = vmatmul.mubr.f32.gmra.mrb[0].mxu0 %v3603
    %v3924 = vpop.f32.mrb[0].mxu0
    %v3925 = vadd.f32 %v3509, %v3924
    %v3926 = vpop.f32.mrb[0].mxu0
    %3927 = vmatprep.mubr.f32.mxu0 0.0
    %3928 = vmatmul.mubr.f32.gmra.mrb[0].mxu0 %v3606
    %v3929 = vpop.f32.mrb[0].mxu0
    %v3930 = vadd.f32 %v3509, %v3929
    %v3931 = vpop.f32.mrb[0].mxu0
    %3932 = vmatprep.mubr.f32.mxu0 0.0
    %3933 = vmatmul.mubr.f32.gmra.mrb[0].mxu0 %v3609
    %v3934 = vpop.f32.mrb[0].mxu0
    %v3935 = vadd.f32 %v3509, %v3934
    %v3936 = vpop.f32.mrb[0].mxu0
    %3937 = vmatprep.mubr.f32.mxu0 0.0
    %3938 = vmatmul.mubr.f32.gmra.mrb[0].mxu0 %v3612
    %v3939 = vpop.f32.mrb[0].mxu0
    %v3940 = vadd.f32 %v3509, %v3939
    %v3941 = vpop.f32.mrb[0].mxu0
    %3942 = vmatprep.mubr.f32.mxu0 0.0
    %3943 = vmatmul.mubr.f32.gmra.mrb[0].mxu0 %v3615
    %v3944 = vpop.f32.mrb[0].mxu0
    %v3945 = vadd.f32 %v3509, %v3944
    %v3946 = vpop.f32.mrb[0].mxu0
    %3947 = vmatprep.mubr.f32.mxu0 0.0
    %3948 = vmatmul.mubr.f32.gmra.mrb[0].mxu0 %v3618
    %v3949 = vpop.f32.mrb[0].mxu0
    %v3950 = vadd.f32 %v3509, %v3949
    %v3951 = vpop.f32.mrb[0].mxu0
    %3952 = vmatprep.mubr.f32.mxu0 0.0
    %3953 = vmatmul.mubr.f32.gmra.mrb[0].mxu0 %v3621
    %v3954 = vpop.f32.mrb[0].mxu0
    %v3955 = vadd.f32 %v3509, %v3954
    %v3956 = vpop.f32.mrb[0].mxu0
    %3957 = vmatprep.mubr.f32.mxu0 0.0
    %3958 = vmatmul.mubr.f32.gmra.mrb[0].mxu0 %v3624
    %v3959 = vpop.f32.mrb[0].mxu0
    %v3960 = vadd.f32 %v3509, %v3959
    %v3961 = vpop.f32.mrb[0].mxu0
    %3962 = vmatprep.mubr.f32.mxu0 0.0
    %3963 = vmatmul.mubr.f32.gmra.mrb[0].mxu0 %v3627
    %v3964 = vpop.f32.mrb[0].mxu0
    %v3965 = vadd.f32 %v3509, %v3964
    %v3966 = vpop.f32.mrb[0].mxu0
    %3967 = vmatprep.mubr.f32.mxu0 0.0
    %3968 = vmatmul.mubr.f32.gmra.mrb[0].mxu0 %v3630
    %v3969 = vpop.f32.mrb[0].mxu0
    %v3970 = vadd.f32 %v3509, %v3969
    %v3971 = vpop.f32.mrb[0].mxu0
    %3972 = vmatprep.mubr.f32.mxu0 0.0
    %3973 = vmatmul.mubr.f32.gmra.mrb[0].mxu0 %v3633
    %v3974 = vpop.f32.mrb[0].mxu0
    %v3975 = vadd.f32 %v3509, %v3974
    %v3976 = vpop.f32.mrb[0].mxu0
    %3977 = vmatprep.mubr.f32.mxu0 0.0
    %3978 = vmatmul.mubr.f32.gmra.mrb[0].mxu0 %v3636
    %v3979 = vpop.f32.mrb[0].mxu0
    %v3980 = vadd.f32 %v3509, %v3979
    %v3981 = vpop.f32.mrb[0].mxu0
    %3982 = vmatprep.mubr.f32.mxu0 0.0
    %3983 = vmatmul.mubr.f32.gmra.mrb[0].mxu0 %v3639
    %v3984 = vpop.f32.mrb[0].mxu0
    %v3985 = vadd.f32 %v3509, %v3984
    %v3986 = vpop.f32.mrb[0].mxu0
    %3987 = vmatprep.mubr.f32.mxu0 0.0
    %3988 = vmatmul.mubr.f32.gmra.mrb[0].mxu0 %v3642
    %v3989 = vpop.f32.mrb[0].mxu0
    %v3990 = vadd.f32 %v3509, %v3989
    %v3991 = vpop.f32.mrb[0].mxu0
    %3992 = vmatprep.mubr.f32.mxu0 0.0
    %3993 = vmatmul.mubr.f32.gmra.mrb[0].mxu0 %v3645
    %v3994 = vpop.f32.mrb[0].mxu0
    %v3995 = vadd.f32 %v3509, %v3994
    %v3996 = vpop.f32.mrb[0].mxu0
    %3997 = vmatprep.mubr.f32.mxu0 0.0
    %3998 = vmatmul.mubr.f32.gmra.mrb[0].mxu0 %v3648
    %v3999 = vpop.f32.mrb[0].mxu0
    %v4000 = vadd.f32 %v3509, %v3999
    %v4001 = vpop.f32.mrb[0].mxu0
    %4002 = vmatprep.mubr.f32.mxu0 0.0
    %4003 = vmatmul.mubr.f32.gmra.mrb[0].mxu0 %v3651
    %v4004 = vpop.f32.mrb[0].mxu0
    %v4005 = vadd.f32 %v3509, %v4004
    %v4006 = vpop.f32.mrb[0].mxu0
    %4007 = vmatprep.mubr.f32.mxu0 0.0
    %4008 = vmatmul.mubr.f32.gmra.mrb[0].mxu0 %v3654
    %v4009 = vpop.f32.mrb[0].mxu0
    %v4010 = vadd.f32 %v3509, %v4009
    %v4011 = vpop.f32.mrb[0].mxu0
    %4012 = vmatprep.mubr.f32.mxu0 0.0
    %4013 = vmatmul.mubr.f32.gmra.mrb[0].mxu0 %v3657
    %v4014 = vpop.f32.mrb[0].mxu0
    %v4015 = vadd.f32 %v3509, %v4014
    %v4016 = vpop.f32.mrb[0].mxu0
    %4017 = vmatprep.mubr.f32.mxu0 0.0
    %4018 = vmatmul.mubr.f32.gmra.mrb[0].mxu0 %v3660
    %v4019 = vpop.f32.mrb[0].mxu0
    %v4020 = vadd.f32 %v3509, %v4019
    %v4021 = vpop.f32.mrb[0].mxu0
    %4022 = vmatprep.mubr.f32.mxu0 0.0
    %4023 = vmatmul.mubr.f32.gmra.mrb[0].mxu0 %v3663
    %v4024 = vpop.f32.mrb[0].mxu0
    %v4025 = vadd.f32 %v3509, %v4024
    %v4026 = vpop.f32.mrb[0].mxu0
    %4027 = vmatprep.mubr.f32.mxu0 0.0
    %4028 = vmatmul.mubr.f32.gmra.mrb[0].mxu0 %v3666
    %v4029 = vpop.f32.mrb[0].mxu0
    %v4030 = vadd.f32 %v3509, %v4029
    %v4031 = vpop.f32.mrb[0].mxu0
    %4032 = vmatprep.mubr.f32.mxu0 0.0
    %4033 = vmatmul.mubr.f32.gmra.mrb[0].mxu0 %v3669
    %v4034 = vpop.f32.mrb[0].mxu0
    %v4035 = vadd.f32 %v3509, %v4034
    %v4036 = vpop.f32.mrb[0].mxu0
    %4037 = vmatprep.mubr.f32.mxu0 0.0
    %4038 = vmatmul.mubr.f32.gmra.mrb[0].mxu0 %v3672
    %v4039 = vpop.f32.mrb[0].mxu0
    %v4040 = vadd.f32 %v3509, %v4039
    %v4041 = vpop.f32.mrb[0].mxu0
    %4042 = vmatprep.mubr.f32.mxu0 0.0
    %4043 = vmatmul.mubr.f32.gmra.mrb[0].mxu0 %v3675
    %v4044 = vpop.f32.mrb[0].mxu0
    %v4045 = vadd.f32 %v3509, %v4044
    %v4046 = vpop.f32.mrb[0].mxu0
    %4047 = vmatprep.mubr.f32.mxu0 0.0
    %4048 = vmatmul.mubr.f32.gmra.mrb[0].mxu0 %v3678
    %v4049 = vpop.f32.mrb[0].mxu0
    %v4050 = vadd.f32 %v3509, %v4049
    %v4051 = vpop.f32.mrb[0].mxu0
    %4052 = vmatprep.mubr.f32.mxu0 0.0
    %4053 = vmatmul.mubr.f32.gmra.mrb[0].mxu0 %v3681
    %v4054 = vpop.f32.mrb[0].mxu0
    %v4055 = vadd.f32 %v3509, %v4054
    %v4056 = vpop.f32.mrb[0].mxu0
    %4057 = vmatprep.mubr.f32.mxu0 0.0
    %4058 = vmatmul.mubr.f32.gmra.mrb[0].mxu0 %v3684
    %v4059 = vpop.f32.mrb[0].mxu0
    %v4060 = vadd.f32 %v3509, %v4059
    %v4061 = vpop.f32.mrb[0].mxu0
    %4062 = vmatprep.mubr.f32.mxu0 0.0
    %4063 = vmatmul.mubr.f32.gmra.mrb[0].mxu0 %v3687
    %v4064 = vpop.f32.mrb[0].mxu0
    %v4065 = vadd.f32 %v3509, %v4064
    %v4066 = vpop.f32.mrb[0].mxu0
    %4067 = vmatprep.mubr.f32.mxu0 0.0
    %4068 = vmatmul.mubr.f32.gmra.mrb[0].mxu0 %v3690
    %v4069 = vpop.f32.mrb[0].mxu0
    %v4070 = vadd.f32 %v3509, %v4069
    %v4071 = vpop.f32.mrb[0].mxu0
    %4072 = vmatprep.mubr.f32.mxu0 0.0
    %4073 = vmatmul.mubr.f32.gmra.mrb[0].mxu0 %v3693
    %v4074 = vpop.f32.mrb[0].mxu0
    %v4075 = vadd.f32 %v3509, %v4074
    %v4076 = vpop.f32.mrb[0].mxu0
    %4077 = vmatprep.mubr.f32.mxu0 0.0
    %4078 = vmatmul.mubr.f32.gmra.mrb[0].mxu0 %v3696
    %v4079 = vpop.f32.mrb[0].mxu0
    %v4080 = vadd.f32 %v3509, %v4079
    %v4081 = vpop.f32.mrb[0].mxu0
    %4082 = vmatprep.mubr.f32.mxu0 0.0
    %4083 = vmatmul.mubr.f32.gmra.mrb[0].mxu0 %v3699
    %v4084 = vpop.f32.mrb[0].mxu0
    %v4085 = vadd.f32 %v3509, %v4084
    %v4086 = vpop.f32.mrb[0].mxu0
    %4087 = vmatprep.mubr.f32.mxu0 0.0
    %4088 = vmatmul.mubr.f32.gmra.mrb[0].mxu0 %v3702
    %v4089 = vpop.f32.mrb[0].mxu0
    %v4090 = vadd.f32 %v3509, %v4089
    %v4091 = vpop.f32.mrb[0].mxu0
    %4092 = vdwg.mxu0
    %v4093 = vmax.f32 %v3775, 0.0
    %v4094 = vmax.f32 %v3780, 0.0
    %v4095 = vmax.f32 %v3785, 0.0
    %v4096 = vmax.f32 %v3790, 0.0
    %v4097 = vmax.f32 %v3795, 0.0
    %v4098 = vmax.f32 %v3800, 0.0
    %v4099 = vmax.f32 %v3805, 0.0
    %v4100 = vmax.f32 %v3810, 0.0
    %v4101 = vmax.f32 %v3815, 0.0
    %v4102 = vmax.f32 %v3820, 0.0
    %v4103 = vmax.f32 %v3825, 0.0
    %v4104 = vmax.f32 %v3830, 0.0
    %v4105 = vmax.f32 %v3835, 0.0
    %v4106 = vmax.f32 %v3840, 0.0
    %v4107 = vmax.f32 %v3845, 0.0
    %v4108 = vmax.f32 %v3850, 0.0
    %v4109 = vmax.f32 %v3855, 0.0
    %v4110 = vmax.f32 %v3860, 0.0
    %v4111 = vmax.f32 %v3865, 0.0
    %v4112 = vmax.f32 %v3870, 0.0
    %v4113 = vmax.f32 %v3875, 0.0
    %v4114 = vmax.f32 %v3880, 0.0
    %v4115 = vmax.f32 %v3885, 0.0
    %v4116 = vmax.f32 %v3890, 0.0
    %v4117 = vmax.f32 %v3895, 0.0
    %v4118 = vmax.f32 %v3900, 0.0
    %v4119 = vmax.f32 %v3905, 0.0
    %v4120 = vmax.f32 %v3910, 0.0
    %v4121 = vmax.f32 %v3915, 0.0
    %v4122 = vmax.f32 %v3920, 0.0
    %v4123 = vmax.f32 %v3925, 0.0
    %v4124 = vmax.f32 %v3930, 0.0
    %v4125 = vmax.f32 %v3935, 0.0
    %v4126 = vmax.f32 %v3940, 0.0
    %v4127 = vmax.f32 %v3945, 0.0
    %v4128 = vmax.f32 %v3950, 0.0
    %v4129 = vmax.f32 %v3955, 0.0
    %v4130 = vmax.f32 %v3960, 0.0
    %v4131 = vmax.f32 %v3965, 0.0
    %v4132 = vmax.f32 %v3970, 0.0
    %v4133 = vmax.f32 %v3975, 0.0
    %v4134 = vmax.f32 %v3980, 0.0
    %v4135 = vmax.f32 %v3985, 0.0
    %v4136 = vmax.f32 %v3990, 0.0
    %v4137 = vmax.f32 %v3995, 0.0
    %v4138 = vmax.f32 %v4000, 0.0
    %v4139 = vmax.f32 %v4005, 0.0
    %v4140 = vmax.f32 %v4010, 0.0
    %v4141 = vmax.f32 %v4015, 0.0
    %v4142 = vmax.f32 %v4020, 0.0
    %v4143 = vmax.f32 %v4025, 0.0
    %v4144 = vmax.f32 %v4030, 0.0
    %v4145 = vmax.f32 %v4035, 0.0
    %v4146 = vmax.f32 %v4040, 0.0
    %v4147 = vmax.f32 %v4045, 0.0
    %v4148 = vmax.f32 %v4050, 0.0
    %v4149 = vmax.f32 %v4055, 0.0
    %v4150 = vmax.f32 %v4060, 0.0
    %v4151 = vmax.f32 %v4065, 0.0
    %v4152 = vmax.f32 %v4070, 0.0
    %v4153 = vmax.f32 %v4075, 0.0
    %v4154 = vmax.f32 %v4080, 0.0
    %v4155 = vmax.f32 %v4085, 0.0
    %v4156 = vmax.f32 %v4090, 0.0
    %vm4157 = vcmask 261120
    %v4158 = vsel %vm4157, %v4093, -inf
    %v4159 = vsel %vm4157, %v4095, -inf
    %v4160 = vmax.f32 %v4158, %v4159
    %v4161 = vsel %vm4157, %v4094, -inf
    %v4162 = vsel %vm4157, %v4096, -inf
    %v4163 = vmax.f32 %v4161, %v4162
    %v4164 = vsel %vm4157, %v4097, -inf
    %v4165 = vsel %vm4157, %v4099, -inf
    %v4166 = vmax.f32 %v4164, %v4165
    %v4167 = vsel %vm4157, %v4098, -inf
    %v4168 = vsel %vm4157, %v4100, -inf
    %v4169 = vmax.f32 %v4167, %v4168
    %v4170 = vsel %vm4157, %v4101, -inf
    %v4171 = vsel %vm4157, %v4103, -inf
    %v4172 = vmax.f32 %v4170, %v4171
    %v4173 = vsel %vm4157, %v4102, -inf
    %v4174 = vsel %vm4157, %v4104, -inf
    %v4175 = vmax.f32 %v4173, %v4174
    %v4176 = vsel %vm4157, %v4105, -inf
    %v4177 = vsel %vm4157, %v4107, -inf
    %v4178 = vmax.f32 %v4176, %v4177
    %v4179 = vsel %vm4157, %v4106, -inf
    %v4180 = vsel %vm4157, %v4108, -inf
    %v4181 = vmax.f32 %v4179, %v4180
    %v4182 = vsel %vm4157, %v4109, -inf
    %v4183 = vsel %vm4157, %v4111, -inf
    %v4184 = vmax.f32 %v4182, %v4183
    %v4185 = vsel %vm4157, %v4110, -inf
    %v4186 = vsel %vm4157, %v4112, -inf
    %v4187 = vmax.f32 %v4185, %v4186
    %v4188 = vsel %vm4157, %v4113, -inf
    %v4189 = vsel %vm4157, %v4115, -inf
    %v4190 = vmax.f32 %v4188, %v4189
    %v4191 = vsel %vm4157, %v4114, -inf
    %v4192 = vsel %vm4157, %v4116, -inf
    %v4193 = vmax.f32 %v4191, %v4192
    %v4194 = vsel %vm4157, %v4117, -inf
    %v4195 = vsel %vm4157, %v4119, -inf
    %v4196 = vmax.f32 %v4194, %v4195
    %v4197 = vsel %vm4157, %v4118, -inf
    %v4198 = vsel %vm4157, %v4120, -inf
    %v4199 = vmax.f32 %v4197, %v4198
    %v4200 = vsel %vm4157, %v4121, -inf
    %v4201 = vsel %vm4157, %v4123, -inf
    %v4202 = vmax.f32 %v4200, %v4201
    %v4203 = vsel %vm4157, %v4122, -inf
    %v4204 = vsel %vm4157, %v4124, -inf
    %v4205 = vmax.f32 %v4203, %v4204
    %v4206 = vsel %vm4157, %v4125, -inf
    %v4207 = vsel %vm4157, %v4127, -inf
    %v4208 = vmax.f32 %v4206, %v4207
    %v4209 = vsel %vm4157, %v4126, -inf
    %v4210 = vsel %vm4157, %v4128, -inf
    %v4211 = vmax.f32 %v4209, %v4210
    %v4212 = vsel %vm4157, %v4129, -inf
    %v4213 = vsel %vm4157, %v4131, -inf
    %v4214 = vmax.f32 %v4212, %v4213
    %v4215 = vsel %vm4157, %v4130, -inf
    %v4216 = vsel %vm4157, %v4132, -inf
    %v4217 = vmax.f32 %v4215, %v4216
    %v4218 = vsel %vm4157, %v4133, -inf
    %v4219 = vsel %vm4157, %v4135, -inf
    %v4220 = vmax.f32 %v4218, %v4219
    %v4221 = vsel %vm4157, %v4134, -inf
    %v4222 = vsel %vm4157, %v4136, -inf
    %v4223 = vmax.f32 %v4221, %v4222
    %v4224 = vsel %vm4157, %v4137, -inf
    %v4225 = vsel %vm4157, %v4139, -inf
    %v4226 = vmax.f32 %v4224, %v4225
    %v4227 = vsel %vm4157, %v4138, -inf
    %v4228 = vsel %vm4157, %v4140, -inf
    %v4229 = vmax.f32 %v4227, %v4228
    %v4230 = vsel %vm4157, %v4141, -inf
    %v4231 = vsel %vm4157, %v4143, -inf
    %v4232 = vmax.f32 %v4230, %v4231
    %v4233 = vsel %vm4157, %v4142, -inf
    %v4234 = vsel %vm4157, %v4144, -inf
    %v4235 = vmax.f32 %v4233, %v4234
    %v4236 = vsel %vm4157, %v4145, -inf
    %v4237 = vsel %vm4157, %v4147, -inf
    %v4238 = vmax.f32 %v4236, %v4237
    %v4239 = vsel %vm4157, %v4146, -inf
    %v4240 = vsel %vm4157, %v4148, -inf
    %v4241 = vmax.f32 %v4239, %v4240
    %v4242 = vsel %vm4157, %v4149, -inf
    %v4243 = vsel %vm4157, %v4151, -inf
    %v4244 = vmax.f32 %v4242, %v4243
    %v4245 = vsel %vm4157, %v4150, -inf
    %v4246 = vsel %vm4157, %v4152, -inf
    %v4247 = vmax.f32 %v4245, %v4246
    %v4248 = vsel %vm4157, %v4153, -inf
    %v4249 = vsel %vm4157, %v4155, -inf
    %v4250 = vmax.f32 %v4248, %v4249
    %v4251 = vsel %vm4157, %v4154, -inf
    %v4252 = vsel %vm4157, %v4156, -inf
    %v4253 = vmax.f32 %v4251, %v4252
    %v4286 = vcombine.high %v4160, %v4160
    %v4288 = vunpack.c.l.s4 1983009808
    %v4289 = vunpack.c.0.s8 %v4288
    %v4290 = vlaneseq
    %v4291 = vshrl.u32 %v4290, 7
    %v4292 = vsub.s32 %v4289, %v4291
    %v4293 = vrot.slane %v4160, %v4292
    %v4295 = vunpack.c.l.s4 1983009808
    %v4296 = vunpack.c.0.s8 %v4295
    %v4297 = vlaneseq
    %v4298 = vshrl.u32 %v4297, 7
    %v4299 = vsub.s32 %v4296, %v4298
    %v4300 = vrot.slane %v4286, %v4299
    %v4301 = vcombine.high %v4293, %v4293
    %v4302 = vcombine.high %v4300, %v4300
    %v4303 = vcombine.high %v4163, %v4163
    %v4305 = vunpack.c.l.s4 1983009808
    %v4306 = vunpack.c.0.s8 %v4305
    %v4307 = vlaneseq
    %v4308 = vshrl.u32 %v4307, 7
    %v4309 = vsub.s32 %v4306, %v4308
    %v4310 = vrot.slane %v4163, %v4309
    %v4312 = vunpack.c.l.s4 1983009808
    %v4313 = vunpack.c.0.s8 %v4312
    %v4314 = vlaneseq
    %v4315 = vshrl.u32 %v4314, 7
    %v4316 = vsub.s32 %v4313, %v4315
    %v4317 = vrot.slane %v4303, %v4316
    %v4318 = vcombine.high %v4310, %v4310
    %v4319 = vcombine.high %v4317, %v4317
    %v4320 = vcombine.high %v4166, %v4166
    %v4322 = vunpack.c.l.s4 1983009808
    %v4323 = vunpack.c.0.s8 %v4322
    %v4324 = vlaneseq
    %v4325 = vshrl.u32 %v4324, 7
    %v4326 = vsub.s32 %v4323, %v4325
    %v4327 = vrot.slane %v4166, %v4326
    %v4329 = vunpack.c.l.s4 1983009808
    %v4330 = vunpack.c.0.s8 %v4329
    %v4331 = vlaneseq
    %v4332 = vshrl.u32 %v4331, 7
    %v4333 = vsub.s32 %v4330, %v4332
    %v4334 = vrot.slane %v4320, %v4333
    %v4335 = vcombine.high %v4327, %v4327
    %v4336 = vcombine.high %v4334, %v4334
    %v4337 = vcombine.high %v4169, %v4169
    %v4339 = vunpack.c.l.s4 1983009808
    %v4340 = vunpack.c.0.s8 %v4339
    %v4341 = vlaneseq
    %v4342 = vshrl.u32 %v4341, 7
    %v4343 = vsub.s32 %v4340, %v4342
    %v4344 = vrot.slane %v4169, %v4343
    %v4346 = vunpack.c.l.s4 1983009808
    %v4347 = vunpack.c.0.s8 %v4346
    %v4348 = vlaneseq
    %v4349 = vshrl.u32 %v4348, 7
    %v4350 = vsub.s32 %v4347, %v4349
    %v4351 = vrot.slane %v4337, %v4350
    %v4352 = vcombine.high %v4344, %v4344
    %v4353 = vcombine.high %v4351, %v4351
    %v4354 = vcombine.high %v4172, %v4172
    %v4356 = vunpack.c.l.s4 1983009808
    %v4357 = vunpack.c.0.s8 %v4356
    %v4358 = vlaneseq
    %v4359 = vshrl.u32 %v4358, 7
    %v4360 = vsub.s32 %v4357, %v4359
    %v4361 = vrot.slane %v4172, %v4360
    %v4363 = vunpack.c.l.s4 1983009808
    %v4364 = vunpack.c.0.s8 %v4363
    %v4365 = vlaneseq
    %v4366 = vshrl.u32 %v4365, 7
    %v4367 = vsub.s32 %v4364, %v4366
    %v4368 = vrot.slane %v4354, %v4367
    %v4369 = vcombine.high %v4361, %v4361
    %v4370 = vcombine.high %v4368, %v4368
    %v4371 = vcombine.high %v4175, %v4175
    %v4373 = vunpack.c.l.s4 1983009808
    %v4374 = vunpack.c.0.s8 %v4373
    %v4375 = vlaneseq
    %v4376 = vshrl.u32 %v4375, 7
    %v4377 = vsub.s32 %v4374, %v4376
    %v4378 = vrot.slane %v4175, %v4377
    %v4380 = vunpack.c.l.s4 1983009808
    %v4381 = vunpack.c.0.s8 %v4380
    %v4382 = vlaneseq
    %v4383 = vshrl.u32 %v4382, 7
    %v4384 = vsub.s32 %v4381, %v4383
    %v4385 = vrot.slane %v4371, %v4384
    %v4386 = vcombine.high %v4378, %v4378
    %v4387 = vcombine.high %v4385, %v4385
    %v4388 = vcombine.high %v4178, %v4178
    %v4390 = vunpack.c.l.s4 1983009808
    %v4391 = vunpack.c.0.s8 %v4390
    %v4392 = vlaneseq
    %v4393 = vshrl.u32 %v4392, 7
    %v4394 = vsub.s32 %v4391, %v4393
    %v4395 = vrot.slane %v4178, %v4394
    %v4397 = vunpack.c.l.s4 1983009808
    %v4398 = vunpack.c.0.s8 %v4397
    %v4399 = vlaneseq
    %v4400 = vshrl.u32 %v4399, 7
    %v4401 = vsub.s32 %v4398, %v4400
    %v4402 = vrot.slane %v4388, %v4401
    %v4403 = vcombine.high %v4395, %v4395
    %v4404 = vcombine.high %v4402, %v4402
    %v4405 = vcombine.high %v4181, %v4181
    %v4407 = vunpack.c.l.s4 1983009808
    %v4408 = vunpack.c.0.s8 %v4407
    %v4409 = vlaneseq
    %v4410 = vshrl.u32 %v4409, 7
    %v4411 = vsub.s32 %v4408, %v4410
    %v4412 = vrot.slane %v4181, %v4411
    %v4414 = vunpack.c.l.s4 1983009808
    %v4415 = vunpack.c.0.s8 %v4414
    %v4416 = vlaneseq
    %v4417 = vshrl.u32 %v4416, 7
    %v4418 = vsub.s32 %v4415, %v4417
    %v4419 = vrot.slane %v4405, %v4418
    %v4420 = vcombine.high %v4412, %v4412
    %v4421 = vcombine.high %v4419, %v4419
    %v4422 = vcombine.high %v4184, %v4184
    %v4424 = vunpack.c.l.s4 1983009808
    %v4425 = vunpack.c.0.s8 %v4424
    %v4426 = vlaneseq
    %v4427 = vshrl.u32 %v4426, 7
    %v4428 = vsub.s32 %v4425, %v4427
    %v4429 = vrot.slane %v4184, %v4428
    %v4431 = vunpack.c.l.s4 1983009808
    %v4432 = vunpack.c.0.s8 %v4431
    %v4433 = vlaneseq
    %v4434 = vshrl.u32 %v4433, 7
    %v4435 = vsub.s32 %v4432, %v4434
    %v4436 = vrot.slane %v4422, %v4435
    %v4437 = vcombine.high %v4429, %v4429
    %v4438 = vcombine.high %v4436, %v4436
    %v4439 = vcombine.high %v4187, %v4187
    %v4441 = vunpack.c.l.s4 1983009808
    %v4442 = vunpack.c.0.s8 %v4441
    %v4443 = vlaneseq
    %v4444 = vshrl.u32 %v4443, 7
    %v4445 = vsub.s32 %v4442, %v4444
    %v4446 = vrot.slane %v4187, %v4445
    %v4448 = vunpack.c.l.s4 1983009808
    %v4449 = vunpack.c.0.s8 %v4448
    %v4450 = vlaneseq
    %v4451 = vshrl.u32 %v4450, 7
    %v4452 = vsub.s32 %v4449, %v4451
    %v4453 = vrot.slane %v4439, %v4452
    %v4454 = vcombine.high %v4446, %v4446
    %v4455 = vcombine.high %v4453, %v4453
    %v4456 = vcombine.high %v4190, %v4190
    %v4458 = vunpack.c.l.s4 1983009808
    %v4459 = vunpack.c.0.s8 %v4458
    %v4460 = vlaneseq
    %v4461 = vshrl.u32 %v4460, 7
    %v4462 = vsub.s32 %v4459, %v4461
    %v4463 = vrot.slane %v4190, %v4462
    %v4465 = vunpack.c.l.s4 1983009808
    %v4466 = vunpack.c.0.s8 %v4465
    %v4467 = vlaneseq
    %v4468 = vshrl.u32 %v4467, 7
    %v4469 = vsub.s32 %v4466, %v4468
    %v4470 = vrot.slane %v4456, %v4469
    %v4471 = vcombine.high %v4463, %v4463
    %v4472 = vcombine.high %v4470, %v4470
    %v4473 = vcombine.high %v4193, %v4193
    %v4475 = vunpack.c.l.s4 1983009808
    %v4476 = vunpack.c.0.s8 %v4475
    %v4477 = vlaneseq
    %v4478 = vshrl.u32 %v4477, 7
    %v4479 = vsub.s32 %v4476, %v4478
    %v4480 = vrot.slane %v4193, %v4479
    %v4482 = vunpack.c.l.s4 1983009808
    %v4483 = vunpack.c.0.s8 %v4482
    %v4484 = vlaneseq
    %v4485 = vshrl.u32 %v4484, 7
    %v4486 = vsub.s32 %v4483, %v4485
    %v4487 = vrot.slane %v4473, %v4486
    %v4488 = vcombine.high %v4480, %v4480
    %v4489 = vcombine.high %v4487, %v4487
    %v4490 = vcombine.high %v4196, %v4196
    %v4492 = vunpack.c.l.s4 1983009808
    %v4493 = vunpack.c.0.s8 %v4492
    %v4494 = vlaneseq
    %v4495 = vshrl.u32 %v4494, 7
    %v4496 = vsub.s32 %v4493, %v4495
    %v4497 = vrot.slane %v4196, %v4496
    %v4499 = vunpack.c.l.s4 1983009808
    %v4500 = vunpack.c.0.s8 %v4499
    %v4501 = vlaneseq
    %v4502 = vshrl.u32 %v4501, 7
    %v4503 = vsub.s32 %v4500, %v4502
    %v4504 = vrot.slane %v4490, %v4503
    %v4505 = vcombine.high %v4497, %v4497
    %v4506 = vcombine.high %v4504, %v4504
    %v4507 = vcombine.high %v4199, %v4199
    %v4509 = vunpack.c.l.s4 1983009808
    %v4510 = vunpack.c.0.s8 %v4509
    %v4511 = vlaneseq
    %v4512 = vshrl.u32 %v4511, 7
    %v4513 = vsub.s32 %v4510, %v4512
    %v4514 = vrot.slane %v4199, %v4513
    %v4516 = vunpack.c.l.s4 1983009808
    %v4517 = vunpack.c.0.s8 %v4516
    %v4518 = vlaneseq
    %v4519 = vshrl.u32 %v4518, 7
    %v4520 = vsub.s32 %v4517, %v4519
    %v4521 = vrot.slane %v4507, %v4520
    %v4522 = vcombine.high %v4514, %v4514
    %v4523 = vcombine.high %v4521, %v4521
    %v4524 = vcombine.high %v4202, %v4202
    %v4526 = vunpack.c.l.s4 1983009808
    %v4527 = vunpack.c.0.s8 %v4526
    %v4528 = vlaneseq
    %v4529 = vshrl.u32 %v4528, 7
    %v4530 = vsub.s32 %v4527, %v4529
    %v4531 = vrot.slane %v4202, %v4530
    %v4533 = vunpack.c.l.s4 1983009808
    %v4534 = vunpack.c.0.s8 %v4533
    %v4535 = vlaneseq
    %v4536 = vshrl.u32 %v4535, 7
    %v4537 = vsub.s32 %v4534, %v4536
    %v4538 = vrot.slane %v4524, %v4537
    %v4539 = vcombine.high %v4531, %v4531
    %v4540 = vcombine.high %v4538, %v4538
    %v4541 = vcombine.high %v4205, %v4205
    %v4543 = vunpack.c.l.s4 1983009808
    %v4544 = vunpack.c.0.s8 %v4543
    %v4545 = vlaneseq
    %v4546 = vshrl.u32 %v4545, 7
    %v4547 = vsub.s32 %v4544, %v4546
    %v4548 = vrot.slane %v4205, %v4547
    %v4550 = vunpack.c.l.s4 1983009808
    %v4551 = vunpack.c.0.s8 %v4550
    %v4552 = vlaneseq
    %v4553 = vshrl.u32 %v4552, 7
    %v4554 = vsub.s32 %v4551, %v4553
    %v4555 = vrot.slane %v4541, %v4554
    %v4556 = vcombine.high %v4548, %v4548
    %v4557 = vcombine.high %v4555, %v4555
    %v4558 = vcombine.high %v4208, %v4208
    %v4560 = vunpack.c.l.s4 1983009808
    %v4561 = vunpack.c.0.s8 %v4560
    %v4562 = vlaneseq
    %v4563 = vshrl.u32 %v4562, 7
    %v4564 = vsub.s32 %v4561, %v4563
    %v4565 = vrot.slane %v4208, %v4564
    %v4567 = vunpack.c.l.s4 1983009808
    %v4568 = vunpack.c.0.s8 %v4567
    %v4569 = vlaneseq
    %v4570 = vshrl.u32 %v4569, 7
    %v4571 = vsub.s32 %v4568, %v4570
    %v4572 = vrot.slane %v4558, %v4571
    %v4573 = vcombine.high %v4565, %v4565
    %v4574 = vcombine.high %v4572, %v4572
    %v4575 = vcombine.high %v4211, %v4211
    %v4577 = vunpack.c.l.s4 1983009808
    %v4578 = vunpack.c.0.s8 %v4577
    %v4579 = vlaneseq
    %v4580 = vshrl.u32 %v4579, 7
    %v4581 = vsub.s32 %v4578, %v4580
    %v4582 = vrot.slane %v4211, %v4581
    %v4584 = vunpack.c.l.s4 1983009808
    %v4585 = vunpack.c.0.s8 %v4584
    %v4586 = vlaneseq
    %v4587 = vshrl.u32 %v4586, 7
    %v4588 = vsub.s32 %v4585, %v4587
    %v4589 = vrot.slane %v4575, %v4588
    %v4590 = vcombine.high %v4582, %v4582
    %v4591 = vcombine.high %v4589, %v4589
    %v4592 = vcombine.high %v4214, %v4214
    %v4594 = vunpack.c.l.s4 1983009808
    %v4595 = vunpack.c.0.s8 %v4594
    %v4596 = vlaneseq
    %v4597 = vshrl.u32 %v4596, 7
    %v4598 = vsub.s32 %v4595, %v4597
    %v4599 = vrot.slane %v4214, %v4598
    %v4601 = vunpack.c.l.s4 1983009808
    %v4602 = vunpack.c.0.s8 %v4601
    %v4603 = vlaneseq
    %v4604 = vshrl.u32 %v4603, 7
    %v4605 = vsub.s32 %v4602, %v4604
    %v4606 = vrot.slane %v4592, %v4605
    %v4607 = vcombine.high %v4599, %v4599
    %v4608 = vcombine.high %v4606, %v4606
    %v4609 = vcombine.high %v4217, %v4217
    %v4611 = vunpack.c.l.s4 1983009808
    %v4612 = vunpack.c.0.s8 %v4611
    %v4613 = vlaneseq
    %v4614 = vshrl.u32 %v4613, 7
    %v4615 = vsub.s32 %v4612, %v4614
    %v4616 = vrot.slane %v4217, %v4615
    %v4618 = vunpack.c.l.s4 1983009808
    %v4619 = vunpack.c.0.s8 %v4618
    %v4620 = vlaneseq
    %v4621 = vshrl.u32 %v4620, 7
    %v4622 = vsub.s32 %v4619, %v4621
    %v4623 = vrot.slane %v4609, %v4622
    %v4624 = vcombine.high %v4616, %v4616
    %v4625 = vcombine.high %v4623, %v4623
    %v4626 = vcombine.high %v4220, %v4220
    %v4628 = vunpack.c.l.s4 1983009808
    %v4629 = vunpack.c.0.s8 %v4628
    %v4630 = vlaneseq
    %v4631 = vshrl.u32 %v4630, 7
    %v4632 = vsub.s32 %v4629, %v4631
    %v4633 = vrot.slane %v4220, %v4632
    %v4635 = vunpack.c.l.s4 1983009808
    %v4636 = vunpack.c.0.s8 %v4635
    %v4637 = vlaneseq
    %v4638 = vshrl.u32 %v4637, 7
    %v4639 = vsub.s32 %v4636, %v4638
    %v4640 = vrot.slane %v4626, %v4639
    %v4641 = vcombine.high %v4633, %v4633
    %v4642 = vcombine.high %v4640, %v4640
    %v4643 = vcombine.high %v4223, %v4223
    %v4645 = vunpack.c.l.s4 1983009808
    %v4646 = vunpack.c.0.s8 %v4645
    %v4647 = vlaneseq
    %v4648 = vshrl.u32 %v4647, 7
    %v4649 = vsub.s32 %v4646, %v4648
    %v4650 = vrot.slane %v4223, %v4649
    %v4652 = vunpack.c.l.s4 1983009808
    %v4653 = vunpack.c.0.s8 %v4652
    %v4654 = vlaneseq
    %v4655 = vshrl.u32 %v4654, 7
    %v4656 = vsub.s32 %v4653, %v4655
    %v4657 = vrot.slane %v4643, %v4656
    %v4658 = vcombine.high %v4650, %v4650
    %v4659 = vcombine.high %v4657, %v4657
    %v4660 = vcombine.high %v4226, %v4226
    %v4662 = vunpack.c.l.s4 1983009808
    %v4663 = vunpack.c.0.s8 %v4662
    %v4664 = vlaneseq
    %v4665 = vshrl.u32 %v4664, 7
    %v4666 = vsub.s32 %v4663, %v4665
    %v4667 = vrot.slane %v4226, %v4666
    %v4669 = vunpack.c.l.s4 1983009808
    %v4670 = vunpack.c.0.s8 %v4669
    %v4671 = vlaneseq
    %v4672 = vshrl.u32 %v4671, 7
    %v4673 = vsub.s32 %v4670, %v4672
    %v4674 = vrot.slane %v4660, %v4673
    %v4675 = vcombine.high %v4667, %v4667
    %v4676 = vcombine.high %v4674, %v4674
    %v4677 = vcombine.high %v4229, %v4229
    %v4679 = vunpack.c.l.s4 1983009808
    %v4680 = vunpack.c.0.s8 %v4679
    %v4681 = vlaneseq
    %v4682 = vshrl.u32 %v4681, 7
    %v4683 = vsub.s32 %v4680, %v4682
    %v4684 = vrot.slane %v4229, %v4683
    %v4686 = vunpack.c.l.s4 1983009808
    %v4687 = vunpack.c.0.s8 %v4686
    %v4688 = vlaneseq
    %v4689 = vshrl.u32 %v4688, 7
    %v4690 = vsub.s32 %v4687, %v4689
    %v4691 = vrot.slane %v4677, %v4690
    %v4692 = vcombine.high %v4684, %v4684
    %v4693 = vcombine.high %v4691, %v4691
    %v4694 = vcombine.high %v4232, %v4232
    %v4696 = vunpack.c.l.s4 1983009808
    %v4697 = vunpack.c.0.s8 %v4696
    %v4698 = vlaneseq
    %v4699 = vshrl.u32 %v4698, 7
    %v4700 = vsub.s32 %v4697, %v4699
    %v4701 = vrot.slane %v4232, %v4700
    %v4703 = vunpack.c.l.s4 1983009808
    %v4704 = vunpack.c.0.s8 %v4703
    %v4705 = vlaneseq
    %v4706 = vshrl.u32 %v4705, 7
    %v4707 = vsub.s32 %v4704, %v4706
    %v4708 = vrot.slane %v4694, %v4707
    %v4709 = vcombine.high %v4701, %v4701
    %v4710 = vcombine.high %v4708, %v4708
    %v4711 = vcombine.high %v4235, %v4235
    %v4713 = vunpack.c.l.s4 1983009808
    %v4714 = vunpack.c.0.s8 %v4713
    %v4715 = vlaneseq
    %v4716 = vshrl.u32 %v4715, 7
    %v4717 = vsub.s32 %v4714, %v4716
    %v4718 = vrot.slane %v4235, %v4717
    %v4720 = vunpack.c.l.s4 1983009808
    %v4721 = vunpack.c.0.s8 %v4720
    %v4722 = vlaneseq
    %v4723 = vshrl.u32 %v4722, 7
    %v4724 = vsub.s32 %v4721, %v4723
    %v4725 = vrot.slane %v4711, %v4724
    %v4726 = vcombine.high %v4718, %v4718
    %v4727 = vcombine.high %v4725, %v4725
    %v4728 = vcombine.high %v4238, %v4238
    %v4730 = vunpack.c.l.s4 1983009808
    %v4731 = vunpack.c.0.s8 %v4730
    %v4732 = vlaneseq
    %v4733 = vshrl.u32 %v4732, 7
    %v4734 = vsub.s32 %v4731, %v4733
    %v4735 = vrot.slane %v4238, %v4734
    %v4737 = vunpack.c.l.s4 1983009808
    %v4738 = vunpack.c.0.s8 %v4737
    %v4739 = vlaneseq
    %v4740 = vshrl.u32 %v4739, 7
    %v4741 = vsub.s32 %v4738, %v4740
    %v4742 = vrot.slane %v4728, %v4741
    %v4743 = vcombine.high %v4735, %v4735
    %v4744 = vcombine.high %v4742, %v4742
    %v4745 = vcombine.high %v4241, %v4241
    %v4747 = vunpack.c.l.s4 1983009808
    %v4748 = vunpack.c.0.s8 %v4747
    %v4749 = vlaneseq
    %v4750 = vshrl.u32 %v4749, 7
    %v4751 = vsub.s32 %v4748, %v4750
    %v4752 = vrot.slane %v4241, %v4751
    %v4754 = vunpack.c.l.s4 1983009808
    %v4755 = vunpack.c.0.s8 %v4754
    %v4756 = vlaneseq
    %v4757 = vshrl.u32 %v4756, 7
    %v4758 = vsub.s32 %v4755, %v4757
    %v4759 = vrot.slane %v4745, %v4758
    %v4760 = vcombine.high %v4752, %v4752
    %v4761 = vcombine.high %v4759, %v4759
    %v4762 = vcombine.high %v4244, %v4244
    %v4764 = vunpack.c.l.s4 1983009808
    %v4765 = vunpack.c.0.s8 %v4764
    %v4766 = vlaneseq
    %v4767 = vshrl.u32 %v4766, 7
    %v4768 = vsub.s32 %v4765, %v4767
    %v4769 = vrot.slane %v4244, %v4768
    %v4771 = vunpack.c.l.s4 1983009808
    %v4772 = vunpack.c.0.s8 %v4771
    %v4773 = vlaneseq
    %v4774 = vshrl.u32 %v4773, 7
    %v4775 = vsub.s32 %v4772, %v4774
    %v4776 = vrot.slane %v4762, %v4775
    %v4777 = vcombine.high %v4769, %v4769
    %v4778 = vcombine.high %v4776, %v4776
    %v4779 = vcombine.high %v4247, %v4247
    %v4781 = vunpack.c.l.s4 1983009808
    %v4782 = vunpack.c.0.s8 %v4781
    %v4783 = vlaneseq
    %v4784 = vshrl.u32 %v4783, 7
    %v4785 = vsub.s32 %v4782, %v4784
    %v4786 = vrot.slane %v4247, %v4785
    %v4788 = vunpack.c.l.s4 1983009808
    %v4789 = vunpack.c.0.s8 %v4788
    %v4790 = vlaneseq
    %v4791 = vshrl.u32 %v4790, 7
    %v4792 = vsub.s32 %v4789, %v4791
    %v4793 = vrot.slane %v4779, %v4792
    %v4794 = vcombine.high %v4786, %v4786
    %v4795 = vcombine.high %v4793, %v4793
    %v4796 = vcombine.high %v4250, %v4250
    %v4798 = vunpack.c.l.s4 1983009808
    %v4799 = vunpack.c.0.s8 %v4798
    %v4800 = vlaneseq
    %v4801 = vshrl.u32 %v4800, 7
    %v4802 = vsub.s32 %v4799, %v4801
    %v4803 = vrot.slane %v4250, %v4802
    %v4805 = vunpack.c.l.s4 1983009808
    %v4806 = vunpack.c.0.s8 %v4805
    %v4807 = vlaneseq
    %v4808 = vshrl.u32 %v4807, 7
    %v4809 = vsub.s32 %v4806, %v4808
    %v4810 = vrot.slane %v4796, %v4809
    %v4811 = vcombine.high %v4803, %v4803
    %v4812 = vcombine.high %v4810, %v4810
    %v4813 = vcombine.high %v4253, %v4253
    %v4815 = vunpack.c.l.s4 1983009808
    %v4816 = vunpack.c.0.s8 %v4815
    %v4817 = vlaneseq
    %v4818 = vshrl.u32 %v4817, 7
    %v4819 = vsub.s32 %v4816, %v4818
    %v4820 = vrot.slane %v4253, %v4819
    %v4822 = vunpack.c.l.s4 1983009808
    %v4823 = vunpack.c.0.s8 %v4822
    %v4824 = vlaneseq
    %v4825 = vshrl.u32 %v4824, 7
    %v4826 = vsub.s32 %v4823, %v4825
    %v4827 = vrot.slane %v4813, %v4826
    %v4828 = vcombine.high %v4820, %v4820
    %v4829 = vcombine.high %v4827, %v4827
    %vm4958 = vcmask 254976
    %v4959 = vsel %vm4958, %v4293, -inf
    %v4960 = vrot.slane %v4959, 4
    %v4961 = vmax.f32 %v4959, %v4960
    %v4962 = vrot.slane %v4961, 2
    %v4963 = vmax.f32 %v4961, %v4962
    %v4964 = vrot.slane %v4963, 1
    %v4965 = vmax.f32 %v4963, %v4964
    %v4966 = vsel %vm4958, %v4301, -inf
    %v4967 = vrot.slane %v4966, 4
    %v4968 = vmax.f32 %v4966, %v4967
    %v4969 = vrot.slane %v4968, 2
    %v4970 = vmax.f32 %v4968, %v4969
    %v4971 = vrot.slane %v4970, 1
    %v4972 = vmax.f32 %v4970, %v4971
    %v4973 = vsel %vm4958, %v4300, -inf
    %v4974 = vrot.slane %v4973, 4
    %v4975 = vmax.f32 %v4973, %v4974
    %v4976 = vrot.slane %v4975, 2
    %v4977 = vmax.f32 %v4975, %v4976
    %v4978 = vrot.slane %v4977, 1
    %v4979 = vmax.f32 %v4977, %v4978
    %v4980 = vsel %vm4958, %v4302, -inf
    %v4981 = vrot.slane %v4980, 4
    %v4982 = vmax.f32 %v4980, %v4981
    %v4983 = vrot.slane %v4982, 2
    %v4984 = vmax.f32 %v4982, %v4983
    %v4985 = vrot.slane %v4984, 1
    %v4986 = vmax.f32 %v4984, %v4985
    %v4987 = vsel %vm4958, %v4310, -inf
    %v4988 = vrot.slane %v4987, 4
    %v4989 = vmax.f32 %v4987, %v4988
    %v4990 = vrot.slane %v4989, 2
    %v4991 = vmax.f32 %v4989, %v4990
    %v4992 = vrot.slane %v4991, 1
    %v4993 = vmax.f32 %v4991, %v4992
    %v4994 = vsel %vm4958, %v4318, -inf
    %v4995 = vrot.slane %v4994, 4
    %v4996 = vmax.f32 %v4994, %v4995
    %v4997 = vrot.slane %v4996, 2
    %v4998 = vmax.f32 %v4996, %v4997
    %v4999 = vrot.slane %v4998, 1
    %v5000 = vmax.f32 %v4998, %v4999
    %v5001 = vsel %vm4958, %v4317, -inf
    %v5002 = vrot.slane %v5001, 4
    %v5003 = vmax.f32 %v5001, %v5002
    %v5004 = vrot.slane %v5003, 2
    %v5005 = vmax.f32 %v5003, %v5004
    %v5006 = vrot.slane %v5005, 1
    %v5007 = vmax.f32 %v5005, %v5006
    %v5008 = vsel %vm4958, %v4319, -inf
    %v5009 = vrot.slane %v5008, 4
    %v5010 = vmax.f32 %v5008, %v5009
    %v5011 = vrot.slane %v5010, 2
    %v5012 = vmax.f32 %v5010, %v5011
    %v5013 = vrot.slane %v5012, 1
    %v5014 = vmax.f32 %v5012, %v5013
    %v5015 = vsel %vm4958, %v4327, -inf
    %v5016 = vrot.slane %v5015, 4
    %v5017 = vmax.f32 %v5015, %v5016
    %v5018 = vrot.slane %v5017, 2
    %v5019 = vmax.f32 %v5017, %v5018
    %v5020 = vrot.slane %v5019, 1
    %v5021 = vmax.f32 %v5019, %v5020
    %v5022 = vsel %vm4958, %v4335, -inf
    %v5023 = vrot.slane %v5022, 4
    %v5024 = vmax.f32 %v5022, %v5023
    %v5025 = vrot.slane %v5024, 2
    %v5026 = vmax.f32 %v5024, %v5025
    %v5027 = vrot.slane %v5026, 1
    %v5028 = vmax.f32 %v5026, %v5027
    %v5029 = vsel %vm4958, %v4334, -inf
    %v5030 = vrot.slane %v5029, 4
    %v5031 = vmax.f32 %v5029, %v5030
    %v5032 = vrot.slane %v5031, 2
    %v5033 = vmax.f32 %v5031, %v5032
    %v5034 = vrot.slane %v5033, 1
    %v5035 = vmax.f32 %v5033, %v5034
    %v5036 = vsel %vm4958, %v4336, -inf
    %v5037 = vrot.slane %v5036, 4
    %v5038 = vmax.f32 %v5036, %v5037
    %v5039 = vrot.slane %v5038, 2
    %v5040 = vmax.f32 %v5038, %v5039
    %v5041 = vrot.slane %v5040, 1
    %v5042 = vmax.f32 %v5040, %v5041
    %v5043 = vsel %vm4958, %v4344, -inf
    %v5044 = vrot.slane %v5043, 4
    %v5045 = vmax.f32 %v5043, %v5044
    %v5046 = vrot.slane %v5045, 2
    %v5047 = vmax.f32 %v5045, %v5046
    %v5048 = vrot.slane %v5047, 1
    %v5049 = vmax.f32 %v5047, %v5048
    %v5050 = vsel %vm4958, %v4352, -inf
    %v5051 = vrot.slane %v5050, 4
    %v5052 = vmax.f32 %v5050, %v5051
    %v5053 = vrot.slane %v5052, 2
    %v5054 = vmax.f32 %v5052, %v5053
    %v5055 = vrot.slane %v5054, 1
    %v5056 = vmax.f32 %v5054, %v5055
    %v5057 = vsel %vm4958, %v4351, -inf
    %v5058 = vrot.slane %v5057, 4
    %v5059 = vmax.f32 %v5057, %v5058
    %v5060 = vrot.slane %v5059, 2
    %v5061 = vmax.f32 %v5059, %v5060
    %v5062 = vrot.slane %v5061, 1
    %v5063 = vmax.f32 %v5061, %v5062
    %v5064 = vsel %vm4958, %v4353, -inf
    %v5065 = vrot.slane %v5064, 4
    %v5066 = vmax.f32 %v5064, %v5065
    %v5067 = vrot.slane %v5066, 2
    %v5068 = vmax.f32 %v5066, %v5067
    %v5069 = vrot.slane %v5068, 1
    %v5070 = vmax.f32 %v5068, %v5069
    %v5071 = vsel %vm4958, %v4361, -inf
    %v5072 = vrot.slane %v5071, 4
    %v5073 = vmax.f32 %v5071, %v5072
    %v5074 = vrot.slane %v5073, 2
    %v5075 = vmax.f32 %v5073, %v5074
    %v5076 = vrot.slane %v5075, 1
    %v5077 = vmax.f32 %v5075, %v5076
    %v5078 = vsel %vm4958, %v4369, -inf
    %v5079 = vrot.slane %v5078, 4
    %v5080 = vmax.f32 %v5078, %v5079
    %v5081 = vrot.slane %v5080, 2
    %v5082 = vmax.f32 %v5080, %v5081
    %v5083 = vrot.slane %v5082, 1
    %v5084 = vmax.f32 %v5082, %v5083
    %v5085 = vsel %vm4958, %v4368, -inf
    %v5086 = vrot.slane %v5085, 4
    %v5087 = vmax.f32 %v5085, %v5086
    %v5088 = vrot.slane %v5087, 2
    %v5089 = vmax.f32 %v5087, %v5088
    %v5090 = vrot.slane %v5089, 1
    %v5091 = vmax.f32 %v5089, %v5090
    %v5092 = vsel %vm4958, %v4370, -inf
    %v5093 = vrot.slane %v5092, 4
    %v5094 = vmax.f32 %v5092, %v5093
    %v5095 = vrot.slane %v5094, 2
    %v5096 = vmax.f32 %v5094, %v5095
    %v5097 = vrot.slane %v5096, 1
    %v5098 = vmax.f32 %v5096, %v5097
    %v5099 = vsel %vm4958, %v4378, -inf
    %v5100 = vrot.slane %v5099, 4
    %v5101 = vmax.f32 %v5099, %v5100
    %v5102 = vrot.slane %v5101, 2
    %v5103 = vmax.f32 %v5101, %v5102
    %v5104 = vrot.slane %v5103, 1
    %v5105 = vmax.f32 %v5103, %v5104
    %v5106 = vsel %vm4958, %v4386, -inf
    %v5107 = vrot.slane %v5106, 4
    %v5108 = vmax.f32 %v5106, %v5107
    %v5109 = vrot.slane %v5108, 2
    %v5110 = vmax.f32 %v5108, %v5109
    %v5111 = vrot.slane %v5110, 1
    %v5112 = vmax.f32 %v5110, %v5111
    %v5113 = vsel %vm4958, %v4385, -inf
    %v5114 = vrot.slane %v5113, 4
    %v5115 = vmax.f32 %v5113, %v5114
    %v5116 = vrot.slane %v5115, 2
    %v5117 = vmax.f32 %v5115, %v5116
    %v5118 = vrot.slane %v5117, 1
    %v5119 = vmax.f32 %v5117, %v5118
    %v5120 = vsel %vm4958, %v4387, -inf
    %v5121 = vrot.slane %v5120, 4
    %v5122 = vmax.f32 %v5120, %v5121
    %v5123 = vrot.slane %v5122, 2
    %v5124 = vmax.f32 %v5122, %v5123
    %v5125 = vrot.slane %v5124, 1
    %v5126 = vmax.f32 %v5124, %v5125
    %v5127 = vsel %vm4958, %v4395, -inf
    %v5128 = vrot.slane %v5127, 4
    %v5129 = vmax.f32 %v5127, %v5128
    %v5130 = vrot.slane %v5129, 2
    %v5131 = vmax.f32 %v5129, %v5130
    %v5132 = vrot.slane %v5131, 1
    %v5133 = vmax.f32 %v5131, %v5132
    %v5134 = vsel %vm4958, %v4403, -inf
    %v5135 = vrot.slane %v5134, 4
    %v5136 = vmax.f32 %v5134, %v5135
    %v5137 = vrot.slane %v5136, 2
    %v5138 = vmax.f32 %v5136, %v5137
    %v5139 = vrot.slane %v5138, 1
    %v5140 = vmax.f32 %v5138, %v5139
    %v5141 = vsel %vm4958, %v4402, -inf
    %v5142 = vrot.slane %v5141, 4
    %v5143 = vmax.f32 %v5141, %v5142
    %v5144 = vrot.slane %v5143, 2
    %v5145 = vmax.f32 %v5143, %v5144
    %v5146 = vrot.slane %v5145, 1
    %v5147 = vmax.f32 %v5145, %v5146
    %v5148 = vsel %vm4958, %v4404, -inf
    %v5149 = vrot.slane %v5148, 4
    %v5150 = vmax.f32 %v5148, %v5149
    %v5151 = vrot.slane %v5150, 2
    %v5152 = vmax.f32 %v5150, %v5151
    %v5153 = vrot.slane %v5152, 1
    %v5154 = vmax.f32 %v5152, %v5153
    %v5155 = vsel %vm4958, %v4412, -inf
    %v5156 = vrot.slane %v5155, 4
    %v5157 = vmax.f32 %v5155, %v5156
    %v5158 = vrot.slane %v5157, 2
    %v5159 = vmax.f32 %v5157, %v5158
    %v5160 = vrot.slane %v5159, 1
    %v5161 = vmax.f32 %v5159, %v5160
    %v5162 = vsel %vm4958, %v4420, -inf
    %v5163 = vrot.slane %v5162, 4
    %v5164 = vmax.f32 %v5162, %v5163
    %v5165 = vrot.slane %v5164, 2
    %v5166 = vmax.f32 %v5164, %v5165
    %v5167 = vrot.slane %v5166, 1
    %v5168 = vmax.f32 %v5166, %v5167
    %v5169 = vsel %vm4958, %v4419, -inf
    %v5170 = vrot.slane %v5169, 4
    %v5171 = vmax.f32 %v5169, %v5170
    %v5172 = vrot.slane %v5171, 2
    %v5173 = vmax.f32 %v5171, %v5172
    %v5174 = vrot.slane %v5173, 1
    %v5175 = vmax.f32 %v5173, %v5174
    %v5176 = vsel %vm4958, %v4421, -inf
    %v5177 = vrot.slane %v5176, 4
    %v5178 = vmax.f32 %v5176, %v5177
    %v5179 = vrot.slane %v5178, 2
    %v5180 = vmax.f32 %v5178, %v5179
    %v5181 = vrot.slane %v5180, 1
    %v5182 = vmax.f32 %v5180, %v5181
    %v5183 = vsel %vm4958, %v4429, -inf
    %v5184 = vrot.slane %v5183, 4
    %v5185 = vmax.f32 %v5183, %v5184
    %v5186 = vrot.slane %v5185, 2
    %v5187 = vmax.f32 %v5185, %v5186
    %v5188 = vrot.slane %v5187, 1
    %v5189 = vmax.f32 %v5187, %v5188
    %v5190 = vsel %vm4958, %v4437, -inf
    %v5191 = vrot.slane %v5190, 4
    %v5192 = vmax.f32 %v5190, %v5191
    %v5193 = vrot.slane %v5192, 2
    %v5194 = vmax.f32 %v5192, %v5193
    %v5195 = vrot.slane %v5194, 1
    %v5196 = vmax.f32 %v5194, %v5195
    %v5197 = vsel %vm4958, %v4436, -inf
    %v5198 = vrot.slane %v5197, 4
    %v5199 = vmax.f32 %v5197, %v5198
    %v5200 = vrot.slane %v5199, 2
    %v5201 = vmax.f32 %v5199, %v5200
    %v5202 = vrot.slane %v5201, 1
    %v5203 = vmax.f32 %v5201, %v5202
    %v5204 = vsel %vm4958, %v4438, -inf
    %v5205 = vrot.slane %v5204, 4
    %v5206 = vmax.f32 %v5204, %v5205
    %v5207 = vrot.slane %v5206, 2
    %v5208 = vmax.f32 %v5206, %v5207
    %v5209 = vrot.slane %v5208, 1
    %v5210 = vmax.f32 %v5208, %v5209
    %v5211 = vsel %vm4958, %v4446, -inf
    %v5212 = vrot.slane %v5211, 4
    %v5213 = vmax.f32 %v5211, %v5212
    %v5214 = vrot.slane %v5213, 2
    %v5215 = vmax.f32 %v5213, %v5214
    %v5216 = vrot.slane %v5215, 1
    %v5217 = vmax.f32 %v5215, %v5216
    %v5218 = vsel %vm4958, %v4454, -inf
    %v5219 = vrot.slane %v5218, 4
    %v5220 = vmax.f32 %v5218, %v5219
    %v5221 = vrot.slane %v5220, 2
    %v5222 = vmax.f32 %v5220, %v5221
    %v5223 = vrot.slane %v5222, 1
    %v5224 = vmax.f32 %v5222, %v5223
    %v5225 = vsel %vm4958, %v4453, -inf
    %v5226 = vrot.slane %v5225, 4
    %v5227 = vmax.f32 %v5225, %v5226
    %v5228 = vrot.slane %v5227, 2
    %v5229 = vmax.f32 %v5227, %v5228
    %v5230 = vrot.slane %v5229, 1
    %v5231 = vmax.f32 %v5229, %v5230
    %v5232 = vsel %vm4958, %v4455, -inf
    %v5233 = vrot.slane %v5232, 4
    %v5234 = vmax.f32 %v5232, %v5233
    %v5235 = vrot.slane %v5234, 2
    %v5236 = vmax.f32 %v5234, %v5235
    %v5237 = vrot.slane %v5236, 1
    %v5238 = vmax.f32 %v5236, %v5237
    %v5239 = vsel %vm4958, %v4463, -inf
    %v5240 = vrot.slane %v5239, 4
    %v5241 = vmax.f32 %v5239, %v5240
    %v5242 = vrot.slane %v5241, 2
    %v5243 = vmax.f32 %v5241, %v5242
    %v5244 = vrot.slane %v5243, 1
    %v5245 = vmax.f32 %v5243, %v5244
    %v5246 = vsel %vm4958, %v4471, -inf
    %v5247 = vrot.slane %v5246, 4
    %v5248 = vmax.f32 %v5246, %v5247
    %v5249 = vrot.slane %v5248, 2
    %v5250 = vmax.f32 %v5248, %v5249
    %v5251 = vrot.slane %v5250, 1
    %v5252 = vmax.f32 %v5250, %v5251
    %v5253 = vsel %vm4958, %v4470, -inf
    %v5254 = vrot.slane %v5253, 4
    %v5255 = vmax.f32 %v5253, %v5254
    %v5256 = vrot.slane %v5255, 2
    %v5257 = vmax.f32 %v5255, %v5256
    %v5258 = vrot.slane %v5257, 1
    %v5259 = vmax.f32 %v5257, %v5258
    %v5260 = vsel %vm4958, %v4472, -inf
    %v5261 = vrot.slane %v5260, 4
    %v5262 = vmax.f32 %v5260, %v5261
    %v5263 = vrot.slane %v5262, 2
    %v5264 = vmax.f32 %v5262, %v5263
    %v5265 = vrot.slane %v5264, 1
    %v5266 = vmax.f32 %v5264, %v5265
    %v5267 = vsel %vm4958, %v4480, -inf
    %v5268 = vrot.slane %v5267, 4
    %v5269 = vmax.f32 %v5267, %v5268
    %v5270 = vrot.slane %v5269, 2
    %v5271 = vmax.f32 %v5269, %v5270
    %v5272 = vrot.slane %v5271, 1
    %v5273 = vmax.f32 %v5271, %v5272
    %v5274 = vsel %vm4958, %v4488, -inf
    %v5275 = vrot.slane %v5274, 4
    %v5276 = vmax.f32 %v5274, %v5275
    %v5277 = vrot.slane %v5276, 2
    %v5278 = vmax.f32 %v5276, %v5277
    %v5279 = vrot.slane %v5278, 1
    %v5280 = vmax.f32 %v5278, %v5279
    %v5281 = vsel %vm4958, %v4487, -inf
    %v5282 = vrot.slane %v5281, 4
    %v5283 = vmax.f32 %v5281, %v5282
    %v5284 = vrot.slane %v5283, 2
    %v5285 = vmax.f32 %v5283, %v5284
    %v5286 = vrot.slane %v5285, 1
    %v5287 = vmax.f32 %v5285, %v5286
    %v5288 = vsel %vm4958, %v4489, -inf
    %v5289 = vrot.slane %v5288, 4
    %v5290 = vmax.f32 %v5288, %v5289
    %v5291 = vrot.slane %v5290, 2
    %v5292 = vmax.f32 %v5290, %v5291
    %v5293 = vrot.slane %v5292, 1
    %v5294 = vmax.f32 %v5292, %v5293
    %v5295 = vsel %vm4958, %v4497, -inf
    %v5296 = vrot.slane %v5295, 4
    %v5297 = vmax.f32 %v5295, %v5296
    %v5298 = vrot.slane %v5297, 2
    %v5299 = vmax.f32 %v5297, %v5298
    %v5300 = vrot.slane %v5299, 1
    %v5301 = vmax.f32 %v5299, %v5300
    %v5302 = vsel %vm4958, %v4505, -inf
    %v5303 = vrot.slane %v5302, 4
    %v5304 = vmax.f32 %v5302, %v5303
    %v5305 = vrot.slane %v5304, 2
    %v5306 = vmax.f32 %v5304, %v5305
    %v5307 = vrot.slane %v5306, 1
    %v5308 = vmax.f32 %v5306, %v5307
    %v5309 = vsel %vm4958, %v4504, -inf
    %v5310 = vrot.slane %v5309, 4
    %v5311 = vmax.f32 %v5309, %v5310
    %v5312 = vrot.slane %v5311, 2
    %v5313 = vmax.f32 %v5311, %v5312
    %v5314 = vrot.slane %v5313, 1
    %v5315 = vmax.f32 %v5313, %v5314
    %v5316 = vsel %vm4958, %v4506, -inf
    %v5317 = vrot.slane %v5316, 4
    %v5318 = vmax.f32 %v5316, %v5317
    %v5319 = vrot.slane %v5318, 2
    %v5320 = vmax.f32 %v5318, %v5319
    %v5321 = vrot.slane %v5320, 1
    %v5322 = vmax.f32 %v5320, %v5321
    %v5323 = vsel %vm4958, %v4514, -inf
    %v5324 = vrot.slane %v5323, 4
    %v5325 = vmax.f32 %v5323, %v5324
    %v5326 = vrot.slane %v5325, 2
    %v5327 = vmax.f32 %v5325, %v5326
    %v5328 = vrot.slane %v5327, 1
    %v5329 = vmax.f32 %v5327, %v5328
    %v5330 = vsel %vm4958, %v4522, -inf
    %v5331 = vrot.slane %v5330, 4
    %v5332 = vmax.f32 %v5330, %v5331
    %v5333 = vrot.slane %v5332, 2
    %v5334 = vmax.f32 %v5332, %v5333
    %v5335 = vrot.slane %v5334, 1
    %v5336 = vmax.f32 %v5334, %v5335
    %v5337 = vsel %vm4958, %v4521, -inf
    %v5338 = vrot.slane %v5337, 4
    %v5339 = vmax.f32 %v5337, %v5338
    %v5340 = vrot.slane %v5339, 2
    %v5341 = vmax.f32 %v5339, %v5340
    %v5342 = vrot.slane %v5341, 1
    %v5343 = vmax.f32 %v5341, %v5342
    %v5344 = vsel %vm4958, %v4523, -inf
    %v5345 = vrot.slane %v5344, 4
    %v5346 = vmax.f32 %v5344, %v5345
    %v5347 = vrot.slane %v5346, 2
    %v5348 = vmax.f32 %v5346, %v5347
    %v5349 = vrot.slane %v5348, 1
    %v5350 = vmax.f32 %v5348, %v5349
    %v5351 = vsel %vm4958, %v4531, -inf
    %v5352 = vrot.slane %v5351, 4
    %v5353 = vmax.f32 %v5351, %v5352
    %v5354 = vrot.slane %v5353, 2
    %v5355 = vmax.f32 %v5353, %v5354
    %v5356 = vrot.slane %v5355, 1
    %v5357 = vmax.f32 %v5355, %v5356
    %v5358 = vsel %vm4958, %v4539, -inf
    %v5359 = vrot.slane %v5358, 4
    %v5360 = vmax.f32 %v5358, %v5359
    %v5361 = vrot.slane %v5360, 2
    %v5362 = vmax.f32 %v5360, %v5361
    %v5363 = vrot.slane %v5362, 1
    %v5364 = vmax.f32 %v5362, %v5363
    %v5365 = vsel %vm4958, %v4538, -inf
    %v5366 = vrot.slane %v5365, 4
    %v5367 = vmax.f32 %v5365, %v5366
    %v5368 = vrot.slane %v5367, 2
    %v5369 = vmax.f32 %v5367, %v5368
    %v5370 = vrot.slane %v5369, 1
    %v5371 = vmax.f32 %v5369, %v5370
    %v5372 = vsel %vm4958, %v4540, -inf
    %v5373 = vrot.slane %v5372, 4
    %v5374 = vmax.f32 %v5372, %v5373
    %v5375 = vrot.slane %v5374, 2
    %v5376 = vmax.f32 %v5374, %v5375
    %v5377 = vrot.slane %v5376, 1
    %v5378 = vmax.f32 %v5376, %v5377
    %v5379 = vsel %vm4958, %v4548, -inf
    %v5380 = vrot.slane %v5379, 4
    %v5381 = vmax.f32 %v5379, %v5380
    %v5382 = vrot.slane %v5381, 2
    %v5383 = vmax.f32 %v5381, %v5382
    %v5384 = vrot.slane %v5383, 1
    %v5385 = vmax.f32 %v5383, %v5384
    %v5386 = vsel %vm4958, %v4556, -inf
    %v5387 = vrot.slane %v5386, 4
    %v5388 = vmax.f32 %v5386, %v5387
    %v5389 = vrot.slane %v5388, 2
    %v5390 = vmax.f32 %v5388, %v5389
    %v5391 = vrot.slane %v5390, 1
    %v5392 = vmax.f32 %v5390, %v5391
    %v5393 = vsel %vm4958, %v4555, -inf
    %v5394 = vrot.slane %v5393, 4
    %v5395 = vmax.f32 %v5393, %v5394
    %v5396 = vrot.slane %v5395, 2
    %v5397 = vmax.f32 %v5395, %v5396
    %v5398 = vrot.slane %v5397, 1
    %v5399 = vmax.f32 %v5397, %v5398
    %v5400 = vsel %vm4958, %v4557, -inf
    %v5401 = vrot.slane %v5400, 4
    %v5402 = vmax.f32 %v5400, %v5401
    %v5403 = vrot.slane %v5402, 2
    %v5404 = vmax.f32 %v5402, %v5403
    %v5405 = vrot.slane %v5404, 1
    %v5406 = vmax.f32 %v5404, %v5405
    %v5407 = vsel %vm4958, %v4565, -inf
    %v5408 = vrot.slane %v5407, 4
    %v5409 = vmax.f32 %v5407, %v5408
    %v5410 = vrot.slane %v5409, 2
    %v5411 = vmax.f32 %v5409, %v5410
    %v5412 = vrot.slane %v5411, 1
    %v5413 = vmax.f32 %v5411, %v5412
    %v5414 = vsel %vm4958, %v4573, -inf
    %v5415 = vrot.slane %v5414, 4
    %v5416 = vmax.f32 %v5414, %v5415
    %v5417 = vrot.slane %v5416, 2
    %v5418 = vmax.f32 %v5416, %v5417
    %v5419 = vrot.slane %v5418, 1
    %v5420 = vmax.f32 %v5418, %v5419
    %v5421 = vsel %vm4958, %v4572, -inf
    %v5422 = vrot.slane %v5421, 4
    %v5423 = vmax.f32 %v5421, %v5422
    %v5424 = vrot.slane %v5423, 2
    %v5425 = vmax.f32 %v5423, %v5424
    %v5426 = vrot.slane %v5425, 1
    %v5427 = vmax.f32 %v5425, %v5426
    %v5428 = vsel %vm4958, %v4574, -inf
    %v5429 = vrot.slane %v5428, 4
    %v5430 = vmax.f32 %v5428, %v5429
    %v5431 = vrot.slane %v5430, 2
    %v5432 = vmax.f32 %v5430, %v5431
    %v5433 = vrot.slane %v5432, 1
    %v5434 = vmax.f32 %v5432, %v5433
    %v5435 = vsel %vm4958, %v4582, -inf
    %v5436 = vrot.slane %v5435, 4
    %v5437 = vmax.f32 %v5435, %v5436
    %v5438 = vrot.slane %v5437, 2
    %v5439 = vmax.f32 %v5437, %v5438
    %v5440 = vrot.slane %v5439, 1
    %v5441 = vmax.f32 %v5439, %v5440
    %v5442 = vsel %vm4958, %v4590, -inf
    %v5443 = vrot.slane %v5442, 4
    %v5444 = vmax.f32 %v5442, %v5443
    %v5445 = vrot.slane %v5444, 2
    %v5446 = vmax.f32 %v5444, %v5445
    %v5447 = vrot.slane %v5446, 1
    %v5448 = vmax.f32 %v5446, %v5447
    %v5449 = vsel %vm4958, %v4589, -inf
    %v5450 = vrot.slane %v5449, 4
    %v5451 = vmax.f32 %v5449, %v5450
    %v5452 = vrot.slane %v5451, 2
    %v5453 = vmax.f32 %v5451, %v5452
    %v5454 = vrot.slane %v5453, 1
    %v5455 = vmax.f32 %v5453, %v5454
    %v5456 = vsel %vm4958, %v4591, -inf
    %v5457 = vrot.slane %v5456, 4
    %v5458 = vmax.f32 %v5456, %v5457
    %v5459 = vrot.slane %v5458, 2
    %v5460 = vmax.f32 %v5458, %v5459
    %v5461 = vrot.slane %v5460, 1
    %v5462 = vmax.f32 %v5460, %v5461
    %v5463 = vsel %vm4958, %v4599, -inf
    %v5464 = vrot.slane %v5463, 4
    %v5465 = vmax.f32 %v5463, %v5464
    %v5466 = vrot.slane %v5465, 2
    %v5467 = vmax.f32 %v5465, %v5466
    %v5468 = vrot.slane %v5467, 1
    %v5469 = vmax.f32 %v5467, %v5468
    %v5470 = vsel %vm4958, %v4607, -inf
    %v5471 = vrot.slane %v5470, 4
    %v5472 = vmax.f32 %v5470, %v5471
    %v5473 = vrot.slane %v5472, 2
    %v5474 = vmax.f32 %v5472, %v5473
    %v5475 = vrot.slane %v5474, 1
    %v5476 = vmax.f32 %v5474, %v5475
    %v5477 = vsel %vm4958, %v4606, -inf
    %v5478 = vrot.slane %v5477, 4
    %v5479 = vmax.f32 %v5477, %v5478
    %v5480 = vrot.slane %v5479, 2
    %v5481 = vmax.f32 %v5479, %v5480
    %v5482 = vrot.slane %v5481, 1
    %v5483 = vmax.f32 %v5481, %v5482
    %v5484 = vsel %vm4958, %v4608, -inf
    %v5485 = vrot.slane %v5484, 4
    %v5486 = vmax.f32 %v5484, %v5485
    %v5487 = vrot.slane %v5486, 2
    %v5488 = vmax.f32 %v5486, %v5487
    %v5489 = vrot.slane %v5488, 1
    %v5490 = vmax.f32 %v5488, %v5489
    %v5491 = vsel %vm4958, %v4616, -inf
    %v5492 = vrot.slane %v5491, 4
    %v5493 = vmax.f32 %v5491, %v5492
    %v5494 = vrot.slane %v5493, 2
    %v5495 = vmax.f32 %v5493, %v5494
    %v5496 = vrot.slane %v5495, 1
    %v5497 = vmax.f32 %v5495, %v5496
    %v5498 = vsel %vm4958, %v4624, -inf
    %v5499 = vrot.slane %v5498, 4
    %v5500 = vmax.f32 %v5498, %v5499
    %v5501 = vrot.slane %v5500, 2
    %v5502 = vmax.f32 %v5500, %v5501
    %v5503 = vrot.slane %v5502, 1
    %v5504 = vmax.f32 %v5502, %v5503
    %v5505 = vsel %vm4958, %v4623, -inf
    %v5506 = vrot.slane %v5505, 4
    %v5507 = vmax.f32 %v5505, %v5506
    %v5508 = vrot.slane %v5507, 2
    %v5509 = vmax.f32 %v5507, %v5508
    %v5510 = vrot.slane %v5509, 1
    %v5511 = vmax.f32 %v5509, %v5510
    %v5512 = vsel %vm4958, %v4625, -inf
    %v5513 = vrot.slane %v5512, 4
    %v5514 = vmax.f32 %v5512, %v5513
    %v5515 = vrot.slane %v5514, 2
    %v5516 = vmax.f32 %v5514, %v5515
    %v5517 = vrot.slane %v5516, 1
    %v5518 = vmax.f32 %v5516, %v5517
    %v5519 = vsel %vm4958, %v4633, -inf
    %v5520 = vrot.slane %v5519, 4
    %v5521 = vmax.f32 %v5519, %v5520
    %v5522 = vrot.slane %v5521, 2
    %v5523 = vmax.f32 %v5521, %v5522
    %v5524 = vrot.slane %v5523, 1
    %v5525 = vmax.f32 %v5523, %v5524
    %v5526 = vsel %vm4958, %v4641, -inf
    %v5527 = vrot.slane %v5526, 4
    %v5528 = vmax.f32 %v5526, %v5527
    %v5529 = vrot.slane %v5528, 2
    %v5530 = vmax.f32 %v5528, %v5529
    %v5531 = vrot.slane %v5530, 1
    %v5532 = vmax.f32 %v5530, %v5531
    %v5533 = vsel %vm4958, %v4640, -inf
    %v5534 = vrot.slane %v5533, 4
    %v5535 = vmax.f32 %v5533, %v5534
    %v5536 = vrot.slane %v5535, 2
    %v5537 = vmax.f32 %v5535, %v5536
    %v5538 = vrot.slane %v5537, 1
    %v5539 = vmax.f32 %v5537, %v5538
    %v5540 = vsel %vm4958, %v4642, -inf
    %v5541 = vrot.slane %v5540, 4
    %v5542 = vmax.f32 %v5540, %v5541
    %v5543 = vrot.slane %v5542, 2
    %v5544 = vmax.f32 %v5542, %v5543
    %v5545 = vrot.slane %v5544, 1
    %v5546 = vmax.f32 %v5544, %v5545
    %v5547 = vsel %vm4958, %v4650, -inf
    %v5548 = vrot.slane %v5547, 4
    %v5549 = vmax.f32 %v5547, %v5548
    %v5550 = vrot.slane %v5549, 2
    %v5551 = vmax.f32 %v5549, %v5550
    %v5552 = vrot.slane %v5551, 1
    %v5553 = vmax.f32 %v5551, %v5552
    %v5554 = vsel %vm4958, %v4658, -inf
    %v5555 = vrot.slane %v5554, 4
    %v5556 = vmax.f32 %v5554, %v5555
    %v5557 = vrot.slane %v5556, 2
    %v5558 = vmax.f32 %v5556, %v5557
    %v5559 = vrot.slane %v5558, 1
    %v5560 = vmax.f32 %v5558, %v5559
    %v5561 = vsel %vm4958, %v4657, -inf
    %v5562 = vrot.slane %v5561, 4
    %v5563 = vmax.f32 %v5561, %v5562
    %v5564 = vrot.slane %v5563, 2
    %v5565 = vmax.f32 %v5563, %v5564
    %v5566 = vrot.slane %v5565, 1
    %v5567 = vmax.f32 %v5565, %v5566
    %v5568 = vsel %vm4958, %v4659, -inf
    %v5569 = vrot.slane %v5568, 4
    %v5570 = vmax.f32 %v5568, %v5569
    %v5571 = vrot.slane %v5570, 2
    %v5572 = vmax.f32 %v5570, %v5571
    %v5573 = vrot.slane %v5572, 1
    %v5574 = vmax.f32 %v5572, %v5573
    %v5575 = vsel %vm4958, %v4667, -inf
    %v5576 = vrot.slane %v5575, 4
    %v5577 = vmax.f32 %v5575, %v5576
    %v5578 = vrot.slane %v5577, 2
    %v5579 = vmax.f32 %v5577, %v5578
    %v5580 = vrot.slane %v5579, 1
    %v5581 = vmax.f32 %v5579, %v5580
    %v5582 = vsel %vm4958, %v4675, -inf
    %v5583 = vrot.slane %v5582, 4
    %v5584 = vmax.f32 %v5582, %v5583
    %v5585 = vrot.slane %v5584, 2
    %v5586 = vmax.f32 %v5584, %v5585
    %v5587 = vrot.slane %v5586, 1
    %v5588 = vmax.f32 %v5586, %v5587
    %v5589 = vsel %vm4958, %v4674, -inf
    %v5590 = vrot.slane %v5589, 4
    %v5591 = vmax.f32 %v5589, %v5590
    %v5592 = vrot.slane %v5591, 2
    %v5593 = vmax.f32 %v5591, %v5592
    %v5594 = vrot.slane %v5593, 1
    %v5595 = vmax.f32 %v5593, %v5594
    %v5596 = vsel %vm4958, %v4676, -inf
    %v5597 = vrot.slane %v5596, 4
    %v5598 = vmax.f32 %v5596, %v5597
    %v5599 = vrot.slane %v5598, 2
    %v5600 = vmax.f32 %v5598, %v5599
    %v5601 = vrot.slane %v5600, 1
    %v5602 = vmax.f32 %v5600, %v5601
    %v5603 = vsel %vm4958, %v4684, -inf
    %v5604 = vrot.slane %v5603, 4
    %v5605 = vmax.f32 %v5603, %v5604
    %v5606 = vrot.slane %v5605, 2
    %v5607 = vmax.f32 %v5605, %v5606
    %v5608 = vrot.slane %v5607, 1
    %v5609 = vmax.f32 %v5607, %v5608
    %v5610 = vsel %vm4958, %v4692, -inf
    %v5611 = vrot.slane %v5610, 4
    %v5612 = vmax.f32 %v5610, %v5611
    %v5613 = vrot.slane %v5612, 2
    %v5614 = vmax.f32 %v5612, %v5613
    %v5615 = vrot.slane %v5614, 1
    %v5616 = vmax.f32 %v5614, %v5615
    %v5617 = vsel %vm4958, %v4691, -inf
    %v5618 = vrot.slane %v5617, 4
    %v5619 = vmax.f32 %v5617, %v5618
    %v5620 = vrot.slane %v5619, 2
    %v5621 = vmax.f32 %v5619, %v5620
    %v5622 = vrot.slane %v5621, 1
    %v5623 = vmax.f32 %v5621, %v5622
    %v5624 = vsel %vm4958, %v4693, -inf
    %v5625 = vrot.slane %v5624, 4
    %v5626 = vmax.f32 %v5624, %v5625
    %v5627 = vrot.slane %v5626, 2
    %v5628 = vmax.f32 %v5626, %v5627
    %v5629 = vrot.slane %v5628, 1
    %v5630 = vmax.f32 %v5628, %v5629
    %v5631 = vsel %vm4958, %v4701, -inf
    %v5632 = vrot.slane %v5631, 4
    %v5633 = vmax.f32 %v5631, %v5632
    %v5634 = vrot.slane %v5633, 2
    %v5635 = vmax.f32 %v5633, %v5634
    %v5636 = vrot.slane %v5635, 1
    %v5637 = vmax.f32 %v5635, %v5636
    %v5638 = vsel %vm4958, %v4709, -inf
    %v5639 = vrot.slane %v5638, 4
    %v5640 = vmax.f32 %v5638, %v5639
    %v5641 = vrot.slane %v5640, 2
    %v5642 = vmax.f32 %v5640, %v5641
    %v5643 = vrot.slane %v5642, 1
    %v5644 = vmax.f32 %v5642, %v5643
    %v5645 = vsel %vm4958, %v4708, -inf
    %v5646 = vrot.slane %v5645, 4
    %v5647 = vmax.f32 %v5645, %v5646
    %v5648 = vrot.slane %v5647, 2
    %v5649 = vmax.f32 %v5647, %v5648
    %v5650 = vrot.slane %v5649, 1
    %v5651 = vmax.f32 %v5649, %v5650
    %v5652 = vsel %vm4958, %v4710, -inf
    %v5653 = vrot.slane %v5652, 4
    %v5654 = vmax.f32 %v5652, %v5653
    %v5655 = vrot.slane %v5654, 2
    %v5656 = vmax.f32 %v5654, %v5655
    %v5657 = vrot.slane %v5656, 1
    %v5658 = vmax.f32 %v5656, %v5657
    %v5659 = vsel %vm4958, %v4718, -inf
    %v5660 = vrot.slane %v5659, 4
    %v5661 = vmax.f32 %v5659, %v5660
    %v5662 = vrot.slane %v5661, 2
    %v5663 = vmax.f32 %v5661, %v5662
    %v5664 = vrot.slane %v5663, 1
    %v5665 = vmax.f32 %v5663, %v5664
    %v5666 = vsel %vm4958, %v4726, -inf
    %v5667 = vrot.slane %v5666, 4
    %v5668 = vmax.f32 %v5666, %v5667
    %v5669 = vrot.slane %v5668, 2
    %v5670 = vmax.f32 %v5668, %v5669
    %v5671 = vrot.slane %v5670, 1
    %v5672 = vmax.f32 %v5670, %v5671
    %v5673 = vsel %vm4958, %v4725, -inf
    %v5674 = vrot.slane %v5673, 4
    %v5675 = vmax.f32 %v5673, %v5674
    %v5676 = vrot.slane %v5675, 2
    %v5677 = vmax.f32 %v5675, %v5676
    %v5678 = vrot.slane %v5677, 1
    %v5679 = vmax.f32 %v5677, %v5678
    %v5680 = vsel %vm4958, %v4727, -inf
    %v5681 = vrot.slane %v5680, 4
    %v5682 = vmax.f32 %v5680, %v5681
    %v5683 = vrot.slane %v5682, 2
    %v5684 = vmax.f32 %v5682, %v5683
    %v5685 = vrot.slane %v5684, 1
    %v5686 = vmax.f32 %v5684, %v5685
    %v5687 = vsel %vm4958, %v4735, -inf
    %v5688 = vrot.slane %v5687, 4
    %v5689 = vmax.f32 %v5687, %v5688
    %v5690 = vrot.slane %v5689, 2
    %v5691 = vmax.f32 %v5689, %v5690
    %v5692 = vrot.slane %v5691, 1
    %v5693 = vmax.f32 %v5691, %v5692
    %v5694 = vsel %vm4958, %v4743, -inf
    %v5695 = vrot.slane %v5694, 4
    %v5696 = vmax.f32 %v5694, %v5695
    %v5697 = vrot.slane %v5696, 2
    %v5698 = vmax.f32 %v5696, %v5697
    %v5699 = vrot.slane %v5698, 1
    %v5700 = vmax.f32 %v5698, %v5699
    %v5701 = vsel %vm4958, %v4742, -inf
    %v5702 = vrot.slane %v5701, 4
    %v5703 = vmax.f32 %v5701, %v5702
    %v5704 = vrot.slane %v5703, 2
    %v5705 = vmax.f32 %v5703, %v5704
    %v5706 = vrot.slane %v5705, 1
    %v5707 = vmax.f32 %v5705, %v5706
    %v5708 = vsel %vm4958, %v4744, -inf
    %v5709 = vrot.slane %v5708, 4
    %v5710 = vmax.f32 %v5708, %v5709
    %v5711 = vrot.slane %v5710, 2
    %v5712 = vmax.f32 %v5710, %v5711
    %v5713 = vrot.slane %v5712, 1
    %v5714 = vmax.f32 %v5712, %v5713
    %v5715 = vsel %vm4958, %v4752, -inf
    %v5716 = vrot.slane %v5715, 4
    %v5717 = vmax.f32 %v5715, %v5716
    %v5718 = vrot.slane %v5717, 2
    %v5719 = vmax.f32 %v5717, %v5718
    %v5720 = vrot.slane %v5719, 1
    %v5721 = vmax.f32 %v5719, %v5720
    %v5722 = vsel %vm4958, %v4760, -inf
    %v5723 = vrot.slane %v5722, 4
    %v5724 = vmax.f32 %v5722, %v5723
    %v5725 = vrot.slane %v5724, 2
    %v5726 = vmax.f32 %v5724, %v5725
    %v5727 = vrot.slane %v5726, 1
    %v5728 = vmax.f32 %v5726, %v5727
    %v5729 = vsel %vm4958, %v4759, -inf
    %v5730 = vrot.slane %v5729, 4
    %v5731 = vmax.f32 %v5729, %v5730
    %v5732 = vrot.slane %v5731, 2
    %v5733 = vmax.f32 %v5731, %v5732
    %v5734 = vrot.slane %v5733, 1
    %v5735 = vmax.f32 %v5733, %v5734
    %v5736 = vsel %vm4958, %v4761, -inf
    %v5737 = vrot.slane %v5736, 4
    %v5738 = vmax.f32 %v5736, %v5737
    %v5739 = vrot.slane %v5738, 2
    %v5740 = vmax.f32 %v5738, %v5739
    %v5741 = vrot.slane %v5740, 1
    %v5742 = vmax.f32 %v5740, %v5741
    %v5743 = vsel %vm4958, %v4769, -inf
    %v5744 = vrot.slane %v5743, 4
    %v5745 = vmax.f32 %v5743, %v5744
    %v5746 = vrot.slane %v5745, 2
    %v5747 = vmax.f32 %v5745, %v5746
    %v5748 = vrot.slane %v5747, 1
    %v5749 = vmax.f32 %v5747, %v5748
    %v5750 = vsel %vm4958, %v4777, -inf
    %v5751 = vrot.slane %v5750, 4
    %v5752 = vmax.f32 %v5750, %v5751
    %v5753 = vrot.slane %v5752, 2
    %v5754 = vmax.f32 %v5752, %v5753
    %v5755 = vrot.slane %v5754, 1
    %v5756 = vmax.f32 %v5754, %v5755
    %v5757 = vsel %vm4958, %v4776, -inf
    %v5758 = vrot.slane %v5757, 4
    %v5759 = vmax.f32 %v5757, %v5758
    %v5760 = vrot.slane %v5759, 2
    %v5761 = vmax.f32 %v5759, %v5760
    %v5762 = vrot.slane %v5761, 1
    %v5763 = vmax.f32 %v5761, %v5762
    %v5764 = vsel %vm4958, %v4778, -inf
    %v5765 = vrot.slane %v5764, 4
    %v5766 = vmax.f32 %v5764, %v5765
    %v5767 = vrot.slane %v5766, 2
    %v5768 = vmax.f32 %v5766, %v5767
    %v5769 = vrot.slane %v5768, 1
    %v5770 = vmax.f32 %v5768, %v5769
    %v5771 = vsel %vm4958, %v4786, -inf
    %v5772 = vrot.slane %v5771, 4
    %v5773 = vmax.f32 %v5771, %v5772
    %v5774 = vrot.slane %v5773, 2
    %v5775 = vmax.f32 %v5773, %v5774
    %v5776 = vrot.slane %v5775, 1
    %v5777 = vmax.f32 %v5775, %v5776
    %v5778 = vsel %vm4958, %v4794, -inf
    %v5779 = vrot.slane %v5778, 4
    %v5780 = vmax.f32 %v5778, %v5779
    %v5781 = vrot.slane %v5780, 2
    %v5782 = vmax.f32 %v5780, %v5781
    %v5783 = vrot.slane %v5782, 1
    %v5784 = vmax.f32 %v5782, %v5783
    %v5785 = vsel %vm4958, %v4793, -inf
    %v5786 = vrot.slane %v5785, 4
    %v5787 = vmax.f32 %v5785, %v5786
    %v5788 = vrot.slane %v5787, 2
    %v5789 = vmax.f32 %v5787, %v5788
    %v5790 = vrot.slane %v5789, 1
    %v5791 = vmax.f32 %v5789, %v5790
    %v5792 = vsel %vm4958, %v4795, -inf
    %v5793 = vrot.slane %v5792, 4
    %v5794 = vmax.f32 %v5792, %v5793
    %v5795 = vrot.slane %v5794, 2
    %v5796 = vmax.f32 %v5794, %v5795
    %v5797 = vrot.slane %v5796, 1
    %v5798 = vmax.f32 %v5796, %v5797
    %v5799 = vsel %vm4958, %v4803, -inf
    %v5800 = vrot.slane %v5799, 4
    %v5801 = vmax.f32 %v5799, %v5800
    %v5802 = vrot.slane %v5801, 2
    %v5803 = vmax.f32 %v5801, %v5802
    %v5804 = vrot.slane %v5803, 1
    %v5805 = vmax.f32 %v5803, %v5804
    %v5806 = vsel %vm4958, %v4811, -inf
    %v5807 = vrot.slane %v5806, 4
    %v5808 = vmax.f32 %v5806, %v5807
    %v5809 = vrot.slane %v5808, 2
    %v5810 = vmax.f32 %v5808, %v5809
    %v5811 = vrot.slane %v5810, 1
    %v5812 = vmax.f32 %v5810, %v5811
    %v5813 = vsel %vm4958, %v4810, -inf
    %v5814 = vrot.slane %v5813, 4
    %v5815 = vmax.f32 %v5813, %v5814
    %v5816 = vrot.slane %v5815, 2
    %v5817 = vmax.f32 %v5815, %v5816
    %v5818 = vrot.slane %v5817, 1
    %v5819 = vmax.f32 %v5817, %v5818
    %v5820 = vsel %vm4958, %v4812, -inf
    %v5821 = vrot.slane %v5820, 4
    %v5822 = vmax.f32 %v5820, %v5821
    %v5823 = vrot.slane %v5822, 2
    %v5824 = vmax.f32 %v5822, %v5823
    %v5825 = vrot.slane %v5824, 1
    %v5826 = vmax.f32 %v5824, %v5825
    %v5827 = vsel %vm4958, %v4820, -inf
    %v5828 = vrot.slane %v5827, 4
    %v5829 = vmax.f32 %v5827, %v5828
    %v5830 = vrot.slane %v5829, 2
    %v5831 = vmax.f32 %v5829, %v5830
    %v5832 = vrot.slane %v5831, 1
    %v5833 = vmax.f32 %v5831, %v5832
    %v5834 = vsel %vm4958, %v4828, -inf
    %v5835 = vrot.slane %v5834, 4
    %v5836 = vmax.f32 %v5834, %v5835
    %v5837 = vrot.slane %v5836, 2
    %v5838 = vmax.f32 %v5836, %v5837
    %v5839 = vrot.slane %v5838, 1
    %v5840 = vmax.f32 %v5838, %v5839
    %v5841 = vsel %vm4958, %v4827, -inf
    %v5842 = vrot.slane %v5841, 4
    %v5843 = vmax.f32 %v5841, %v5842
    %v5844 = vrot.slane %v5843, 2
    %v5845 = vmax.f32 %v5843, %v5844
    %v5846 = vrot.slane %v5845, 1
    %v5847 = vmax.f32 %v5845, %v5846
    %v5848 = vsel %vm4958, %v4829, -inf
    %v5849 = vrot.slane %v5848, 4
    %v5850 = vmax.f32 %v5848, %v5849
    %v5851 = vrot.slane %v5850, 2
    %v5852 = vmax.f32 %v5850, %v5851
    %v5853 = vrot.slane %v5852, 1
    %v5854 = vmax.f32 %v5852, %v5853
    %5855 = vst.msk [vmem:[#allocation3] sm:$0xff] %vm4157, 0.0
    %5856 = vst.msk [vmem:[#allocation3 + $0x8] sm:$0x3] %vm4958, 0.0
    %5857 = vst.msk [vmem:[#allocation3 + $0x10] sm:$0xff] %vm4157, 0.0
    %5858 = vst.msk [vmem:[#allocation3 + $0x18] sm:$0x3] %vm4958, 0.0
    %5859 = vst.msk [vmem:[#allocation3 + $0x20] sm:$0xff] %vm4157, 0.0
    %5860 = vst.msk [vmem:[#allocation3 + $0x28] sm:$0x3] %vm4958, 0.0
    %5861 = vst.msk [vmem:[#allocation3 + $0x30] sm:$0xff] %vm4157, 0.0
    %5862 = vst.msk [vmem:[#allocation3 + $0x38] sm:$0x3] %vm4958, 0.0
    %5863 = vst.msk [vmem:[#allocation3 + $0x40] sm:$0xff] %vm4157, 0.0
    %5864 = vst.msk [vmem:[#allocation3 + $0x48] sm:$0x3] %vm4958, 0.0
    %5865 = vst.msk [vmem:[#allocation3 + $0x50] sm:$0xff] %vm4157, 0.0
    %5866 = vst.msk [vmem:[#allocation3 + $0x58] sm:$0x3] %vm4958, 0.0
    %5867 = vst.msk [vmem:[#allocation3 + $0x60] sm:$0xff] %vm4157, 0.0
    %5868 = vst.msk [vmem:[#allocation3 + $0x68] sm:$0x3] %vm4958, 0.0
    %5869 = vst.msk [vmem:[#allocation3 + $0x70] sm:$0xff] %vm4157, 0.0
    %5870 = vst.msk [vmem:[#allocation3 + $0x78] sm:$0x3] %vm4958, 0.0
    %5871 = vst.msk [vmem:[#allocation3 + $0x80] sm:$0xff] %vm4157, 0.0
    %5872 = vst.msk [vmem:[#allocation3 + $0x88] sm:$0x3] %vm4958, 0.0
    %5873 = vst.msk [vmem:[#allocation3 + $0x90] sm:$0xff] %vm4157, 0.0
    %5874 = vst.msk [vmem:[#allocation3 + $0x98] sm:$0x3] %vm4958, 0.0
    %5875 = vst.msk [vmem:[#allocation3 + $0xa0] sm:$0xff] %vm4157, 0.0
    %5876 = vst.msk [vmem:[#allocation3 + $0xa8] sm:$0x3] %vm4958, 0.0
    %5877 = vst.msk [vmem:[#allocation3 + $0xb0] sm:$0xff] %vm4157, 0.0
    %5878 = vst.msk [vmem:[#allocation3 + $0xb8] sm:$0x3] %vm4958, 0.0
    %5879 = vst.msk [vmem:[#allocation3 + $0xc0] sm:$0xff] %vm4157, 0.0
    %5880 = vst.msk [vmem:[#allocation3 + $0xc8] sm:$0x3] %vm4958, 0.0
    %5881 = vst.msk [vmem:[#allocation3 + $0xd0] sm:$0xff] %vm4157, 0.0
    %5882 = vst.msk [vmem:[#allocation3 + $0xd8] sm:$0x3] %vm4958, 0.0
    %5883 = vst.msk [vmem:[#allocation3 + $0xe0] sm:$0xff] %vm4157, 0.0
    %5884 = vst.msk [vmem:[#allocation3 + $0xe8] sm:$0x3] %vm4958, 0.0
    %5885 = vst.msk [vmem:[#allocation3 + $0xf0] sm:$0xff] %vm4157, 0.0
    %5886 = vst.msk [vmem:[#allocation3 + $0xf8] sm:$0x3] %vm4958, 0.0
    %5887 = vst.msk [vmem:[#allocation3 + $0x100] sm:$0xff] %vm4157, 0.0
    %5888 = vst.msk [vmem:[#allocation3 + $0x108] sm:$0x3] %vm4958, 0.0
    %5889 = vst.msk [vmem:[#allocation3 + $0x110] sm:$0xff] %vm4157, 0.0
    %5890 = vst.msk [vmem:[#allocation3 + $0x118] sm:$0x3] %vm4958, 0.0
    %5891 = vst.msk [vmem:[#allocation3 + $0x120] sm:$0xff] %vm4157, 0.0
    %5892 = vst.msk [vmem:[#allocation3 + $0x128] sm:$0x3] %vm4958, 0.0
    %5893 = vst.msk [vmem:[#allocation3 + $0x130] sm:$0xff] %vm4157, 0.0
    %5894 = vst.msk [vmem:[#allocation3 + $0x138] sm:$0x3] %vm4958, 0.0
    %vm6023 = vcmask 1041409
    %v6024 = vsel %vm6023, %v4972, %v4965
    %vm6025 = vcmask 1042434
    %v6026 = vsel %vm6025, %v4979, %v6024
    %vm6027 = vcmask 1043459
    %v6028 = vsel %vm6027, %v4986, %v6026
    %vm6029 = vcmask 1044484
    %v6030 = vsel %vm6029, %v4993, %v6028
    %vm6031 = vcmask 1045509
    %v6032 = vsel %vm6031, %v5000, %v6030
    %vm6033 = vcmask 1046534
    %v6034 = vsel %vm6033, %v5007, %v6032
    %vm6035 = vcmask 1047559
    %v6036 = vsel %vm6035, %v5014, %v6034
    %v6037 = vsel %vm6023, %v5028, %v5021
    %v6038 = vsel %vm6025, %v5035, %v6037
    %v6039 = vsel %vm6027, %v5042, %v6038
    %v6040 = vsel %vm6029, %v5049, %v6039
    %v6041 = vsel %vm6031, %v5056, %v6040
    %v6042 = vsel %vm6033, %v5063, %v6041
    %v6043 = vsel %vm6035, %v5070, %v6042
    %v6044 = vsel %vm6023, %v5084, %v5077
    %v6045 = vsel %vm6025, %v5091, %v6044
    %v6046 = vsel %vm6027, %v5098, %v6045
    %v6047 = vsel %vm6029, %v5105, %v6046
    %v6048 = vsel %vm6031, %v5112, %v6047
    %v6049 = vsel %vm6033, %v5119, %v6048
    %v6050 = vsel %vm6035, %v5126, %v6049
    %v6051 = vsel %vm6023, %v5140, %v5133
    %v6052 = vsel %vm6025, %v5147, %v6051
    %v6053 = vsel %vm6027, %v5154, %v6052
    %v6054 = vsel %vm6029, %v5161, %v6053
    %v6055 = vsel %vm6031, %v5168, %v6054
    %v6056 = vsel %vm6033, %v5175, %v6055
    %v6057 = vsel %vm6035, %v5182, %v6056
    %v6058 = vsel %vm6023, %v5196, %v5189
    %v6059 = vsel %vm6025, %v5203, %v6058
    %v6060 = vsel %vm6027, %v5210, %v6059
    %v6061 = vsel %vm6029, %v5217, %v6060
    %v6062 = vsel %vm6031, %v5224, %v6061
    %v6063 = vsel %vm6033, %v5231, %v6062
    %v6064 = vsel %vm6035, %v5238, %v6063
    %v6065 = vsel %vm6023, %v5252, %v5245
    %v6066 = vsel %vm6025, %v5259, %v6065
    %v6067 = vsel %vm6027, %v5266, %v6066
    %v6068 = vsel %vm6029, %v5273, %v6067
    %v6069 = vsel %vm6031, %v5280, %v6068
    %v6070 = vsel %vm6033, %v5287, %v6069
    %v6071 = vsel %vm6035, %v5294, %v6070
    %v6072 = vsel %vm6023, %v5308, %v5301
    %v6073 = vsel %vm6025, %v5315, %v6072
    %v6074 = vsel %vm6027, %v5322, %v6073
    %v6075 = vsel %vm6029, %v5329, %v6074
    %v6076 = vsel %vm6031, %v5336, %v6075
    %v6077 = vsel %vm6033, %v5343, %v6076
    %v6078 = vsel %vm6035, %v5350, %v6077
    %v6079 = vsel %vm6023, %v5364, %v5357
    %v6080 = vsel %vm6025, %v5371, %v6079
    %v6081 = vsel %vm6027, %v5378, %v6080
    %v6082 = vsel %vm6029, %v5385, %v6081
    %v6083 = vsel %vm6031, %v5392, %v6082
    %v6084 = vsel %vm6033, %v5399, %v6083
    %v6085 = vsel %vm6035, %v5406, %v6084
    %v6086 = vsel %vm6023, %v5420, %v5413
    %v6087 = vsel %vm6025, %v5427, %v6086
    %v6088 = vsel %vm6027, %v5434, %v6087
    %v6089 = vsel %vm6029, %v5441, %v6088
    %v6090 = vsel %vm6031, %v5448, %v6089
    %v6091 = vsel %vm6033, %v5455, %v6090
    %v6092 = vsel %vm6035, %v5462, %v6091
    %v6093 = vsel %vm6023, %v5476, %v5469
    %v6094 = vsel %vm6025, %v5483, %v6093
    %v6095 = vsel %vm6027, %v5490, %v6094
    %v6096 = vsel %vm6029, %v5497, %v6095
    %v6097 = vsel %vm6031, %v5504, %v6096
    %v6098 = vsel %vm6033, %v5511, %v6097
    %v6099 = vsel %vm6035, %v5518, %v6098
    %v6100 = vsel %vm6023, %v5532, %v5525
    %v6101 = vsel %vm6025, %v5539, %v6100
    %v6102 = vsel %vm6027, %v5546, %v6101
    %v6103 = vsel %vm6029, %v5553, %v6102
    %v6104 = vsel %vm6031, %v5560, %v6103
    %v6105 = vsel %vm6033, %v5567, %v6104
    %v6106 = vsel %vm6035, %v5574, %v6105
    %v6107 = vsel %vm6023, %v5588, %v5581
    %v6108 = vsel %vm6025, %v5595, %v6107
    %v6109 = vsel %vm6027, %v5602, %v6108
    %v6110 = vsel %vm6029, %v5609, %v6109
    %v6111 = vsel %vm6031, %v5616, %v6110
    %v6112 = vsel %vm6033, %v5623, %v6111
    %v6113 = vsel %vm6035, %v5630, %v6112
    %v6114 = vsel %vm6023, %v5644, %v5637
    %v6115 = vsel %vm6025, %v5651, %v6114
    %v6116 = vsel %vm6027, %v5658, %v6115
    %v6117 = vsel %vm6029, %v5665, %v6116
    %v6118 = vsel %vm6031, %v5672, %v6117
    %v6119 = vsel %vm6033, %v5679, %v6118
    %v6120 = vsel %vm6035, %v5686, %v6119
    %v6121 = vsel %vm6023, %v5700, %v5693
    %v6122 = vsel %vm6025, %v5707, %v6121
    %v6123 = vsel %vm6027, %v5714, %v6122
    %v6124 = vsel %vm6029, %v5721, %v6123
    %v6125 = vsel %vm6031, %v5728, %v6124
    %v6126 = vsel %vm6033, %v5735, %v6125
    %v6127 = vsel %vm6035, %v5742, %v6126
    %v6128 = vsel %vm6023, %v5756, %v5749
    %v6129 = vsel %vm6025, %v5763, %v6128
    %v6130 = vsel %vm6027, %v5770, %v6129
    %v6131 = vsel %vm6029, %v5777, %v6130
    %v6132 = vsel %vm6031, %v5784, %v6131
    %v6133 = vsel %vm6033, %v5791, %v6132
    %v6134 = vsel %vm6035, %v5798, %v6133
    %v6135 = vsel %vm6023, %v5812, %v5805
    %v6136 = vsel %vm6025, %v5819, %v6135
    %v6137 = vsel %vm6027, %v5826, %v6136
    %v6138 = vsel %vm6029, %v5833, %v6137
    %v6139 = vsel %vm6031, %v5840, %v6138
    %v6140 = vsel %vm6033, %v5847, %v6139
    %v6141 = vsel %vm6035, %v5854, %v6140
    %s6158 = scalar_lea.vmem [#allocation3], 16
    %6159 = vst.msk [vmem:[%s6158 + $0x1] sm:$0xff] %vm4157, %v6036
    %6160 = vst.msk [vmem:[%s6158 + $0x11] sm:$0xff] %vm4157, %v6043
    %6161 = vst.msk [vmem:[%s6158 + $0x21] sm:$0xff] %vm4157, %v6050
    %6162 = vst.msk [vmem:[%s6158 + $0x31] sm:$0xff] %vm4157, %v6057
    %6163 = vst.msk [vmem:[%s6158 + $0x41] sm:$0xff] %vm4157, %v6064
    %6164 = vst.msk [vmem:[%s6158 + $0x51] sm:$0xff] %vm4157, %v6071
    %6165 = vst.msk [vmem:[%s6158 + $0x61] sm:$0xff] %vm4157, %v6078
    %6166 = vst.msk [vmem:[%s6158 + $0x71] sm:$0xff] %vm4157, %v6085
    %6167 = vst.msk [vmem:[%s6158 + $0xa1] sm:$0xff] %vm4157, %v6092
    %6168 = vst.msk [vmem:[%s6158 + $0xb1] sm:$0xff] %vm4157, %v6099
    %6169 = vst.msk [vmem:[%s6158 + $0xc1] sm:$0xff] %vm4157, %v6106
    %6170 = vst.msk [vmem:[%s6158 + $0xd1] sm:$0xff] %vm4157, %v6113
    %6171 = vst.msk [vmem:[%s6158 + $0xe1] sm:$0xff] %vm4157, %v6120
    %6172 = vst.msk [vmem:[%s6158 + $0xf1] sm:$0xff] %vm4157, %v6127
    %6173 = vst.msk [vmem:[%s6158 + $0x101] sm:$0xff] %vm4157, %v6134
    %6174 = vst.msk [vmem:[%s6158 + $0x111] sm:$0xff] %vm4157, %v6141
    %v6175 = vld [vmem:[#allocation3] sm:$0xff]
    %v6176 = vld [vmem:[#allocation3 + $0x10] sm:$0xff]
    %v6177 = vld [vmem:[#allocation3 + $0x20] sm:$0xff]
    %v6178 = vld [vmem:[#allocation3 + $0x30] sm:$0xff]
    %v6179 = vld [vmem:[#allocation3 + $0x40] sm:$0xff]
    %v6180 = vld [vmem:[#allocation3 + $0x50] sm:$0xff]
    %v6181 = vld [vmem:[#allocation3 + $0x60] sm:$0xff]
    %v6182 = vld [vmem:[#allocation3 + $0x70] sm:$0xff]
    %v6183 = vld [vmem:[#allocation3 + $0xa0] sm:$0xff]
    %v6184 = vld [vmem:[#allocation3 + $0xb0] sm:$0xff]
    %v6185 = vld [vmem:[#allocation3 + $0xc0] sm:$0xff]
    %v6186 = vld [vmem:[#allocation3 + $0xd0] sm:$0xff]
    %v6187 = vld [vmem:[#allocation3 + $0xe0] sm:$0xff]
    %v6188 = vld [vmem:[#allocation3 + $0xf0] sm:$0xff]
    %v6189 = vld [vmem:[#allocation3 + $0x100] sm:$0xff]
    %v6190 = vld [vmem:[#allocation3 + $0x110] sm:$0xff]
    %v6191 = vld [vmem:[#allocation3 + $0x1] sm:$0xff]
    %v6192 = vld [vmem:[#allocation3 + $0x11] sm:$0xff]
    %v6193 = vld [vmem:[#allocation3 + $0x21] sm:$0xff]
    %v6194 = vld [vmem:[#allocation3 + $0x31] sm:$0xff]
    %v6195 = vld [vmem:[#allocation3 + $0x41] sm:$0xff]
    %v6196 = vld [vmem:[#allocation3 + $0x51] sm:$0xff]
    %v6197 = vld [vmem:[#allocation3 + $0x61] sm:$0xff]
    %v6198 = vld [vmem:[#allocation3 + $0x71] sm:$0xff]
    %v6199 = vld [vmem:[#allocation3 + $0xa1] sm:$0xff]
    %v6200 = vld [vmem:[#allocation3 + $0xb1] sm:$0xff]
    %v6201 = vld [vmem:[#allocation3 + $0xc1] sm:$0xff]
    %v6202 = vld [vmem:[#allocation3 + $0xd1] sm:$0xff]
    %v6203 = vld [vmem:[#allocation3 + $0xe1] sm:$0xff]
    %v6204 = vld [vmem:[#allocation3 + $0xf1] sm:$0xff]
    %v6205 = vld [vmem:[#allocation3 + $0x101] sm:$0xff]
    %v6206 = vld [vmem:[#allocation3 + $0x111] sm:$0xff]
    %v6207 = vld [vmem:[#allocation3 + $0x2] sm:$0xff]
    %v6208 = vld [vmem:[#allocation3 + $0x12] sm:$0xff]
    %v6209 = vld [vmem:[#allocation3 + $0x22] sm:$0xff]
    %v6210 = vld [vmem:[#allocation3 + $0x32] sm:$0xff]
    %v6211 = vld [vmem:[#allocation3 + $0x42] sm:$0xff]
    %v6212 = vld [vmem:[#allocation3 + $0x52] sm:$0xff]
    %v6213 = vld [vmem:[#allocation3 + $0x62] sm:$0xff]
    %v6214 = vld [vmem:[#allocation3 + $0x72] sm:$0xff]
    %v6215 = vld [vmem:[#allocation3 + $0xa2] sm:$0xff]
    %v6216 = vld [vmem:[#allocation3 + $0xb2] sm:$0xff]
    %v6217 = vld [vmem:[#allocation3 + $0xc2] sm:$0xff]
    %v6218 = vld [vmem:[#allocation3 + $0xd2] sm:$0xff]
    %v6219 = vld [vmem:[#allocation3 + $0xe2] sm:$0xff]
    %v6220 = vld [vmem:[#allocation3 + $0xf2] sm:$0xff]
    %v6221 = vld [vmem:[#allocation3 + $0x102] sm:$0xff]
    %v6222 = vld [vmem:[#allocation3 + $0x112] sm:$0xff]
    %v6223 = vld [vmem:[%s6158] sm:$0xff]
    %v6224 = vld [vmem:[%s6158 + $0x10] sm:$0xff]
    %v6225 = vld [vmem:[%s6158 + $0x20] sm:$0xff]
    %v6226 = vld [vmem:[%s6158 + $0x30] sm:$0xff]
    %v6227 = vld [vmem:[%s6158 + $0x40] sm:$0xff]
    %v6228 = vld [vmem:[%s6158 + $0x50] sm:$0xff]
    %v6229 = vld [vmem:[%s6158 + $0x60] sm:$0xff]
    %v6230 = vld [vmem:[%s6158 + $0x70] sm:$0xff]
    %v6231 = vld [vmem:[%s6158 + $0xa0] sm:$0xff]
    %v6232 = vld [vmem:[%s6158 + $0xb0] sm:$0xff]
    %v6233 = vld [vmem:[%s6158 + $0xc0] sm:$0xff]
    %v6234 = vld [vmem:[%s6158 + $0xd0] sm:$0xff]
    %v6235 = vld [vmem:[%s6158 + $0xe0] sm:$0xff]
    %v6236 = vld [vmem:[%s6158 + $0xf0] sm:$0xff]
    %v6237 = vld [vmem:[%s6158 + $0x100] sm:$0xff]
    %v6238 = vld [vmem:[%s6158 + $0x110] sm:$0xff]
    %v6239 = vld [vmem:[%s6158 + $0x1] sm:$0xff]
    %v6240 = vld [vmem:[%s6158 + $0x11] sm:$0xff]
    %v6241 = vld [vmem:[%s6158 + $0x21] sm:$0xff]
    %v6242 = vld [vmem:[%s6158 + $0x31] sm:$0xff]
    %v6243 = vld [vmem:[%s6158 + $0x41] sm:$0xff]
    %v6244 = vld [vmem:[%s6158 + $0x51] sm:$0xff]
    %v6245 = vld [vmem:[%s6158 + $0x61] sm:$0xff]
    %v6246 = vld [vmem:[%s6158 + $0x71] sm:$0xff]
    %v6247 = vld [vmem:[%s6158 + $0xa1] sm:$0xff]
    %v6248 = vld [vmem:[%s6158 + $0xb1] sm:$0xff]
    %v6249 = vld [vmem:[%s6158 + $0xc1] sm:$0xff]
    %v6250 = vld [vmem:[%s6158 + $0xd1] sm:$0xff]
    %v6251 = vld [vmem:[%s6158 + $0xe1] sm:$0xff]
    %v6252 = vld [vmem:[%s6158 + $0xf1] sm:$0xff]
    %v6253 = vld [vmem:[%s6158 + $0x101] sm:$0xff]
    %v6254 = vld [vmem:[%s6158 + $0x111] sm:$0xff]
    %v6255 = vld [vmem:[%s6158 + $0x2] sm:$0xff]
    %v6256 = vld [vmem:[%s6158 + $0x12] sm:$0xff]
    %v6257 = vld [vmem:[%s6158 + $0x22] sm:$0xff]
    %v6258 = vld [vmem:[%s6158 + $0x32] sm:$0xff]
    %v6259 = vld [vmem:[%s6158 + $0x42] sm:$0xff]
    %v6260 = vld [vmem:[%s6158 + $0x52] sm:$0xff]
    %v6261 = vld [vmem:[%s6158 + $0x62] sm:$0xff]
    %v6262 = vld [vmem:[%s6158 + $0x72] sm:$0xff]
    %v6263 = vld [vmem:[%s6158 + $0xa2] sm:$0xff]
    %v6264 = vld [vmem:[%s6158 + $0xb2] sm:$0xff]
    %v6265 = vld [vmem:[%s6158 + $0xc2] sm:$0xff]
    %v6266 = vld [vmem:[%s6158 + $0xd2] sm:$0xff]
    %v6267 = vld [vmem:[%s6158 + $0xe2] sm:$0xff]
    %v6268 = vld [vmem:[%s6158 + $0xf2] sm:$0xff]
    %v6269 = vld [vmem:[%s6158 + $0x102] sm:$0xff]
    %v6270 = vld [vmem:[%s6158 + $0x112] sm:$0xff]
    %s6271 = scalar_lea.vmem [#allocation3], 32
    %v6272 = vld [vmem:[%s6271] sm:$0xff]
    %v6273 = vld [vmem:[%s6271 + $0x10] sm:$0xff]
    %v6274 = vld [vmem:[%s6271 + $0x20] sm:$0xff]
    %v6275 = vld [vmem:[%s6271 + $0x30] sm:$0xff]
    %v6276 = vld [vmem:[%s6271 + $0x40] sm:$0xff]
    %v6277 = vld [vmem:[%s6271 + $0x50] sm:$0xff]
    %v6278 = vld [vmem:[%s6271 + $0x60] sm:$0xff]
    %v6279 = vld [vmem:[%s6271 + $0x70] sm:$0xff]
    %v6280 = vld [vmem:[%s6271 + $0xa0] sm:$0xff]
    %v6281 = vld [vmem:[%s6271 + $0xb0] sm:$0xff]
    %v6282 = vld [vmem:[%s6271 + $0xc0] sm:$0xff]
    %v6283 = vld [vmem:[%s6271 + $0xd0] sm:$0xff]
    %v6284 = vld [vmem:[%s6271 + $0xe0] sm:$0xff]
    %v6285 = vld [vmem:[%s6271 + $0xf0] sm:$0xff]
    %v6286 = vld [vmem:[%s6271 + $0x100] sm:$0xff]
    %v6287 = vld [vmem:[%s6271 + $0x110] sm:$0xff]
    %v6288 = vld [vmem:[%s6271 + $0x1] sm:$0xff]
    %v6289 = vld [vmem:[%s6271 + $0x11] sm:$0xff]
    %v6290 = vld [vmem:[%s6271 + $0x21] sm:$0xff]
    %v6291 = vld [vmem:[%s6271 + $0x31] sm:$0xff]
    %v6292 = vld [vmem:[%s6271 + $0x41] sm:$0xff]
    %v6293 = vld [vmem:[%s6271 + $0x51] sm:$0xff]
    %v6294 = vld [vmem:[%s6271 + $0x61] sm:$0xff]
    %v6295 = vld [vmem:[%s6271 + $0x71] sm:$0xff]
    %v6296 = vld [vmem:[%s6271 + $0xa1] sm:$0xff]
    %v6297 = vld [vmem:[%s6271 + $0xb1] sm:$0xff]
    %v6298 = vld [vmem:[%s6271 + $0xc1] sm:$0xff]
    %v6299 = vld [vmem:[%s6271 + $0xd1] sm:$0xff]
    %v6300 = vld [vmem:[%s6271 + $0xe1] sm:$0xff]
    %v6301 = vld [vmem:[%s6271 + $0xf1] sm:$0xff]
    %v6302 = vld [vmem:[%s6271 + $0x101] sm:$0xff]
    %v6303 = vld [vmem:[%s6271 + $0x111] sm:$0xff]
    %v6304 = vld [vmem:[%s6271 + $0x2] sm:$0xff]
    %v6305 = vld [vmem:[%s6271 + $0x12] sm:$0xff]
    %v6306 = vld [vmem:[%s6271 + $0x22] sm:$0xff]
    %v6307 = vld [vmem:[%s6271 + $0x32] sm:$0xff]
    %v6308 = vld [vmem:[%s6271 + $0x42] sm:$0xff]
    %v6309 = vld [vmem:[%s6271 + $0x52] sm:$0xff]
    %v6310 = vld [vmem:[%s6271 + $0x62] sm:$0xff]
    %v6311 = vld [vmem:[%s6271 + $0x72] sm:$0xff]
    %v6312 = vld [vmem:[%s6271 + $0xa2] sm:$0xff]
    %v6313 = vld [vmem:[%s6271 + $0xb2] sm:$0xff]
    %v6314 = vld [vmem:[%s6271 + $0xc2] sm:$0xff]
    %v6315 = vld [vmem:[%s6271 + $0xd2] sm:$0xff]
    %v6316 = vld [vmem:[%s6271 + $0xe2] sm:$0xff]
    %v6317 = vld [vmem:[%s6271 + $0xf2] sm:$0xff]
    %v6318 = vld [vmem:[%s6271 + $0x102] sm:$0xff]
    %v6319 = vld [vmem:[%s6271 + $0x112] sm:$0xff]
    %6336 = vrot.lane.b32.xlu0 %v6191, 32
    %v6337 = vpop.permute.xlu0 %6336
    %6338 = vrot.lane.b32.xlu0 %v6192, 32
    %v6339 = vpop.permute.xlu0 %6338
    %6340 = vrot.lane.b32.xlu0 %v6193, 32
    %v6341 = vpop.permute.xlu0 %6340
    %6342 = vrot.lane.b32.xlu0 %v6194, 32
    %v6343 = vpop.permute.xlu0 %6342
    %6344 = vrot.lane.b32.xlu0 %v6195, 32
    %v6345 = vpop.permute.xlu0 %6344
    %6346 = vrot.lane.b32.xlu0 %v6196, 32
    %v6347 = vpop.permute.xlu0 %6346
    %6348 = vrot.lane.b32.xlu0 %v6197, 32
    %v6349 = vpop.permute.xlu0 %6348
    %6350 = vrot.lane.b32.xlu0 %v6198, 32
    %v6351 = vpop.permute.xlu0 %6350
    %6352 = vrot.lane.b32.xlu0 %v6199, 32
    %v6353 = vpop.permute.xlu0 %6352
    %6354 = vrot.lane.b32.xlu0 %v6200, 32
    %v6355 = vpop.permute.xlu0 %6354
    %6356 = vrot.lane.b32.xlu0 %v6201, 32
    %v6357 = vpop.permute.xlu0 %6356
    %6358 = vrot.lane.b32.xlu0 %v6202, 32
    %v6359 = vpop.permute.xlu0 %6358
    %6360 = vrot.lane.b32.xlu0 %v6203, 32
    %v6361 = vpop.permute.xlu0 %6360
    %6362 = vrot.lane.b32.xlu0 %v6204, 32
    %v6363 = vpop.permute.xlu0 %6362
    %6364 = vrot.lane.b32.xlu0 %v6205, 32
    %v6365 = vpop.permute.xlu0 %6364
    %6366 = vrot.lane.b32.xlu0 %v6206, 32
    %v6367 = vpop.permute.xlu0 %6366
    %6400 = vrot.lane.b32.xlu0 %v6207, 64
    %v6401 = vpop.permute.xlu0 %6400
    %6402 = vrot.lane.b32.xlu0 %v6208, 64
    %v6403 = vpop.permute.xlu0 %6402
    %6404 = vrot.lane.b32.xlu0 %v6209, 64
    %v6405 = vpop.permute.xlu0 %6404
    %6406 = vrot.lane.b32.xlu0 %v6210, 64
    %v6407 = vpop.permute.xlu0 %6406
    %6408 = vrot.lane.b32.xlu0 %v6211, 64
    %v6409 = vpop.permute.xlu0 %6408
    %6410 = vrot.lane.b32.xlu0 %v6212, 64
    %v6411 = vpop.permute.xlu0 %6410
    %6412 = vrot.lane.b32.xlu0 %v6213, 64
    %v6413 = vpop.permute.xlu0 %6412
    %6414 = vrot.lane.b32.xlu0 %v6214, 64
    %v6415 = vpop.permute.xlu0 %6414
    %6416 = vrot.lane.b32.xlu0 %v6215, 64
    %v6417 = vpop.permute.xlu0 %6416
    %6418 = vrot.lane.b32.xlu0 %v6216, 64
    %v6419 = vpop.permute.xlu0 %6418
    %6420 = vrot.lane.b32.xlu0 %v6217, 64
    %v6421 = vpop.permute.xlu0 %6420
    %6422 = vrot.lane.b32.xlu0 %v6218, 64
    %v6423 = vpop.permute.xlu0 %6422
    %6424 = vrot.lane.b32.xlu0 %v6219, 64
    %v6425 = vpop.permute.xlu0 %6424
    %6426 = vrot.lane.b32.xlu0 %v6220, 64
    %v6427 = vpop.permute.xlu0 %6426
    %6428 = vrot.lane.b32.xlu0 %v6221, 64
    %v6429 = vpop.permute.xlu0 %6428
    %6430 = vrot.lane.b32.xlu0 %v6222, 64
    %v6431 = vpop.permute.xlu0 %6430
    %6464 = vrot.lane.b32.xlu0 %v6223, 96
    %v6465 = vpop.permute.xlu0 %6464
    %6466 = vrot.lane.b32.xlu0 %v6224, 96
    %v6467 = vpop.permute.xlu0 %6466
    %6468 = vrot.lane.b32.xlu0 %v6225, 96
    %v6469 = vpop.permute.xlu0 %6468
    %6470 = vrot.lane.b32.xlu0 %v6226, 96
    %v6471 = vpop.permute.xlu0 %6470
    %6472 = vrot.lane.b32.xlu0 %v6227, 96
    %v6473 = vpop.permute.xlu0 %6472
    %6474 = vrot.lane.b32.xlu0 %v6228, 96
    %v6475 = vpop.permute.xlu0 %6474
    %6476 = vrot.lane.b32.xlu0 %v6229, 96
    %v6477 = vpop.permute.xlu0 %6476
    %6478 = vrot.lane.b32.xlu0 %v6230, 96
    %v6479 = vpop.permute.xlu0 %6478
    %6480 = vrot.lane.b32.xlu0 %v6231, 96
    %v6481 = vpop.permute.xlu0 %6480
    %6482 = vrot.lane.b32.xlu0 %v6232, 96
    %v6483 = vpop.permute.xlu0 %6482
    %6484 = vrot.lane.b32.xlu0 %v6233, 96
    %v6485 = vpop.permute.xlu0 %6484
    %6486 = vrot.lane.b32.xlu0 %v6234, 96
    %v6487 = vpop.permute.xlu0 %6486
    %6488 = vrot.lane.b32.xlu0 %v6235, 96
    %v6489 = vpop.permute.xlu0 %6488
    %6490 = vrot.lane.b32.xlu0 %v6236, 96
    %v6491 = vpop.permute.xlu0 %6490
    %6492 = vrot.lane.b32.xlu0 %v6237, 96
    %v6493 = vpop.permute.xlu0 %6492
    %6494 = vrot.lane.b32.xlu0 %v6238, 96
    %v6495 = vpop.permute.xlu0 %6494
    %6528 = vrot.lane.b32.xlu0 %v6255, 32
    %v6529 = vpop.permute.xlu0 %6528
    %6530 = vrot.lane.b32.xlu0 %v6256, 32
    %v6531 = vpop.permute.xlu0 %6530
    %6532 = vrot.lane.b32.xlu0 %v6257, 32
    %v6533 = vpop.permute.xlu0 %6532
    %6534 = vrot.lane.b32.xlu0 %v6258, 32
    %v6535 = vpop.permute.xlu0 %6534
    %6536 = vrot.lane.b32.xlu0 %v6259, 32
    %v6537 = vpop.permute.xlu0 %6536
    %6538 = vrot.lane.b32.xlu0 %v6260, 32
    %v6539 = vpop.permute.xlu0 %6538
    %6540 = vrot.lane.b32.xlu0 %v6261, 32
    %v6541 = vpop.permute.xlu0 %6540
    %6542 = vrot.lane.b32.xlu0 %v6262, 32
    %v6543 = vpop.permute.xlu0 %6542
    %6544 = vrot.lane.b32.xlu0 %v6263, 32
    %v6545 = vpop.permute.xlu0 %6544
    %6546 = vrot.lane.b32.xlu0 %v6264, 32
    %v6547 = vpop.permute.xlu0 %6546
    %6548 = vrot.lane.b32.xlu0 %v6265, 32
    %v6549 = vpop.permute.xlu0 %6548
    %6550 = vrot.lane.b32.xlu0 %v6266, 32
    %v6551 = vpop.permute.xlu0 %6550
    %6552 = vrot.lane.b32.xlu0 %v6267, 32
    %v6553 = vpop.permute.xlu0 %6552
    %6554 = vrot.lane.b32.xlu0 %v6268, 32
    %v6555 = vpop.permute.xlu0 %6554
    %6556 = vrot.lane.b32.xlu0 %v6269, 32
    %v6557 = vpop.permute.xlu0 %6556
    %6558 = vrot.lane.b32.xlu0 %v6270, 32
    %v6559 = vpop.permute.xlu0 %6558
    %6592 = vrot.lane.b32.xlu0 %v6272, 64
    %v6593 = vpop.permute.xlu0 %6592
    %6594 = vrot.lane.b32.xlu0 %v6273, 64
    %v6595 = vpop.permute.xlu0 %6594
    %6596 = vrot.lane.b32.xlu0 %v6274, 64
    %v6597 = vpop.permute.xlu0 %6596
    %6598 = vrot.lane.b32.xlu0 %v6275, 64
    %v6599 = vpop.permute.xlu0 %6598
    %6600 = vrot.lane.b32.xlu0 %v6276, 64
    %v6601 = vpop.permute.xlu0 %6600
    %6602 = vrot.lane.b32.xlu0 %v6277, 64
    %v6603 = vpop.permute.xlu0 %6602
    %6604 = vrot.lane.b32.xlu0 %v6278, 64
    %v6605 = vpop.permute.xlu0 %6604
    %6606 = vrot.lane.b32.xlu0 %v6279, 64
    %v6607 = vpop.permute.xlu0 %6606
    %6608 = vrot.lane.b32.xlu0 %v6280, 64
    %v6609 = vpop.permute.xlu0 %6608
    %6610 = vrot.lane.b32.xlu0 %v6281, 64
    %v6611 = vpop.permute.xlu0 %6610
    %6612 = vrot.lane.b32.xlu0 %v6282, 64
    %v6613 = vpop.permute.xlu0 %6612
    %6614 = vrot.lane.b32.xlu0 %v6283, 64
    %v6615 = vpop.permute.xlu0 %6614
    %6616 = vrot.lane.b32.xlu0 %v6284, 64
    %v6617 = vpop.permute.xlu0 %6616
    %6618 = vrot.lane.b32.xlu0 %v6285, 64
    %v6619 = vpop.permute.xlu0 %6618
    %6620 = vrot.lane.b32.xlu0 %v6286, 64
    %v6621 = vpop.permute.xlu0 %6620
    %6622 = vrot.lane.b32.xlu0 %v6287, 64
    %v6623 = vpop.permute.xlu0 %6622
    %6656 = vrot.lane.b32.xlu0 %v6288, 96
    %v6657 = vpop.permute.xlu0 %6656
    %6658 = vrot.lane.b32.xlu0 %v6289, 96
    %v6659 = vpop.permute.xlu0 %6658
    %6660 = vrot.lane.b32.xlu0 %v6290, 96
    %v6661 = vpop.permute.xlu0 %6660
    %6662 = vrot.lane.b32.xlu0 %v6291, 96
    %v6663 = vpop.permute.xlu0 %6662
    %6664 = vrot.lane.b32.xlu0 %v6292, 96
    %v6665 = vpop.permute.xlu0 %6664
    %6666 = vrot.lane.b32.xlu0 %v6293, 96
    %v6667 = vpop.permute.xlu0 %6666
    %6668 = vrot.lane.b32.xlu0 %v6294, 96
    %v6669 = vpop.permute.xlu0 %6668
    %6670 = vrot.lane.b32.xlu0 %v6295, 96
    %v6671 = vpop.permute.xlu0 %6670
    %6672 = vrot.lane.b32.xlu0 %v6296, 96
    %v6673 = vpop.permute.xlu0 %6672
    %6674 = vrot.lane.b32.xlu0 %v6297, 96
    %v6675 = vpop.permute.xlu0 %6674
    %6676 = vrot.lane.b32.xlu0 %v6298, 96
    %v6677 = vpop.permute.xlu0 %6676
    %6678 = vrot.lane.b32.xlu0 %v6299, 96
    %v6679 = vpop.permute.xlu0 %6678
    %6680 = vrot.lane.b32.xlu0 %v6300, 96
    %v6681 = vpop.permute.xlu0 %6680
    %6682 = vrot.lane.b32.xlu0 %v6301, 96
    %v6683 = vpop.permute.xlu0 %6682
    %6684 = vrot.lane.b32.xlu0 %v6302, 96
    %v6685 = vpop.permute.xlu0 %6684
    %6686 = vrot.lane.b32.xlu0 %v6303, 96
    %v6687 = vpop.permute.xlu0 %6686
    %v6704 = vsel %vm4157, %v6175, %v6337
    %v6705 = vsel %vm4157, %v6176, %v6339
    %v6706 = vsel %vm4157, %v6177, %v6341
    %v6707 = vsel %vm4157, %v6178, %v6343
    %v6708 = vsel %vm4157, %v6179, %v6345
    %v6709 = vsel %vm4157, %v6180, %v6347
    %v6710 = vsel %vm4157, %v6181, %v6349
    %v6711 = vsel %vm4157, %v6182, %v6351
    %v6712 = vsel %vm4157, %v6183, %v6353
    %v6713 = vsel %vm4157, %v6184, %v6355
    %v6714 = vsel %vm4157, %v6185, %v6357
    %v6715 = vsel %vm4157, %v6186, %v6359
    %v6716 = vsel %vm4157, %v6187, %v6361
    %v6717 = vsel %vm4157, %v6188, %v6363
    %v6718 = vsel %vm4157, %v6189, %v6365
    %v6719 = vsel %vm4157, %v6190, %v6367
    %vm6720 = vcmask 523264
    %v6721 = vsel %vm6720, %v6704, %v6401
    %v6722 = vsel %vm6720, %v6705, %v6403
    %v6723 = vsel %vm6720, %v6706, %v6405
    %v6724 = vsel %vm6720, %v6707, %v6407
    %v6725 = vsel %vm6720, %v6708, %v6409
    %v6726 = vsel %vm6720, %v6709, %v6411
    %v6727 = vsel %vm6720, %v6710, %v6413
    %v6728 = vsel %vm6720, %v6711, %v6415
    %v6729 = vsel %vm6720, %v6712, %v6417
    %v6730 = vsel %vm6720, %v6713, %v6419
    %v6731 = vsel %vm6720, %v6714, %v6421
    %v6732 = vsel %vm6720, %v6715, %v6423
    %v6733 = vsel %vm6720, %v6716, %v6425
    %v6734 = vsel %vm6720, %v6717, %v6427
    %v6735 = vsel %vm6720, %v6718, %v6429
    %v6736 = vsel %vm6720, %v6719, %v6431
    %vm6737 = vcmask 785408
    %v6738 = vsel %vm6737, %v6721, %v6465
    %v6739 = vsel %vm6737, %v6722, %v6467
    %v6740 = vsel %vm6737, %v6723, %v6469
    %v6741 = vsel %vm6737, %v6724, %v6471
    %v6742 = vsel %vm6737, %v6725, %v6473
    %v6743 = vsel %vm6737, %v6726, %v6475
    %v6744 = vsel %vm6737, %v6727, %v6477
    %v6745 = vsel %vm6737, %v6728, %v6479
    %v6746 = vsel %vm6737, %v6729, %v6481
    %v6747 = vsel %vm6737, %v6730, %v6483
    %v6748 = vsel %vm6737, %v6731, %v6485
    %v6749 = vsel %vm6737, %v6732, %v6487
    %v6750 = vsel %vm6737, %v6733, %v6489
    %v6751 = vsel %vm6737, %v6734, %v6491
    %v6752 = vsel %vm6737, %v6735, %v6493
    %v6753 = vsel %vm6737, %v6736, %v6495
    %v6754 = vsel %vm4157, %v6239, %v6529
    %v6755 = vsel %vm4157, %v6240, %v6531
    %v6756 = vsel %vm4157, %v6241, %v6533
    %v6757 = vsel %vm4157, %v6242, %v6535
    %v6758 = vsel %vm4157, %v6243, %v6537
    %v6759 = vsel %vm4157, %v6244, %v6539
    %v6760 = vsel %vm4157, %v6245, %v6541
    %v6761 = vsel %vm4157, %v6246, %v6543
    %v6762 = vsel %vm4157, %v6247, %v6545
    %v6763 = vsel %vm4157, %v6248, %v6547
    %v6764 = vsel %vm4157, %v6249, %v6549
    %v6765 = vsel %vm4157, %v6250, %v6551
    %v6766 = vsel %vm4157, %v6251, %v6553
    %v6767 = vsel %vm4157, %v6252, %v6555
    %v6768 = vsel %vm4157, %v6253, %v6557
    %v6769 = vsel %vm4157, %v6254, %v6559
    %v6770 = vsel %vm6720, %v6754, %v6593
    %v6771 = vsel %vm6720, %v6755, %v6595
    %v6772 = vsel %vm6720, %v6756, %v6597
    %v6773 = vsel %vm6720, %v6757, %v6599
    %v6774 = vsel %vm6720, %v6758, %v6601
    %v6775 = vsel %vm6720, %v6759, %v6603
    %v6776 = vsel %vm6720, %v6760, %v6605
    %v6777 = vsel %vm6720, %v6761, %v6607
    %v6778 = vsel %vm6720, %v6762, %v6609
    %v6779 = vsel %vm6720, %v6763, %v6611
    %v6780 = vsel %vm6720, %v6764, %v6613
    %v6781 = vsel %vm6720, %v6765, %v6615
    %v6782 = vsel %vm6720, %v6766, %v6617
    %v6783 = vsel %vm6720, %v6767, %v6619
    %v6784 = vsel %vm6720, %v6768, %v6621
    %v6785 = vsel %vm6720, %v6769, %v6623
    %v6786 = vsel %vm6737, %v6770, %v6657
    %v6787 = vsel %vm6737, %v6771, %v6659
    %v6788 = vsel %vm6737, %v6772, %v6661
    %v6789 = vsel %vm6737, %v6773, %v6663
    %v6790 = vsel %vm6737, %v6774, %v6665
    %v6791 = vsel %vm6737, %v6775, %v6667
    %v6792 = vsel %vm6737, %v6776, %v6669
    %v6793 = vsel %vm6737, %v6777, %v6671
    %v6794 = vsel %vm6737, %v6778, %v6673
    %v6795 = vsel %vm6737, %v6779, %v6675
    %v6796 = vsel %vm6737, %v6780, %v6677
    %v6797 = vsel %vm6737, %v6781, %v6679
    %v6798 = vsel %vm6737, %v6782, %v6681
    %v6799 = vsel %vm6737, %v6783, %v6683
    %v6800 = vsel %vm6737, %v6784, %v6685
    %v6801 = vsel %vm6737, %v6785, %v6687
    %v6802 = vld [vmem:[%s3] sm:$0xff]
    %v6803 = vld [vmem:[%s3 + $0x8] sm:$0xff]
    %v6804 = vld [vmem:[%s3 + $0x10] sm:$0xff]
    %v6805 = vld [vmem:[%s3 + $0x18] sm:$0xff]
    %v6806 = vld [vmem:[%s3 + $0x20] sm:$0xff]
    %v6807 = vld [vmem:[%s3 + $0x28] sm:$0xff]
    %v6808 = vld [vmem:[%s3 + $0x30] sm:$0xff]
    %v6809 = vld [vmem:[%s3 + $0x38] sm:$0xff]
    %v6810 = vld [vmem:[%s3 + $0x40] sm:$0xff]
    %v6811 = vld [vmem:[%s3 + $0x48] sm:$0xff]
    %v6812 = vld [vmem:[%s3 + $0x50] sm:$0xff]
    %v6813 = vld [vmem:[%s3 + $0x58] sm:$0xff]
    %v6814 = vld [vmem:[%s3 + $0x60] sm:$0xff]
    %v6815 = vld [vmem:[%s3 + $0x68] sm:$0xff]
    %v6816 = vld [vmem:[%s3 + $0x70] sm:$0xff]
    %v6817 = vld [vmem:[%s3 + $0x78] sm:$0xff]
    %v6818 = vld [vmem:[%s3 + $0x80] sm:$0xff]
    %v6819 = vld [vmem:[%s3 + $0x88] sm:$0xff]
    %v6820 = vld [vmem:[%s3 + $0x90] sm:$0xff]
    %v6821 = vld [vmem:[%s3 + $0x98] sm:$0xff]
    %v6822 = vld [vmem:[%s3 + $0xa0] sm:$0xff]
    %v6823 = vld [vmem:[%s3 + $0xa8] sm:$0xff]
    %v6824 = vld [vmem:[%s3 + $0xb0] sm:$0xff]
    %v6825 = vld [vmem:[%s3 + $0xb8] sm:$0xff]
    %v6826 = vld [vmem:[%s3 + $0xc0] sm:$0xff]
    %v6827 = vld [vmem:[%s3 + $0xc8] sm:$0xff]
    %v6828 = vld [vmem:[%s3 + $0xd0] sm:$0xff]
    %v6829 = vld [vmem:[%s3 + $0xd8] sm:$0xff]
    %v6830 = vld [vmem:[%s3 + $0xe0] sm:$0xff]
    %v6831 = vld [vmem:[%s3 + $0xe8] sm:$0xff]
    %v6832 = vld [vmem:[%s3 + $0xf0] sm:$0xff]
    %v6833 = vld [vmem:[%s3 + $0xf8] sm:$0xff]
    %v6834 = vld [vmem:[%s3 + $0x100] sm:$0xff]
    %v6835 = vld [vmem:[%s3 + $0x108] sm:$0xff]
    %v6836 = vld [vmem:[%s3 + $0x110] sm:$0xff]
    %v6837 = vld [vmem:[%s3 + $0x118] sm:$0xff]
    %v6838 = vld [vmem:[%s4] sm:$0x1]
    %v6840 = vlaneseq
    %v6841 = vshrl.u32 %v6840, 7
    %v6842 = vsub.s32 0, %v6841
    %v6843 = vrot.slane %v6838, %v6842
    %v6846 = vsel %vm4157, %v6304, 0
    %v6849 = vsel %vm4157, %v6305, 0
    %v6852 = vsel %vm4157, %v6306, 0
    %v6855 = vsel %vm4157, %v6307, 0
    %v6858 = vsel %vm4157, %v6308, 0
    %v6861 = vsel %vm4157, %v6309, 0
    %v6864 = vsel %vm4157, %v6310, 0
    %v6867 = vsel %vm4157, %v6311, 0
    %v6870 = vsel %vm4157, %v6312, 0
    %v6873 = vsel %vm4157, %v6313, 0
    %v6876 = vsel %vm4157, %v6314, 0
    %v6879 = vsel %vm4157, %v6315, 0
    %v6882 = vsel %vm4157, %v6316, 0
    %v6885 = vsel %vm4157, %v6317, 0
    %v6888 = vsel %vm4157, %v6318, 0
    %v6891 = vsel %vm4157, %v6319, 0
    %6893 = vmatprep.subr.mxu0 0.0
    %6894 = vmatpush1.msra.mxu0 %v6802
    %6895 = vmatprep.subr.mxu0 0.0
    %6896 = vmatpush1.msra.mxu0 %v6803
    %6897 = vmatprep.subr.mxu0 0.0
    %6898 = vmatpush1.msra.mxu0 %v6804
    %6899 = vmatprep.subr.mxu0 0.0
    %6900 = vmatpush1.msra.mxu0 %v6805
    %6901 = vmatprep.subr.mxu0 0.0
    %6902 = vmatpush1.msra.mxu0 %v6806
    %6903 = vmatprep.subr.mxu0 0.0
    %6904 = vmatpush1.msra.mxu0 %v6807
    %6905 = vmatprep.subr.mxu0 0.0
    %6906 = vmatpush1.msra.mxu0 %v6808
    %6907 = vmatprep.subr.mxu0 0.0
    %6908 = vmatpush1.msra.mxu0 %v6809
    %6909 = vmatprep.subr.mxu0 0.0
    %6910 = vmatpush1.msra.mxu0 %v6810
    %6911 = vmatprep.subr.mxu0 0.0
    %6912 = vmatpush1.msra.mxu0 %v6811
    %6913 = vmatprep.subr.mxu0 0.0
    %6914 = vmatpush1.msra.mxu0 %v6812
    %6915 = vmatprep.subr.mxu0 0.0
    %6916 = vmatpush1.msra.mxu0 %v6813
    %6917 = vmatprep.subr.mxu0 0.0
    %6918 = vmatpush1.msra.mxu0 %v6814
    %6919 = vmatprep.subr.mxu0 0.0
    %6920 = vmatpush1.msra.mxu0 %v6815
    %6921 = vmatprep.subr.mxu0 0.0
    %6922 = vmatpush1.msra.mxu0 %v6816
    %6923 = vmatprep.subr.mxu0 0.0
    %6924 = vmatpush1.msra.mxu0 %v6817
    %6925 = vmatprep.subr.mxu0 0.0
    %6926 = vmatpush1.msra.mxu0 %v6818
    %6927 = vmatprep.subr.mxu0 0.0
    %6928 = vmatpush1.msra.mxu0 %v6819
    %6929 = vmatprep.subr.mxu0 0.0
    %6930 = vmatpush1.msra.mxu0 %v6820
    %6931 = vmatprep.subr.mxu0 0.0
    %6932 = vmatpush1.msra.mxu0 %v6821
    %6933 = vmatprep.subr.mxu0 0.0
    %6934 = vmatpush1.msra.mxu0 %v6822
    %6935 = vmatprep.subr.mxu0 0.0
    %6936 = vmatpush1.msra.mxu0 %v6823
    %6937 = vmatprep.subr.mxu0 0.0
    %6938 = vmatpush1.msra.mxu0 %v6824
    %6939 = vmatprep.subr.mxu0 0.0
    %6940 = vmatpush1.msra.mxu0 %v6825
    %6941 = vmatprep.subr.mxu0 0.0
    %6942 = vmatpush1.msra.mxu0 %v6826
    %6943 = vmatprep.subr.mxu0 0.0
    %6944 = vmatpush1.msra.mxu0 %v6827
    %6945 = vmatprep.subr.mxu0 0.0
    %6946 = vmatpush1.msra.mxu0 %v6828
    %6947 = vmatprep.subr.mxu0 0.0
    %6948 = vmatpush1.msra.mxu0 %v6829
    %6949 = vmatprep.subr.mxu0 0.0
    %6950 = vmatpush1.msra.mxu0 %v6830
    %6951 = vmatprep.subr.mxu0 0.0
    %6952 = vmatpush1.msra.mxu0 %v6831
    %6953 = vmatprep.subr.mxu0 0.0
    %6954 = vmatpush1.msra.mxu0 %v6832
    %6955 = vmatprep.subr.mxu0 0.0
    %6956 = vmatpush1.msra.mxu0 %v6833
    %6957 = vmatprep.mubr.f32.mxu0 %v6786
    %6958 = vmatmul.mubr.f32.gmra.mrb[0].mxu0 %v6738
    %v6959 = vpop.f32.mrb[0].mxu0
    %v6960 = vadd.f32 %v6843, %v6959
    %v6961 = vpop.f32.mrb[0].mxu0
    %6962 = vmatprep.mubr.f32.mxu0 %v6787
    %6963 = vmatmul.mubr.f32.gmra.mrb[0].mxu0 %v6739
    %v6964 = vpop.f32.mrb[0].mxu0
    %v6965 = vadd.f32 %v6843, %v6964
    %v6966 = vpop.f32.mrb[0].mxu0
    %6967 = vmatprep.mubr.f32.mxu0 %v6788
    %6968 = vmatmul.mubr.f32.gmra.mrb[0].mxu0 %v6740
    %v6969 = vpop.f32.mrb[0].mxu0
    %v6970 = vadd.f32 %v6843, %v6969
    %v6971 = vpop.f32.mrb[0].mxu0
    %6972 = vmatprep.mubr.f32.mxu0 %v6789
    %6973 = vmatmul.mubr.f32.gmra.mrb[0].mxu0 %v6741
    %v6974 = vpop.f32.mrb[0].mxu0
    %v6975 = vadd.f32 %v6843, %v6974
    %v6976 = vpop.f32.mrb[0].mxu0
    %6977 = vmatprep.mubr.f32.mxu0 %v6790
    %6978 = vmatmul.mubr.f32.gmra.mrb[0].mxu0 %v6742
    %v6979 = vpop.f32.mrb[0].mxu0
    %v6980 = vadd.f32 %v6843, %v6979
    %v6981 = vpop.f32.mrb[0].mxu0
    %6982 = vmatprep.mubr.f32.mxu0 %v6791
    %6983 = vmatmul.mubr.f32.gmra.mrb[0].mxu0 %v6743
    %v6984 = vpop.f32.mrb[0].mxu0
    %v6985 = vadd.f32 %v6843, %v6984
    %v6986 = vpop.f32.mrb[0].mxu0
    %6987 = vmatprep.mubr.f32.mxu0 %v6792
    %6988 = vmatmul.mubr.f32.gmra.mrb[0].mxu0 %v6744
    %v6989 = vpop.f32.mrb[0].mxu0
    %v6990 = vadd.f32 %v6843, %v6989
    %v6991 = vpop.f32.mrb[0].mxu0
    %6992 = vmatprep.mubr.f32.mxu0 %v6793
    %6993 = vmatmul.mubr.f32.gmra.mrb[0].mxu0 %v6745
    %v6994 = vpop.f32.mrb[0].mxu0
    %v6995 = vadd.f32 %v6843, %v6994
    %v6996 = vpop.f32.mrb[0].mxu0
    %6997 = vmatprep.mubr.f32.mxu0 %v6794
    %6998 = vmatmul.mubr.f32.gmra.mrb[0].mxu0 %v6746
    %v6999 = vpop.f32.mrb[0].mxu0
    %v7000 = vadd.f32 %v6843, %v6999
    %v7001 = vpop.f32.mrb[0].mxu0
    %7002 = vmatprep.mubr.f32.mxu0 %v6795
    %7003 = vmatmul.mubr.f32.gmra.mrb[0].mxu0 %v6747
    %v7004 = vpop.f32.mrb[0].mxu0
    %v7005 = vadd.f32 %v6843, %v7004
    %v7006 = vpop.f32.mrb[0].mxu0
    %7007 = vmatprep.mubr.f32.mxu0 %v6796
    %7008 = vmatmul.mubr.f32.gmra.mrb[0].mxu0 %v6748
    %v7009 = vpop.f32.mrb[0].mxu0
    %v7010 = vadd.f32 %v6843, %v7009
    %v7011 = vpop.f32.mrb[0].mxu0
    %7012 = vmatprep.mubr.f32.mxu0 %v6797
    %7013 = vmatmul.mubr.f32.gmra.mrb[0].mxu0 %v6749
    %v7014 = vpop.f32.mrb[0].mxu0
    %v7015 = vadd.f32 %v6843, %v7014
    %v7016 = vpop.f32.mrb[0].mxu0
    %7017 = vmatprep.mubr.f32.mxu0 %v6798
    %7018 = vmatmul.mubr.f32.gmra.mrb[0].mxu0 %v6750
    %v7019 = vpop.f32.mrb[0].mxu0
    %v7020 = vadd.f32 %v6843, %v7019
    %v7021 = vpop.f32.mrb[0].mxu0
    %7022 = vmatprep.mubr.f32.mxu0 %v6799
    %7023 = vmatmul.mubr.f32.gmra.mrb[0].mxu0 %v6751
    %v7024 = vpop.f32.mrb[0].mxu0
    %v7025 = vadd.f32 %v6843, %v7024
    %v7026 = vpop.f32.mrb[0].mxu0
    %7027 = vmatprep.mubr.f32.mxu0 %v6800
    %7028 = vmatmul.mubr.f32.gmra.mrb[0].mxu0 %v6752
    %v7029 = vpop.f32.mrb[0].mxu0
    %v7030 = vadd.f32 %v6843, %v7029
    %v7031 = vpop.f32.mrb[0].mxu0
    %7032 = vmatprep.mubr.f32.mxu0 %v6801
    %7033 = vmatmul.mubr.f32.gmra.mrb[0].mxu0 %v6753
    %v7034 = vpop.f32.mrb[0].mxu0
    %v7035 = vadd.f32 %v6843, %v7034
    %v7036 = vpop.f32.mrb[0].mxu0
    %7037 = vdwg.mxu0
    %7038 = vmatprep.subr.mxu0 0.0
    %7039 = vmatpush1.msra.mxu0 %v6834
    %7040 = vmatprep.subr.mxu0 0.0
    %7041 = vmatpush1.msra.mxu0 %v6835
    %7042 = vmatprep.subr.mxu0 0.0
    %7043 = vmatpush1.msra.mxu0 %v6836
    %7044 = vmatprep.subr.mxu0 0.0
    %7045 = vmatpush1.msra.mxu0 %v6837
    %7046 = vmatprep.subr.mxu0 0.0
    %7047 = vmatpush1.msra.mxu0 0.0
    %7048 = vmatprep.subr.mxu0 0.0
    %7049 = vmatpush1.msra.mxu0 0.0
    %7050 = vmatprep.subr.mxu0 0.0
    %7051 = vmatpush1.msra.mxu0 0.0
    %7052 = vmatprep.subr.mxu0 0.0
    %7053 = vmatpush1.msra.mxu0 0.0
    %7054 = vmatprep.subr.mxu0 0.0
    %7055 = vmatpush1.msra.mxu0 0.0
    %7056 = vmatprep.subr.mxu0 0.0
    %7057 = vmatpush1.msra.mxu0 0.0
    %7058 = vmatprep.subr.mxu0 0.0
    %7059 = vmatpush1.msra.mxu0 0.0
    %7060 = vmatprep.subr.mxu0 0.0
    %7061 = vmatpush1.msra.mxu0 0.0
    %7062 = vmatprep.subr.mxu0 0.0
    %7063 = vmatpush1.msra.mxu0 0.0
    %7064 = vmatprep.subr.mxu0 0.0
    %7065 = vmatpush1.msra.mxu0 0.0
    %7066 = vmatprep.subr.mxu0 0.0
    %7067 = vmatpush1.msra.mxu0 0.0
    %7068 = vmatprep.subr.mxu0 0.0
    %7069 = vmatpush1.msra.mxu0 0.0
    %7070 = vmatprep.subr.mxu0 0.0
    %7071 = vmatpush1.msra.mxu0 0.0
    %7072 = vmatprep.subr.mxu0 0.0
    %7073 = vmatpush1.msra.mxu0 0.0
    %7074 = vmatprep.subr.mxu0 0.0
    %7075 = vmatpush1.msra.mxu0 0.0
    %7076 = vmatprep.subr.mxu0 0.0
    %7077 = vmatpush1.msra.mxu0 0.0
    %7078 = vmatprep.subr.mxu0 0.0
    %7079 = vmatpush1.msra.mxu0 0.0
    %7080 = vmatprep.subr.mxu0 0.0
    %7081 = vmatpush1.msra.mxu0 0.0
    %7082 = vmatprep.subr.mxu0 0.0
    %7083 = vmatpush1.msra.mxu0 0.0
    %7084 = vmatprep.subr.mxu0 0.0
    %7085 = vmatpush1.msra.mxu0 0.0
    %7086 = vmatprep.subr.mxu0 0.0
    %7087 = vmatpush1.msra.mxu0 0.0
    %7088 = vmatprep.subr.mxu0 0.0
    %7089 = vmatpush1.msra.mxu0 0.0
    %7090 = vmatprep.subr.mxu0 0.0
    %7091 = vmatpush1.msra.mxu0 0.0
    %7092 = vmatprep.subr.mxu0 0.0
    %7093 = vmatpush1.msra.mxu0 0.0
    %7094 = vmatprep.subr.mxu0 0.0
    %7095 = vmatpush1.msra.mxu0 0.0
    %7096 = vmatprep.subr.mxu0 0.0
    %7097 = vmatpush1.msra.mxu0 0.0
    %7098 = vmatprep.subr.mxu0 0.0
    %7099 = vmatpush1.msra.mxu0 0.0
    %7100 = vmatprep.subr.mxu0 0.0
    %7101 = vmatpush1.msra.mxu0 0.0
    %7102 = vmatprep.mubr.f32.mxu0 0.0
    %7103 = vmatmul.mubr.f32.gmra.mrb[0].mxu0 %v6846
    %v7104 = vpop.f32.mrb[0].mxu0
    %v7105 = vadd.f32 %v6960, %v7104
    %v7106 = vpop.f32.mrb[0].mxu0
    %7107 = vmatprep.mubr.f32.mxu0 0.0
    %7108 = vmatmul.mubr.f32.gmra.mrb[0].mxu0 %v6849
    %v7109 = vpop.f32.mrb[0].mxu0
    %v7110 = vadd.f32 %v6965, %v7109
    %v7111 = vpop.f32.mrb[0].mxu0
    %7112 = vmatprep.mubr.f32.mxu0 0.0
    %7113 = vmatmul.mubr.f32.gmra.mrb[0].mxu0 %v6852
    %v7114 = vpop.f32.mrb[0].mxu0
    %v7115 = vadd.f32 %v6970, %v7114
    %v7116 = vpop.f32.mrb[0].mxu0
    %7117 = vmatprep.mubr.f32.mxu0 0.0
    %7118 = vmatmul.mubr.f32.gmra.mrb[0].mxu0 %v6855
    %v7119 = vpop.f32.mrb[0].mxu0
    %v7120 = vadd.f32 %v6975, %v7119
    %v7121 = vpop.f32.mrb[0].mxu0
    %7122 = vmatprep.mubr.f32.mxu0 0.0
    %7123 = vmatmul.mubr.f32.gmra.mrb[0].mxu0 %v6858
    %v7124 = vpop.f32.mrb[0].mxu0
    %v7125 = vadd.f32 %v6980, %v7124
    %v7126 = vpop.f32.mrb[0].mxu0
    %7127 = vmatprep.mubr.f32.mxu0 0.0
    %7128 = vmatmul.mubr.f32.gmra.mrb[0].mxu0 %v6861
    %v7129 = vpop.f32.mrb[0].mxu0
    %v7130 = vadd.f32 %v6985, %v7129
    %v7131 = vpop.f32.mrb[0].mxu0
    %7132 = vmatprep.mubr.f32.mxu0 0.0
    %7133 = vmatmul.mubr.f32.gmra.mrb[0].mxu0 %v6864
    %v7134 = vpop.f32.mrb[0].mxu0
    %v7135 = vadd.f32 %v6990, %v7134
    %v7136 = vpop.f32.mrb[0].mxu0
    %7137 = vmatprep.mubr.f32.mxu0 0.0
    %7138 = vmatmul.mubr.f32.gmra.mrb[0].mxu0 %v6867
    %v7139 = vpop.f32.mrb[0].mxu0
    %v7140 = vadd.f32 %v6995, %v7139
    %v7141 = vpop.f32.mrb[0].mxu0
    %7142 = vmatprep.mubr.f32.mxu0 0.0
    %7143 = vmatmul.mubr.f32.gmra.mrb[0].mxu0 %v6870
    %v7144 = vpop.f32.mrb[0].mxu0
    %v7145 = vadd.f32 %v7000, %v7144
    %v7146 = vpop.f32.mrb[0].mxu0
    %7147 = vmatprep.mubr.f32.mxu0 0.0
    %7148 = vmatmul.mubr.f32.gmra.mrb[0].mxu0 %v6873
    %v7149 = vpop.f32.mrb[0].mxu0
    %v7150 = vadd.f32 %v7005, %v7149
    %v7151 = vpop.f32.mrb[0].mxu0
    %7152 = vmatprep.mubr.f32.mxu0 0.0
    %7153 = vmatmul.mubr.f32.gmra.mrb[0].mxu0 %v6876
    %v7154 = vpop.f32.mrb[0].mxu0
    %v7155 = vadd.f32 %v7010, %v7154
    %v7156 = vpop.f32.mrb[0].mxu0
    %7157 = vmatprep.mubr.f32.mxu0 0.0
    %7158 = vmatmul.mubr.f32.gmra.mrb[0].mxu0 %v6879
    %v7159 = vpop.f32.mrb[0].mxu0
    %v7160 = vadd.f32 %v7015, %v7159
    %v7161 = vpop.f32.mrb[0].mxu0
    %7162 = vmatprep.mubr.f32.mxu0 0.0
    %7163 = vmatmul.mubr.f32.gmra.mrb[0].mxu0 %v6882
    %v7164 = vpop.f32.mrb[0].mxu0
    %v7165 = vadd.f32 %v7020, %v7164
    %v7166 = vpop.f32.mrb[0].mxu0
    %7167 = vmatprep.mubr.f32.mxu0 0.0
    %7168 = vmatmul.mubr.f32.gmra.mrb[0].mxu0 %v6885
    %v7169 = vpop.f32.mrb[0].mxu0
    %v7170 = vadd.f32 %v7025, %v7169
    %v7171 = vpop.f32.mrb[0].mxu0
    %7172 = vmatprep.mubr.f32.mxu0 0.0
    %7173 = vmatmul.mubr.f32.gmra.mrb[0].mxu0 %v6888
    %v7174 = vpop.f32.mrb[0].mxu0
    %v7175 = vadd.f32 %v7030, %v7174
    %v7176 = vpop.f32.mrb[0].mxu0
    %7177 = vmatprep.mubr.f32.mxu0 0.0
    %7178 = vmatmul.mubr.f32.gmra.mrb[0].mxu0 %v6891
    %v7179 = vpop.f32.mrb[0].mxu0
    %v7180 = vadd.f32 %v7035, %v7179
    %v7181 = vpop.f32.mrb[0].mxu0
    %7182 = vdwg.mxu0
    %v7183 = vmax.f32 %v7105, 0.0
    %v7184 = vmax.f32 %v7110, 0.0
    %v7185 = vmax.f32 %v7115, 0.0
    %v7186 = vmax.f32 %v7120, 0.0
    %v7187 = vmax.f32 %v7125, 0.0
    %v7188 = vmax.f32 %v7130, 0.0
    %v7189 = vmax.f32 %v7135, 0.0
    %v7190 = vmax.f32 %v7140, 0.0
    %v7191 = vmax.f32 %v7145, 0.0
    %v7192 = vmax.f32 %v7150, 0.0
    %v7193 = vmax.f32 %v7155, 0.0
    %v7194 = vmax.f32 %v7160, 0.0
    %v7195 = vmax.f32 %v7165, 0.0
    %v7196 = vmax.f32 %v7170, 0.0
    %v7197 = vmax.f32 %v7175, 0.0
    %v7198 = vmax.f32 %v7180, 0.0
    %v7199 = vsel %vm6720, %v7183, -inf
    %v7200 = vsel %vm6720, %v7184, -inf
    %v7201 = vmax.f32 %v7199, %v7200
    %v7202 = vsel %vm6720, %v7185, -inf
    %v7203 = vsel %vm6720, %v7186, -inf
    %v7204 = vmax.f32 %v7202, %v7203
    %v7205 = vsel %vm6720, %v7187, -inf
    %v7206 = vsel %vm6720, %v7188, -inf
    %v7207 = vmax.f32 %v7205, %v7206
    %v7208 = vsel %vm6720, %v7189, -inf
    %v7209 = vsel %vm6720, %v7190, -inf
    %v7210 = vmax.f32 %v7208, %v7209
    %v7211 = vsel %vm6720, %v7191, -inf
    %v7212 = vsel %vm6720, %v7192, -inf
    %v7213 = vmax.f32 %v7211, %v7212
    %v7214 = vsel %vm6720, %v7193, -inf
    %v7215 = vsel %vm6720, %v7194, -inf
    %v7216 = vmax.f32 %v7214, %v7215
    %v7217 = vsel %vm6720, %v7195, -inf
    %v7218 = vsel %vm6720, %v7196, -inf
    %v7219 = vmax.f32 %v7217, %v7218
    %v7220 = vsel %vm6720, %v7197, -inf
    %v7221 = vsel %vm6720, %v7198, -inf
    %v7222 = vmax.f32 %v7220, %v7221
    %v7231 = vcombine.high %v7201, %v7201
    %v7233 = vunpack.c.l.s4 1983009808
    %v7234 = vunpack.c.0.s8 %v7233
    %v7235 = vlaneseq
    %v7236 = vshrl.u32 %v7235, 7
    %v7237 = vsub.s32 %v7234, %v7236
    %v7238 = vrot.slane %v7201, %v7237
    %v7240 = vunpack.c.l.s4 1983009808
    %v7241 = vunpack.c.0.s8 %v7240
    %v7242 = vlaneseq
    %v7243 = vshrl.u32 %v7242, 7
    %v7244 = vsub.s32 %v7241, %v7243
    %v7245 = vrot.slane %v7231, %v7244
    %v7246 = vcombine.high %v7238, %v7238
    %v7247 = vcombine.high %v7245, %v7245
    %v7248 = vcombine.high %v7204, %v7204
    %v7250 = vunpack.c.l.s4 1983009808
    %v7251 = vunpack.c.0.s8 %v7250
    %v7252 = vlaneseq
    %v7253 = vshrl.u32 %v7252, 7
    %v7254 = vsub.s32 %v7251, %v7253
    %v7255 = vrot.slane %v7204, %v7254
    %v7257 = vunpack.c.l.s4 1983009808
    %v7258 = vunpack.c.0.s8 %v7257
    %v7259 = vlaneseq
    %v7260 = vshrl.u32 %v7259, 7
    %v7261 = vsub.s32 %v7258, %v7260
    %v7262 = vrot.slane %v7248, %v7261
    %v7263 = vcombine.high %v7255, %v7255
    %v7264 = vcombine.high %v7262, %v7262
    %v7265 = vcombine.high %v7207, %v7207
    %v7267 = vunpack.c.l.s4 1983009808
    %v7268 = vunpack.c.0.s8 %v7267
    %v7269 = vlaneseq
    %v7270 = vshrl.u32 %v7269, 7
    %v7271 = vsub.s32 %v7268, %v7270
    %v7272 = vrot.slane %v7207, %v7271
    %v7274 = vunpack.c.l.s4 1983009808
    %v7275 = vunpack.c.0.s8 %v7274
    %v7276 = vlaneseq
    %v7277 = vshrl.u32 %v7276, 7
    %v7278 = vsub.s32 %v7275, %v7277
    %v7279 = vrot.slane %v7265, %v7278
    %v7280 = vcombine.high %v7272, %v7272
    %v7281 = vcombine.high %v7279, %v7279
    %v7282 = vcombine.high %v7210, %v7210
    %v7284 = vunpack.c.l.s4 1983009808
    %v7285 = vunpack.c.0.s8 %v7284
    %v7286 = vlaneseq
    %v7287 = vshrl.u32 %v7286, 7
    %v7288 = vsub.s32 %v7285, %v7287
    %v7289 = vrot.slane %v7210, %v7288
    %v7291 = vunpack.c.l.s4 1983009808
    %v7292 = vunpack.c.0.s8 %v7291
    %v7293 = vlaneseq
    %v7294 = vshrl.u32 %v7293, 7
    %v7295 = vsub.s32 %v7292, %v7294
    %v7296 = vrot.slane %v7282, %v7295
    %v7297 = vcombine.high %v7289, %v7289
    %v7298 = vcombine.high %v7296, %v7296
    %v7299 = vcombine.high %v7213, %v7213
    %v7301 = vunpack.c.l.s4 1983009808
    %v7302 = vunpack.c.0.s8 %v7301
    %v7303 = vlaneseq
    %v7304 = vshrl.u32 %v7303, 7
    %v7305 = vsub.s32 %v7302, %v7304
    %v7306 = vrot.slane %v7213, %v7305
    %v7308 = vunpack.c.l.s4 1983009808
    %v7309 = vunpack.c.0.s8 %v7308
    %v7310 = vlaneseq
    %v7311 = vshrl.u32 %v7310, 7
    %v7312 = vsub.s32 %v7309, %v7311
    %v7313 = vrot.slane %v7299, %v7312
    %v7314 = vcombine.high %v7306, %v7306
    %v7315 = vcombine.high %v7313, %v7313
    %v7316 = vcombine.high %v7216, %v7216
    %v7318 = vunpack.c.l.s4 1983009808
    %v7319 = vunpack.c.0.s8 %v7318
    %v7320 = vlaneseq
    %v7321 = vshrl.u32 %v7320, 7
    %v7322 = vsub.s32 %v7319, %v7321
    %v7323 = vrot.slane %v7216, %v7322
    %v7325 = vunpack.c.l.s4 1983009808
    %v7326 = vunpack.c.0.s8 %v7325
    %v7327 = vlaneseq
    %v7328 = vshrl.u32 %v7327, 7
    %v7329 = vsub.s32 %v7326, %v7328
    %v7330 = vrot.slane %v7316, %v7329
    %v7331 = vcombine.high %v7323, %v7323
    %v7332 = vcombine.high %v7330, %v7330
    %v7333 = vcombine.high %v7219, %v7219
    %v7335 = vunpack.c.l.s4 1983009808
    %v7336 = vunpack.c.0.s8 %v7335
    %v7337 = vlaneseq
    %v7338 = vshrl.u32 %v7337, 7
    %v7339 = vsub.s32 %v7336, %v7338
    %v7340 = vrot.slane %v7219, %v7339
    %v7342 = vunpack.c.l.s4 1983009808
    %v7343 = vunpack.c.0.s8 %v7342
    %v7344 = vlaneseq
    %v7345 = vshrl.u32 %v7344, 7
    %v7346 = vsub.s32 %v7343, %v7345
    %v7347 = vrot.slane %v7333, %v7346
    %v7348 = vcombine.high %v7340, %v7340
    %v7349 = vcombine.high %v7347, %v7347
    %v7350 = vcombine.high %v7222, %v7222
    %v7352 = vunpack.c.l.s4 1983009808
    %v7353 = vunpack.c.0.s8 %v7352
    %v7354 = vlaneseq
    %v7355 = vshrl.u32 %v7354, 7
    %v7356 = vsub.s32 %v7353, %v7355
    %v7357 = vrot.slane %v7222, %v7356
    %v7359 = vunpack.c.l.s4 1983009808
    %v7360 = vunpack.c.0.s8 %v7359
    %v7361 = vlaneseq
    %v7362 = vshrl.u32 %v7361, 7
    %v7363 = vsub.s32 %v7360, %v7362
    %v7364 = vrot.slane %v7350, %v7363
    %v7365 = vcombine.high %v7357, %v7357
    %v7366 = vcombine.high %v7364, %v7364
    %vm7399 = vcmask 517120
    %v7400 = vsel %vm7399, %v7238, -inf
    %v7401 = vrot.slane %v7400, 4
    %v7402 = vmax.f32 %v7400, %v7401
    %v7403 = vrot.slane %v7402, 2
    %v7404 = vmax.f32 %v7402, %v7403
    %v7405 = vrot.slane %v7404, 1
    %v7406 = vmax.f32 %v7404, %v7405
    %v7407 = vsel %vm7399, %v7246, -inf
    %v7408 = vrot.slane %v7407, 4
    %v7409 = vmax.f32 %v7407, %v7408
    %v7410 = vrot.slane %v7409, 2
    %v7411 = vmax.f32 %v7409, %v7410
    %v7412 = vrot.slane %v7411, 1
    %v7413 = vmax.f32 %v7411, %v7412
    %v7414 = vsel %vm7399, %v7245, -inf
    %v7415 = vrot.slane %v7414, 4
    %v7416 = vmax.f32 %v7414, %v7415
    %v7417 = vrot.slane %v7416, 2
    %v7418 = vmax.f32 %v7416, %v7417
    %v7419 = vrot.slane %v7418, 1
    %v7420 = vmax.f32 %v7418, %v7419
    %v7421 = vsel %vm7399, %v7247, -inf
    %v7422 = vrot.slane %v7421, 4
    %v7423 = vmax.f32 %v7421, %v7422
    %v7424 = vrot.slane %v7423, 2
    %v7425 = vmax.f32 %v7423, %v7424
    %v7426 = vrot.slane %v7425, 1
    %v7427 = vmax.f32 %v7425, %v7426
    %v7428 = vsel %vm7399, %v7255, -inf
    %v7429 = vrot.slane %v7428, 4
    %v7430 = vmax.f32 %v7428, %v7429
    %v7431 = vrot.slane %v7430, 2
    %v7432 = vmax.f32 %v7430, %v7431
    %v7433 = vrot.slane %v7432, 1
    %v7434 = vmax.f32 %v7432, %v7433
    %v7435 = vsel %vm7399, %v7263, -inf
    %v7436 = vrot.slane %v7435, 4
    %v7437 = vmax.f32 %v7435, %v7436
    %v7438 = vrot.slane %v7437, 2
    %v7439 = vmax.f32 %v7437, %v7438
    %v7440 = vrot.slane %v7439, 1
    %v7441 = vmax.f32 %v7439, %v7440
    %v7442 = vsel %vm7399, %v7262, -inf
    %v7443 = vrot.slane %v7442, 4
    %v7444 = vmax.f32 %v7442, %v7443
    %v7445 = vrot.slane %v7444, 2
    %v7446 = vmax.f32 %v7444, %v7445
    %v7447 = vrot.slane %v7446, 1
    %v7448 = vmax.f32 %v7446, %v7447
    %v7449 = vsel %vm7399, %v7264, -inf
    %v7450 = vrot.slane %v7449, 4
    %v7451 = vmax.f32 %v7449, %v7450
    %v7452 = vrot.slane %v7451, 2
    %v7453 = vmax.f32 %v7451, %v7452
    %v7454 = vrot.slane %v7453, 1
    %v7455 = vmax.f32 %v7453, %v7454
    %v7456 = vsel %vm7399, %v7272, -inf
    %v7457 = vrot.slane %v7456, 4
    %v7458 = vmax.f32 %v7456, %v7457
    %v7459 = vrot.slane %v7458, 2
    %v7460 = vmax.f32 %v7458, %v7459
    %v7461 = vrot.slane %v7460, 1
    %v7462 = vmax.f32 %v7460, %v7461
    %v7463 = vsel %vm7399, %v7280, -inf
    %v7464 = vrot.slane %v7463, 4
    %v7465 = vmax.f32 %v7463, %v7464
    %v7466 = vrot.slane %v7465, 2
    %v7467 = vmax.f32 %v7465, %v7466
    %v7468 = vrot.slane %v7467, 1
    %v7469 = vmax.f32 %v7467, %v7468
    %v7470 = vsel %vm7399, %v7279, -inf
    %v7471 = vrot.slane %v7470, 4
    %v7472 = vmax.f32 %v7470, %v7471
    %v7473 = vrot.slane %v7472, 2
    %v7474 = vmax.f32 %v7472, %v7473
    %v7475 = vrot.slane %v7474, 1
    %v7476 = vmax.f32 %v7474, %v7475
    %v7477 = vsel %vm7399, %v7281, -inf
    %v7478 = vrot.slane %v7477, 4
    %v7479 = vmax.f32 %v7477, %v7478
    %v7480 = vrot.slane %v7479, 2
    %v7481 = vmax.f32 %v7479, %v7480
    %v7482 = vrot.slane %v7481, 1
    %v7483 = vmax.f32 %v7481, %v7482
    %v7484 = vsel %vm7399, %v7289, -inf
    %v7485 = vrot.slane %v7484, 4
    %v7486 = vmax.f32 %v7484, %v7485
    %v7487 = vrot.slane %v7486, 2
    %v7488 = vmax.f32 %v7486, %v7487
    %v7489 = vrot.slane %v7488, 1
    %v7490 = vmax.f32 %v7488, %v7489
    %v7491 = vsel %vm7399, %v7297, -inf
    %v7492 = vrot.slane %v7491, 4
    %v7493 = vmax.f32 %v7491, %v7492
    %v7494 = vrot.slane %v7493, 2
    %v7495 = vmax.f32 %v7493, %v7494
    %v7496 = vrot.slane %v7495, 1
    %v7497 = vmax.f32 %v7495, %v7496
    %v7498 = vsel %vm7399, %v7296, -inf
    %v7499 = vrot.slane %v7498, 4
    %v7500 = vmax.f32 %v7498, %v7499
    %v7501 = vrot.slane %v7500, 2
    %v7502 = vmax.f32 %v7500, %v7501
    %v7503 = vrot.slane %v7502, 1
    %v7504 = vmax.f32 %v7502, %v7503
    %v7505 = vsel %vm7399, %v7298, -inf
    %v7506 = vrot.slane %v7505, 4
    %v7507 = vmax.f32 %v7505, %v7506
    %v7508 = vrot.slane %v7507, 2
    %v7509 = vmax.f32 %v7507, %v7508
    %v7510 = vrot.slane %v7509, 1
    %v7511 = vmax.f32 %v7509, %v7510
    %v7512 = vsel %vm7399, %v7306, -inf
    %v7513 = vrot.slane %v7512, 4
    %v7514 = vmax.f32 %v7512, %v7513
    %v7515 = vrot.slane %v7514, 2
    %v7516 = vmax.f32 %v7514, %v7515
    %v7517 = vrot.slane %v7516, 1
    %v7518 = vmax.f32 %v7516, %v7517
    %v7519 = vsel %vm7399, %v7314, -inf
    %v7520 = vrot.slane %v7519, 4
    %v7521 = vmax.f32 %v7519, %v7520
    %v7522 = vrot.slane %v7521, 2
    %v7523 = vmax.f32 %v7521, %v7522
    %v7524 = vrot.slane %v7523, 1
    %v7525 = vmax.f32 %v7523, %v7524
    %v7526 = vsel %vm7399, %v7313, -inf
    %v7527 = vrot.slane %v7526, 4
    %v7528 = vmax.f32 %v7526, %v7527
    %v7529 = vrot.slane %v7528, 2
    %v7530 = vmax.f32 %v7528, %v7529
    %v7531 = vrot.slane %v7530, 1
    %v7532 = vmax.f32 %v7530, %v7531
    %v7533 = vsel %vm7399, %v7315, -inf
    %v7534 = vrot.slane %v7533, 4
    %v7535 = vmax.f32 %v7533, %v7534
    %v7536 = vrot.slane %v7535, 2
    %v7537 = vmax.f32 %v7535, %v7536
    %v7538 = vrot.slane %v7537, 1
    %v7539 = vmax.f32 %v7537, %v7538
    %v7540 = vsel %vm7399, %v7323, -inf
    %v7541 = vrot.slane %v7540, 4
    %v7542 = vmax.f32 %v7540, %v7541
    %v7543 = vrot.slane %v7542, 2
    %v7544 = vmax.f32 %v7542, %v7543
    %v7545 = vrot.slane %v7544, 1
    %v7546 = vmax.f32 %v7544, %v7545
    %v7547 = vsel %vm7399, %v7331, -inf
    %v7548 = vrot.slane %v7547, 4
    %v7549 = vmax.f32 %v7547, %v7548
    %v7550 = vrot.slane %v7549, 2
    %v7551 = vmax.f32 %v7549, %v7550
    %v7552 = vrot.slane %v7551, 1
    %v7553 = vmax.f32 %v7551, %v7552
    %v7554 = vsel %vm7399, %v7330, -inf
    %v7555 = vrot.slane %v7554, 4
    %v7556 = vmax.f32 %v7554, %v7555
    %v7557 = vrot.slane %v7556, 2
    %v7558 = vmax.f32 %v7556, %v7557
    %v7559 = vrot.slane %v7558, 1
    %v7560 = vmax.f32 %v7558, %v7559
    %v7561 = vsel %vm7399, %v7332, -inf
    %v7562 = vrot.slane %v7561, 4
    %v7563 = vmax.f32 %v7561, %v7562
    %v7564 = vrot.slane %v7563, 2
    %v7565 = vmax.f32 %v7563, %v7564
    %v7566 = vrot.slane %v7565, 1
    %v7567 = vmax.f32 %v7565, %v7566
    %v7568 = vsel %vm7399, %v7340, -inf
    %v7569 = vrot.slane %v7568, 4
    %v7570 = vmax.f32 %v7568, %v7569
    %v7571 = vrot.slane %v7570, 2
    %v7572 = vmax.f32 %v7570, %v7571
    %v7573 = vrot.slane %v7572, 1
    %v7574 = vmax.f32 %v7572, %v7573
    %v7575 = vsel %vm7399, %v7348, -inf
    %v7576 = vrot.slane %v7575, 4
    %v7577 = vmax.f32 %v7575, %v7576
    %v7578 = vrot.slane %v7577, 2
    %v7579 = vmax.f32 %v7577, %v7578
    %v7580 = vrot.slane %v7579, 1
    %v7581 = vmax.f32 %v7579, %v7580
    %v7582 = vsel %vm7399, %v7347, -inf
    %v7583 = vrot.slane %v7582, 4
    %v7584 = vmax.f32 %v7582, %v7583
    %v7585 = vrot.slane %v7584, 2
    %v7586 = vmax.f32 %v7584, %v7585
    %v7587 = vrot.slane %v7586, 1
    %v7588 = vmax.f32 %v7586, %v7587
    %v7589 = vsel %vm7399, %v7349, -inf
    %v7590 = vrot.slane %v7589, 4
    %v7591 = vmax.f32 %v7589, %v7590
    %v7592 = vrot.slane %v7591, 2
    %v7593 = vmax.f32 %v7591, %v7592
    %v7594 = vrot.slane %v7593, 1
    %v7595 = vmax.f32 %v7593, %v7594
    %v7596 = vsel %vm7399, %v7357, -inf
    %v7597 = vrot.slane %v7596, 4
    %v7598 = vmax.f32 %v7596, %v7597
    %v7599 = vrot.slane %v7598, 2
    %v7600 = vmax.f32 %v7598, %v7599
    %v7601 = vrot.slane %v7600, 1
    %v7602 = vmax.f32 %v7600, %v7601
    %v7603 = vsel %vm7399, %v7365, -inf
    %v7604 = vrot.slane %v7603, 4
    %v7605 = vmax.f32 %v7603, %v7604
    %v7606 = vrot.slane %v7605, 2
    %v7607 = vmax.f32 %v7605, %v7606
    %v7608 = vrot.slane %v7607, 1
    %v7609 = vmax.f32 %v7607, %v7608
    %v7610 = vsel %vm7399, %v7364, -inf
    %v7611 = vrot.slane %v7610, 4
    %v7612 = vmax.f32 %v7610, %v7611
    %v7613 = vrot.slane %v7612, 2
    %v7614 = vmax.f32 %v7612, %v7613
    %v7615 = vrot.slane %v7614, 1
    %v7616 = vmax.f32 %v7614, %v7615
    %v7617 = vsel %vm7399, %v7366, -inf
    %v7618 = vrot.slane %v7617, 4
    %v7619 = vmax.f32 %v7617, %v7618
    %v7620 = vrot.slane %v7619, 2
    %v7621 = vmax.f32 %v7619, %v7620
    %v7622 = vrot.slane %v7621, 1
    %v7623 = vmax.f32 %v7621, %v7622
    %vm7624 = vcmask 521216
    %7625 = vst.msk [vmem:[#allocation4] sm:$0x3f] %vm7624, 0.0
    %7626 = vst.msk [vmem:[#allocation4 + $0x8] sm:$0x3f] %vm7624, 0.0
    %7627 = vst.msk [vmem:[#allocation4 + $0x10] sm:$0x3f] %vm7624, 0.0
    %7628 = vst.msk [vmem:[#allocation4 + $0x18] sm:$0x3f] %vm7624, 0.0
    %7629 = vst.msk [vmem:[#allocation4 + $0x20] sm:$0x3f] %vm7624, 0.0
    %7630 = vst.msk [vmem:[#allocation4 + $0x28] sm:$0x3f] %vm7624, 0.0
    %7631 = vst.msk [vmem:[#allocation4 + $0x30] sm:$0x3f] %vm7624, 0.0
    %7632 = vst.msk [vmem:[#allocation4 + $0x38] sm:$0x3f] %vm7624, 0.0
    %7633 = vst.msk [vmem:[#allocation4 + $0x40] sm:$0x3f] %vm7624, 0.0
    %7634 = vst.msk [vmem:[#allocation4 + $0x48] sm:$0x3f] %vm7624, 0.0
    %7635 = vst.msk [vmem:[#allocation4 + $0x50] sm:$0x3f] %vm7624, 0.0
    %7636 = vst.msk [vmem:[#allocation4 + $0x58] sm:$0x3f] %vm7624, 0.0
    %v7669 = vsel %vm6023, %v7413, %v7406
    %v7670 = vsel %vm6025, %v7420, %v7669
    %v7671 = vsel %vm6027, %v7427, %v7670
    %v7672 = vsel %vm6023, %v7441, %v7434
    %v7673 = vsel %vm6025, %v7448, %v7672
    %v7674 = vsel %vm6027, %v7455, %v7673
    %v7675 = vsel %vm6023, %v7469, %v7462
    %v7676 = vsel %vm6025, %v7476, %v7675
    %v7677 = vsel %vm6027, %v7483, %v7676
    %v7678 = vsel %vm6023, %v7497, %v7490
    %v7679 = vsel %vm6025, %v7504, %v7678
    %v7680 = vsel %vm6027, %v7511, %v7679
    %v7681 = vsel %vm6023, %v7525, %v7518
    %v7682 = vsel %vm6025, %v7532, %v7681
    %v7683 = vsel %vm6027, %v7539, %v7682
    %v7684 = vsel %vm6023, %v7553, %v7546
    %v7685 = vsel %vm6025, %v7560, %v7684
    %v7686 = vsel %vm6027, %v7567, %v7685
    %v7687 = vsel %vm6023, %v7581, %v7574
    %v7688 = vsel %vm6025, %v7588, %v7687
    %v7689 = vsel %vm6027, %v7595, %v7688
    %v7690 = vsel %vm6023, %v7609, %v7602
    %v7691 = vsel %vm6025, %v7616, %v7690
    %v7692 = vsel %vm6027, %v7623, %v7691
    %s7701 = scalar_lea.vmem [#allocation4], 8
    %vm7702 = vcmask 519168
    %7703 = vst.msk [vmem:[%s7701 + $0x1] sm:$0xf] %vm7702, %v7671
    %7704 = vst.msk [vmem:[%s7701 + $0x9] sm:$0xf] %vm7702, %v7674
    %7705 = vst.msk [vmem:[%s7701 + $0x11] sm:$0xf] %vm7702, %v7677
    %7706 = vst.msk [vmem:[%s7701 + $0x19] sm:$0xf] %vm7702, %v7680
    %7707 = vst.msk [vmem:[%s7701 + $0x31] sm:$0xf] %vm7702, %v7683
    %7708 = vst.msk [vmem:[%s7701 + $0x39] sm:$0xf] %vm7702, %v7686
    %7709 = vst.msk [vmem:[%s7701 + $0x41] sm:$0xf] %vm7702, %v7689
    %7710 = vst.msk [vmem:[%s7701 + $0x49] sm:$0xf] %vm7702, %v7692
    %v7711 = vld [vmem:[#allocation4] sm:$0xf]
    %v7712 = vld [vmem:[#allocation4 + $0x8] sm:$0xf]
    %v7713 = vld [vmem:[#allocation4 + $0x10] sm:$0xf]
    %v7714 = vld [vmem:[#allocation4 + $0x18] sm:$0xf]
    %v7715 = vld [vmem:[#allocation4 + $0x30] sm:$0xf]
    %v7716 = vld [vmem:[#allocation4 + $0x38] sm:$0xf]
    %v7717 = vld [vmem:[#allocation4 + $0x40] sm:$0xf]
    %v7718 = vld [vmem:[#allocation4 + $0x48] sm:$0xf]
    %v7719 = vld [vmem:[#allocation4 + $0x1] sm:$0xf]
    %v7720 = vld [vmem:[#allocation4 + $0x9] sm:$0xf]
    %v7721 = vld [vmem:[#allocation4 + $0x11] sm:$0xf]
    %v7722 = vld [vmem:[#allocation4 + $0x19] sm:$0xf]
    %v7723 = vld [vmem:[#allocation4 + $0x31] sm:$0xf]
    %v7724 = vld [vmem:[#allocation4 + $0x39] sm:$0xf]
    %v7725 = vld [vmem:[#allocation4 + $0x41] sm:$0xf]
    %v7726 = vld [vmem:[#allocation4 + $0x49] sm:$0xf]
    %v7727 = vld [vmem:[#allocation4 + $0x2] sm:$0xf]
    %v7728 = vld [vmem:[#allocation4 + $0xa] sm:$0xf]
    %v7729 = vld [vmem:[#allocation4 + $0x12] sm:$0xf]
    %v7730 = vld [vmem:[#allocation4 + $0x1a] sm:$0xf]
    %v7731 = vld [vmem:[#allocation4 + $0x32] sm:$0xf]
    %v7732 = vld [vmem:[#allocation4 + $0x3a] sm:$0xf]
    %v7733 = vld [vmem:[#allocation4 + $0x42] sm:$0xf]
    %v7734 = vld [vmem:[#allocation4 + $0x4a] sm:$0xf]
    %v7735 = vld [vmem:[%s7701] sm:$0xf]
    %v7736 = vld [vmem:[%s7701 + $0x8] sm:$0xf]
    %v7737 = vld [vmem:[%s7701 + $0x10] sm:$0xf]
    %v7738 = vld [vmem:[%s7701 + $0x18] sm:$0xf]
    %v7739 = vld [vmem:[%s7701 + $0x30] sm:$0xf]
    %v7740 = vld [vmem:[%s7701 + $0x38] sm:$0xf]
    %v7741 = vld [vmem:[%s7701 + $0x40] sm:$0xf]
    %v7742 = vld [vmem:[%s7701 + $0x48] sm:$0xf]
    %v7743 = vld [vmem:[%s7701 + $0x1] sm:$0xf]
    %v7744 = vld [vmem:[%s7701 + $0x9] sm:$0xf]
    %v7745 = vld [vmem:[%s7701 + $0x11] sm:$0xf]
    %v7746 = vld [vmem:[%s7701 + $0x19] sm:$0xf]
    %v7747 = vld [vmem:[%s7701 + $0x31] sm:$0xf]
    %v7748 = vld [vmem:[%s7701 + $0x39] sm:$0xf]
    %v7749 = vld [vmem:[%s7701 + $0x41] sm:$0xf]
    %v7750 = vld [vmem:[%s7701 + $0x49] sm:$0xf]
    %v7751 = vld [vmem:[%s7701 + $0x2] sm:$0xf]
    %v7752 = vld [vmem:[%s7701 + $0xa] sm:$0xf]
    %v7753 = vld [vmem:[%s7701 + $0x12] sm:$0xf]
    %v7754 = vld [vmem:[%s7701 + $0x1a] sm:$0xf]
    %v7755 = vld [vmem:[%s7701 + $0x32] sm:$0xf]
    %v7756 = vld [vmem:[%s7701 + $0x3a] sm:$0xf]
    %v7757 = vld [vmem:[%s7701 + $0x42] sm:$0xf]
    %v7758 = vld [vmem:[%s7701 + $0x4a] sm:$0xf]
    %s7759 = scalar_lea.vmem [#allocation4], 16
    %v7760 = vld [vmem:[%s7759] sm:$0xf]
    %v7761 = vld [vmem:[%s7759 + $0x8] sm:$0xf]
    %v7762 = vld [vmem:[%s7759 + $0x10] sm:$0xf]
    %v7763 = vld [vmem:[%s7759 + $0x18] sm:$0xf]
    %v7764 = vld [vmem:[%s7759 + $0x30] sm:$0xf]
    %v7765 = vld [vmem:[%s7759 + $0x38] sm:$0xf]
    %v7766 = vld [vmem:[%s7759 + $0x40] sm:$0xf]
    %v7767 = vld [vmem:[%s7759 + $0x48] sm:$0xf]
    %v7768 = vld [vmem:[%s7759 + $0x1] sm:$0xf]
    %v7769 = vld [vmem:[%s7759 + $0x9] sm:$0xf]
    %v7770 = vld [vmem:[%s7759 + $0x11] sm:$0xf]
    %v7771 = vld [vmem:[%s7759 + $0x19] sm:$0xf]
    %v7772 = vld [vmem:[%s7759 + $0x31] sm:$0xf]
    %v7773 = vld [vmem:[%s7759 + $0x39] sm:$0xf]
    %v7774 = vld [vmem:[%s7759 + $0x41] sm:$0xf]
    %v7775 = vld [vmem:[%s7759 + $0x49] sm:$0xf]
    %v7776 = vld [vmem:[%s7759 + $0x2] sm:$0xf]
    %v7777 = vld [vmem:[%s7759 + $0xa] sm:$0xf]
    %v7778 = vld [vmem:[%s7759 + $0x12] sm:$0xf]
    %v7779 = vld [vmem:[%s7759 + $0x1a] sm:$0xf]
    %v7780 = vld [vmem:[%s7759 + $0x32] sm:$0xf]
    %v7781 = vld [vmem:[%s7759 + $0x3a] sm:$0xf]
    %v7782 = vld [vmem:[%s7759 + $0x42] sm:$0xf]
    %v7783 = vld [vmem:[%s7759 + $0x4a] sm:$0xf]
    %7792 = vrot.lane.b32.xlu0 %v7719, 64
    %v7793 = vpop.permute.xlu0 %7792
    %7794 = vrot.lane.b32.xlu0 %v7720, 64
    %v7795 = vpop.permute.xlu0 %7794
    %7796 = vrot.lane.b32.xlu0 %v7721, 64
    %v7797 = vpop.permute.xlu0 %7796
    %7798 = vrot.lane.b32.xlu0 %v7722, 64
    %v7799 = vpop.permute.xlu0 %7798
    %7800 = vrot.lane.b32.xlu0 %v7723, 64
    %v7801 = vpop.permute.xlu0 %7800
    %7802 = vrot.lane.b32.xlu0 %v7724, 64
    %v7803 = vpop.permute.xlu0 %7802
    %7804 = vrot.lane.b32.xlu0 %v7725, 64
    %v7805 = vpop.permute.xlu0 %7804
    %7806 = vrot.lane.b32.xlu0 %v7726, 64
    %v7807 = vpop.permute.xlu0 %7806
    %7824 = vrot.lane.b32.xlu0 %v7735, 64
    %v7825 = vpop.permute.xlu0 %7824
    %7826 = vrot.lane.b32.xlu0 %v7736, 64
    %v7827 = vpop.permute.xlu0 %7826
    %7828 = vrot.lane.b32.xlu0 %v7737, 64
    %v7829 = vpop.permute.xlu0 %7828
    %7830 = vrot.lane.b32.xlu0 %v7738, 64
    %v7831 = vpop.permute.xlu0 %7830
    %7832 = vrot.lane.b32.xlu0 %v7739, 64
    %v7833 = vpop.permute.xlu0 %7832
    %7834 = vrot.lane.b32.xlu0 %v7740, 64
    %v7835 = vpop.permute.xlu0 %7834
    %7836 = vrot.lane.b32.xlu0 %v7741, 64
    %v7837 = vpop.permute.xlu0 %7836
    %7838 = vrot.lane.b32.xlu0 %v7742, 64
    %v7839 = vpop.permute.xlu0 %7838
    %7856 = vrot.lane.b32.xlu0 %v7751, 64
    %v7857 = vpop.permute.xlu0 %7856
    %7858 = vrot.lane.b32.xlu0 %v7752, 64
    %v7859 = vpop.permute.xlu0 %7858
    %7860 = vrot.lane.b32.xlu0 %v7753, 64
    %v7861 = vpop.permute.xlu0 %7860
    %7862 = vrot.lane.b32.xlu0 %v7754, 64
    %v7863 = vpop.permute.xlu0 %7862
    %7864 = vrot.lane.b32.xlu0 %v7755, 64
    %v7865 = vpop.permute.xlu0 %7864
    %7866 = vrot.lane.b32.xlu0 %v7756, 64
    %v7867 = vpop.permute.xlu0 %7866
    %7868 = vrot.lane.b32.xlu0 %v7757, 64
    %v7869 = vpop.permute.xlu0 %7868
    %7870 = vrot.lane.b32.xlu0 %v7758, 64
    %v7871 = vpop.permute.xlu0 %7870
    %7888 = vrot.lane.b32.xlu0 %v7768, 64
    %v7889 = vpop.permute.xlu0 %7888
    %7890 = vrot.lane.b32.xlu0 %v7769, 64
    %v7891 = vpop.permute.xlu0 %7890
    %7892 = vrot.lane.b32.xlu0 %v7770, 64
    %v7893 = vpop.permute.xlu0 %7892
    %7894 = vrot.lane.b32.xlu0 %v7771, 64
    %v7895 = vpop.permute.xlu0 %7894
    %7896 = vrot.lane.b32.xlu0 %v7772, 64
    %v7897 = vpop.permute.xlu0 %7896
    %7898 = vrot.lane.b32.xlu0 %v7773, 64
    %v7899 = vpop.permute.xlu0 %7898
    %7900 = vrot.lane.b32.xlu0 %v7774, 64
    %v7901 = vpop.permute.xlu0 %7900
    %7902 = vrot.lane.b32.xlu0 %v7775, 64
    %v7903 = vpop.permute.xlu0 %7902
    %v7912 = vsel %vm6720, %v7711, %v7793
    %v7913 = vsel %vm6720, %v7712, %v7795
    %v7914 = vsel %vm6720, %v7713, %v7797
    %v7915 = vsel %vm6720, %v7714, %v7799
    %v7916 = vsel %vm6720, %v7715, %v7801
    %v7917 = vsel %vm6720, %v7716, %v7803
    %v7918 = vsel %vm6720, %v7717, %v7805
    %v7919 = vsel %vm6720, %v7718, %v7807
    %v7920 = vsel %vm6720, %v7727, %v7825
    %v7921 = vsel %vm6720, %v7728, %v7827
    %v7922 = vsel %vm6720, %v7729, %v7829
    %v7923 = vsel %vm6720, %v7730, %v7831
    %v7924 = vsel %vm6720, %v7731, %v7833
    %v7925 = vsel %vm6720, %v7732, %v7835
    %v7926 = vsel %vm6720, %v7733, %v7837
    %v7927 = vsel %vm6720, %v7734, %v7839
    %v7928 = vsel %vm6720, %v7743, %v7857
    %v7929 = vsel %vm6720, %v7744, %v7859
    %v7930 = vsel %vm6720, %v7745, %v7861
    %v7931 = vsel %vm6720, %v7746, %v7863
    %v7932 = vsel %vm6720, %v7747, %v7865
    %v7933 = vsel %vm6720, %v7748, %v7867
    %v7934 = vsel %vm6720, %v7749, %v7869
    %v7935 = vsel %vm6720, %v7750, %v7871
    %v7936 = vsel %vm6720, %v7760, %v7889
    %v7937 = vsel %vm6720, %v7761, %v7891
    %v7938 = vsel %vm6720, %v7762, %v7893
    %v7939 = vsel %vm6720, %v7763, %v7895
    %v7940 = vsel %vm6720, %v7764, %v7897
    %v7941 = vsel %vm6720, %v7765, %v7899
    %v7942 = vsel %vm6720, %v7766, %v7901
    %v7943 = vsel %vm6720, %v7767, %v7903
    %v7984 = vcombine.low %v7912, %v7920
    %v7985 = vcombine.low %v7928, %v7936
    %v7986 = vcombine.low %v7913, %v7921
    %v7987 = vcombine.low %v7929, %v7937
    %v7988 = vcombine.low %v7914, %v7922
    %v7989 = vcombine.low %v7930, %v7938
    %v7990 = vcombine.low %v7915, %v7923
    %v7991 = vcombine.low %v7931, %v7939
    %v7992 = vcombine.low %v7916, %v7924
    %v7993 = vcombine.low %v7932, %v7940
    %v7994 = vcombine.low %v7917, %v7925
    %v7995 = vcombine.low %v7933, %v7941
    %v7996 = vcombine.low %v7918, %v7926
    %v7997 = vcombine.low %v7934, %v7942
    %v7998 = vcombine.low %v7919, %v7927
    %v7999 = vcombine.low %v7935, %v7943
    %v8000 = vld [vmem:[%s5] sm:$0xff]
    %v8001 = vld [vmem:[%s5 + $0x8] sm:$0xff]
    %v8002 = vld [vmem:[%s5 + $0x10] sm:$0xff]
    %v8003 = vld [vmem:[%s5 + $0x18] sm:$0xff]
    %v8004 = vld [vmem:[%s5 + $0x20] sm:$0xff]
    %v8005 = vld [vmem:[%s5 + $0x28] sm:$0xff]
    %v8006 = vld [vmem:[%s5 + $0x30] sm:$0xff]
    %v8007 = vld [vmem:[%s5 + $0x38] sm:$0xff]
    %v8008 = vld [vmem:[%s5 + $0x40] sm:$0xff]
    %v8009 = vld [vmem:[%s5 + $0x48] sm:$0xff]
    %v8010 = vld [vmem:[%s5 + $0x50] sm:$0xff]
    %v8011 = vld [vmem:[%s5 + $0x58] sm:$0xff]
    %v8012 = vld [vmem:[%s5 + $0x60] sm:$0xff]
    %v8013 = vld [vmem:[%s5 + $0x68] sm:$0xff]
    %v8014 = vld [vmem:[%s5 + $0x70] sm:$0xff]
    %v8015 = vld [vmem:[%s5 + $0x78] sm:$0xff]
    %v8016 = vld [vmem:[%s5 + $0x80] sm:$0xff]
    %v8017 = vld [vmem:[%s5 + $0x88] sm:$0xff]
    %v8018 = vld [vmem:[%s5 + $0x90] sm:$0xff]
    %v8019 = vld [vmem:[%s5 + $0x98] sm:$0xff]
    %v8020 = vld [vmem:[%s5 + $0xa0] sm:$0xff]
    %v8021 = vld [vmem:[%s5 + $0xa8] sm:$0xff]
    %v8022 = vld [vmem:[%s5 + $0xb0] sm:$0xff]
    %v8023 = vld [vmem:[%s5 + $0xb8] sm:$0xff]
    %v8024 = vld [vmem:[%s5 + $0xc0] sm:$0xff]
    %v8025 = vld [vmem:[%s5 + $0xc8] sm:$0xff]
    %v8026 = vld [vmem:[%s5 + $0xd0] sm:$0xff]
    %v8027 = vld [vmem:[%s5 + $0xd8] sm:$0xff]
    %v8028 = vld [vmem:[%s5 + $0xe0] sm:$0xff]
    %v8029 = vld [vmem:[%s5 + $0xe8] sm:$0xff]
    %v8030 = vld [vmem:[%s5 + $0xf0] sm:$0xff]
    %v8031 = vld [vmem:[%s5 + $0xf8] sm:$0xff]
    %v8032 = vld [vmem:[%s5 + $0x100] sm:$0xff]
    %v8033 = vld [vmem:[%s5 + $0x108] sm:$0xff]
    %v8034 = vld [vmem:[%s5 + $0x110] sm:$0xff]
    %v8035 = vld [vmem:[%s5 + $0x118] sm:$0xff]
    %v8036 = vld [vmem:[%s5 + $0x120] sm:$0xff]
    %v8037 = vld [vmem:[%s5 + $0x128] sm:$0xff]
    %v8038 = vld [vmem:[%s5 + $0x130] sm:$0xff]
    %v8039 = vld [vmem:[%s5 + $0x138] sm:$0xff]
    %v8040 = vld [vmem:[%s5 + $0x140] sm:$0xff]
    %v8041 = vld [vmem:[%s5 + $0x148] sm:$0xff]
    %v8042 = vld [vmem:[%s5 + $0x150] sm:$0xff]
    %v8043 = vld [vmem:[%s5 + $0x158] sm:$0xff]
    %v8044 = vld [vmem:[%s5 + $0x160] sm:$0xff]
    %v8045 = vld [vmem:[%s5 + $0x168] sm:$0xff]
    %v8046 = vld [vmem:[%s5 + $0x170] sm:$0xff]
    %v8047 = vld [vmem:[%s5 + $0x178] sm:$0xff]
    %v8048 = vld [vmem:[%s5 + $0x180] sm:$0xff]
    %v8049 = vld [vmem:[%s5 + $0x188] sm:$0xff]
    %v8050 = vld [vmem:[%s5 + $0x190] sm:$0xff]
    %v8051 = vld [vmem:[%s5 + $0x198] sm:$0xff]
    %v8052 = vld [vmem:[%s5 + $0x1a0] sm:$0xff]
    %v8053 = vld [vmem:[%s5 + $0x1a8] sm:$0xff]
    %v8054 = vld [vmem:[%s5 + $0x1b0] sm:$0xff]
    %v8055 = vld [vmem:[%s5 + $0x1b8] sm:$0xff]
    %v8056 = vld [vmem:[%s5 + $0x1c0] sm:$0xff]
    %v8057 = vld [vmem:[%s5 + $0x1c8] sm:$0xff]
    %v8058 = vld [vmem:[%s5 + $0x1d0] sm:$0xff]
    %v8059 = vld [vmem:[%s5 + $0x1d8] sm:$0xff]
    %v8060 = vld [vmem:[%s5 + $0x1e0] sm:$0xff]
    %v8061 = vld [vmem:[%s5 + $0x1e8] sm:$0xff]
    %v8062 = vld [vmem:[%s5 + $0x1f0] sm:$0xff]
    %v8063 = vld [vmem:[%s5 + $0x1f8] sm:$0xff]
    %v8064 = vld [vmem:[%s5 + $0x200] sm:$0xff]
    %v8065 = vld [vmem:[%s5 + $0x208] sm:$0xff]
    %v8066 = vld [vmem:[%s5 + $0x210] sm:$0xff]
    %v8067 = vld [vmem:[%s5 + $0x218] sm:$0xff]
    %v8068 = vld [vmem:[%s5 + $0x220] sm:$0xff]
    %v8069 = vld [vmem:[%s5 + $0x228] sm:$0xff]
    %v8070 = vld [vmem:[%s5 + $0x230] sm:$0xff]
    %v8071 = vld [vmem:[%s5 + $0x238] sm:$0xff]
    %v8072 = vld [vmem:[%s6] sm:$0x1]
    %v8074 = vlaneseq
    %v8075 = vshrl.u32 %v8074, 7
    %v8076 = vsub.s32 0, %v8075
    %v8077 = vrot.slane %v8072, %v8076
    %v8079 = vcombine.low %v7984, %v7986
    %v8080 = vcombine.high %v7984, %v7986
    %v8081 = vcombine.low %v7985, %v7987
    %v8082 = vcombine.high %v7985, %v7987
    %v8083 = vcombine.low %v7776, %v7777
    %v8084 = vcombine.low %v7988, %v7990
    %v8085 = vcombine.high %v7988, %v7990
    %v8086 = vcombine.low %v7989, %v7991
    %v8087 = vcombine.high %v7989, %v7991
    %v8088 = vcombine.low %v7778, %v7779
    %v8089 = vcombine.low %v7992, %v7994
    %v8090 = vcombine.high %v7992, %v7994
    %v8091 = vcombine.low %v7993, %v7995
    %v8092 = vcombine.high %v7993, %v7995
    %v8093 = vcombine.low %v7780, %v7781
    %v8094 = vcombine.low %v7996, %v7998
    %v8095 = vcombine.high %v7996, %v7998
    %v8096 = vcombine.low %v7997, %v7999
    %v8097 = vcombine.high %v7997, %v7999
    %v8098 = vcombine.low %v7782, %v7783
    %v8115 = vsel %vm6720, %v8083, 0
    %v8117 = vsel %vm6720, %v8088, 0
    %v8119 = vsel %vm6720, %v8093, 0
    %v8121 = vsel %vm6720, %v8098, 0
    %8123 = vmatprep.subr.mxu0 0.0
    %8124 = vmatpush1.msra.mxu0 %v8000
    %8125 = vmatprep.subr.mxu0 0.0
    %8126 = vmatpush1.msra.mxu0 %v8001
    %8127 = vmatprep.subr.mxu0 0.0
    %8128 = vmatpush1.msra.mxu0 %v8002
    %8129 = vmatprep.subr.mxu0 0.0
    %8130 = vmatpush1.msra.mxu0 %v8003
    %8131 = vmatprep.subr.mxu0 0.0
    %8132 = vmatpush1.msra.mxu0 %v8004
    %8133 = vmatprep.subr.mxu0 0.0
    %8134 = vmatpush1.msra.mxu0 %v8005
    %8135 = vmatprep.subr.mxu0 0.0
    %8136 = vmatpush1.msra.mxu0 %v8006
    %8137 = vmatprep.subr.mxu0 0.0
    %8138 = vmatpush1.msra.mxu0 %v8007
    %8139 = vmatprep.subr.mxu0 0.0
    %8140 = vmatpush1.msra.mxu0 %v8008
    %8141 = vmatprep.subr.mxu0 0.0
    %8142 = vmatpush1.msra.mxu0 %v8009
    %8143 = vmatprep.subr.mxu0 0.0
    %8144 = vmatpush1.msra.mxu0 %v8010
    %8145 = vmatprep.subr.mxu0 0.0
    %8146 = vmatpush1.msra.mxu0 %v8011
    %8147 = vmatprep.subr.mxu0 0.0
    %8148 = vmatpush1.msra.mxu0 %v8012
    %8149 = vmatprep.subr.mxu0 0.0
    %8150 = vmatpush1.msra.mxu0 %v8013
    %8151 = vmatprep.subr.mxu0 0.0
    %8152 = vmatpush1.msra.mxu0 %v8014
    %8153 = vmatprep.subr.mxu0 0.0
    %8154 = vmatpush1.msra.mxu0 %v8015
    %8155 = vmatprep.subr.mxu0 0.0
    %8156 = vmatpush1.msra.mxu0 %v8016
    %8157 = vmatprep.subr.mxu0 0.0
    %8158 = vmatpush1.msra.mxu0 %v8017
    %8159 = vmatprep.subr.mxu0 0.0
    %8160 = vmatpush1.msra.mxu0 %v8018
    %8161 = vmatprep.subr.mxu0 0.0
    %8162 = vmatpush1.msra.mxu0 %v8019
    %8163 = vmatprep.subr.mxu0 0.0
    %8164 = vmatpush1.msra.mxu0 %v8020
    %8165 = vmatprep.subr.mxu0 0.0
    %8166 = vmatpush1.msra.mxu0 %v8021
    %8167 = vmatprep.subr.mxu0 0.0
    %8168 = vmatpush1.msra.mxu0 %v8022
    %8169 = vmatprep.subr.mxu0 0.0
    %8170 = vmatpush1.msra.mxu0 %v8023
    %8171 = vmatprep.subr.mxu0 0.0
    %8172 = vmatpush1.msra.mxu0 %v8024
    %8173 = vmatprep.subr.mxu0 0.0
    %8174 = vmatpush1.msra.mxu0 %v8025
    %8175 = vmatprep.subr.mxu0 0.0
    %8176 = vmatpush1.msra.mxu0 %v8026
    %8177 = vmatprep.subr.mxu0 0.0
    %8178 = vmatpush1.msra.mxu0 %v8027
    %8179 = vmatprep.subr.mxu0 0.0
    %8180 = vmatpush1.msra.mxu0 %v8028
    %8181 = vmatprep.subr.mxu0 0.0
    %8182 = vmatpush1.msra.mxu0 %v8029
    %8183 = vmatprep.subr.mxu0 0.0
    %8184 = vmatpush1.msra.mxu0 %v8030
    %8185 = vmatprep.subr.mxu0 0.0
    %8186 = vmatpush1.msra.mxu0 %v8031
    %8187 = vmatprep.mubr.f32.mxu0 %v8080
    %8188 = vmatmul.mubr.f32.gmra.mrb[0].mxu0 %v8079
    %v8189 = vpop.f32.mrb[0].mxu0
    %v8190 = vadd.f32 %v8077, %v8189
    %v8191 = vpop.f32.mrb[0].mxu0
    %8192 = vmatprep.mubr.f32.mxu0 %v8085
    %8193 = vmatmul.mubr.f32.gmra.mrb[0].mxu0 %v8084
    %v8194 = vpop.f32.mrb[0].mxu0
    %v8195 = vadd.f32 %v8077, %v8194
    %v8196 = vpop.f32.mrb[0].mxu0
    %8197 = vmatprep.mubr.f32.mxu0 %v8090
    %8198 = vmatmul.mubr.f32.gmra.mrb[0].mxu0 %v8089
    %v8199 = vpop.f32.mrb[0].mxu0
    %v8200 = vadd.f32 %v8077, %v8199
    %v8201 = vpop.f32.mrb[0].mxu0
    %8202 = vmatprep.mubr.f32.mxu0 %v8095
    %8203 = vmatmul.mubr.f32.gmra.mrb[0].mxu0 %v8094
    %v8204 = vpop.f32.mrb[0].mxu0
    %v8205 = vadd.f32 %v8077, %v8204
    %v8206 = vpop.f32.mrb[0].mxu0
    %8207 = vdwg.mxu0
    %8208 = vmatprep.subr.mxu0 0.0
    %8209 = vmatpush1.msra.mxu0 %v8032
    %8210 = vmatprep.subr.mxu0 0.0
    %8211 = vmatpush1.msra.mxu0 %v8033
    %8212 = vmatprep.subr.mxu0 0.0
    %8213 = vmatpush1.msra.mxu0 %v8034
    %8214 = vmatprep.subr.mxu0 0.0
    %8215 = vmatpush1.msra.mxu0 %v8035
    %8216 = vmatprep.subr.mxu0 0.0
    %8217 = vmatpush1.msra.mxu0 %v8036
    %8218 = vmatprep.subr.mxu0 0.0
    %8219 = vmatpush1.msra.mxu0 %v8037
    %8220 = vmatprep.subr.mxu0 0.0
    %8221 = vmatpush1.msra.mxu0 %v8038
    %8222 = vmatprep.subr.mxu0 0.0
    %8223 = vmatpush1.msra.mxu0 %v8039
    %8224 = vmatprep.subr.mxu0 0.0
    %8225 = vmatpush1.msra.mxu0 %v8040
    %8226 = vmatprep.subr.mxu0 0.0
    %8227 = vmatpush1.msra.mxu0 %v8041
    %8228 = vmatprep.subr.mxu0 0.0
    %8229 = vmatpush1.msra.mxu0 %v8042
    %8230 = vmatprep.subr.mxu0 0.0
    %8231 = vmatpush1.msra.mxu0 %v8043
    %8232 = vmatprep.subr.mxu0 0.0
    %8233 = vmatpush1.msra.mxu0 %v8044
    %8234 = vmatprep.subr.mxu0 0.0
    %8235 = vmatpush1.msra.mxu0 %v8045
    %8236 = vmatprep.subr.mxu0 0.0
    %8237 = vmatpush1.msra.mxu0 %v8046
    %8238 = vmatprep.subr.mxu0 0.0
    %8239 = vmatpush1.msra.mxu0 %v8047
    %8240 = vmatprep.subr.mxu0 0.0
    %8241 = vmatpush1.msra.mxu0 %v8048
    %8242 = vmatprep.subr.mxu0 0.0
    %8243 = vmatpush1.msra.mxu0 %v8049
    %8244 = vmatprep.subr.mxu0 0.0
    %8245 = vmatpush1.msra.mxu0 %v8050
    %8246 = vmatprep.subr.mxu0 0.0
    %8247 = vmatpush1.msra.mxu0 %v8051
    %8248 = vmatprep.subr.mxu0 0.0
    %8249 = vmatpush1.msra.mxu0 %v8052
    %8250 = vmatprep.subr.mxu0 0.0
    %8251 = vmatpush1.msra.mxu0 %v8053
    %8252 = vmatprep.subr.mxu0 0.0
    %8253 = vmatpush1.msra.mxu0 %v8054
    %8254 = vmatprep.subr.mxu0 0.0
    %8255 = vmatpush1.msra.mxu0 %v8055
    %8256 = vmatprep.subr.mxu0 0.0
    %8257 = vmatpush1.msra.mxu0 %v8056
    %8258 = vmatprep.subr.mxu0 0.0
    %8259 = vmatpush1.msra.mxu0 %v8057
    %8260 = vmatprep.subr.mxu0 0.0
    %8261 = vmatpush1.msra.mxu0 %v8058
    %8262 = vmatprep.subr.mxu0 0.0
    %8263 = vmatpush1.msra.mxu0 %v8059
    %8264 = vmatprep.subr.mxu0 0.0
    %8265 = vmatpush1.msra.mxu0 %v8060
    %8266 = vmatprep.subr.mxu0 0.0
    %8267 = vmatpush1.msra.mxu0 %v8061
    %8268 = vmatprep.subr.mxu0 0.0
    %8269 = vmatpush1.msra.mxu0 %v8062
    %8270 = vmatprep.subr.mxu0 0.0
    %8271 = vmatpush1.msra.mxu0 %v8063
    %8272 = vmatprep.mubr.f32.mxu0 %v8082
    %8273 = vmatmul.mubr.f32.gmra.mrb[0].mxu0 %v8081
    %v8274 = vpop.f32.mrb[0].mxu0
    %v8275 = vadd.f32 %v8190, %v8274
    %v8276 = vpop.f32.mrb[0].mxu0
    %8277 = vmatprep.mubr.f32.mxu0 %v8087
    %8278 = vmatmul.mubr.f32.gmra.mrb[0].mxu0 %v8086
    %v8279 = vpop.f32.mrb[0].mxu0
    %v8280 = vadd.f32 %v8195, %v8279
    %v8281 = vpop.f32.mrb[0].mxu0
    %8282 = vmatprep.mubr.f32.mxu0 %v8092
    %8283 = vmatmul.mubr.f32.gmra.mrb[0].mxu0 %v8091
    %v8284 = vpop.f32.mrb[0].mxu0
    %v8285 = vadd.f32 %v8200, %v8284
    %v8286 = vpop.f32.mrb[0].mxu0
    %8287 = vmatprep.mubr.f32.mxu0 %v8097
    %8288 = vmatmul.mubr.f32.gmra.mrb[0].mxu0 %v8096
    %v8289 = vpop.f32.mrb[0].mxu0
    %v8290 = vadd.f32 %v8205, %v8289
    %v8291 = vpop.f32.mrb[0].mxu0
    %8292 = vdwg.mxu0
    %8293 = vmatprep.subr.mxu0 0.0
    %8294 = vmatpush1.msra.mxu0 %v8064
    %8295 = vmatprep.subr.mxu0 0.0
    %8296 = vmatpush1.msra.mxu0 %v8065
    %8297 = vmatprep.subr.mxu0 0.0
    %8298 = vmatpush1.msra.mxu0 %v8066
    %8299 = vmatprep.subr.mxu0 0.0
    %8300 = vmatpush1.msra.mxu0 %v8067
    %8301 = vmatprep.subr.mxu0 0.0
    %8302 = vmatpush1.msra.mxu0 %v8068
    %8303 = vmatprep.subr.mxu0 0.0
    %8304 = vmatpush1.msra.mxu0 %v8069
    %8305 = vmatprep.subr.mxu0 0.0
    %8306 = vmatpush1.msra.mxu0 %v8070
    %8307 = vmatprep.subr.mxu0 0.0
    %8308 = vmatpush1.msra.mxu0 %v8071
    %8309 = vmatprep.subr.mxu0 0.0
    %8310 = vmatpush1.msra.mxu0 0.0
    %8311 = vmatprep.subr.mxu0 0.0
    %8312 = vmatpush1.msra.mxu0 0.0
    %8313 = vmatprep.subr.mxu0 0.0
    %8314 = vmatpush1.msra.mxu0 0.0
    %8315 = vmatprep.subr.mxu0 0.0
    %8316 = vmatpush1.msra.mxu0 0.0
    %8317 = vmatprep.subr.mxu0 0.0
    %8318 = vmatpush1.msra.mxu0 0.0
    %8319 = vmatprep.subr.mxu0 0.0
    %8320 = vmatpush1.msra.mxu0 0.0
    %8321 = vmatprep.subr.mxu0 0.0
    %8322 = vmatpush1.msra.mxu0 0.0
    %8323 = vmatprep.subr.mxu0 0.0
    %8324 = vmatpush1.msra.mxu0 0.0
    %8325 = vmatprep.subr.mxu0 0.0
    %8326 = vmatpush1.msra.mxu0 0.0
    %8327 = vmatprep.subr.mxu0 0.0
    %8328 = vmatpush1.msra.mxu0 0.0
    %8329 = vmatprep.subr.mxu0 0.0
    %8330 = vmatpush1.msra.mxu0 0.0
    %8331 = vmatprep.subr.mxu0 0.0
    %8332 = vmatpush1.msra.mxu0 0.0
    %8333 = vmatprep.subr.mxu0 0.0
    %8334 = vmatpush1.msra.mxu0 0.0
    %8335 = vmatprep.subr.mxu0 0.0
    %8336 = vmatpush1.msra.mxu0 0.0
    %8337 = vmatprep.subr.mxu0 0.0
    %8338 = vmatpush1.msra.mxu0 0.0
    %8339 = vmatprep.subr.mxu0 0.0
    %8340 = vmatpush1.msra.mxu0 0.0
    %8341 = vmatprep.subr.mxu0 0.0
    %8342 = vmatpush1.msra.mxu0 0.0
    %8343 = vmatprep.subr.mxu0 0.0
    %8344 = vmatpush1.msra.mxu0 0.0
    %8345 = vmatprep.subr.mxu0 0.0
    %8346 = vmatpush1.msra.mxu0 0.0
    %8347 = vmatprep.subr.mxu0 0.0
    %8348 = vmatpush1.msra.mxu0 0.0
    %8349 = vmatprep.subr.mxu0 0.0
    %8350 = vmatpush1.msra.mxu0 0.0
    %8351 = vmatprep.subr.mxu0 0.0
    %8352 = vmatpush1.msra.mxu0 0.0
    %8353 = vmatprep.subr.mxu0 0.0
    %8354 = vmatpush1.msra.mxu0 0.0
    %8355 = vmatprep.subr.mxu0 0.0
    %8356 = vmatpush1.msra.mxu0 0.0
    %8357 = vmatprep.mubr.f32.mxu0 0.0
    %8358 = vmatmul.mubr.f32.gmra.mrb[0].mxu0 %v8115
    %v8359 = vpop.f32.mrb[0].mxu0
    %v8360 = vadd.f32 %v8275, %v8359
    %v8361 = vpop.f32.mrb[0].mxu0
    %8362 = vmatprep.mubr.f32.mxu0 0.0
    %8363 = vmatmul.mubr.f32.gmra.mrb[0].mxu0 %v8117
    %v8364 = vpop.f32.mrb[0].mxu0
    %v8365 = vadd.f32 %v8280, %v8364
    %v8366 = vpop.f32.mrb[0].mxu0
    %8367 = vmatprep.mubr.f32.mxu0 0.0
    %8368 = vmatmul.mubr.f32.gmra.mrb[0].mxu0 %v8119
    %v8369 = vpop.f32.mrb[0].mxu0
    %v8370 = vadd.f32 %v8285, %v8369
    %v8371 = vpop.f32.mrb[0].mxu0
    %8372 = vmatprep.mubr.f32.mxu0 0.0
    %8373 = vmatmul.mubr.f32.gmra.mrb[0].mxu0 %v8121
    %v8374 = vpop.f32.mrb[0].mxu0
    %v8375 = vadd.f32 %v8290, %v8374
    %v8376 = vpop.f32.mrb[0].mxu0
    %8377 = vdwg.mxu0
    %v8378 = vmax.f32 %v8360, 0.0
    %v8379 = vmax.f32 %v8365, 0.0
    %v8380 = vmax.f32 %v8370, 0.0
    %v8381 = vmax.f32 %v8375, 0.0
    %v8386 = vcombine.high %v8378, %v8378
    %v8387 = vcombine.high %v8379, %v8379
    %v8388 = vcombine.high %v8380, %v8380
    %v8389 = vcombine.high %v8381, %v8381
    %vm8394 = vcmask 1043456
    %v8395 = vsel %vm8394, %v8378, -inf
    %v8396 = vsel %vm8394, %v8386, -inf
    %v8397 = vmax.f32 %v8395, %v8396
    %v8398 = vsel %vm8394, %v8379, -inf
    %v8399 = vsel %vm8394, %v8387, -inf
    %v8400 = vmax.f32 %v8398, %v8399
    %v8401 = vsel %vm8394, %v8380, -inf
    %v8402 = vsel %vm8394, %v8388, -inf
    %v8403 = vmax.f32 %v8401, %v8402
    %v8404 = vsel %vm8394, %v8381, -inf
    %v8405 = vsel %vm8394, %v8389, -inf
    %v8406 = vmax.f32 %v8404, %v8405
    %v8412 = vunpack.c.l.s4 1983009808
    %v8413 = vunpack.c.0.s8 %v8412
    %v8414 = vlaneseq
    %v8415 = vshrl.u32 %v8414, 7
    %v8416 = vsub.s32 %v8413, %v8415
    %v8417 = vrot.slane %v8397, %v8416
    %v8418 = vcombine.high %v8417, %v8417
    %v8420 = vunpack.c.l.s4 1983009808
    %v8421 = vunpack.c.0.s8 %v8420
    %v8422 = vlaneseq
    %v8423 = vshrl.u32 %v8422, 7
    %v8424 = vsub.s32 %v8421, %v8423
    %v8425 = vrot.slane %v8400, %v8424
    %v8426 = vcombine.high %v8425, %v8425
    %v8428 = vunpack.c.l.s4 1983009808
    %v8429 = vunpack.c.0.s8 %v8428
    %v8430 = vlaneseq
    %v8431 = vshrl.u32 %v8430, 7
    %v8432 = vsub.s32 %v8429, %v8431
    %v8433 = vrot.slane %v8403, %v8432
    %v8434 = vcombine.high %v8433, %v8433
    %v8436 = vunpack.c.l.s4 1983009808
    %v8437 = vunpack.c.0.s8 %v8436
    %v8438 = vlaneseq
    %v8439 = vshrl.u32 %v8438, 7
    %v8440 = vsub.s32 %v8437, %v8439
    %v8441 = vrot.slane %v8406, %v8440
    %v8442 = vcombine.high %v8441, %v8441
    %vm8451 = vcmask 1041408
    %v8452 = vsel %vm8451, %v8417, -inf
    %v8453 = vrot.slane %v8452, 4
    %v8454 = vmax.f32 %v8452, %v8453
    %v8455 = vrot.slane %v8454, 2
    %v8456 = vmax.f32 %v8454, %v8455
    %v8457 = vrot.slane %v8456, 1
    %v8458 = vmax.f32 %v8456, %v8457
    %v8459 = vsel %vm8451, %v8418, -inf
    %v8460 = vrot.slane %v8459, 4
    %v8461 = vmax.f32 %v8459, %v8460
    %v8462 = vrot.slane %v8461, 2
    %v8463 = vmax.f32 %v8461, %v8462
    %v8464 = vrot.slane %v8463, 1
    %v8465 = vmax.f32 %v8463, %v8464
    %v8466 = vsel %vm8451, %v8425, -inf
    %v8467 = vrot.slane %v8466, 4
    %v8468 = vmax.f32 %v8466, %v8467
    %v8469 = vrot.slane %v8468, 2
    %v8470 = vmax.f32 %v8468, %v8469
    %v8471 = vrot.slane %v8470, 1
    %v8472 = vmax.f32 %v8470, %v8471
    %v8473 = vsel %vm8451, %v8426, -inf
    %v8474 = vrot.slane %v8473, 4
    %v8475 = vmax.f32 %v8473, %v8474
    %v8476 = vrot.slane %v8475, 2
    %v8477 = vmax.f32 %v8475, %v8476
    %v8478 = vrot.slane %v8477, 1
    %v8479 = vmax.f32 %v8477, %v8478
    %v8480 = vsel %vm8451, %v8433, -inf
    %v8481 = vrot.slane %v8480, 4
    %v8482 = vmax.f32 %v8480, %v8481
    %v8483 = vrot.slane %v8482, 2
    %v8484 = vmax.f32 %v8482, %v8483
    %v8485 = vrot.slane %v8484, 1
    %v8486 = vmax.f32 %v8484, %v8485
    %v8487 = vsel %vm8451, %v8434, -inf
    %v8488 = vrot.slane %v8487, 4
    %v8489 = vmax.f32 %v8487, %v8488
    %v8490 = vrot.slane %v8489, 2
    %v8491 = vmax.f32 %v8489, %v8490
    %v8492 = vrot.slane %v8491, 1
    %v8493 = vmax.f32 %v8491, %v8492
    %v8494 = vsel %vm8451, %v8441, -inf
    %v8495 = vrot.slane %v8494, 4
    %v8496 = vmax.f32 %v8494, %v8495
    %v8497 = vrot.slane %v8496, 2
    %v8498 = vmax.f32 %v8496, %v8497
    %v8499 = vrot.slane %v8498, 1
    %v8500 = vmax.f32 %v8498, %v8499
    %v8501 = vsel %vm8451, %v8442, -inf
    %v8502 = vrot.slane %v8501, 4
    %v8503 = vmax.f32 %v8501, %v8502
    %v8504 = vrot.slane %v8503, 2
    %v8505 = vmax.f32 %v8503, %v8504
    %v8506 = vrot.slane %v8505, 1
    %v8507 = vmax.f32 %v8505, %v8506
    %v8508 = vld [vmem:[%s7] sm:$0xff]
    %v8509 = vld [vmem:[%s7 + $0x8] sm:$0xff]
    %v8510 = vld [vmem:[%s7 + $0x10] sm:$0xff]
    %v8511 = vld [vmem:[%s7 + $0x18] sm:$0xff]
    %v8512 = vld [vmem:[%s7 + $0x20] sm:$0xff]
    %v8513 = vld [vmem:[%s7 + $0x28] sm:$0xff]
    %v8514 = vld [vmem:[%s7 + $0x30] sm:$0xff]
    %v8515 = vld [vmem:[%s7 + $0x38] sm:$0xff]
    %v8516 = vld [vmem:[%s7 + $0x40] sm:$0xff]
    %v8517 = vld [vmem:[%s7 + $0x48] sm:$0xff]
    %v8518 = vld [vmem:[%s7 + $0x50] sm:$0xff]
    %v8519 = vld [vmem:[%s7 + $0x58] sm:$0xff]
    %v8520 = vld [vmem:[%s7 + $0x60] sm:$0xff]
    %v8521 = vld [vmem:[%s7 + $0x68] sm:$0xff]
    %v8522 = vld [vmem:[%s7 + $0x70] sm:$0xff]
    %v8523 = vld [vmem:[%s7 + $0x78] sm:$0xff]
    %v8524 = vld [vmem:[%s7 + $0x80] sm:$0xff]
    %v8525 = vld [vmem:[%s7 + $0x88] sm:$0xff]
    %v8526 = vld [vmem:[%s7 + $0x90] sm:$0xff]
    %v8527 = vld [vmem:[%s7 + $0x98] sm:$0xff]
    %v8528 = vld [vmem:[%s7 + $0xa0] sm:$0xff]
    %v8529 = vld [vmem:[%s7 + $0xa8] sm:$0xff]
    %v8530 = vld [vmem:[%s7 + $0xb0] sm:$0xff]
    %v8531 = vld [vmem:[%s7 + $0xb8] sm:$0xff]
    %v8532 = vld [vmem:[%s7 + $0xc0] sm:$0xff]
    %v8533 = vld [vmem:[%s7 + $0xc8] sm:$0xff]
    %v8534 = vld [vmem:[%s7 + $0xd0] sm:$0xff]
    %v8535 = vld [vmem:[%s7 + $0xd8] sm:$0xff]
    %v8536 = vld [vmem:[%s7 + $0xe0] sm:$0xff]
    %v8537 = vld [vmem:[%s7 + $0xe8] sm:$0xff]
    %v8538 = vld [vmem:[%s7 + $0xf0] sm:$0xff]
    %v8539 = vld [vmem:[%s7 + $0xf8] sm:$0xff]
    %v8540 = vld [vmem:[%s7 + $0x100] sm:$0xff]
    %v8541 = vld [vmem:[%s7 + $0x108] sm:$0xff]
    %v8542 = vld [vmem:[%s7 + $0x110] sm:$0xff]
    %v8543 = vld [vmem:[%s7 + $0x118] sm:$0xff]
    %v8544 = vld [vmem:[%s7 + $0x120] sm:$0xff]
    %v8545 = vld [vmem:[%s7 + $0x128] sm:$0xff]
    %v8546 = vld [vmem:[%s7 + $0x130] sm:$0xff]
    %v8547 = vld [vmem:[%s7 + $0x138] sm:$0xff]
    %v8548 = vld [vmem:[%s7 + $0x140] sm:$0xff]
    %v8549 = vld [vmem:[%s7 + $0x148] sm:$0xff]
    %v8550 = vld [vmem:[%s7 + $0x150] sm:$0xff]
    %v8551 = vld [vmem:[%s7 + $0x158] sm:$0xff]
    %v8552 = vld [vmem:[%s7 + $0x160] sm:$0xff]
    %v8553 = vld [vmem:[%s7 + $0x168] sm:$0xff]
    %v8554 = vld [vmem:[%s7 + $0x170] sm:$0xff]
    %v8555 = vld [vmem:[%s7 + $0x178] sm:$0xff]
    %v8556 = vld [vmem:[#allocation10] sm:$0x7]
    %v8558 = vlaneseq
    %v8559 = vshrl.u32 %v8558, 7
    %v8560 = vsub.s32 0, %v8559
    %v8561 = vrot.slane %v8556, %v8560
    %v8562 = vlaneseq
    %v8563 = vshrl.u32 %v8562, 7
    %v8564 = vsub.s32 1, %v8563
    %v8565 = vrot.slane %v8556, %v8564
    %v8566 = vlaneseq
    %v8567 = vshrl.u32 %v8566, 7
    %v8568 = vsub.s32 2, %v8567
    %v8569 = vrot.slane %v8556, %v8568
    %v8581 = vsel %vm6023, %v8465, %v8458
    %v8582 = vsel %vm6025, %v8472, %v8581
    %v8583 = vsel %vm6027, %v8479, %v8582
    %v8584 = vsel %vm6029, %v8486, %v8583
    %v8585 = vsel %vm6031, %v8493, %v8584
    %v8586 = vsel %vm6033, %v8500, %v8585
    %v8587 = vsel %vm6035, %v8507, %v8586
    %8589 = vmatprep.subr.mxu0 %v8509
    %8590 = vmatpush1.msra.mxu0 %v8508
    %8591 = vmatprep.subr.mxu0 %v8512
    %8592 = vmatpush1.msra.mxu0 %v8511
    %8593 = vmatprep.subr.mxu0 %v8515
    %8594 = vmatpush1.msra.mxu0 %v8514
    %8595 = vmatprep.subr.mxu0 %v8518
    %8596 = vmatpush1.msra.mxu0 %v8517
    %8597 = vmatprep.subr.mxu0 %v8521
    %8598 = vmatpush1.msra.mxu0 %v8520
    %8599 = vmatprep.subr.mxu0 %v8524
    %8600 = vmatpush1.msra.mxu0 %v8523
    %8601 = vmatprep.subr.mxu0 %v8527
    %8602 = vmatpush1.msra.mxu0 %v8526
    %8603 = vmatprep.subr.mxu0 %v8530
    %8604 = vmatpush1.msra.mxu0 %v8529
    %8605 = vmatprep.subr.mxu0 %v8533
    %8606 = vmatpush1.msra.mxu0 %v8532
    %8607 = vmatprep.subr.mxu0 %v8536
    %8608 = vmatpush1.msra.mxu0 %v8535
    %8609 = vmatprep.subr.mxu0 %v8539
    %8610 = vmatpush1.msra.mxu0 %v8538
    %8611 = vmatprep.subr.mxu0 %v8542
    %8612 = vmatpush1.msra.mxu0 %v8541
    %8613 = vmatprep.subr.mxu0 %v8545
    %8614 = vmatpush1.msra.mxu0 %v8544
    %8615 = vmatprep.subr.mxu0 %v8548
    %8616 = vmatpush1.msra.mxu0 %v8547
    %8617 = vmatprep.subr.mxu0 %v8551
    %8618 = vmatpush1.msra.mxu0 %v8550
    %8619 = vmatprep.subr.mxu0 %v8554
    %8620 = vmatpush1.msra.mxu0 %v8553
    %8621 = vmatprep.subr.mxu0 0.0
    %8622 = vmatpush1.msra.mxu0 0.0
    %8623 = vmatprep.subr.mxu0 0.0
    %8624 = vmatpush1.msra.mxu0 0.0
    %8625 = vmatprep.subr.mxu0 0.0
    %8626 = vmatpush1.msra.mxu0 0.0
    %8627 = vmatprep.subr.mxu0 0.0
    %8628 = vmatpush1.msra.mxu0 0.0
    %8629 = vmatprep.subr.mxu0 0.0
    %8630 = vmatpush1.msra.mxu0 0.0
    %8631 = vmatprep.subr.mxu0 0.0
    %8632 = vmatpush1.msra.mxu0 0.0
    %8633 = vmatprep.subr.mxu0 0.0
    %8634 = vmatpush1.msra.mxu0 0.0
    %8635 = vmatprep.subr.mxu0 0.0
    %8636 = vmatpush1.msra.mxu0 0.0
    %8637 = vmatprep.subr.mxu0 0.0
    %8638 = vmatpush1.msra.mxu0 0.0
    %8639 = vmatprep.subr.mxu0 0.0
    %8640 = vmatpush1.msra.mxu0 0.0
    %8641 = vmatprep.subr.mxu0 0.0
    %8642 = vmatpush1.msra.mxu0 0.0
    %8643 = vmatprep.subr.mxu0 0.0
    %8644 = vmatpush1.msra.mxu0 0.0
    %8645 = vmatprep.subr.mxu0 0.0
    %8646 = vmatpush1.msra.mxu0 0.0
    %8647 = vmatprep.subr.mxu0 0.0
    %8648 = vmatpush1.msra.mxu0 0.0
    %8649 = vmatprep.subr.mxu0 0.0
    %8650 = vmatpush1.msra.mxu0 0.0
    %8651 = vmatprep.subr.mxu0 0.0
    %8652 = vmatpush1.msra.mxu0 0.0
    %8653 = vmatprep.mubr.f32.mxu0 0.0
    %8654 = vmatmul.mubr.f32.gmra.mrb[0].mxu0 %v8587
    %v8655 = vpop.f32.mrb[0].mxu0
    %v8656 = vadd.f32 %v8561, %v8655
    %v8657 = vpop.f32.mrb[0].mxu0
    %v8658 = vadd.f32 %v8565, %v8657
    %8659 = vdwg.mxu0
    %8660 = vmatprep.subr.mxu0 0.0
    %8661 = vmatpush1.msra.mxu0 %v8510
    %8662 = vmatprep.subr.mxu0 0.0
    %8663 = vmatpush1.msra.mxu0 %v8513
    %8664 = vmatprep.subr.mxu0 0.0
    %8665 = vmatpush1.msra.mxu0 %v8516
    %8666 = vmatprep.subr.mxu0 0.0
    %8667 = vmatpush1.msra.mxu0 %v8519
    %8668 = vmatprep.subr.mxu0 0.0
    %8669 = vmatpush1.msra.mxu0 %v8522
    %8670 = vmatprep.subr.mxu0 0.0
    %8671 = vmatpush1.msra.mxu0 %v8525
    %8672 = vmatprep.subr.mxu0 0.0
    %8673 = vmatpush1.msra.mxu0 %v8528
    %8674 = vmatprep.subr.mxu0 0.0
    %8675 = vmatpush1.msra.mxu0 %v8531
    %8676 = vmatprep.subr.mxu0 0.0
    %8677 = vmatpush1.msra.mxu0 %v8534
    %8678 = vmatprep.subr.mxu0 0.0
    %8679 = vmatpush1.msra.mxu0 %v8537
    %8680 = vmatprep.subr.mxu0 0.0
    %8681 = vmatpush1.msra.mxu0 %v8540
    %8682 = vmatprep.subr.mxu0 0.0
    %8683 = vmatpush1.msra.mxu0 %v8543
    %8684 = vmatprep.subr.mxu0 0.0
    %8685 = vmatpush1.msra.mxu0 %v8546
    %8686 = vmatprep.subr.mxu0 0.0
    %8687 = vmatpush1.msra.mxu0 %v8549
    %8688 = vmatprep.subr.mxu0 0.0
    %8689 = vmatpush1.msra.mxu0 %v8552
    %8690 = vmatprep.subr.mxu0 0.0
    %8691 = vmatpush1.msra.mxu0 %v8555
    %8692 = vmatprep.subr.mxu0 0.0
    %8693 = vmatpush1.msra.mxu0 0.0
    %8694 = vmatprep.subr.mxu0 0.0
    %8695 = vmatpush1.msra.mxu0 0.0
    %8696 = vmatprep.subr.mxu0 0.0
    %8697 = vmatpush1.msra.mxu0 0.0
    %8698 = vmatprep.subr.mxu0 0.0
    %8699 = vmatpush1.msra.mxu0 0.0
    %8700 = vmatprep.subr.mxu0 0.0
    %8701 = vmatpush1.msra.mxu0 0.0
    %8702 = vmatprep.subr.mxu0 0.0
    %8703 = vmatpush1.msra.mxu0 0.0
    %8704 = vmatprep.subr.mxu0 0.0
    %8705 = vmatpush1.msra.mxu0 0.0
    %8706 = vmatprep.subr.mxu0 0.0
    %8707 = vmatpush1.msra.mxu0 0.0
    %8708 = vmatprep.subr.mxu0 0.0
    %8709 = vmatpush1.msra.mxu0 0.0
    %8710 = vmatprep.subr.mxu0 0.0
    %8711 = vmatpush1.msra.mxu0 0.0
    %8712 = vmatprep.subr.mxu0 0.0
    %8713 = vmatpush1.msra.mxu0 0.0
    %8714 = vmatprep.subr.mxu0 0.0
    %8715 = vmatpush1.msra.mxu0 0.0
    %8716 = vmatprep.subr.mxu0 0.0
    %8717 = vmatpush1.msra.mxu0 0.0
    %8718 = vmatprep.subr.mxu0 0.0
    %8719 = vmatpush1.msra.mxu0 0.0
    %8720 = vmatprep.subr.mxu0 0.0
    %8721 = vmatpush1.msra.mxu0 0.0
    %8722 = vmatprep.subr.mxu0 0.0
    %8723 = vmatpush1.msra.mxu0 0.0
    %8724 = vmatprep.mubr.f32.mxu0 0.0
    %8725 = vmatmul.mubr.f32.gmra.mrb[0].mxu0 %v8587
    %v8726 = vpop.f32.mrb[0].mxu0
    %v8727 = vadd.f32 %v8569, %v8726
    %v8728 = vpop.f32.mrb[0].mxu0
    %8729 = vdwg.mxu0
    %v8731 = vcombine.high %v8656, %v8656
    %v8733 = vcombine.high %v8658, %v8658
    %v8735 = vcombine.high %v8727, %v8727
    %vm8736 = vcmask 130048
    %v8737 = vsel %vm8736, %v8656, 0
    %v8739 = vsel %vm8736, %v8658, 0
    %8741 = vmatprep.subr.mxu0 0.0
    %8742 = vmatpush1.xpose.msra.mxu0 %v8739
    %8743 = vmatprep.subr.mxu0 0.0
    %8744 = vmatpush1.xpose.msra.mxu0 0.0
    %8745 = vmatprep.subr.mxu0 0.0
    %8746 = vmatpush1.xpose.msra.mxu0 0.0
    %8747 = vmatprep.subr.mxu0 0.0
    %8748 = vmatpush1.xpose.msra.mxu0 0.0
    %8749 = vmatprep.subr.mxu0 0.0
    %8750 = vmatpush1.xpose.msra.mxu0 0.0
    %8751 = vmatprep.subr.mxu0 0.0
    %8752 = vmatpush1.xpose.msra.mxu0 0.0
    %8753 = vmatprep.subr.mxu0 0.0
    %8754 = vmatpush1.xpose.msra.mxu0 0.0
    %8755 = vmatprep.subr.mxu0 0.0
    %8756 = vmatpush1.xpose.msra.mxu0 0.0
    %8757 = vmatprep.subr.mxu0 0.0
    %8758 = vmatpush1.xpose.msra.mxu0 0.0
    %8759 = vmatprep.subr.mxu0 0.0
    %8760 = vmatpush1.xpose.msra.mxu0 0.0
    %8761 = vmatprep.subr.mxu0 0.0
    %8762 = vmatpush1.xpose.msra.mxu0 0.0
    %8763 = vmatprep.subr.mxu0 0.0
    %8764 = vmatpush1.xpose.msra.mxu0 0.0
    %8765 = vmatprep.subr.mxu0 0.0
    %8766 = vmatpush1.xpose.msra.mxu0 0.0
    %8767 = vmatprep.subr.mxu0 0.0
    %8768 = vmatpush1.xpose.msra.mxu0 0.0
    %8769 = vmatprep.subr.mxu0 0.0
    %8770 = vmatpush1.xpose.msra.mxu0 0.0
    %8771 = vmatprep.subr.mxu0 0.0
    %8772 = vmatpush1.xpose.msra.mxu0 0.0
    %8773 = vmatprep.subr.mxu0 0.0
    %8774 = vmatpush1.xpose.msra.mxu0 0.0
    %8775 = vmatprep.subr.mxu0 0.0
    %8776 = vmatpush1.xpose.msra.mxu0 0.0
    %8777 = vmatprep.subr.mxu0 0.0
    %8778 = vmatpush1.xpose.msra.mxu0 0.0
    %8779 = vmatprep.subr.mxu0 0.0
    %8780 = vmatpush1.xpose.msra.mxu0 0.0
    %8781 = vmatprep.subr.mxu0 0.0
    %8782 = vmatpush1.xpose.msra.mxu0 0.0
    %8783 = vmatprep.subr.mxu0 0.0
    %8784 = vmatpush1.xpose.msra.mxu0 0.0
    %8785 = vmatprep.subr.mxu0 0.0
    %8786 = vmatpush1.xpose.msra.mxu0 0.0
    %8787 = vmatprep.subr.mxu0 0.0
    %8788 = vmatpush1.xpose.msra.mxu0 0.0
    %8789 = vmatprep.subr.mxu0 0.0
    %8790 = vmatpush1.xpose.msra.mxu0 0.0
    %8791 = vmatprep.subr.mxu0 0.0
    %8792 = vmatpush1.xpose.msra.mxu0 0.0
    %8793 = vmatprep.subr.mxu0 0.0
    %8794 = vmatpush1.xpose.msra.mxu0 0.0
    %8795 = vmatprep.subr.mxu0 0.0
    %8796 = vmatpush1.xpose.msra.mxu0 0.0
    %8797 = vmatprep.subr.mxu0 0.0
    %8798 = vmatpush1.xpose.msra.mxu0 0.0
    %8799 = vmatprep.subr.mxu0 0.0
    %8800 = vmatpush1.xpose.msra.mxu0 0.0
    %8801 = vmatprep.subr.mxu0 0.0
    %8802 = vmatpush1.xpose.msra.mxu0 0.0
    %8803 = vmatprep.subr.mxu0 0.0
    %8804 = vmatpush1.xpose.msra.mxu0 0.0
    %8805 = vmatprep.mubr.f32.mxu0 0.0
    %8806 = vmatmul.mubr.f32.gmra.mrb[0].mxu0 %v8737
    %v8807 = vpop.f32.mrb[0].mxu0
    %v8808 = vadd.f32 0.0, %v8807
    %v8809 = vpop.f32.mrb[0].mxu0
    %8810 = vdwg.mxu0
    %v8811 = vsel %vm8736, %v8731, 0
    %v8813 = vsel %vm8736, %v8733, 0
    %8815 = vmatprep.subr.mxu0 0.0
    %8816 = vmatpush1.xpose.msra.mxu0 %v8813
    %8817 = vmatprep.subr.mxu0 0.0
    %8818 = vmatpush1.xpose.msra.mxu0 0.0
    %8819 = vmatprep.subr.mxu0 0.0
    %8820 = vmatpush1.xpose.msra.mxu0 0.0
    %8821 = vmatprep.subr.mxu0 0.0
    %8822 = vmatpush1.xpose.msra.mxu0 0.0
    %8823 = vmatprep.subr.mxu0 0.0
    %8824 = vmatpush1.xpose.msra.mxu0 0.0
    %8825 = vmatprep.subr.mxu0 0.0
    %8826 = vmatpush1.xpose.msra.mxu0 0.0
    %8827 = vmatprep.subr.mxu0 0.0
    %8828 = vmatpush1.xpose.msra.mxu0 0.0
    %8829 = vmatprep.subr.mxu0 0.0
    %8830 = vmatpush1.xpose.msra.mxu0 0.0
    %8831 = vmatprep.subr.mxu0 0.0
    %8832 = vmatpush1.xpose.msra.mxu0 0.0
    %8833 = vmatprep.subr.mxu0 0.0
    %8834 = vmatpush1.xpose.msra.mxu0 0.0
    %8835 = vmatprep.subr.mxu0 0.0
    %8836 = vmatpush1.xpose.msra.mxu0 0.0
    %8837 = vmatprep.subr.mxu0 0.0
    %8838 = vmatpush1.xpose.msra.mxu0 0.0
    %8839 = vmatprep.subr.mxu0 0.0
    %8840 = vmatpush1.xpose.msra.mxu0 0.0
    %8841 = vmatprep.subr.mxu0 0.0
    %8842 = vmatpush1.xpose.msra.mxu0 0.0
    %8843 = vmatprep.subr.mxu0 0.0
    %8844 = vmatpush1.xpose.msra.mxu0 0.0
    %8845 = vmatprep.subr.mxu0 0.0
    %8846 = vmatpush1.xpose.msra.mxu0 0.0
    %8847 = vmatprep.subr.mxu0 0.0
    %8848 = vmatpush1.xpose.msra.mxu0 0.0
    %8849 = vmatprep.subr.mxu0 0.0
    %8850 = vmatpush1.xpose.msra.mxu0 0.0
    %8851 = vmatprep.subr.mxu0 0.0
    %8852 = vmatpush1.xpose.msra.mxu0 0.0
    %8853 = vmatprep.subr.mxu0 0.0
    %8854 = vmatpush1.xpose.msra.mxu0 0.0
    %8855 = vmatprep.subr.mxu0 0.0
    %8856 = vmatpush1.xpose.msra.mxu0 0.0
    %8857 = vmatprep.subr.mxu0 0.0
    %8858 = vmatpush1.xpose.msra.mxu0 0.0
    %8859 = vmatprep.subr.mxu0 0.0
    %8860 = vmatpush1.xpose.msra.mxu0 0.0
    %8861 = vmatprep.subr.mxu0 0.0
    %8862 = vmatpush1.xpose.msra.mxu0 0.0
    %8863 = vmatprep.subr.mxu0 0.0
    %8864 = vmatpush1.xpose.msra.mxu0 0.0
    %8865 = vmatprep.subr.mxu0 0.0
    %8866 = vmatpush1.xpose.msra.mxu0 0.0
    %8867 = vmatprep.subr.mxu0 0.0
    %8868 = vmatpush1.xpose.msra.mxu0 0.0
    %8869 = vmatprep.subr.mxu0 0.0
    %8870 = vmatpush1.xpose.msra.mxu0 0.0
    %8871 = vmatprep.subr.mxu0 0.0
    %8872 = vmatpush1.xpose.msra.mxu0 0.0
    %8873 = vmatprep.subr.mxu0 0.0
    %8874 = vmatpush1.xpose.msra.mxu0 0.0
    %8875 = vmatprep.subr.mxu0 0.0
    %8876 = vmatpush1.xpose.msra.mxu0 0.0
    %8877 = vmatprep.subr.mxu0 0.0
    %8878 = vmatpush1.xpose.msra.mxu0 0.0
    %8879 = vmatprep.mubr.f32.mxu0 0.0
    %8880 = vmatmul.mubr.f32.gmra.mrb[0].mxu0 %v8811
    %v8881 = vpop.f32.mrb[0].mxu0
    %v8882 = vadd.f32 0.0, %v8881
    %v8883 = vpop.f32.mrb[0].mxu0
    %8884 = vdwg.mxu0
    %v8885 = vmul.f32 %v8808, 0.25
    %v8886 = vmul.f32 %v8882, 0.25
    %vm8887 = vcmask 27648
    %v8888 = vsel %vm8887, %v8885, -inf
    %8889 = vmax.xlane.f32.xlu0 %v8888
    %v8890 = vpop.xlane.xlu0 %8889
    %v8891 = vsel %vm8887, %v8886, -inf
    %8892 = vmax.xlane.f32.xlu0 %v8891
    %v8893 = vpop.xlane.xlu0 %8892
    %v8894 = vsub.f32 %v8885, %v8890
    %v8895 = vsub.f32 %v8886, %v8893
    %v8896 = vmul.f32 %v8894, 1.442695
    %v8897 = vpow.pop %v8896
    %v8898 = vmul.f32 %v8895, 1.442695
    %v8899 = vpow.pop %v8898
    %v8900 = vsel %vm8887, %v8897, 0.0
    %8901 = vadd.xlane.f32.xlu0 %v8900
    %v8902 = vpop.xlane.xlu0 %8901
    %v8903 = vsel %vm8887, %v8899, 0.0
    %8904 = vadd.xlane.f32.xlu0 %v8903
    %v8905 = vpop.xlane.xlu0 %8904
    %v8906 = vrcp.pop %v8902
    %v8907 = vmul.f32 %v8897, %v8906
    %v8908 = vrcp.pop %v8905
    %v8909 = vmul.f32 %v8899, %v8908
    %v8911 = vsel %vm3177, %v8907, 0
    %v8913 = vsel %vm8394, %v8727, 0
    %8915 = vmatprep.subr.mxu0 0.0
    %8916 = vmatpush1.msra.mxu0 %v8913
    %8917 = vmatprep.subr.mxu0 0.0
    %8918 = vmatpush1.msra.mxu0 0.0
    %8919 = vmatprep.subr.mxu0 0.0
    %8920 = vmatpush1.msra.mxu0 0.0
    %8921 = vmatprep.subr.mxu0 0.0
    %8922 = vmatpush1.msra.mxu0 0.0
    %8923 = vmatprep.subr.mxu0 0.0
    %8924 = vmatpush1.msra.mxu0 0.0
    %8925 = vmatprep.subr.mxu0 0.0
    %8926 = vmatpush1.msra.mxu0 0.0
    %8927 = vmatprep.subr.mxu0 0.0
    %8928 = vmatpush1.msra.mxu0 0.0
    %8929 = vmatprep.subr.mxu0 0.0
    %8930 = vmatpush1.msra.mxu0 0.0
    %8931 = vmatprep.subr.mxu0 0.0
    %8932 = vmatpush1.msra.mxu0 0.0
    %8933 = vmatprep.subr.mxu0 0.0
    %8934 = vmatpush1.msra.mxu0 0.0
    %8935 = vmatprep.subr.mxu0 0.0
    %8936 = vmatpush1.msra.mxu0 0.0
    %8937 = vmatprep.subr.mxu0 0.0
    %8938 = vmatpush1.msra.mxu0 0.0
    %8939 = vmatprep.subr.mxu0 0.0
    %8940 = vmatpush1.msra.mxu0 0.0
    %8941 = vmatprep.subr.mxu0 0.0
    %8942 = vmatpush1.msra.mxu0 0.0
    %8943 = vmatprep.subr.mxu0 0.0
    %8944 = vmatpush1.msra.mxu0 0.0
    %8945 = vmatprep.subr.mxu0 0.0
    %8946 = vmatpush1.msra.mxu0 0.0
    %8947 = vmatprep.subr.mxu0 0.0
    %8948 = vmatpush1.msra.mxu0 0.0
    %8949 = vmatprep.subr.mxu0 0.0
    %8950 = vmatpush1.msra.mxu0 0.0
    %8951 = vmatprep.subr.mxu0 0.0
    %8952 = vmatpush1.msra.mxu0 0.0
    %8953 = vmatprep.subr.mxu0 0.0
    %8954 = vmatpush1.msra.mxu0 0.0
    %8955 = vmatprep.subr.mxu0 0.0
    %8956 = vmatpush1.msra.mxu0 0.0
    %8957 = vmatprep.subr.mxu0 0.0
    %8958 = vmatpush1.msra.mxu0 0.0
    %8959 = vmatprep.subr.mxu0 0.0
    %8960 = vmatpush1.msra.mxu0 0.0
    %8961 = vmatprep.subr.mxu0 0.0
    %8962 = vmatpush1.msra.mxu0 0.0
    %8963 = vmatprep.subr.mxu0 0.0
    %8964 = vmatpush1.msra.mxu0 0.0
    %8965 = vmatprep.subr.mxu0 0.0
    %8966 = vmatpush1.msra.mxu0 0.0
    %8967 = vmatprep.subr.mxu0 0.0
    %8968 = vmatpush1.msra.mxu0 0.0
    %8969 = vmatprep.subr.mxu0 0.0
    %8970 = vmatpush1.msra.mxu0 0.0
    %8971 = vmatprep.subr.mxu0 0.0
    %8972 = vmatpush1.msra.mxu0 0.0
    %8973 = vmatprep.subr.mxu0 0.0
    %8974 = vmatpush1.msra.mxu0 0.0
    %8975 = vmatprep.subr.mxu0 0.0
    %8976 = vmatpush1.msra.mxu0 0.0
    %8977 = vmatprep.subr.mxu0 0.0
    %8978 = vmatpush1.msra.mxu0 0.0
    %8979 = vmatprep.mubr.f32.mxu0 0.0
    %8980 = vmatmul.mubr.f32.gmra.mrb[0].mxu0 %v8911
    %v8981 = vpop.f32.mrb[0].mxu0
    %v8982 = vadd.f32 0.0, %v8981
    %v8983 = vpop.f32.mrb[0].mxu0
    %8984 = vdwg.mxu0
    %v8986 = vsel %vm3177, %v8909, 0
    %v8988 = vsel %vm8394, %v8735, 0
    %8990 = vmatprep.subr.mxu0 0.0
    %8991 = vmatpush1.msra.mxu0 %v8988
    %8992 = vmatprep.subr.mxu0 0.0
    %8993 = vmatpush1.msra.mxu0 0.0
    %8994 = vmatprep.subr.mxu0 0.0
    %8995 = vmatpush1.msra.mxu0 0.0
    %8996 = vmatprep.subr.mxu0 0.0
    %8997 = vmatpush1.msra.mxu0 0.0
    %8998 = vmatprep.subr.mxu0 0.0
    %8999 = vmatpush1.msra.mxu0 0.0
    %9000 = vmatprep.subr.mxu0 0.0
    %9001 = vmatpush1.msra.mxu0 0.0
    %9002 = vmatprep.subr.mxu0 0.0
    %9003 = vmatpush1.msra.mxu0 0.0
    %9004 = vmatprep.subr.mxu0 0.0
    %9005 = vmatpush1.msra.mxu0 0.0
    %9006 = vmatprep.subr.mxu0 0.0
    %9007 = vmatpush1.msra.mxu0 0.0
    %9008 = vmatprep.subr.mxu0 0.0
    %9009 = vmatpush1.msra.mxu0 0.0
    %9010 = vmatprep.subr.mxu0 0.0
    %9011 = vmatpush1.msra.mxu0 0.0
    %9012 = vmatprep.subr.mxu0 0.0
    %9013 = vmatpush1.msra.mxu0 0.0
    %9014 = vmatprep.subr.mxu0 0.0
    %9015 = vmatpush1.msra.mxu0 0.0
    %9016 = vmatprep.subr.mxu0 0.0
    %9017 = vmatpush1.msra.mxu0 0.0
    %9018 = vmatprep.subr.mxu0 0.0
    %9019 = vmatpush1.msra.mxu0 0.0
    %9020 = vmatprep.subr.mxu0 0.0
    %9021 = vmatpush1.msra.mxu0 0.0
    %9022 = vmatprep.subr.mxu0 0.0
    %9023 = vmatpush1.msra.mxu0 0.0
    %9024 = vmatprep.subr.mxu0 0.0
    %9025 = vmatpush1.msra.mxu0 0.0
    %9026 = vmatprep.subr.mxu0 0.0
    %9027 = vmatpush1.msra.mxu0 0.0
    %9028 = vmatprep.subr.mxu0 0.0
    %9029 = vmatpush1.msra.mxu0 0.0
    %9030 = vmatprep.subr.mxu0 0.0
    %9031 = vmatpush1.msra.mxu0 0.0
    %9032 = vmatprep.subr.mxu0 0.0
    %9033 = vmatpush1.msra.mxu0 0.0
    %9034 = vmatprep.subr.mxu0 0.0
    %9035 = vmatpush1.msra.mxu0 0.0
    %9036 = vmatprep.subr.mxu0 0.0
    %9037 = vmatpush1.msra.mxu0 0.0
    %9038 = vmatprep.subr.mxu0 0.0
    %9039 = vmatpush1.msra.mxu0 0.0
    %9040 = vmatprep.subr.mxu0 0.0
    %9041 = vmatpush1.msra.mxu0 0.0
    %9042 = vmatprep.subr.mxu0 0.0
    %9043 = vmatpush1.msra.mxu0 0.0
    %9044 = vmatprep.subr.mxu0 0.0
    %9045 = vmatpush1.msra.mxu0 0.0
    %9046 = vmatprep.subr.mxu0 0.0
    %9047 = vmatpush1.msra.mxu0 0.0
    %9048 = vmatprep.subr.mxu0 0.0
    %9049 = vmatpush1.msra.mxu0 0.0
    %9050 = vmatprep.subr.mxu0 0.0
    %9051 = vmatpush1.msra.mxu0 0.0
    %9052 = vmatprep.subr.mxu0 0.0
    %9053 = vmatpush1.msra.mxu0 0.0
    %9054 = vmatprep.mubr.f32.mxu0 0.0
    %9055 = vmatmul.mubr.f32.gmra.mrb[0].mxu0 %v8986
    %v9056 = vpop.f32.mrb[0].mxu0
    %v9057 = vadd.f32 0.0, %v9056
    %v9058 = vpop.f32.mrb[0].mxu0
    %9059 = vdwg.mxu0
    %9060 = vrot.lane.b32.xlu0 %v8656, 112
    %v9061 = vpop.permute.xlu0 %9060
    %9062 = vrot.lane.b32.xlu0 %v8658, 112
    %v9063 = vpop.permute.xlu0 %9062
    %v9064 = vsel %vm8736, %v9061, 0
    %v9066 = vsel %vm8736, %v9063, 0
    %9068 = vmatprep.subr.mxu0 0.0
    %9069 = vmatpush1.xpose.msra.mxu0 %v9066
    %9070 = vmatprep.subr.mxu0 0.0
    %9071 = vmatpush1.xpose.msra.mxu0 0.0
    %9072 = vmatprep.subr.mxu0 0.0
    %9073 = vmatpush1.xpose.msra.mxu0 0.0
    %9074 = vmatprep.subr.mxu0 0.0
    %9075 = vmatpush1.xpose.msra.mxu0 0.0
    %9076 = vmatprep.subr.mxu0 0.0
    %9077 = vmatpush1.xpose.msra.mxu0 0.0
    %9078 = vmatprep.subr.mxu0 0.0
    %9079 = vmatpush1.xpose.msra.mxu0 0.0
    %9080 = vmatprep.subr.mxu0 0.0
    %9081 = vmatpush1.xpose.msra.mxu0 0.0
    %9082 = vmatprep.subr.mxu0 0.0
    %9083 = vmatpush1.xpose.msra.mxu0 0.0
    %9084 = vmatprep.subr.mxu0 0.0
    %9085 = vmatpush1.xpose.msra.mxu0 0.0
    %9086 = vmatprep.subr.mxu0 0.0
    %9087 = vmatpush1.xpose.msra.mxu0 0.0
    %9088 = vmatprep.subr.mxu0 0.0
    %9089 = vmatpush1.xpose.msra.mxu0 0.0
    %9090 = vmatprep.subr.mxu0 0.0
    %9091 = vmatpush1.xpose.msra.mxu0 0.0
    %9092 = vmatprep.subr.mxu0 0.0
    %9093 = vmatpush1.xpose.msra.mxu0 0.0
    %9094 = vmatprep.subr.mxu0 0.0
    %9095 = vmatpush1.xpose.msra.mxu0 0.0
    %9096 = vmatprep.subr.mxu0 0.0
    %9097 = vmatpush1.xpose.msra.mxu0 0.0
    %9098 = vmatprep.subr.mxu0 0.0
    %9099 = vmatpush1.xpose.msra.mxu0 0.0
    %9100 = vmatprep.subr.mxu0 0.0
    %9101 = vmatpush1.xpose.msra.mxu0 0.0
    %9102 = vmatprep.subr.mxu0 0.0
    %9103 = vmatpush1.xpose.msra.mxu0 0.0
    %9104 = vmatprep.subr.mxu0 0.0
    %9105 = vmatpush1.xpose.msra.mxu0 0.0
    %9106 = vmatprep.subr.mxu0 0.0
    %9107 = vmatpush1.xpose.msra.mxu0 0.0
    %9108 = vmatprep.subr.mxu0 0.0
    %9109 = vmatpush1.xpose.msra.mxu0 0.0
    %9110 = vmatprep.subr.mxu0 0.0
    %9111 = vmatpush1.xpose.msra.mxu0 0.0
    %9112 = vmatprep.subr.mxu0 0.0
    %9113 = vmatpush1.xpose.msra.mxu0 0.0
    %9114 = vmatprep.subr.mxu0 0.0
    %9115 = vmatpush1.xpose.msra.mxu0 0.0
    %9116 = vmatprep.subr.mxu0 0.0
    %9117 = vmatpush1.xpose.msra.mxu0 0.0
    %9118 = vmatprep.subr.mxu0 0.0
    %9119 = vmatpush1.xpose.msra.mxu0 0.0
    %9120 = vmatprep.subr.mxu0 0.0
    %9121 = vmatpush1.xpose.msra.mxu0 0.0
    %9122 = vmatprep.subr.mxu0 0.0
    %9123 = vmatpush1.xpose.msra.mxu0 0.0
    %9124 = vmatprep.subr.mxu0 0.0
    %9125 = vmatpush1.xpose.msra.mxu0 0.0
    %9126 = vmatprep.subr.mxu0 0.0
    %9127 = vmatpush1.xpose.msra.mxu0 0.0
    %9128 = vmatprep.subr.mxu0 0.0
    %9129 = vmatpush1.xpose.msra.mxu0 0.0
    %9130 = vmatprep.subr.mxu0 0.0
    %9131 = vmatpush1.xpose.msra.mxu0 0.0
    %9132 = vmatprep.mubr.f32.mxu0 0.0
    %9133 = vmatmul.mubr.f32.gmra.mrb[0].mxu0 %v9064
    %v9134 = vpop.f32.mrb[0].mxu0
    %v9135 = vadd.f32 0.0, %v9134
    %v9136 = vpop.f32.mrb[0].mxu0
    %9137 = vdwg.mxu0
    %9138 = vrot.lane.b32.xlu0 %v8731, 112
    %v9139 = vpop.permute.xlu0 %9138
    %9140 = vrot.lane.b32.xlu0 %v8733, 112
    %v9141 = vpop.permute.xlu0 %9140
    %v9142 = vsel %vm8736, %v9139, 0
    %v9144 = vsel %vm8736, %v9141, 0
    %9146 = vmatprep.subr.mxu0 0.0
    %9147 = vmatpush1.xpose.msra.mxu0 %v9144
    %9148 = vmatprep.subr.mxu0 0.0
    %9149 = vmatpush1.xpose.msra.mxu0 0.0
    %9150 = vmatprep.subr.mxu0 0.0
    %9151 = vmatpush1.xpose.msra.mxu0 0.0
    %9152 = vmatprep.subr.mxu0 0.0
    %9153 = vmatpush1.xpose.msra.mxu0 0.0
    %9154 = vmatprep.subr.mxu0 0.0
    %9155 = vmatpush1.xpose.msra.mxu0 0.0
    %9156 = vmatprep.subr.mxu0 0.0
    %9157 = vmatpush1.xpose.msra.mxu0 0.0
    %9158 = vmatprep.subr.mxu0 0.0
    %9159 = vmatpush1.xpose.msra.mxu0 0.0
    %9160 = vmatprep.subr.mxu0 0.0
    %9161 = vmatpush1.xpose.msra.mxu0 0.0
    %9162 = vmatprep.subr.mxu0 0.0
    %9163 = vmatpush1.xpose.msra.mxu0 0.0
    %9164 = vmatprep.subr.mxu0 0.0
    %9165 = vmatpush1.xpose.msra.mxu0 0.0
    %9166 = vmatprep.subr.mxu0 0.0
    %9167 = vmatpush1.xpose.msra.mxu0 0.0
    %9168 = vmatprep.subr.mxu0 0.0
    %9169 = vmatpush1.xpose.msra.mxu0 0.0
    %9170 = vmatprep.subr.mxu0 0.0
    %9171 = vmatpush1.xpose.msra.mxu0 0.0
    %9172 = vmatprep.subr.mxu0 0.0
    %9173 = vmatpush1.xpose.msra.mxu0 0.0
    %9174 = vmatprep.subr.mxu0 0.0
    %9175 = vmatpush1.xpose.msra.mxu0 0.0
    %9176 = vmatprep.subr.mxu0 0.0
    %9177 = vmatpush1.xpose.msra.mxu0 0.0
    %9178 = vmatprep.subr.mxu0 0.0
    %9179 = vmatpush1.xpose.msra.mxu0 0.0
    %9180 = vmatprep.subr.mxu0 0.0
    %9181 = vmatpush1.xpose.msra.mxu0 0.0
    %9182 = vmatprep.subr.mxu0 0.0
    %9183 = vmatpush1.xpose.msra.mxu0 0.0
    %9184 = vmatprep.subr.mxu0 0.0
    %9185 = vmatpush1.xpose.msra.mxu0 0.0
    %9186 = vmatprep.subr.mxu0 0.0
    %9187 = vmatpush1.xpose.msra.mxu0 0.0
    %9188 = vmatprep.subr.mxu0 0.0
    %9189 = vmatpush1.xpose.msra.mxu0 0.0
    %9190 = vmatprep.subr.mxu0 0.0
    %9191 = vmatpush1.xpose.msra.mxu0 0.0
    %9192 = vmatprep.subr.mxu0 0.0
    %9193 = vmatpush1.xpose.msra.mxu0 0.0
    %9194 = vmatprep.subr.mxu0 0.0
    %9195 = vmatpush1.xpose.msra.mxu0 0.0
    %9196 = vmatprep.subr.mxu0 0.0
    %9197 = vmatpush1.xpose.msra.mxu0 0.0
    %9198 = vmatprep.subr.mxu0 0.0
    %9199 = vmatpush1.xpose.msra.mxu0 0.0
    %9200 = vmatprep.subr.mxu0 0.0
    %9201 = vmatpush1.xpose.msra.mxu0 0.0
    %9202 = vmatprep.subr.mxu0 0.0
    %9203 = vmatpush1.xpose.msra.mxu0 0.0
    %9204 = vmatprep.subr.mxu0 0.0
    %9205 = vmatpush1.xpose.msra.mxu0 0.0
    %9206 = vmatprep.subr.mxu0 0.0
    %9207 = vmatpush1.xpose.msra.mxu0 0.0
    %9208 = vmatprep.subr.mxu0 0.0
    %9209 = vmatpush1.xpose.msra.mxu0 0.0
    %9210 = vmatprep.mubr.f32.mxu0 0.0
    %9211 = vmatmul.mubr.f32.gmra.mrb[0].mxu0 %v9142
    %v9212 = vpop.f32.mrb[0].mxu0
    %v9213 = vadd.f32 0.0, %v9212
    %v9214 = vpop.f32.mrb[0].mxu0
    %9215 = vdwg.mxu0
    %v9216 = vmul.f32 %v9135, 0.25
    %v9217 = vmul.f32 %v9213, 0.25
    %v9218 = vsel %vm8887, %v9216, -inf
    %9219 = vmax.xlane.f32.xlu0 %v9218
    %v9220 = vpop.xlane.xlu0 %9219
    %v9221 = vsel %vm8887, %v9217, -inf
    %9222 = vmax.xlane.f32.xlu0 %v9221
    %v9223 = vpop.xlane.xlu0 %9222
    %v9224 = vsub.f32 %v9216, %v9220
    %v9225 = vsub.f32 %v9217, %v9223
    %v9226 = vmul.f32 %v9224, 1.442695
    %v9227 = vpow.pop %v9226
    %v9228 = vmul.f32 %v9225, 1.442695
    %v9229 = vpow.pop %v9228
    %v9230 = vsel %vm8887, %v9227, 0.0
    %9231 = vadd.xlane.f32.xlu0 %v9230
    %v9232 = vpop.xlane.xlu0 %9231
    %v9233 = vsel %vm8887, %v9229, 0.0
    %9234 = vadd.xlane.f32.xlu0 %v9233
    %v9235 = vpop.xlane.xlu0 %9234
    %v9236 = vrcp.pop %v9232
    %v9237 = vmul.f32 %v9227, %v9236
    %v9238 = vrcp.pop %v9235
    %v9239 = vmul.f32 %v9229, %v9238
    %9240 = vrot.lane.b32.xlu0 %v8727, 112
    %v9241 = vpop.permute.xlu0 %9240
    %v9243 = vsel %vm3177, %v9237, 0
    %v9245 = vsel %vm8394, %v9241, 0
    %9247 = vmatprep.subr.mxu0 0.0
    %9248 = vmatpush1.msra.mxu0 %v9245
    %9249 = vmatprep.subr.mxu0 0.0
    %9250 = vmatpush1.msra.mxu0 0.0
    %9251 = vmatprep.subr.mxu0 0.0
    %9252 = vmatpush1.msra.mxu0 0.0
    %9253 = vmatprep.subr.mxu0 0.0
    %9254 = vmatpush1.msra.mxu0 0.0
    %9255 = vmatprep.subr.mxu0 0.0
    %9256 = vmatpush1.msra.mxu0 0.0
    %9257 = vmatprep.subr.mxu0 0.0
    %9258 = vmatpush1.msra.mxu0 0.0
    %9259 = vmatprep.subr.mxu0 0.0
    %9260 = vmatpush1.msra.mxu0 0.0
    %9261 = vmatprep.subr.mxu0 0.0
    %9262 = vmatpush1.msra.mxu0 0.0
    %9263 = vmatprep.subr.mxu0 0.0
    %9264 = vmatpush1.msra.mxu0 0.0
    %9265 = vmatprep.subr.mxu0 0.0
    %9266 = vmatpush1.msra.mxu0 0.0
    %9267 = vmatprep.subr.mxu0 0.0
    %9268 = vmatpush1.msra.mxu0 0.0
    %9269 = vmatprep.subr.mxu0 0.0
    %9270 = vmatpush1.msra.mxu0 0.0
    %9271 = vmatprep.subr.mxu0 0.0
    %9272 = vmatpush1.msra.mxu0 0.0
    %9273 = vmatprep.subr.mxu0 0.0
    %9274 = vmatpush1.msra.mxu0 0.0
    %9275 = vmatprep.subr.mxu0 0.0
    %9276 = vmatpush1.msra.mxu0 0.0
    %9277 = vmatprep.subr.mxu0 0.0
    %9278 = vmatpush1.msra.mxu0 0.0
    %9279 = vmatprep.subr.mxu0 0.0
    %9280 = vmatpush1.msra.mxu0 0.0
    %9281 = vmatprep.subr.mxu0 0.0
    %9282 = vmatpush1.msra.mxu0 0.0
    %9283 = vmatprep.subr.mxu0 0.0
    %9284 = vmatpush1.msra.mxu0 0.0
    %9285 = vmatprep.subr.mxu0 0.0
    %9286 = vmatpush1.msra.mxu0 0.0
    %9287 = vmatprep.subr.mxu0 0.0
    %9288 = vmatpush1.msra.mxu0 0.0
    %9289 = vmatprep.subr.mxu0 0.0
    %9290 = vmatpush1.msra.mxu0 0.0
    %9291 = vmatprep.subr.mxu0 0.0
    %9292 = vmatpush1.msra.mxu0 0.0
    %9293 = vmatprep.subr.mxu0 0.0
    %9294 = vmatpush1.msra.mxu0 0.0
    %9295 = vmatprep.subr.mxu0 0.0
    %9296 = vmatpush1.msra.mxu0 0.0
    %9297 = vmatprep.subr.mxu0 0.0
    %9298 = vmatpush1.msra.mxu0 0.0
    %9299 = vmatprep.subr.mxu0 0.0
    %9300 = vmatpush1.msra.mxu0 0.0
    %9301 = vmatprep.subr.mxu0 0.0
    %9302 = vmatpush1.msra.mxu0 0.0
    %9303 = vmatprep.subr.mxu0 0.0
    %9304 = vmatpush1.msra.mxu0 0.0
    %9305 = vmatprep.subr.mxu0 0.0
    %9306 = vmatpush1.msra.mxu0 0.0
    %9307 = vmatprep.subr.mxu0 0.0
    %9308 = vmatpush1.msra.mxu0 0.0
    %9309 = vmatprep.subr.mxu0 0.0
    %9310 = vmatpush1.msra.mxu0 0.0
    %9311 = vmatprep.mubr.f32.mxu0 0.0
    %9312 = vmatmul.mubr.f32.gmra.mrb[0].mxu0 %v9243
    %v9313 = vpop.f32.mrb[0].mxu0
    %v9314 = vadd.f32 0.0, %v9313
    %v9315 = vpop.f32.mrb[0].mxu0
    %9316 = vdwg.mxu0
    %9317 = vrot.lane.b32.xlu0 %v8735, 112
    %v9318 = vpop.permute.xlu0 %9317
    %v9320 = vsel %vm3177, %v9239, 0
    %v9322 = vsel %vm8394, %v9318, 0
    %9324 = vmatprep.subr.mxu0 0.0
    %9325 = vmatpush1.msra.mxu0 %v9322
    %9326 = vmatprep.subr.mxu0 0.0
    %9327 = vmatpush1.msra.mxu0 0.0
    %9328 = vmatprep.subr.mxu0 0.0
    %9329 = vmatpush1.msra.mxu0 0.0
    %9330 = vmatprep.subr.mxu0 0.0
    %9331 = vmatpush1.msra.mxu0 0.0
    %9332 = vmatprep.subr.mxu0 0.0
    %9333 = vmatpush1.msra.mxu0 0.0
    %9334 = vmatprep.subr.mxu0 0.0
    %9335 = vmatpush1.msra.mxu0 0.0
    %9336 = vmatprep.subr.mxu0 0.0
    %9337 = vmatpush1.msra.mxu0 0.0
    %9338 = vmatprep.subr.mxu0 0.0
    %9339 = vmatpush1.msra.mxu0 0.0
    %9340 = vmatprep.subr.mxu0 0.0
    %9341 = vmatpush1.msra.mxu0 0.0
    %9342 = vmatprep.subr.mxu0 0.0
    %9343 = vmatpush1.msra.mxu0 0.0
    %9344 = vmatprep.subr.mxu0 0.0
    %9345 = vmatpush1.msra.mxu0 0.0
    %9346 = vmatprep.subr.mxu0 0.0
    %9347 = vmatpush1.msra.mxu0 0.0
    %9348 = vmatprep.subr.mxu0 0.0
    %9349 = vmatpush1.msra.mxu0 0.0
    %9350 = vmatprep.subr.mxu0 0.0
    %9351 = vmatpush1.msra.mxu0 0.0
    %9352 = vmatprep.subr.mxu0 0.0
    %9353 = vmatpush1.msra.mxu0 0.0
    %9354 = vmatprep.subr.mxu0 0.0
    %9355 = vmatpush1.msra.mxu0 0.0
    %9356 = vmatprep.subr.mxu0 0.0
    %9357 = vmatpush1.msra.mxu0 0.0
    %9358 = vmatprep.subr.mxu0 0.0
    %9359 = vmatpush1.msra.mxu0 0.0
    %9360 = vmatprep.subr.mxu0 0.0
    %9361 = vmatpush1.msra.mxu0 0.0
    %9362 = vmatprep.subr.mxu0 0.0
    %9363 = vmatpush1.msra.mxu0 0.0
    %9364 = vmatprep.subr.mxu0 0.0
    %9365 = vmatpush1.msra.mxu0 0.0
    %9366 = vmatprep.subr.mxu0 0.0
    %9367 = vmatpush1.msra.mxu0 0.0
    %9368 = vmatprep.subr.mxu0 0.0
    %9369 = vmatpush1.msra.mxu0 0.0
    %9370 = vmatprep.subr.mxu0 0.0
    %9371 = vmatpush1.msra.mxu0 0.0
    %9372 = vmatprep.subr.mxu0 0.0
    %9373 = vmatpush1.msra.mxu0 0.0
    %9374 = vmatprep.subr.mxu0 0.0
    %9375 = vmatpush1.msra.mxu0 0.0
    %9376 = vmatprep.subr.mxu0 0.0
    %9377 = vmatpush1.msra.mxu0 0.0
    %9378 = vmatprep.subr.mxu0 0.0
    %9379 = vmatpush1.msra.mxu0 0.0
    %9380 = vmatprep.subr.mxu0 0.0
    %9381 = vmatpush1.msra.mxu0 0.0
    %9382 = vmatprep.subr.mxu0 0.0
    %9383 = vmatpush1.msra.mxu0 0.0
    %9384 = vmatprep.subr.mxu0 0.0
    %9385 = vmatpush1.msra.mxu0 0.0
    %9386 = vmatprep.subr.mxu0 0.0
    %9387 = vmatpush1.msra.mxu0 0.0
    %9388 = vmatprep.mubr.f32.mxu0 0.0
    %9389 = vmatmul.mubr.f32.gmra.mrb[0].mxu0 %v9320
    %v9390 = vpop.f32.mrb[0].mxu0
    %v9391 = vadd.f32 0.0, %v9390
    %v9392 = vpop.f32.mrb[0].mxu0
    %9393 = vdwg.mxu0
    %9394 = vrot.lane.b32.xlu0 %v8656, 96
    %v9395 = vpop.permute.xlu0 %9394
    %9396 = vrot.lane.b32.xlu0 %v8658, 96
    %v9397 = vpop.permute.xlu0 %9396
    %v9398 = vsel %vm8736, %v9395, 0
    %v9400 = vsel %vm8736, %v9397, 0
    %9402 = vmatprep.subr.mxu0 0.0
    %9403 = vmatpush1.xpose.msra.mxu0 %v9400
    %9404 = vmatprep.subr.mxu0 0.0
    %9405 = vmatpush1.xpose.msra.mxu0 0.0
    %9406 = vmatprep.subr.mxu0 0.0
    %9407 = vmatpush1.xpose.msra.mxu0 0.0
    %9408 = vmatprep.subr.mxu0 0.0
    %9409 = vmatpush1.xpose.msra.mxu0 0.0
    %9410 = vmatprep.subr.mxu0 0.0
    %9411 = vmatpush1.xpose.msra.mxu0 0.0
    %9412 = vmatprep.subr.mxu0 0.0
    %9413 = vmatpush1.xpose.msra.mxu0 0.0
    %9414 = vmatprep.subr.mxu0 0.0
    %9415 = vmatpush1.xpose.msra.mxu0 0.0
    %9416 = vmatprep.subr.mxu0 0.0
    %9417 = vmatpush1.xpose.msra.mxu0 0.0
    %9418 = vmatprep.subr.mxu0 0.0
    %9419 = vmatpush1.xpose.msra.mxu0 0.0
    %9420 = vmatprep.subr.mxu0 0.0
    %9421 = vmatpush1.xpose.msra.mxu0 0.0
    %9422 = vmatprep.subr.mxu0 0.0
    %9423 = vmatpush1.xpose.msra.mxu0 0.0
    %9424 = vmatprep.subr.mxu0 0.0
    %9425 = vmatpush1.xpose.msra.mxu0 0.0
    %9426 = vmatprep.subr.mxu0 0.0
    %9427 = vmatpush1.xpose.msra.mxu0 0.0
    %9428 = vmatprep.subr.mxu0 0.0
    %9429 = vmatpush1.xpose.msra.mxu0 0.0
    %9430 = vmatprep.subr.mxu0 0.0
    %9431 = vmatpush1.xpose.msra.mxu0 0.0
    %9432 = vmatprep.subr.mxu0 0.0
    %9433 = vmatpush1.xpose.msra.mxu0 0.0
    %9434 = vmatprep.subr.mxu0 0.0
    %9435 = vmatpush1.xpose.msra.mxu0 0.0
    %9436 = vmatprep.subr.mxu0 0.0
    %9437 = vmatpush1.xpose.msra.mxu0 0.0
    %9438 = vmatprep.subr.mxu0 0.0
    %9439 = vmatpush1.xpose.msra.mxu0 0.0
    %9440 = vmatprep.subr.mxu0 0.0
    %9441 = vmatpush1.xpose.msra.mxu0 0.0
    %9442 = vmatprep.subr.mxu0 0.0
    %9443 = vmatpush1.xpose.msra.mxu0 0.0
    %9444 = vmatprep.subr.mxu0 0.0
    %9445 = vmatpush1.xpose.msra.mxu0 0.0
    %9446 = vmatprep.subr.mxu0 0.0
    %9447 = vmatpush1.xpose.msra.mxu0 0.0
    %9448 = vmatprep.subr.mxu0 0.0
    %9449 = vmatpush1.xpose.msra.mxu0 0.0
    %9450 = vmatprep.subr.mxu0 0.0
    %9451 = vmatpush1.xpose.msra.mxu0 0.0
    %9452 = vmatprep.subr.mxu0 0.0
    %9453 = vmatpush1.xpose.msra.mxu0 0.0
    %9454 = vmatprep.subr.mxu0 0.0
    %9455 = vmatpush1.xpose.msra.mxu0 0.0
    %9456 = vmatprep.subr.mxu0 0.0
    %9457 = vmatpush1.xpose.msra.mxu0 0.0
    %9458 = vmatprep.subr.mxu0 0.0
    %9459 = vmatpush1.xpose.msra.mxu0 0.0
    %9460 = vmatprep.subr.mxu0 0.0
    %9461 = vmatpush1.xpose.msra.mxu0 0.0
    %9462 = vmatprep.subr.mxu0 0.0
    %9463 = vmatpush1.xpose.msra.mxu0 0.0
    %9464 = vmatprep.subr.mxu0 0.0
    %9465 = vmatpush1.xpose.msra.mxu0 0.0
    %9466 = vmatprep.mubr.f32.mxu0 0.0
    %9467 = vmatmul.mubr.f32.gmra.mrb[0].mxu0 %v9398
    %v9468 = vpop.f32.mrb[0].mxu0
    %v9469 = vadd.f32 0.0, %v9468
    %v9470 = vpop.f32.mrb[0].mxu0
    %9471 = vdwg.mxu0
    %9472 = vrot.lane.b32.xlu0 %v8731, 96
    %v9473 = vpop.permute.xlu0 %9472
    %9474 = vrot.lane.b32.xlu0 %v8733, 96
    %v9475 = vpop.permute.xlu0 %9474
    %v9476 = vsel %vm8736, %v9473, 0
    %v9478 = vsel %vm8736, %v9475, 0
    %9480 = vmatprep.subr.mxu0 0.0
    %9481 = vmatpush1.xpose.msra.mxu0 %v9478
    %9482 = vmatprep.subr.mxu0 0.0
    %9483 = vmatpush1.xpose.msra.mxu0 0.0
    %9484 = vmatprep.subr.mxu0 0.0
    %9485 = vmatpush1.xpose.msra.mxu0 0.0
    %9486 = vmatprep.subr.mxu0 0.0
    %9487 = vmatpush1.xpose.msra.mxu0 0.0
    %9488 = vmatprep.subr.mxu0 0.0
    %9489 = vmatpush1.xpose.msra.mxu0 0.0
    %9490 = vmatprep.subr.mxu0 0.0
    %9491 = vmatpush1.xpose.msra.mxu0 0.0
    %9492 = vmatprep.subr.mxu0 0.0
    %9493 = vmatpush1.xpose.msra.mxu0 0.0
    %9494 = vmatprep.subr.mxu0 0.0
    %9495 = vmatpush1.xpose.msra.mxu0 0.0
    %9496 = vmatprep.subr.mxu0 0.0
    %9497 = vmatpush1.xpose.msra.mxu0 0.0
    %9498 = vmatprep.subr.mxu0 0.0
    %9499 = vmatpush1.xpose.msra.mxu0 0.0
    %9500 = vmatprep.subr.mxu0 0.0
    %9501 = vmatpush1.xpose.msra.mxu0 0.0
    %9502 = vmatprep.subr.mxu0 0.0
    %9503 = vmatpush1.xpose.msra.mxu0 0.0
    %9504 = vmatprep.subr.mxu0 0.0
    %9505 = vmatpush1.xpose.msra.mxu0 0.0
    %9506 = vmatprep.subr.mxu0 0.0
    %9507 = vmatpush1.xpose.msra.mxu0 0.0
    %9508 = vmatprep.subr.mxu0 0.0
    %9509 = vmatpush1.xpose.msra.mxu0 0.0
    %9510 = vmatprep.subr.mxu0 0.0
    %9511 = vmatpush1.xpose.msra.mxu0 0.0
    %9512 = vmatprep.subr.mxu0 0.0
    %9513 = vmatpush1.xpose.msra.mxu0 0.0
    %9514 = vmatprep.subr.mxu0 0.0
    %9515 = vmatpush1.xpose.msra.mxu0 0.0
    %9516 = vmatprep.subr.mxu0 0.0
    %9517 = vmatpush1.xpose.msra.mxu0 0.0
    %9518 = vmatprep.subr.mxu0 0.0
    %9519 = vmatpush1.xpose.msra.mxu0 0.0
    %9520 = vmatprep.subr.mxu0 0.0
    %9521 = vmatpush1.xpose.msra.mxu0 0.0
    %9522 = vmatprep.subr.mxu0 0.0
    %9523 = vmatpush1.xpose.msra.mxu0 0.0
    %9524 = vmatprep.subr.mxu0 0.0
    %9525 = vmatpush1.xpose.msra.mxu0 0.0
    %9526 = vmatprep.subr.mxu0 0.0
    %9527 = vmatpush1.xpose.msra.mxu0 0.0
    %9528 = vmatprep.subr.mxu0 0.0
    %9529 = vmatpush1.xpose.msra.mxu0 0.0
    %9530 = vmatprep.subr.mxu0 0.0
    %9531 = vmatpush1.xpose.msra.mxu0 0.0
    %9532 = vmatprep.subr.mxu0 0.0
    %9533 = vmatpush1.xpose.msra.mxu0 0.0
    %9534 = vmatprep.subr.mxu0 0.0
    %9535 = vmatpush1.xpose.msra.mxu0 0.0
    %9536 = vmatprep.subr.mxu0 0.0
    %9537 = vmatpush1.xpose.msra.mxu0 0.0
    %9538 = vmatprep.subr.mxu0 0.0
    %9539 = vmatpush1.xpose.msra.mxu0 0.0
    %9540 = vmatprep.subr.mxu0 0.0
    %9541 = vmatpush1.xpose.msra.mxu0 0.0
    %9542 = vmatprep.subr.mxu0 0.0
    %9543 = vmatpush1.xpose.msra.mxu0 0.0
    %9544 = vmatprep.mubr.f32.mxu0 0.0
    %9545 = vmatmul.mubr.f32.gmra.mrb[0].mxu0 %v9476
    %v9546 = vpop.f32.mrb[0].mxu0
    %v9547 = vadd.f32 0.0, %v9546
    %v9548 = vpop.f32.mrb[0].mxu0
    %9549 = vdwg.mxu0
    %v9550 = vmul.f32 %v9469, 0.25
    %v9551 = vmul.f32 %v9547, 0.25
    %v9552 = vsel %vm8887, %v9550, -inf
    %9553 = vmax.xlane.f32.xlu0 %v9552
    %v9554 = vpop.xlane.xlu0 %9553
    %v9555 = vsel %vm8887, %v9551, -inf
    %9556 = vmax.xlane.f32.xlu0 %v9555
    %v9557 = vpop.xlane.xlu0 %9556
    %v9558 = vsub.f32 %v9550, %v9554
    %v9559 = vsub.f32 %v9551, %v9557
    %v9560 = vmul.f32 %v9558, 1.442695
    %v9561 = vpow.pop %v9560
    %v9562 = vmul.f32 %v9559, 1.442695
    %v9563 = vpow.pop %v9562
    %v9564 = vsel %vm8887, %v9561, 0.0
    %9565 = vadd.xlane.f32.xlu0 %v9564
    %v9566 = vpop.xlane.xlu0 %9565
    %v9567 = vsel %vm8887, %v9563, 0.0
    %9568 = vadd.xlane.f32.xlu0 %v9567
    %v9569 = vpop.xlane.xlu0 %9568
    %v9570 = vrcp.pop %v9566
    %v9571 = vmul.f32 %v9561, %v9570
    %v9572 = vrcp.pop %v9569
    %v9573 = vmul.f32 %v9563, %v9572
    %9574 = vrot.lane.b32.xlu0 %v8727, 96
    %v9575 = vpop.permute.xlu0 %9574
    %v9577 = vsel %vm3177, %v9571, 0
    %v9579 = vsel %vm8394, %v9575, 0
    %9581 = vmatprep.subr.mxu0 0.0
    %9582 = vmatpush1.msra.mxu0 %v9579
    %9583 = vmatprep.subr.mxu0 0.0
    %9584 = vmatpush1.msra.mxu0 0.0
    %9585 = vmatprep.subr.mxu0 0.0
    %9586 = vmatpush1.msra.mxu0 0.0
    %9587 = vmatprep.subr.mxu0 0.0
    %9588 = vmatpush1.msra.mxu0 0.0
    %9589 = vmatprep.subr.mxu0 0.0
    %9590 = vmatpush1.msra.mxu0 0.0
    %9591 = vmatprep.subr.mxu0 0.0
    %9592 = vmatpush1.msra.mxu0 0.0
    %9593 = vmatprep.subr.mxu0 0.0
    %9594 = vmatpush1.msra.mxu0 0.0
    %9595 = vmatprep.subr.mxu0 0.0
    %9596 = vmatpush1.msra.mxu0 0.0
    %9597 = vmatprep.subr.mxu0 0.0
    %9598 = vmatpush1.msra.mxu0 0.0
    %9599 = vmatprep.subr.mxu0 0.0
    %9600 = vmatpush1.msra.mxu0 0.0
    %9601 = vmatprep.subr.mxu0 0.0
    %9602 = vmatpush1.msra.mxu0 0.0
    %9603 = vmatprep.subr.mxu0 0.0
    %9604 = vmatpush1.msra.mxu0 0.0
    %9605 = vmatprep.subr.mxu0 0.0
    %9606 = vmatpush1.msra.mxu0 0.0
    %9607 = vmatprep.subr.mxu0 0.0
    %9608 = vmatpush1.msra.mxu0 0.0
    %9609 = vmatprep.subr.mxu0 0.0
    %9610 = vmatpush1.msra.mxu0 0.0
    %9611 = vmatprep.subr.mxu0 0.0
    %9612 = vmatpush1.msra.mxu0 0.0
    %9613 = vmatprep.subr.mxu0 0.0
    %9614 = vmatpush1.msra.mxu0 0.0
    %9615 = vmatprep.subr.mxu0 0.0
    %9616 = vmatpush1.msra.mxu0 0.0
    %9617 = vmatprep.subr.mxu0 0.0
    %9618 = vmatpush1.msra.mxu0 0.0
    %9619 = vmatprep.subr.mxu0 0.0
    %9620 = vmatpush1.msra.mxu0 0.0
    %9621 = vmatprep.subr.mxu0 0.0
    %9622 = vmatpush1.msra.mxu0 0.0
    %9623 = vmatprep.subr.mxu0 0.0
    %9624 = vmatpush1.msra.mxu0 0.0
    %9625 = vmatprep.subr.mxu0 0.0
    %9626 = vmatpush1.msra.mxu0 0.0
    %9627 = vmatprep.subr.mxu0 0.0
    %9628 = vmatpush1.msra.mxu0 0.0
    %9629 = vmatprep.subr.mxu0 0.0
    %9630 = vmatpush1.msra.mxu0 0.0
    %9631 = vmatprep.subr.mxu0 0.0
    %9632 = vmatpush1.msra.mxu0 0.0
    %9633 = vmatprep.subr.mxu0 0.0
    %9634 = vmatpush1.msra.mxu0 0.0
    %9635 = vmatprep.subr.mxu0 0.0
    %9636 = vmatpush1.msra.mxu0 0.0
    %9637 = vmatprep.subr.mxu0 0.0
    %9638 = vmatpush1.msra.mxu0 0.0
    %9639 = vmatprep.subr.mxu0 0.0
    %9640 = vmatpush1.msra.mxu0 0.0
    %9641 = vmatprep.subr.mxu0 0.0
    %9642 = vmatpush1.msra.mxu0 0.0
    %9643 = vmatprep.subr.mxu0 0.0
    %9644 = vmatpush1.msra.mxu0 0.0
    %9645 = vmatprep.mubr.f32.mxu0 0.0
    %9646 = vmatmul.mubr.f32.gmra.mrb[0].mxu0 %v9577
    %v9647 = vpop.f32.mrb[0].mxu0
    %v9648 = vadd.f32 0.0, %v9647
    %v9649 = vpop.f32.mrb[0].mxu0
    %9650 = vdwg.mxu0
    %9651 = vrot.lane.b32.xlu0 %v8735, 96
    %v9652 = vpop.permute.xlu0 %9651
    %v9654 = vsel %vm3177, %v9573, 0
    %v9656 = vsel %vm8394, %v9652, 0
    %9658 = vmatprep.subr.mxu0 0.0
    %9659 = vmatpush1.msra.mxu0 %v9656
    %9660 = vmatprep.subr.mxu0 0.0
    %9661 = vmatpush1.msra.mxu0 0.0
    %9662 = vmatprep.subr.mxu0 0.0
    %9663 = vmatpush1.msra.mxu0 0.0
    %9664 = vmatprep.subr.mxu0 0.0
    %9665 = vmatpush1.msra.mxu0 0.0
    %9666 = vmatprep.subr.mxu0 0.0
    %9667 = vmatpush1.msra.mxu0 0.0
    %9668 = vmatprep.subr.mxu0 0.0
    %9669 = vmatpush1.msra.mxu0 0.0
    %9670 = vmatprep.subr.mxu0 0.0
    %9671 = vmatpush1.msra.mxu0 0.0
    %9672 = vmatprep.subr.mxu0 0.0
    %9673 = vmatpush1.msra.mxu0 0.0
    %9674 = vmatprep.subr.mxu0 0.0
    %9675 = vmatpush1.msra.mxu0 0.0
    %9676 = vmatprep.subr.mxu0 0.0
    %9677 = vmatpush1.msra.mxu0 0.0
    %9678 = vmatprep.subr.mxu0 0.0
    %9679 = vmatpush1.msra.mxu0 0.0
    %9680 = vmatprep.subr.mxu0 0.0
    %9681 = vmatpush1.msra.mxu0 0.0
    %9682 = vmatprep.subr.mxu0 0.0
    %9683 = vmatpush1.msra.mxu0 0.0
    %9684 = vmatprep.subr.mxu0 0.0
    %9685 = vmatpush1.msra.mxu0 0.0
    %9686 = vmatprep.subr.mxu0 0.0
    %9687 = vmatpush1.msra.mxu0 0.0
    %9688 = vmatprep.subr.mxu0 0.0
    %9689 = vmatpush1.msra.mxu0 0.0
    %9690 = vmatprep.subr.mxu0 0.0
    %9691 = vmatpush1.msra.mxu0 0.0
    %9692 = vmatprep.subr.mxu0 0.0
    %9693 = vmatpush1.msra.mxu0 0.0
    %9694 = vmatprep.subr.mxu0 0.0
    %9695 = vmatpush1.msra.mxu0 0.0
    %9696 = vmatprep.subr.mxu0 0.0
    %9697 = vmatpush1.msra.mxu0 0.0
    %9698 = vmatprep.subr.mxu0 0.0
    %9699 = vmatpush1.msra.mxu0 0.0
    %9700 = vmatprep.subr.mxu0 0.0
    %9701 = vmatpush1.msra.mxu0 0.0
    %9702 = vmatprep.subr.mxu0 0.0
    %9703 = vmatpush1.msra.mxu0 0.0
    %9704 = vmatprep.subr.mxu0 0.0
    %9705 = vmatpush1.msra.mxu0 0.0
    %9706 = vmatprep.subr.mxu0 0.0
    %9707 = vmatpush1.msra.mxu0 0.0
    %9708 = vmatprep.subr.mxu0 0.0
    %9709 = vmatpush1.msra.mxu0 0.0
    %9710 = vmatprep.subr.mxu0 0.0
    %9711 = vmatpush1.msra.mxu0 0.0
    %9712 = vmatprep.subr.mxu0 0.0
    %9713 = vmatpush1.msra.mxu0 0.0
    %9714 = vmatprep.subr.mxu0 0.0
    %9715 = vmatpush1.msra.mxu0 0.0
    %9716 = vmatprep.subr.mxu0 0.0
    %9717 = vmatpush1.msra.mxu0 0.0
    %9718 = vmatprep.subr.mxu0 0.0
    %9719 = vmatpush1.msra.mxu0 0.0
    %9720 = vmatprep.subr.mxu0 0.0
    %9721 = vmatpush1.msra.mxu0 0.0
    %9722 = vmatprep.mubr.f32.mxu0 0.0
    %9723 = vmatmul.mubr.f32.gmra.mrb[0].mxu0 %v9654
    %v9724 = vpop.f32.mrb[0].mxu0
    %v9725 = vadd.f32 0.0, %v9724
    %v9726 = vpop.f32.mrb[0].mxu0
    %9727 = vdwg.mxu0
    %9728 = vrot.lane.b32.xlu0 %v8656, 80
    %v9729 = vpop.permute.xlu0 %9728
    %9730 = vrot.lane.b32.xlu0 %v8658, 80
    %v9731 = vpop.permute.xlu0 %9730
    %v9732 = vsel %vm8736, %v9729, 0
    %v9734 = vsel %vm8736, %v9731, 0
    %9736 = vmatprep.subr.mxu0 0.0
    %9737 = vmatpush1.xpose.msra.mxu0 %v9734
    %9738 = vmatprep.subr.mxu0 0.0
    %9739 = vmatpush1.xpose.msra.mxu0 0.0
    %9740 = vmatprep.subr.mxu0 0.0
    %9741 = vmatpush1.xpose.msra.mxu0 0.0
    %9742 = vmatprep.subr.mxu0 0.0
    %9743 = vmatpush1.xpose.msra.mxu0 0.0
    %9744 = vmatprep.subr.mxu0 0.0
    %9745 = vmatpush1.xpose.msra.mxu0 0.0
    %9746 = vmatprep.subr.mxu0 0.0
    %9747 = vmatpush1.xpose.msra.mxu0 0.0
    %9748 = vmatprep.subr.mxu0 0.0
    %9749 = vmatpush1.xpose.msra.mxu0 0.0
    %9750 = vmatprep.subr.mxu0 0.0
    %9751 = vmatpush1.xpose.msra.mxu0 0.0
    %9752 = vmatprep.subr.mxu0 0.0
    %9753 = vmatpush1.xpose.msra.mxu0 0.0
    %9754 = vmatprep.subr.mxu0 0.0
    %9755 = vmatpush1.xpose.msra.mxu0 0.0
    %9756 = vmatprep.subr.mxu0 0.0
    %9757 = vmatpush1.xpose.msra.mxu0 0.0
    %9758 = vmatprep.subr.mxu0 0.0
    %9759 = vmatpush1.xpose.msra.mxu0 0.0
    %9760 = vmatprep.subr.mxu0 0.0
    %9761 = vmatpush1.xpose.msra.mxu0 0.0
    %9762 = vmatprep.subr.mxu0 0.0
    %9763 = vmatpush1.xpose.msra.mxu0 0.0
    %9764 = vmatprep.subr.mxu0 0.0
    %9765 = vmatpush1.xpose.msra.mxu0 0.0
    %9766 = vmatprep.subr.mxu0 0.0
    %9767 = vmatpush1.xpose.msra.mxu0 0.0
    %9768 = vmatprep.subr.mxu0 0.0
    %9769 = vmatpush1.xpose.msra.mxu0 0.0
    %9770 = vmatprep.subr.mxu0 0.0
    %9771 = vmatpush1.xpose.msra.mxu0 0.0
    %9772 = vmatprep.subr.mxu0 0.0
    %9773 = vmatpush1.xpose.msra.mxu0 0.0
    %9774 = vmatprep.subr.mxu0 0.0
    %9775 = vmatpush1.xpose.msra.mxu0 0.0
    %9776 = vmatprep.subr.mxu0 0.0
    %9777 = vmatpush1.xpose.msra.mxu0 0.0
    %9778 = vmatprep.subr.mxu0 0.0
    %9779 = vmatpush1.xpose.msra.mxu0 0.0
    %9780 = vmatprep.subr.mxu0 0.0
    %9781 = vmatpush1.xpose.msra.mxu0 0.0
    %9782 = vmatprep.subr.mxu0 0.0
    %9783 = vmatpush1.xpose.msra.mxu0 0.0
    %9784 = vmatprep.subr.mxu0 0.0
    %9785 = vmatpush1.xpose.msra.mxu0 0.0
    %9786 = vmatprep.subr.mxu0 0.0
    %9787 = vmatpush1.xpose.msra.mxu0 0.0
    %9788 = vmatprep.subr.mxu0 0.0
    %9789 = vmatpush1.xpose.msra.mxu0 0.0
    %9790 = vmatprep.subr.mxu0 0.0
    %9791 = vmatpush1.xpose.msra.mxu0 0.0
    %9792 = vmatprep.subr.mxu0 0.0
    %9793 = vmatpush1.xpose.msra.mxu0 0.0
    %9794 = vmatprep.subr.mxu0 0.0
    %9795 = vmatpush1.xpose.msra.mxu0 0.0
    %9796 = vmatprep.subr.mxu0 0.0
    %9797 = vmatpush1.xpose.msra.mxu0 0.0
    %9798 = vmatprep.subr.mxu0 0.0
    %9799 = vmatpush1.xpose.msra.mxu0 0.0
    %9800 = vmatprep.mubr.f32.mxu0 0.0
    %9801 = vmatmul.mubr.f32.gmra.mrb[0].mxu0 %v9732
    %v9802 = vpop.f32.mrb[0].mxu0
    %v9803 = vadd.f32 0.0, %v9802
    %v9804 = vpop.f32.mrb[0].mxu0
    %9805 = vdwg.mxu0
    %9806 = vrot.lane.b32.xlu0 %v8731, 80
    %v9807 = vpop.permute.xlu0 %9806
    %9808 = vrot.lane.b32.xlu0 %v8733, 80
    %v9809 = vpop.permute.xlu0 %9808
    %v9810 = vsel %vm8736, %v9807, 0
    %v9812 = vsel %vm8736, %v9809, 0
    %9814 = vmatprep.subr.mxu0 0.0
    %9815 = vmatpush1.xpose.msra.mxu0 %v9812
    %9816 = vmatprep.subr.mxu0 0.0
    %9817 = vmatpush1.xpose.msra.mxu0 0.0
    %9818 = vmatprep.subr.mxu0 0.0
    %9819 = vmatpush1.xpose.msra.mxu0 0.0
    %9820 = vmatprep.subr.mxu0 0.0
    %9821 = vmatpush1.xpose.msra.mxu0 0.0
    %9822 = vmatprep.subr.mxu0 0.0
    %9823 = vmatpush1.xpose.msra.mxu0 0.0
    %9824 = vmatprep.subr.mxu0 0.0
    %9825 = vmatpush1.xpose.msra.mxu0 0.0
    %9826 = vmatprep.subr.mxu0 0.0
    %9827 = vmatpush1.xpose.msra.mxu0 0.0
    %9828 = vmatprep.subr.mxu0 0.0
    %9829 = vmatpush1.xpose.msra.mxu0 0.0
    %9830 = vmatprep.subr.mxu0 0.0
    %9831 = vmatpush1.xpose.msra.mxu0 0.0
    %9832 = vmatprep.subr.mxu0 0.0
    %9833 = vmatpush1.xpose.msra.mxu0 0.0
    %9834 = vmatprep.subr.mxu0 0.0
    %9835 = vmatpush1.xpose.msra.mxu0 0.0
    %9836 = vmatprep.subr.mxu0 0.0
    %9837 = vmatpush1.xpose.msra.mxu0 0.0
    %9838 = vmatprep.subr.mxu0 0.0
    %9839 = vmatpush1.xpose.msra.mxu0 0.0
    %9840 = vmatprep.subr.mxu0 0.0
    %9841 = vmatpush1.xpose.msra.mxu0 0.0
    %9842 = vmatprep.subr.mxu0 0.0
    %9843 = vmatpush1.xpose.msra.mxu0 0.0
    %9844 = vmatprep.subr.mxu0 0.0
    %9845 = vmatpush1.xpose.msra.mxu0 0.0
    %9846 = vmatprep.subr.mxu0 0.0
    %9847 = vmatpush1.xpose.msra.mxu0 0.0
    %9848 = vmatprep.subr.mxu0 0.0
    %9849 = vmatpush1.xpose.msra.mxu0 0.0
    %9850 = vmatprep.subr.mxu0 0.0
    %9851 = vmatpush1.xpose.msra.mxu0 0.0
    %9852 = vmatprep.subr.mxu0 0.0
    %9853 = vmatpush1.xpose.msra.mxu0 0.0
    %9854 = vmatprep.subr.mxu0 0.0
    %9855 = vmatpush1.xpose.msra.mxu0 0.0
    %9856 = vmatprep.subr.mxu0 0.0
    %9857 = vmatpush1.xpose.msra.mxu0 0.0
    %9858 = vmatprep.subr.mxu0 0.0
    %9859 = vmatpush1.xpose.msra.mxu0 0.0
    %9860 = vmatprep.subr.mxu0 0.0
    %9861 = vmatpush1.xpose.msra.mxu0 0.0
    %9862 = vmatprep.subr.mxu0 0.0
    %9863 = vmatpush1.xpose.msra.mxu0 0.0
    %9864 = vmatprep.subr.mxu0 0.0
    %9865 = vmatpush1.xpose.msra.mxu0 0.0
    %9866 = vmatprep.subr.mxu0 0.0
    %9867 = vmatpush1.xpose.msra.mxu0 0.0
    %9868 = vmatprep.subr.mxu0 0.0
    %9869 = vmatpush1.xpose.msra.mxu0 0.0
    %9870 = vmatprep.subr.mxu0 0.0
    %9871 = vmatpush1.xpose.msra.mxu0 0.0
    %9872 = vmatprep.subr.mxu0 0.0
    %9873 = vmatpush1.xpose.msra.mxu0 0.0
    %9874 = vmatprep.subr.mxu0 0.0
    %9875 = vmatpush1.xpose.msra.mxu0 0.0
    %9876 = vmatprep.subr.mxu0 0.0
    %9877 = vmatpush1.xpose.msra.mxu0 0.0
    %9878 = vmatprep.mubr.f32.mxu0 0.0
    %9879 = vmatmul.mubr.f32.gmra.mrb[0].mxu0 %v9810
    %v9880 = vpop.f32.mrb[0].mxu0
    %v9881 = vadd.f32 0.0, %v9880
    %v9882 = vpop.f32.mrb[0].mxu0
    %9883 = vdwg.mxu0
    %v9884 = vmul.f32 %v9803, 0.25
    %v9885 = vmul.f32 %v9881, 0.25
    %v9886 = vsel %vm8887, %v9884, -inf
    %9887 = vmax.xlane.f32.xlu0 %v9886
    %v9888 = vpop.xlane.xlu0 %9887
    %v9889 = vsel %vm8887, %v9885, -inf
    %9890 = vmax.xlane.f32.xlu0 %v9889
    %v9891 = vpop.xlane.xlu0 %9890
    %v9892 = vsub.f32 %v9884, %v9888
    %v9893 = vsub.f32 %v9885, %v9891
    %v9894 = vmul.f32 %v9892, 1.442695
    %v9895 = vpow.pop %v9894
    %v9896 = vmul.f32 %v9893, 1.442695
    %v9897 = vpow.pop %v9896
    %v9898 = vsel %vm8887, %v9895, 0.0
    %9899 = vadd.xlane.f32.xlu0 %v9898
    %v9900 = vpop.xlane.xlu0 %9899
    %v9901 = vsel %vm8887, %v9897, 0.0
    %9902 = vadd.xlane.f32.xlu0 %v9901
    %v9903 = vpop.xlane.xlu0 %9902
    %v9904 = vrcp.pop %v9900
    %v9905 = vmul.f32 %v9895, %v9904
    %v9906 = vrcp.pop %v9903
    %v9907 = vmul.f32 %v9897, %v9906
    %9908 = vrot.lane.b32.xlu0 %v8727, 80
    %v9909 = vpop.permute.xlu0 %9908
    %v9911 = vsel %vm3177, %v9905, 0
    %v9913 = vsel %vm8394, %v9909, 0
    %9915 = vmatprep.subr.mxu0 0.0
    %9916 = vmatpush1.msra.mxu0 %v9913
    %9917 = vmatprep.subr.mxu0 0.0
    %9918 = vmatpush1.msra.mxu0 0.0
    %9919 = vmatprep.subr.mxu0 0.0
    %9920 = vmatpush1.msra.mxu0 0.0
    %9921 = vmatprep.subr.mxu0 0.0
    %9922 = vmatpush1.msra.mxu0 0.0
    %9923 = vmatprep.subr.mxu0 0.0
    %9924 = vmatpush1.msra.mxu0 0.0
    %9925 = vmatprep.subr.mxu0 0.0
    %9926 = vmatpush1.msra.mxu0 0.0
    %9927 = vmatprep.subr.mxu0 0.0
    %9928 = vmatpush1.msra.mxu0 0.0
    %9929 = vmatprep.subr.mxu0 0.0
    %9930 = vmatpush1.msra.mxu0 0.0
    %9931 = vmatprep.subr.mxu0 0.0
    %9932 = vmatpush1.msra.mxu0 0.0
    %9933 = vmatprep.subr.mxu0 0.0
    %9934 = vmatpush1.msra.mxu0 0.0
    %9935 = vmatprep.subr.mxu0 0.0
    %9936 = vmatpush1.msra.mxu0 0.0
    %9937 = vmatprep.subr.mxu0 0.0
    %9938 = vmatpush1.msra.mxu0 0.0
    %9939 = vmatprep.subr.mxu0 0.0
    %9940 = vmatpush1.msra.mxu0 0.0
    %9941 = vmatprep.subr.mxu0 0.0
    %9942 = vmatpush1.msra.mxu0 0.0
    %9943 = vmatprep.subr.mxu0 0.0
    %9944 = vmatpush1.msra.mxu0 0.0
    %9945 = vmatprep.subr.mxu0 0.0
    %9946 = vmatpush1.msra.mxu0 0.0
    %9947 = vmatprep.subr.mxu0 0.0
    %9948 = vmatpush1.msra.mxu0 0.0
    %9949 = vmatprep.subr.mxu0 0.0
    %9950 = vmatpush1.msra.mxu0 0.0
    %9951 = vmatprep.subr.mxu0 0.0
    %9952 = vmatpush1.msra.mxu0 0.0
    %9953 = vmatprep.subr.mxu0 0.0
    %9954 = vmatpush1.msra.mxu0 0.0
    %9955 = vmatprep.subr.mxu0 0.0
    %9956 = vmatpush1.msra.mxu0 0.0
    %9957 = vmatprep.subr.mxu0 0.0
    %9958 = vmatpush1.msra.mxu0 0.0
    %9959 = vmatprep.subr.mxu0 0.0
    %9960 = vmatpush1.msra.mxu0 0.0
    %9961 = vmatprep.subr.mxu0 0.0
    %9962 = vmatpush1.msra.mxu0 0.0
    %9963 = vmatprep.subr.mxu0 0.0
    %9964 = vmatpush1.msra.mxu0 0.0
    %9965 = vmatprep.subr.mxu0 0.0
    %9966 = vmatpush1.msra.mxu0 0.0
    %9967 = vmatprep.subr.mxu0 0.0
    %9968 = vmatpush1.msra.mxu0 0.0
    %9969 = vmatprep.subr.mxu0 0.0
    %9970 = vmatpush1.msra.mxu0 0.0
    %9971 = vmatprep.subr.mxu0 0.0
    %9972 = vmatpush1.msra.mxu0 0.0
    %9973 = vmatprep.subr.mxu0 0.0
    %9974 = vmatpush1.msra.mxu0 0.0
    %9975 = vmatprep.subr.mxu0 0.0
    %9976 = vmatpush1.msra.mxu0 0.0
    %9977 = vmatprep.subr.mxu0 0.0
    %9978 = vmatpush1.msra.mxu0 0.0
    %9979 = vmatprep.mubr.f32.mxu0 0.0
    %9980 = vmatmul.mubr.f32.gmra.mrb[0].mxu0 %v9911
    %v9981 = vpop.f32.mrb[0].mxu0
    %v9982 = vadd.f32 0.0, %v9981
    %v9983 = vpop.f32.mrb[0].mxu0
    %9984 = vdwg.mxu0
    %9985 = vrot.lane.b32.xlu0 %v8735, 80
    %v9986 = vpop.permute.xlu0 %9985
    %v9988 = vsel %vm3177, %v9907, 0
    %v9990 = vsel %vm8394, %v9986, 0
    %9992 = vmatprep.subr.mxu0 0.0
    %9993 = vmatpush1.msra.mxu0 %v9990
    %9994 = vmatprep.subr.mxu0 0.0
    %9995 = vmatpush1.msra.mxu0 0.0
    %9996 = vmatprep.subr.mxu0 0.0
    %9997 = vmatpush1.msra.mxu0 0.0
    %9998 = vmatprep.subr.mxu0 0.0
    %9999 = vmatpush1.msra.mxu0 0.0
    %10000 = vmatprep.subr.mxu0 0.0
    %10001 = vmatpush1.msra.mxu0 0.0
    %10002 = vmatprep.subr.mxu0 0.0
    %10003 = vmatpush1.msra.mxu0 0.0
    %10004 = vmatprep.subr.mxu0 0.0
    %10005 = vmatpush1.msra.mxu0 0.0
    %10006 = vmatprep.subr.mxu0 0.0
    %10007 = vmatpush1.msra.mxu0 0.0
    %10008 = vmatprep.subr.mxu0 0.0
    %10009 = vmatpush1.msra.mxu0 0.0
    %10010 = vmatprep.subr.mxu0 0.0
    %10011 = vmatpush1.msra.mxu0 0.0
    %10012 = vmatprep.subr.mxu0 0.0
    %10013 = vmatpush1.msra.mxu0 0.0
    %10014 = vmatprep.subr.mxu0 0.0
    %10015 = vmatpush1.msra.mxu0 0.0
    %10016 = vmatprep.subr.mxu0 0.0
    %10017 = vmatpush1.msra.mxu0 0.0
    %10018 = vmatprep.subr.mxu0 0.0
    %10019 = vmatpush1.msra.mxu0 0.0
    %10020 = vmatprep.subr.mxu0 0.0
    %10021 = vmatpush1.msra.mxu0 0.0
    %10022 = vmatprep.subr.mxu0 0.0
    %10023 = vmatpush1.msra.mxu0 0.0
    %10024 = vmatprep.subr.mxu0 0.0
    %10025 = vmatpush1.msra.mxu0 0.0
    %10026 = vmatprep.subr.mxu0 0.0
    %10027 = vmatpush1.msra.mxu0 0.0
    %10028 = vmatprep.subr.mxu0 0.0
    %10029 = vmatpush1.msra.mxu0 0.0
    %10030 = vmatprep.subr.mxu0 0.0
    %10031 = vmatpush1.msra.mxu0 0.0
    %10032 = vmatprep.subr.mxu0 0.0
    %10033 = vmatpush1.msra.mxu0 0.0
    %10034 = vmatprep.subr.mxu0 0.0
    %10035 = vmatpush1.msra.mxu0 0.0
    %10036 = vmatprep.subr.mxu0 0.0
    %10037 = vmatpush1.msra.mxu0 0.0
    %10038 = vmatprep.subr.mxu0 0.0
    %10039 = vmatpush1.msra.mxu0 0.0
    %10040 = vmatprep.subr.mxu0 0.0
    %10041 = vmatpush1.msra.mxu0 0.0
    %10042 = vmatprep.subr.mxu0 0.0
    %10043 = vmatpush1.msra.mxu0 0.0
    %10044 = vmatprep.subr.mxu0 0.0
    %10045 = vmatpush1.msra.mxu0 0.0
    %10046 = vmatprep.subr.mxu0 0.0
    %10047 = vmatpush1.msra.mxu0 0.0
    %10048 = vmatprep.subr.mxu0 0.0
    %10049 = vmatpush1.msra.mxu0 0.0
    %10050 = vmatprep.subr.mxu0 0.0
    %10051 = vmatpush1.msra.mxu0 0.0
    %10052 = vmatprep.subr.mxu0 0.0
    %10053 = vmatpush1.msra.mxu0 0.0
    %10054 = vmatprep.subr.mxu0 0.0
    %10055 = vmatpush1.msra.mxu0 0.0
    %10056 = vmatprep.mubr.f32.mxu0 0.0
    %10057 = vmatmul.mubr.f32.gmra.mrb[0].mxu0 %v9988
    %v10058 = vpop.f32.mrb[0].mxu0
    %v10059 = vadd.f32 0.0, %v10058
    %v10060 = vpop.f32.mrb[0].mxu0
    %10061 = vdwg.mxu0
    %10062 = vrot.lane.b32.xlu0 %v8656, 64
    %v10063 = vpop.permute.xlu0 %10062
    %10064 = vrot.lane.b32.xlu0 %v8658, 64
    %v10065 = vpop.permute.xlu0 %10064
    %v10066 = vsel %vm8736, %v10063, 0
    %v10068 = vsel %vm8736, %v10065, 0
    %10070 = vmatprep.subr.mxu0 0.0
    %10071 = vmatpush1.xpose.msra.mxu0 %v10068
    %10072 = vmatprep.subr.mxu0 0.0
    %10073 = vmatpush1.xpose.msra.mxu0 0.0
    %10074 = vmatprep.subr.mxu0 0.0
    %10075 = vmatpush1.xpose.msra.mxu0 0.0
    %10076 = vmatprep.subr.mxu0 0.0
    %10077 = vmatpush1.xpose.msra.mxu0 0.0
    %10078 = vmatprep.subr.mxu0 0.0
    %10079 = vmatpush1.xpose.msra.mxu0 0.0
    %10080 = vmatprep.subr.mxu0 0.0
    %10081 = vmatpush1.xpose.msra.mxu0 0.0
    %10082 = vmatprep.subr.mxu0 0.0
    %10083 = vmatpush1.xpose.msra.mxu0 0.0
    %10084 = vmatprep.subr.mxu0 0.0
    %10085 = vmatpush1.xpose.msra.mxu0 0.0
    %10086 = vmatprep.subr.mxu0 0.0
    %10087 = vmatpush1.xpose.msra.mxu0 0.0
    %10088 = vmatprep.subr.mxu0 0.0
    %10089 = vmatpush1.xpose.msra.mxu0 0.0
    %10090 = vmatprep.subr.mxu0 0.0
    %10091 = vmatpush1.xpose.msra.mxu0 0.0
    %10092 = vmatprep.subr.mxu0 0.0
    %10093 = vmatpush1.xpose.msra.mxu0 0.0
    %10094 = vmatprep.subr.mxu0 0.0
    %10095 = vmatpush1.xpose.msra.mxu0 0.0
    %10096 = vmatprep.subr.mxu0 0.0
    %10097 = vmatpush1.xpose.msra.mxu0 0.0
    %10098 = vmatprep.subr.mxu0 0.0
    %10099 = vmatpush1.xpose.msra.mxu0 0.0
    %10100 = vmatprep.subr.mxu0 0.0
    %10101 = vmatpush1.xpose.msra.mxu0 0.0
    %10102 = vmatprep.subr.mxu0 0.0
    %10103 = vmatpush1.xpose.msra.mxu0 0.0
    %10104 = vmatprep.subr.mxu0 0.0
    %10105 = vmatpush1.xpose.msra.mxu0 0.0
    %10106 = vmatprep.subr.mxu0 0.0
    %10107 = vmatpush1.xpose.msra.mxu0 0.0
    %10108 = vmatprep.subr.mxu0 0.0
    %10109 = vmatpush1.xpose.msra.mxu0 0.0
    %10110 = vmatprep.subr.mxu0 0.0
    %10111 = vmatpush1.xpose.msra.mxu0 0.0
    %10112 = vmatprep.subr.mxu0 0.0
    %10113 = vmatpush1.xpose.msra.mxu0 0.0
    %10114 = vmatprep.subr.mxu0 0.0
    %10115 = vmatpush1.xpose.msra.mxu0 0.0
    %10116 = vmatprep.subr.mxu0 0.0
    %10117 = vmatpush1.xpose.msra.mxu0 0.0
    %10118 = vmatprep.subr.mxu0 0.0
    %10119 = vmatpush1.xpose.msra.mxu0 0.0
    %10120 = vmatprep.subr.mxu0 0.0
    %10121 = vmatpush1.xpose.msra.mxu0 0.0
    %10122 = vmatprep.subr.mxu0 0.0
    %10123 = vmatpush1.xpose.msra.mxu0 0.0
    %10124 = vmatprep.subr.mxu0 0.0
    %10125 = vmatpush1.xpose.msra.mxu0 0.0
    %10126 = vmatprep.subr.mxu0 0.0
    %10127 = vmatpush1.xpose.msra.mxu0 0.0
    %10128 = vmatprep.subr.mxu0 0.0
    %10129 = vmatpush1.xpose.msra.mxu0 0.0
    %10130 = vmatprep.subr.mxu0 0.0
    %10131 = vmatpush1.xpose.msra.mxu0 0.0
    %10132 = vmatprep.subr.mxu0 0.0
    %10133 = vmatpush1.xpose.msra.mxu0 0.0
    %10134 = vmatprep.mubr.f32.mxu0 0.0
    %10135 = vmatmul.mubr.f32.gmra.mrb[0].mxu0 %v10066
    %v10136 = vpop.f32.mrb[0].mxu0
    %v10137 = vadd.f32 0.0, %v10136
    %v10138 = vpop.f32.mrb[0].mxu0
    %10139 = vdwg.mxu0
    %10140 = vrot.lane.b32.xlu0 %v8731, 64
    %v10141 = vpop.permute.xlu0 %10140
    %10142 = vrot.lane.b32.xlu0 %v8733, 64
    %v10143 = vpop.permute.xlu0 %10142
    %v10144 = vsel %vm8736, %v10141, 0
    %v10146 = vsel %vm8736, %v10143, 0
    %10148 = vmatprep.subr.mxu0 0.0
    %10149 = vmatpush1.xpose.msra.mxu0 %v10146
    %10150 = vmatprep.subr.mxu0 0.0
    %10151 = vmatpush1.xpose.msra.mxu0 0.0
    %10152 = vmatprep.subr.mxu0 0.0
    %10153 = vmatpush1.xpose.msra.mxu0 0.0
    %10154 = vmatprep.subr.mxu0 0.0
    %10155 = vmatpush1.xpose.msra.mxu0 0.0
    %10156 = vmatprep.subr.mxu0 0.0
    %10157 = vmatpush1.xpose.msra.mxu0 0.0
    %10158 = vmatprep.subr.mxu0 0.0
    %10159 = vmatpush1.xpose.msra.mxu0 0.0
    %10160 = vmatprep.subr.mxu0 0.0
    %10161 = vmatpush1.xpose.msra.mxu0 0.0
    %10162 = vmatprep.subr.mxu0 0.0
    %10163 = vmatpush1.xpose.msra.mxu0 0.0
    %10164 = vmatprep.subr.mxu0 0.0
    %10165 = vmatpush1.xpose.msra.mxu0 0.0
    %10166 = vmatprep.subr.mxu0 0.0
    %10167 = vmatpush1.xpose.msra.mxu0 0.0
    %10168 = vmatprep.subr.mxu0 0.0
    %10169 = vmatpush1.xpose.msra.mxu0 0.0
    %10170 = vmatprep.subr.mxu0 0.0
    %10171 = vmatpush1.xpose.msra.mxu0 0.0
    %10172 = vmatprep.subr.mxu0 0.0
    %10173 = vmatpush1.xpose.msra.mxu0 0.0
    %10174 = vmatprep.subr.mxu0 0.0
    %10175 = vmatpush1.xpose.msra.mxu0 0.0
    %10176 = vmatprep.subr.mxu0 0.0
    %10177 = vmatpush1.xpose.msra.mxu0 0.0
    %10178 = vmatprep.subr.mxu0 0.0
    %10179 = vmatpush1.xpose.msra.mxu0 0.0
    %10180 = vmatprep.subr.mxu0 0.0
    %10181 = vmatpush1.xpose.msra.mxu0 0.0
    %10182 = vmatprep.subr.mxu0 0.0
    %10183 = vmatpush1.xpose.msra.mxu0 0.0
    %10184 = vmatprep.subr.mxu0 0.0
    %10185 = vmatpush1.xpose.msra.mxu0 0.0
    %10186 = vmatprep.subr.mxu0 0.0
    %10187 = vmatpush1.xpose.msra.mxu0 0.0
    %10188 = vmatprep.subr.mxu0 0.0
    %10189 = vmatpush1.xpose.msra.mxu0 0.0
    %10190 = vmatprep.subr.mxu0 0.0
    %10191 = vmatpush1.xpose.msra.mxu0 0.0
    %10192 = vmatprep.subr.mxu0 0.0
    %10193 = vmatpush1.xpose.msra.mxu0 0.0
    %10194 = vmatprep.subr.mxu0 0.0
    %10195 = vmatpush1.xpose.msra.mxu0 0.0
    %10196 = vmatprep.subr.mxu0 0.0
    %10197 = vmatpush1.xpose.msra.mxu0 0.0
    %10198 = vmatprep.subr.mxu0 0.0
    %10199 = vmatpush1.xpose.msra.mxu0 0.0
    %10200 = vmatprep.subr.mxu0 0.0
    %10201 = vmatpush1.xpose.msra.mxu0 0.0
    %10202 = vmatprep.subr.mxu0 0.0
    %10203 = vmatpush1.xpose.msra.mxu0 0.0
    %10204 = vmatprep.subr.mxu0 0.0
    %10205 = vmatpush1.xpose.msra.mxu0 0.0
    %10206 = vmatprep.subr.mxu0 0.0
    %10207 = vmatpush1.xpose.msra.mxu0 0.0
    %10208 = vmatprep.subr.mxu0 0.0
    %10209 = vmatpush1.xpose.msra.mxu0 0.0
    %10210 = vmatprep.subr.mxu0 0.0
    %10211 = vmatpush1.xpose.msra.mxu0 0.0
    %10212 = vmatprep.mubr.f32.mxu0 0.0
    %10213 = vmatmul.mubr.f32.gmra.mrb[0].mxu0 %v10144
    %v10214 = vpop.f32.mrb[0].mxu0
    %v10215 = vadd.f32 0.0, %v10214
    %v10216 = vpop.f32.mrb[0].mxu0
    %10217 = vdwg.mxu0
    %v10218 = vmul.f32 %v10137, 0.25
    %v10219 = vmul.f32 %v10215, 0.25
    %v10220 = vsel %vm8887, %v10218, -inf
    %10221 = vmax.xlane.f32.xlu0 %v10220
    %v10222 = vpop.xlane.xlu0 %10221
    %v10223 = vsel %vm8887, %v10219, -inf
    %10224 = vmax.xlane.f32.xlu0 %v10223
    %v10225 = vpop.xlane.xlu0 %10224
    %v10226 = vsub.f32 %v10218, %v10222
    %v10227 = vsub.f32 %v10219, %v10225
    %v10228 = vmul.f32 %v10226, 1.442695
    %v10229 = vpow.pop %v10228
    %v10230 = vmul.f32 %v10227, 1.442695
    %v10231 = vpow.pop %v10230
    %v10232 = vsel %vm8887, %v10229, 0.0
    %10233 = vadd.xlane.f32.xlu0 %v10232
    %v10234 = vpop.xlane.xlu0 %10233
    %v10235 = vsel %vm8887, %v10231, 0.0
    %10236 = vadd.xlane.f32.xlu0 %v10235
    %v10237 = vpop.xlane.xlu0 %10236
    %v10238 = vrcp.pop %v10234
    %v10239 = vmul.f32 %v10229, %v10238
    %v10240 = vrcp.pop %v10237
    %v10241 = vmul.f32 %v10231, %v10240
    %10242 = vrot.lane.b32.xlu0 %v8727, 64
    %v10243 = vpop.permute.xlu0 %10242
    %v10245 = vsel %vm3177, %v10239, 0
    %v10247 = vsel %vm8394, %v10243, 0
    %10249 = vmatprep.subr.mxu0 0.0
    %10250 = vmatpush1.msra.mxu0 %v10247
    %10251 = vmatprep.subr.mxu0 0.0
    %10252 = vmatpush1.msra.mxu0 0.0
    %10253 = vmatprep.subr.mxu0 0.0
    %10254 = vmatpush1.msra.mxu0 0.0
    %10255 = vmatprep.subr.mxu0 0.0
    %10256 = vmatpush1.msra.mxu0 0.0
    %10257 = vmatprep.subr.mxu0 0.0
    %10258 = vmatpush1.msra.mxu0 0.0
    %10259 = vmatprep.subr.mxu0 0.0
    %10260 = vmatpush1.msra.mxu0 0.0
    %10261 = vmatprep.subr.mxu0 0.0
    %10262 = vmatpush1.msra.mxu0 0.0
    %10263 = vmatprep.subr.mxu0 0.0
    %10264 = vmatpush1.msra.mxu0 0.0
    %10265 = vmatprep.subr.mxu0 0.0
    %10266 = vmatpush1.msra.mxu0 0.0
    %10267 = vmatprep.subr.mxu0 0.0
    %10268 = vmatpush1.msra.mxu0 0.0
    %10269 = vmatprep.subr.mxu0 0.0
    %10270 = vmatpush1.msra.mxu0 0.0
    %10271 = vmatprep.subr.mxu0 0.0
    %10272 = vmatpush1.msra.mxu0 0.0
    %10273 = vmatprep.subr.mxu0 0.0
    %10274 = vmatpush1.msra.mxu0 0.0
    %10275 = vmatprep.subr.mxu0 0.0
    %10276 = vmatpush1.msra.mxu0 0.0
    %10277 = vmatprep.subr.mxu0 0.0
    %10278 = vmatpush1.msra.mxu0 0.0
    %10279 = vmatprep.subr.mxu0 0.0
    %10280 = vmatpush1.msra.mxu0 0.0
    %10281 = vmatprep.subr.mxu0 0.0
    %10282 = vmatpush1.msra.mxu0 0.0
    %10283 = vmatprep.subr.mxu0 0.0
    %10284 = vmatpush1.msra.mxu0 0.0
    %10285 = vmatprep.subr.mxu0 0.0
    %10286 = vmatpush1.msra.mxu0 0.0
    %10287 = vmatprep.subr.mxu0 0.0
    %10288 = vmatpush1.msra.mxu0 0.0
    %10289 = vmatprep.subr.mxu0 0.0
    %10290 = vmatpush1.msra.mxu0 0.0
    %10291 = vmatprep.subr.mxu0 0.0
    %10292 = vmatpush1.msra.mxu0 0.0
    %10293 = vmatprep.subr.mxu0 0.0
    %10294 = vmatpush1.msra.mxu0 0.0
    %10295 = vmatprep.subr.mxu0 0.0
    %10296 = vmatpush1.msra.mxu0 0.0
    %10297 = vmatprep.subr.mxu0 0.0
    %10298 = vmatpush1.msra.mxu0 0.0
    %10299 = vmatprep.subr.mxu0 0.0
    %10300 = vmatpush1.msra.mxu0 0.0
    %10301 = vmatprep.subr.mxu0 0.0
    %10302 = vmatpush1.msra.mxu0 0.0
    %10303 = vmatprep.subr.mxu0 0.0
    %10304 = vmatpush1.msra.mxu0 0.0
    %10305 = vmatprep.subr.mxu0 0.0
    %10306 = vmatpush1.msra.mxu0 0.0
    %10307 = vmatprep.subr.mxu0 0.0
    %10308 = vmatpush1.msra.mxu0 0.0
    %10309 = vmatprep.subr.mxu0 0.0
    %10310 = vmatpush1.msra.mxu0 0.0
    %10311 = vmatprep.subr.mxu0 0.0
    %10312 = vmatpush1.msra.mxu0 0.0
    %10313 = vmatprep.mubr.f32.mxu0 0.0
    %10314 = vmatmul.mubr.f32.gmra.mrb[0].mxu0 %v10245
    %v10315 = vpop.f32.mrb[0].mxu0
    %v10316 = vadd.f32 0.0, %v10315
    %v10317 = vpop.f32.mrb[0].mxu0
    %10318 = vdwg.mxu0
    %10319 = vrot.lane.b32.xlu0 %v8735, 64
    %v10320 = vpop.permute.xlu0 %10319
    %v10322 = vsel %vm3177, %v10241, 0
    %v10324 = vsel %vm8394, %v10320, 0
    %10326 = vmatprep.subr.mxu0 0.0
    %10327 = vmatpush1.msra.mxu0 %v10324
    %10328 = vmatprep.subr.mxu0 0.0
    %10329 = vmatpush1.msra.mxu0 0.0
    %10330 = vmatprep.subr.mxu0 0.0
    %10331 = vmatpush1.msra.mxu0 0.0
    %10332 = vmatprep.subr.mxu0 0.0
    %10333 = vmatpush1.msra.mxu0 0.0
    %10334 = vmatprep.subr.mxu0 0.0
    %10335 = vmatpush1.msra.mxu0 0.0
    %10336 = vmatprep.subr.mxu0 0.0
    %10337 = vmatpush1.msra.mxu0 0.0
    %10338 = vmatprep.subr.mxu0 0.0
    %10339 = vmatpush1.msra.mxu0 0.0
    %10340 = vmatprep.subr.mxu0 0.0
    %10341 = vmatpush1.msra.mxu0 0.0
    %10342 = vmatprep.subr.mxu0 0.0
    %10343 = vmatpush1.msra.mxu0 0.0
    %10344 = vmatprep.subr.mxu0 0.0
    %10345 = vmatpush1.msra.mxu0 0.0
    %10346 = vmatprep.subr.mxu0 0.0
    %10347 = vmatpush1.msra.mxu0 0.0
    %10348 = vmatprep.subr.mxu0 0.0
    %10349 = vmatpush1.msra.mxu0 0.0
    %10350 = vmatprep.subr.mxu0 0.0
    %10351 = vmatpush1.msra.mxu0 0.0
    %10352 = vmatprep.subr.mxu0 0.0
    %10353 = vmatpush1.msra.mxu0 0.0
    %10354 = vmatprep.subr.mxu0 0.0
    %10355 = vmatpush1.msra.mxu0 0.0
    %10356 = vmatprep.subr.mxu0 0.0
    %10357 = vmatpush1.msra.mxu0 0.0
    %10358 = vmatprep.subr.mxu0 0.0
    %10359 = vmatpush1.msra.mxu0 0.0
    %10360 = vmatprep.subr.mxu0 0.0
    %10361 = vmatpush1.msra.mxu0 0.0
    %10362 = vmatprep.subr.mxu0 0.0
    %10363 = vmatpush1.msra.mxu0 0.0
    %10364 = vmatprep.subr.mxu0 0.0
    %10365 = vmatpush1.msra.mxu0 0.0
    %10366 = vmatprep.subr.mxu0 0.0
    %10367 = vmatpush1.msra.mxu0 0.0
    %10368 = vmatprep.subr.mxu0 0.0
    %10369 = vmatpush1.msra.mxu0 0.0
    %10370 = vmatprep.subr.mxu0 0.0
    %10371 = vmatpush1.msra.mxu0 0.0
    %10372 = vmatprep.subr.mxu0 0.0
    %10373 = vmatpush1.msra.mxu0 0.0
    %10374 = vmatprep.subr.mxu0 0.0
    %10375 = vmatpush1.msra.mxu0 0.0
    %10376 = vmatprep.subr.mxu0 0.0
    %10377 = vmatpush1.msra.mxu0 0.0
    %10378 = vmatprep.subr.mxu0 0.0
    %10379 = vmatpush1.msra.mxu0 0.0
    %10380 = vmatprep.subr.mxu0 0.0
    %10381 = vmatpush1.msra.mxu0 0.0
    %10382 = vmatprep.subr.mxu0 0.0
    %10383 = vmatpush1.msra.mxu0 0.0
    %10384 = vmatprep.subr.mxu0 0.0
    %10385 = vmatpush1.msra.mxu0 0.0
    %10386 = vmatprep.subr.mxu0 0.0
    %10387 = vmatpush1.msra.mxu0 0.0
    %10388 = vmatprep.subr.mxu0 0.0
    %10389 = vmatpush1.msra.mxu0 0.0
    %10390 = vmatprep.mubr.f32.mxu0 0.0
    %10391 = vmatmul.mubr.f32.gmra.mrb[0].mxu0 %v10322
    %v10392 = vpop.f32.mrb[0].mxu0
    %v10393 = vadd.f32 0.0, %v10392
    %v10394 = vpop.f32.mrb[0].mxu0
    %10395 = vdwg.mxu0
    %10396 = vrot.lane.b32.xlu0 %v8656, 48
    %v10397 = vpop.permute.xlu0 %10396
    %10398 = vrot.lane.b32.xlu0 %v8658, 48
    %v10399 = vpop.permute.xlu0 %10398
    %v10400 = vsel %vm8736, %v10397, 0
    %v10402 = vsel %vm8736, %v10399, 0
    %10404 = vmatprep.subr.mxu0 0.0
    %10405 = vmatpush1.xpose.msra.mxu0 %v10402
    %10406 = vmatprep.subr.mxu0 0.0
    %10407 = vmatpush1.xpose.msra.mxu0 0.0
    %10408 = vmatprep.subr.mxu0 0.0
    %10409 = vmatpush1.xpose.msra.mxu0 0.0
    %10410 = vmatprep.subr.mxu0 0.0
    %10411 = vmatpush1.xpose.msra.mxu0 0.0
    %10412 = vmatprep.subr.mxu0 0.0
    %10413 = vmatpush1.xpose.msra.mxu0 0.0
    %10414 = vmatprep.subr.mxu0 0.0
    %10415 = vmatpush1.xpose.msra.mxu0 0.0
    %10416 = vmatprep.subr.mxu0 0.0
    %10417 = vmatpush1.xpose.msra.mxu0 0.0
    %10418 = vmatprep.subr.mxu0 0.0
    %10419 = vmatpush1.xpose.msra.mxu0 0.0
    %10420 = vmatprep.subr.mxu0 0.0
    %10421 = vmatpush1.xpose.msra.mxu0 0.0
    %10422 = vmatprep.subr.mxu0 0.0
    %10423 = vmatpush1.xpose.msra.mxu0 0.0
    %10424 = vmatprep.subr.mxu0 0.0
    %10425 = vmatpush1.xpose.msra.mxu0 0.0
    %10426 = vmatprep.subr.mxu0 0.0
    %10427 = vmatpush1.xpose.msra.mxu0 0.0
    %10428 = vmatprep.subr.mxu0 0.0
    %10429 = vmatpush1.xpose.msra.mxu0 0.0
    %10430 = vmatprep.subr.mxu0 0.0
    %10431 = vmatpush1.xpose.msra.mxu0 0.0
    %10432 = vmatprep.subr.mxu0 0.0
    %10433 = vmatpush1.xpose.msra.mxu0 0.0
    %10434 = vmatprep.subr.mxu0 0.0
    %10435 = vmatpush1.xpose.msra.mxu0 0.0
    %10436 = vmatprep.subr.mxu0 0.0
    %10437 = vmatpush1.xpose.msra.mxu0 0.0
    %10438 = vmatprep.subr.mxu0 0.0
    %10439 = vmatpush1.xpose.msra.mxu0 0.0
    %10440 = vmatprep.subr.mxu0 0.0
    %10441 = vmatpush1.xpose.msra.mxu0 0.0
    %10442 = vmatprep.subr.mxu0 0.0
    %10443 = vmatpush1.xpose.msra.mxu0 0.0
    %10444 = vmatprep.subr.mxu0 0.0
    %10445 = vmatpush1.xpose.msra.mxu0 0.0
    %10446 = vmatprep.subr.mxu0 0.0
    %10447 = vmatpush1.xpose.msra.mxu0 0.0
    %10448 = vmatprep.subr.mxu0 0.0
    %10449 = vmatpush1.xpose.msra.mxu0 0.0
    %10450 = vmatprep.subr.mxu0 0.0
    %10451 = vmatpush1.xpose.msra.mxu0 0.0
    %10452 = vmatprep.subr.mxu0 0.0
    %10453 = vmatpush1.xpose.msra.mxu0 0.0
    %10454 = vmatprep.subr.mxu0 0.0
    %10455 = vmatpush1.xpose.msra.mxu0 0.0
    %10456 = vmatprep.subr.mxu0 0.0
    %10457 = vmatpush1.xpose.msra.mxu0 0.0
    %10458 = vmatprep.subr.mxu0 0.0
    %10459 = vmatpush1.xpose.msra.mxu0 0.0
    %10460 = vmatprep.subr.mxu0 0.0
    %10461 = vmatpush1.xpose.msra.mxu0 0.0
    %10462 = vmatprep.subr.mxu0 0.0
    %10463 = vmatpush1.xpose.msra.mxu0 0.0
    %10464 = vmatprep.subr.mxu0 0.0
    %10465 = vmatpush1.xpose.msra.mxu0 0.0
    %10466 = vmatprep.subr.mxu0 0.0
    %10467 = vmatpush1.xpose.msra.mxu0 0.0
    %10468 = vmatprep.mubr.f32.mxu0 0.0
    %10469 = vmatmul.mubr.f32.gmra.mrb[0].mxu0 %v10400
    %v10470 = vpop.f32.mrb[0].mxu0
    %v10471 = vadd.f32 0.0, %v10470
    %v10472 = vpop.f32.mrb[0].mxu0
    %10473 = vdwg.mxu0
    %10474 = vrot.lane.b32.xlu0 %v8731, 48
    %v10475 = vpop.permute.xlu0 %10474
    %10476 = vrot.lane.b32.xlu0 %v8733, 48
    %v10477 = vpop.permute.xlu0 %10476
    %v10478 = vsel %vm8736, %v10475, 0
    %v10480 = vsel %vm8736, %v10477, 0
    %10482 = vmatprep.subr.mxu0 0.0
    %10483 = vmatpush1.xpose.msra.mxu0 %v10480
    %10484 = vmatprep.subr.mxu0 0.0
    %10485 = vmatpush1.xpose.msra.mxu0 0.0
    %10486 = vmatprep.subr.mxu0 0.0
    %10487 = vmatpush1.xpose.msra.mxu0 0.0
    %10488 = vmatprep.subr.mxu0 0.0
    %10489 = vmatpush1.xpose.msra.mxu0 0.0
    %10490 = vmatprep.subr.mxu0 0.0
    %10491 = vmatpush1.xpose.msra.mxu0 0.0
    %10492 = vmatprep.subr.mxu0 0.0
    %10493 = vmatpush1.xpose.msra.mxu0 0.0
    %10494 = vmatprep.subr.mxu0 0.0
    %10495 = vmatpush1.xpose.msra.mxu0 0.0
    %10496 = vmatprep.subr.mxu0 0.0
    %10497 = vmatpush1.xpose.msra.mxu0 0.0
    %10498 = vmatprep.subr.mxu0 0.0
    %10499 = vmatpush1.xpose.msra.mxu0 0.0
    %10500 = vmatprep.subr.mxu0 0.0
    %10501 = vmatpush1.xpose.msra.mxu0 0.0
    %10502 = vmatprep.subr.mxu0 0.0
    %10503 = vmatpush1.xpose.msra.mxu0 0.0
    %10504 = vmatprep.subr.mxu0 0.0
    %10505 = vmatpush1.xpose.msra.mxu0 0.0
    %10506 = vmatprep.subr.mxu0 0.0
    %10507 = vmatpush1.xpose.msra.mxu0 0.0
    %10508 = vmatprep.subr.mxu0 0.0
    %10509 = vmatpush1.xpose.msra.mxu0 0.0
    %10510 = vmatprep.subr.mxu0 0.0
    %10511 = vmatpush1.xpose.msra.mxu0 0.0
    %10512 = vmatprep.subr.mxu0 0.0
    %10513 = vmatpush1.xpose.msra.mxu0 0.0
    %10514 = vmatprep.subr.mxu0 0.0
    %10515 = vmatpush1.xpose.msra.mxu0 0.0
    %10516 = vmatprep.subr.mxu0 0.0
    %10517 = vmatpush1.xpose.msra.mxu0 0.0
    %10518 = vmatprep.subr.mxu0 0.0
    %10519 = vmatpush1.xpose.msra.mxu0 0.0
    %10520 = vmatprep.subr.mxu0 0.0
    %10521 = vmatpush1.xpose.msra.mxu0 0.0
    %10522 = vmatprep.subr.mxu0 0.0
    %10523 = vmatpush1.xpose.msra.mxu0 0.0
    %10524 = vmatprep.subr.mxu0 0.0
    %10525 = vmatpush1.xpose.msra.mxu0 0.0
    %10526 = vmatprep.subr.mxu0 0.0
    %10527 = vmatpush1.xpose.msra.mxu0 0.0
    %10528 = vmatprep.subr.mxu0 0.0
    %10529 = vmatpush1.xpose.msra.mxu0 0.0
    %10530 = vmatprep.subr.mxu0 0.0
    %10531 = vmatpush1.xpose.msra.mxu0 0.0
    %10532 = vmatprep.subr.mxu0 0.0
    %10533 = vmatpush1.xpose.msra.mxu0 0.0
    %10534 = vmatprep.subr.mxu0 0.0
    %10535 = vmatpush1.xpose.msra.mxu0 0.0
    %10536 = vmatprep.subr.mxu0 0.0
    %10537 = vmatpush1.xpose.msra.mxu0 0.0
    %10538 = vmatprep.subr.mxu0 0.0
    %10539 = vmatpush1.xpose.msra.mxu0 0.0
    %10540 = vmatprep.subr.mxu0 0.0
    %10541 = vmatpush1.xpose.msra.mxu0 0.0
    %10542 = vmatprep.subr.mxu0 0.0
    %10543 = vmatpush1.xpose.msra.mxu0 0.0
    %10544 = vmatprep.subr.mxu0 0.0
    %10545 = vmatpush1.xpose.msra.mxu0 0.0
    %10546 = vmatprep.mubr.f32.mxu0 0.0
    %10547 = vmatmul.mubr.f32.gmra.mrb[0].mxu0 %v10478
    %v10548 = vpop.f32.mrb[0].mxu0
    %v10549 = vadd.f32 0.0, %v10548
    %v10550 = vpop.f32.mrb[0].mxu0
    %10551 = vdwg.mxu0
    %v10552 = vmul.f32 %v10471, 0.25
    %v10553 = vmul.f32 %v10549, 0.25
    %v10554 = vsel %vm8887, %v10552, -inf
    %10555 = vmax.xlane.f32.xlu0 %v10554
    %v10556 = vpop.xlane.xlu0 %10555
    %v10557 = vsel %vm8887, %v10553, -inf
    %10558 = vmax.xlane.f32.xlu0 %v10557
    %v10559 = vpop.xlane.xlu0 %10558
    %v10560 = vsub.f32 %v10552, %v10556
    %v10561 = vsub.f32 %v10553, %v10559
    %v10562 = vmul.f32 %v10560, 1.442695
    %v10563 = vpow.pop %v10562
    %v10564 = vmul.f32 %v10561, 1.442695
    %v10565 = vpow.pop %v10564
    %v10566 = vsel %vm8887, %v10563, 0.0
    %10567 = vadd.xlane.f32.xlu0 %v10566
    %v10568 = vpop.xlane.xlu0 %10567
    %v10569 = vsel %vm8887, %v10565, 0.0
    %10570 = vadd.xlane.f32.xlu0 %v10569
    %v10571 = vpop.xlane.xlu0 %10570
    %v10572 = vrcp.pop %v10568
    %v10573 = vmul.f32 %v10563, %v10572
    %v10574 = vrcp.pop %v10571
    %v10575 = vmul.f32 %v10565, %v10574
    %10576 = vrot.lane.b32.xlu0 %v8727, 48
    %v10577 = vpop.permute.xlu0 %10576
    %v10579 = vsel %vm3177, %v10573, 0
    %v10581 = vsel %vm8394, %v10577, 0
    %10583 = vmatprep.subr.mxu0 0.0
    %10584 = vmatpush1.msra.mxu0 %v10581
    %10585 = vmatprep.subr.mxu0 0.0
    %10586 = vmatpush1.msra.mxu0 0.0
    %10587 = vmatprep.subr.mxu0 0.0
    %10588 = vmatpush1.msra.mxu0 0.0
    %10589 = vmatprep.subr.mxu0 0.0
    %10590 = vmatpush1.msra.mxu0 0.0
    %10591 = vmatprep.subr.mxu0 0.0
    %10592 = vmatpush1.msra.mxu0 0.0
    %10593 = vmatprep.subr.mxu0 0.0
    %10594 = vmatpush1.msra.mxu0 0.0
    %10595 = vmatprep.subr.mxu0 0.0
    %10596 = vmatpush1.msra.mxu0 0.0
    %10597 = vmatprep.subr.mxu0 0.0
    %10598 = vmatpush1.msra.mxu0 0.0
    %10599 = vmatprep.subr.mxu0 0.0
    %10600 = vmatpush1.msra.mxu0 0.0
    %10601 = vmatprep.subr.mxu0 0.0
    %10602 = vmatpush1.msra.mxu0 0.0
    %10603 = vmatprep.subr.mxu0 0.0
    %10604 = vmatpush1.msra.mxu0 0.0
    %10605 = vmatprep.subr.mxu0 0.0
    %10606 = vmatpush1.msra.mxu0 0.0
    %10607 = vmatprep.subr.mxu0 0.0
    %10608 = vmatpush1.msra.mxu0 0.0
    %10609 = vmatprep.subr.mxu0 0.0
    %10610 = vmatpush1.msra.mxu0 0.0
    %10611 = vmatprep.subr.mxu0 0.0
    %10612 = vmatpush1.msra.mxu0 0.0
    %10613 = vmatprep.subr.mxu0 0.0
    %10614 = vmatpush1.msra.mxu0 0.0
    %10615 = vmatprep.subr.mxu0 0.0
    %10616 = vmatpush1.msra.mxu0 0.0
    %10617 = vmatprep.subr.mxu0 0.0
    %10618 = vmatpush1.msra.mxu0 0.0
    %10619 = vmatprep.subr.mxu0 0.0
    %10620 = vmatpush1.msra.mxu0 0.0
    %10621 = vmatprep.subr.mxu0 0.0
    %10622 = vmatpush1.msra.mxu0 0.0
    %10623 = vmatprep.subr.mxu0 0.0
    %10624 = vmatpush1.msra.mxu0 0.0
    %10625 = vmatprep.subr.mxu0 0.0
    %10626 = vmatpush1.msra.mxu0 0.0
    %10627 = vmatprep.subr.mxu0 0.0
    %10628 = vmatpush1.msra.mxu0 0.0
    %10629 = vmatprep.subr.mxu0 0.0
    %10630 = vmatpush1.msra.mxu0 0.0
    %10631 = vmatprep.subr.mxu0 0.0
    %10632 = vmatpush1.msra.mxu0 0.0
    %10633 = vmatprep.subr.mxu0 0.0
    %10634 = vmatpush1.msra.mxu0 0.0
    %10635 = vmatprep.subr.mxu0 0.0
    %10636 = vmatpush1.msra.mxu0 0.0
    %10637 = vmatprep.subr.mxu0 0.0
    %10638 = vmatpush1.msra.mxu0 0.0
    %10639 = vmatprep.subr.mxu0 0.0
    %10640 = vmatpush1.msra.mxu0 0.0
    %10641 = vmatprep.subr.mxu0 0.0
    %10642 = vmatpush1.msra.mxu0 0.0
    %10643 = vmatprep.subr.mxu0 0.0
    %10644 = vmatpush1.msra.mxu0 0.0
    %10645 = vmatprep.subr.mxu0 0.0
    %10646 = vmatpush1.msra.mxu0 0.0
    %10647 = vmatprep.mubr.f32.mxu0 0.0
    %10648 = vmatmul.mubr.f32.gmra.mrb[0].mxu0 %v10579
    %v10649 = vpop.f32.mrb[0].mxu0
    %v10650 = vadd.f32 0.0, %v10649
    %v10651 = vpop.f32.mrb[0].mxu0
    %10652 = vdwg.mxu0
    %10653 = vrot.lane.b32.xlu0 %v8735, 48
    %v10654 = vpop.permute.xlu0 %10653
    %v10656 = vsel %vm3177, %v10575, 0
    %v10658 = vsel %vm8394, %v10654, 0
    %10660 = vmatprep.subr.mxu0 0.0
    %10661 = vmatpush1.msra.mxu0 %v10658
    %10662 = vmatprep.subr.mxu0 0.0
    %10663 = vmatpush1.msra.mxu0 0.0
    %10664 = vmatprep.subr.mxu0 0.0
    %10665 = vmatpush1.msra.mxu0 0.0
    %10666 = vmatprep.subr.mxu0 0.0
    %10667 = vmatpush1.msra.mxu0 0.0
    %10668 = vmatprep.subr.mxu0 0.0
    %10669 = vmatpush1.msra.mxu0 0.0
    %10670 = vmatprep.subr.mxu0 0.0
    %10671 = vmatpush1.msra.mxu0 0.0
    %10672 = vmatprep.subr.mxu0 0.0
    %10673 = vmatpush1.msra.mxu0 0.0
    %10674 = vmatprep.subr.mxu0 0.0
    %10675 = vmatpush1.msra.mxu0 0.0
    %10676 = vmatprep.subr.mxu0 0.0
    %10677 = vmatpush1.msra.mxu0 0.0
    %10678 = vmatprep.subr.mxu0 0.0
    %10679 = vmatpush1.msra.mxu0 0.0
    %10680 = vmatprep.subr.mxu0 0.0
    %10681 = vmatpush1.msra.mxu0 0.0
    %10682 = vmatprep.subr.mxu0 0.0
    %10683 = vmatpush1.msra.mxu0 0.0
    %10684 = vmatprep.subr.mxu0 0.0
    %10685 = vmatpush1.msra.mxu0 0.0
    %10686 = vmatprep.subr.mxu0 0.0
    %10687 = vmatpush1.msra.mxu0 0.0
    %10688 = vmatprep.subr.mxu0 0.0
    %10689 = vmatpush1.msra.mxu0 0.0
    %10690 = vmatprep.subr.mxu0 0.0
    %10691 = vmatpush1.msra.mxu0 0.0
    %10692 = vmatprep.subr.mxu0 0.0
    %10693 = vmatpush1.msra.mxu0 0.0
    %10694 = vmatprep.subr.mxu0 0.0
    %10695 = vmatpush1.msra.mxu0 0.0
    %10696 = vmatprep.subr.mxu0 0.0
    %10697 = vmatpush1.msra.mxu0 0.0
    %10698 = vmatprep.subr.mxu0 0.0
    %10699 = vmatpush1.msra.mxu0 0.0
    %10700 = vmatprep.subr.mxu0 0.0
    %10701 = vmatpush1.msra.mxu0 0.0
    %10702 = vmatprep.subr.mxu0 0.0
    %10703 = vmatpush1.msra.mxu0 0.0
    %10704 = vmatprep.subr.mxu0 0.0
    %10705 = vmatpush1.msra.mxu0 0.0
    %10706 = vmatprep.subr.mxu0 0.0
    %10707 = vmatpush1.msra.mxu0 0.0
    %10708 = vmatprep.subr.mxu0 0.0
    %10709 = vmatpush1.msra.mxu0 0.0
    %10710 = vmatprep.subr.mxu0 0.0
    %10711 = vmatpush1.msra.mxu0 0.0
    %10712 = vmatprep.subr.mxu0 0.0
    %10713 = vmatpush1.msra.mxu0 0.0
    %10714 = vmatprep.subr.mxu0 0.0
    %10715 = vmatpush1.msra.mxu0 0.0
    %10716 = vmatprep.subr.mxu0 0.0
    %10717 = vmatpush1.msra.mxu0 0.0
    %10718 = vmatprep.subr.mxu0 0.0
    %10719 = vmatpush1.msra.mxu0 0.0
    %10720 = vmatprep.subr.mxu0 0.0
    %10721 = vmatpush1.msra.mxu0 0.0
    %10722 = vmatprep.subr.mxu0 0.0
    %10723 = vmatpush1.msra.mxu0 0.0
    %10724 = vmatprep.mubr.f32.mxu0 0.0
    %10725 = vmatmul.mubr.f32.gmra.mrb[0].mxu0 %v10656
    %v10726 = vpop.f32.mrb[0].mxu0
    %v10727 = vadd.f32 0.0, %v10726
    %v10728 = vpop.f32.mrb[0].mxu0
    %10729 = vdwg.mxu0
    %10730 = vrot.lane.b32.xlu0 %v8656, 32
    %v10731 = vpop.permute.xlu0 %10730
    %10732 = vrot.lane.b32.xlu0 %v8658, 32
    %v10733 = vpop.permute.xlu0 %10732
    %v10734 = vsel %vm8736, %v10731, 0
    %v10736 = vsel %vm8736, %v10733, 0
    %10738 = vmatprep.subr.mxu0 0.0
    %10739 = vmatpush1.xpose.msra.mxu0 %v10736
    %10740 = vmatprep.subr.mxu0 0.0
    %10741 = vmatpush1.xpose.msra.mxu0 0.0
    %10742 = vmatprep.subr.mxu0 0.0
    %10743 = vmatpush1.xpose.msra.mxu0 0.0
    %10744 = vmatprep.subr.mxu0 0.0
    %10745 = vmatpush1.xpose.msra.mxu0 0.0
    %10746 = vmatprep.subr.mxu0 0.0
    %10747 = vmatpush1.xpose.msra.mxu0 0.0
    %10748 = vmatprep.subr.mxu0 0.0
    %10749 = vmatpush1.xpose.msra.mxu0 0.0
    %10750 = vmatprep.subr.mxu0 0.0
    %10751 = vmatpush1.xpose.msra.mxu0 0.0
    %10752 = vmatprep.subr.mxu0 0.0
    %10753 = vmatpush1.xpose.msra.mxu0 0.0
    %10754 = vmatprep.subr.mxu0 0.0
    %10755 = vmatpush1.xpose.msra.mxu0 0.0
    %10756 = vmatprep.subr.mxu0 0.0
    %10757 = vmatpush1.xpose.msra.mxu0 0.0
    %10758 = vmatprep.subr.mxu0 0.0
    %10759 = vmatpush1.xpose.msra.mxu0 0.0
    %10760 = vmatprep.subr.mxu0 0.0
    %10761 = vmatpush1.xpose.msra.mxu0 0.0
    %10762 = vmatprep.subr.mxu0 0.0
    %10763 = vmatpush1.xpose.msra.mxu0 0.0
    %10764 = vmatprep.subr.mxu0 0.0
    %10765 = vmatpush1.xpose.msra.mxu0 0.0
    %10766 = vmatprep.subr.mxu0 0.0
    %10767 = vmatpush1.xpose.msra.mxu0 0.0
    %10768 = vmatprep.subr.mxu0 0.0
    %10769 = vmatpush1.xpose.msra.mxu0 0.0
    %10770 = vmatprep.subr.mxu0 0.0
    %10771 = vmatpush1.xpose.msra.mxu0 0.0
    %10772 = vmatprep.subr.mxu0 0.0
    %10773 = vmatpush1.xpose.msra.mxu0 0.0
    %10774 = vmatprep.subr.mxu0 0.0
    %10775 = vmatpush1.xpose.msra.mxu0 0.0
    %10776 = vmatprep.subr.mxu0 0.0
    %10777 = vmatpush1.xpose.msra.mxu0 0.0
    %10778 = vmatprep.subr.mxu0 0.0
    %10779 = vmatpush1.xpose.msra.mxu0 0.0
    %10780 = vmatprep.subr.mxu0 0.0
    %10781 = vmatpush1.xpose.msra.mxu0 0.0
    %10782 = vmatprep.subr.mxu0 0.0
    %10783 = vmatpush1.xpose.msra.mxu0 0.0
    %10784 = vmatprep.subr.mxu0 0.0
    %10785 = vmatpush1.xpose.msra.mxu0 0.0
    %10786 = vmatprep.subr.mxu0 0.0
    %10787 = vmatpush1.xpose.msra.mxu0 0.0
    %10788 = vmatprep.subr.mxu0 0.0
    %10789 = vmatpush1.xpose.msra.mxu0 0.0
    %10790 = vmatprep.subr.mxu0 0.0
    %10791 = vmatpush1.xpose.msra.mxu0 0.0
    %10792 = vmatprep.subr.mxu0 0.0
    %10793 = vmatpush1.xpose.msra.mxu0 0.0
    %10794 = vmatprep.subr.mxu0 0.0
    %10795 = vmatpush1.xpose.msra.mxu0 0.0
    %10796 = vmatprep.subr.mxu0 0.0
    %10797 = vmatpush1.xpose.msra.mxu0 0.0
    %10798 = vmatprep.subr.mxu0 0.0
    %10799 = vmatpush1.xpose.msra.mxu0 0.0
    %10800 = vmatprep.subr.mxu0 0.0
    %10801 = vmatpush1.xpose.msra.mxu0 0.0
    %10802 = vmatprep.mubr.f32.mxu0 0.0
    %10803 = vmatmul.mubr.f32.gmra.mrb[0].mxu0 %v10734
    %v10804 = vpop.f32.mrb[0].mxu0
    %v10805 = vadd.f32 0.0, %v10804
    %v10806 = vpop.f32.mrb[0].mxu0
    %10807 = vdwg.mxu0
    %10808 = vrot.lane.b32.xlu0 %v8731, 32
    %v10809 = vpop.permute.xlu0 %10808
    %10810 = vrot.lane.b32.xlu0 %v8733, 32
    %v10811 = vpop.permute.xlu0 %10810
    %v10812 = vsel %vm8736, %v10809, 0
    %v10814 = vsel %vm8736, %v10811, 0
    %10816 = vmatprep.subr.mxu0 0.0
    %10817 = vmatpush1.xpose.msra.mxu0 %v10814
    %10818 = vmatprep.subr.mxu0 0.0
    %10819 = vmatpush1.xpose.msra.mxu0 0.0
    %10820 = vmatprep.subr.mxu0 0.0
    %10821 = vmatpush1.xpose.msra.mxu0 0.0
    %10822 = vmatprep.subr.mxu0 0.0
    %10823 = vmatpush1.xpose.msra.mxu0 0.0
    %10824 = vmatprep.subr.mxu0 0.0
    %10825 = vmatpush1.xpose.msra.mxu0 0.0
    %10826 = vmatprep.subr.mxu0 0.0
    %10827 = vmatpush1.xpose.msra.mxu0 0.0
    %10828 = vmatprep.subr.mxu0 0.0
    %10829 = vmatpush1.xpose.msra.mxu0 0.0
    %10830 = vmatprep.subr.mxu0 0.0
    %10831 = vmatpush1.xpose.msra.mxu0 0.0
    %10832 = vmatprep.subr.mxu0 0.0
    %10833 = vmatpush1.xpose.msra.mxu0 0.0
    %10834 = vmatprep.subr.mxu0 0.0
    %10835 = vmatpush1.xpose.msra.mxu0 0.0
    %10836 = vmatprep.subr.mxu0 0.0
    %10837 = vmatpush1.xpose.msra.mxu0 0.0
    %10838 = vmatprep.subr.mxu0 0.0
    %10839 = vmatpush1.xpose.msra.mxu0 0.0
    %10840 = vmatprep.subr.mxu0 0.0
    %10841 = vmatpush1.xpose.msra.mxu0 0.0
    %10842 = vmatprep.subr.mxu0 0.0
    %10843 = vmatpush1.xpose.msra.mxu0 0.0
    %10844 = vmatprep.subr.mxu0 0.0
    %10845 = vmatpush1.xpose.msra.mxu0 0.0
    %10846 = vmatprep.subr.mxu0 0.0
    %10847 = vmatpush1.xpose.msra.mxu0 0.0
    %10848 = vmatprep.subr.mxu0 0.0
    %10849 = vmatpush1.xpose.msra.mxu0 0.0
    %10850 = vmatprep.subr.mxu0 0.0
    %10851 = vmatpush1.xpose.msra.mxu0 0.0
    %10852 = vmatprep.subr.mxu0 0.0
    %10853 = vmatpush1.xpose.msra.mxu0 0.0
    %10854 = vmatprep.subr.mxu0 0.0
    %10855 = vmatpush1.xpose.msra.mxu0 0.0
    %10856 = vmatprep.subr.mxu0 0.0
    %10857 = vmatpush1.xpose.msra.mxu0 0.0
    %10858 = vmatprep.subr.mxu0 0.0
    %10859 = vmatpush1.xpose.msra.mxu0 0.0
    %10860 = vmatprep.subr.mxu0 0.0
    %10861 = vmatpush1.xpose.msra.mxu0 0.0
    %10862 = vmatprep.subr.mxu0 0.0
    %10863 = vmatpush1.xpose.msra.mxu0 0.0
    %10864 = vmatprep.subr.mxu0 0.0
    %10865 = vmatpush1.xpose.msra.mxu0 0.0
    %10866 = vmatprep.subr.mxu0 0.0
    %10867 = vmatpush1.xpose.msra.mxu0 0.0
    %10868 = vmatprep.subr.mxu0 0.0
    %10869 = vmatpush1.xpose.msra.mxu0 0.0
    %10870 = vmatprep.subr.mxu0 0.0
    %10871 = vmatpush1.xpose.msra.mxu0 0.0
    %10872 = vmatprep.subr.mxu0 0.0
    %10873 = vmatpush1.xpose.msra.mxu0 0.0
    %10874 = vmatprep.subr.mxu0 0.0
    %10875 = vmatpush1.xpose.msra.mxu0 0.0
    %10876 = vmatprep.subr.mxu0 0.0
    %10877 = vmatpush1.xpose.msra.mxu0 0.0
    %10878 = vmatprep.subr.mxu0 0.0
    %10879 = vmatpush1.xpose.msra.mxu0 0.0
    %10880 = vmatprep.mubr.f32.mxu0 0.0
    %10881 = vmatmul.mubr.f32.gmra.mrb[0].mxu0 %v10812
    %v10882 = vpop.f32.mrb[0].mxu0
    %v10883 = vadd.f32 0.0, %v10882
    %v10884 = vpop.f32.mrb[0].mxu0
    %10885 = vdwg.mxu0
    %v10886 = vmul.f32 %v10805, 0.25
    %v10887 = vmul.f32 %v10883, 0.25
    %v10888 = vsel %vm8887, %v10886, -inf
    %10889 = vmax.xlane.f32.xlu0 %v10888
    %v10890 = vpop.xlane.xlu0 %10889
    %v10891 = vsel %vm8887, %v10887, -inf
    %10892 = vmax.xlane.f32.xlu0 %v10891
    %v10893 = vpop.xlane.xlu0 %10892
    %v10894 = vsub.f32 %v10886, %v10890
    %v10895 = vsub.f32 %v10887, %v10893
    %v10896 = vmul.f32 %v10894, 1.442695
    %v10897 = vpow.pop %v10896
    %v10898 = vmul.f32 %v10895, 1.442695
    %v10899 = vpow.pop %v10898
    %v10900 = vsel %vm8887, %v10897, 0.0
    %10901 = vadd.xlane.f32.xlu0 %v10900
    %v10902 = vpop.xlane.xlu0 %10901
    %v10903 = vsel %vm8887, %v10899, 0.0
    %10904 = vadd.xlane.f32.xlu0 %v10903
    %v10905 = vpop.xlane.xlu0 %10904
    %v10906 = vrcp.pop %v10902
    %v10907 = vmul.f32 %v10897, %v10906
    %v10908 = vrcp.pop %v10905
    %v10909 = vmul.f32 %v10899, %v10908
    %10910 = vrot.lane.b32.xlu0 %v8727, 32
    %v10911 = vpop.permute.xlu0 %10910
    %v10913 = vsel %vm3177, %v10907, 0
    %v10915 = vsel %vm8394, %v10911, 0
    %10917 = vmatprep.subr.mxu0 0.0
    %10918 = vmatpush1.msra.mxu0 %v10915
    %10919 = vmatprep.subr.mxu0 0.0
    %10920 = vmatpush1.msra.mxu0 0.0
    %10921 = vmatprep.subr.mxu0 0.0
    %10922 = vmatpush1.msra.mxu0 0.0
    %10923 = vmatprep.subr.mxu0 0.0
    %10924 = vmatpush1.msra.mxu0 0.0
    %10925 = vmatprep.subr.mxu0 0.0
    %10926 = vmatpush1.msra.mxu0 0.0
    %10927 = vmatprep.subr.mxu0 0.0
    %10928 = vmatpush1.msra.mxu0 0.0
    %10929 = vmatprep.subr.mxu0 0.0
    %10930 = vmatpush1.msra.mxu0 0.0
    %10931 = vmatprep.subr.mxu0 0.0
    %10932 = vmatpush1.msra.mxu0 0.0
    %10933 = vmatprep.subr.mxu0 0.0
    %10934 = vmatpush1.msra.mxu0 0.0
    %10935 = vmatprep.subr.mxu0 0.0
    %10936 = vmatpush1.msra.mxu0 0.0
    %10937 = vmatprep.subr.mxu0 0.0
    %10938 = vmatpush1.msra.mxu0 0.0
    %10939 = vmatprep.subr.mxu0 0.0
    %10940 = vmatpush1.msra.mxu0 0.0
    %10941 = vmatprep.subr.mxu0 0.0
    %10942 = vmatpush1.msra.mxu0 0.0
    %10943 = vmatprep.subr.mxu0 0.0
    %10944 = vmatpush1.msra.mxu0 0.0
    %10945 = vmatprep.subr.mxu0 0.0
    %10946 = vmatpush1.msra.mxu0 0.0
    %10947 = vmatprep.subr.mxu0 0.0
    %10948 = vmatpush1.msra.mxu0 0.0
    %10949 = vmatprep.subr.mxu0 0.0
    %10950 = vmatpush1.msra.mxu0 0.0
    %10951 = vmatprep.subr.mxu0 0.0
    %10952 = vmatpush1.msra.mxu0 0.0
    %10953 = vmatprep.subr.mxu0 0.0
    %10954 = vmatpush1.msra.mxu0 0.0
    %10955 = vmatprep.subr.mxu0 0.0
    %10956 = vmatpush1.msra.mxu0 0.0
    %10957 = vmatprep.subr.mxu0 0.0
    %10958 = vmatpush1.msra.mxu0 0.0
    %10959 = vmatprep.subr.mxu0 0.0
    %10960 = vmatpush1.msra.mxu0 0.0
    %10961 = vmatprep.subr.mxu0 0.0
    %10962 = vmatpush1.msra.mxu0 0.0
    %10963 = vmatprep.subr.mxu0 0.0
    %10964 = vmatpush1.msra.mxu0 0.0
    %10965 = vmatprep.subr.mxu0 0.0
    %10966 = vmatpush1.msra.mxu0 0.0
    %10967 = vmatprep.subr.mxu0 0.0
    %10968 = vmatpush1.msra.mxu0 0.0
    %10969 = vmatprep.subr.mxu0 0.0
    %10970 = vmatpush1.msra.mxu0 0.0
    %10971 = vmatprep.subr.mxu0 0.0
    %10972 = vmatpush1.msra.mxu0 0.0
    %10973 = vmatprep.subr.mxu0 0.0
    %10974 = vmatpush1.msra.mxu0 0.0
    %10975 = vmatprep.subr.mxu0 0.0
    %10976 = vmatpush1.msra.mxu0 0.0
    %10977 = vmatprep.subr.mxu0 0.0
    %10978 = vmatpush1.msra.mxu0 0.0
    %10979 = vmatprep.subr.mxu0 0.0
    %10980 = vmatpush1.msra.mxu0 0.0
    %10981 = vmatprep.mubr.f32.mxu0 0.0
    %10982 = vmatmul.mubr.f32.gmra.mrb[0].mxu0 %v10913
    %v10983 = vpop.f32.mrb[0].mxu0
    %v10984 = vadd.f32 0.0, %v10983
    %v10985 = vpop.f32.mrb[0].mxu0
    %10986 = vdwg.mxu0
    %10987 = vrot.lane.b32.xlu0 %v8735, 32
    %v10988 = vpop.permute.xlu0 %10987
    %v10990 = vsel %vm3177, %v10909, 0
    %v10992 = vsel %vm8394, %v10988, 0
    %10994 = vmatprep.subr.mxu0 0.0
    %10995 = vmatpush1.msra.mxu0 %v10992
    %10996 = vmatprep.subr.mxu0 0.0
    %10997 = vmatpush1.msra.mxu0 0.0
    %10998 = vmatprep.subr.mxu0 0.0
    %10999 = vmatpush1.msra.mxu0 0.0
    %11000 = vmatprep.subr.mxu0 0.0
    %11001 = vmatpush1.msra.mxu0 0.0
    %11002 = vmatprep.subr.mxu0 0.0
    %11003 = vmatpush1.msra.mxu0 0.0
    %11004 = vmatprep.subr.mxu0 0.0
    %11005 = vmatpush1.msra.mxu0 0.0
    %11006 = vmatprep.subr.mxu0 0.0
    %11007 = vmatpush1.msra.mxu0 0.0
    %11008 = vmatprep.subr.mxu0 0.0
    %11009 = vmatpush1.msra.mxu0 0.0
    %11010 = vmatprep.subr.mxu0 0.0
    %11011 = vmatpush1.msra.mxu0 0.0
    %11012 = vmatprep.subr.mxu0 0.0
    %11013 = vmatpush1.msra.mxu0 0.0
    %11014 = vmatprep.subr.mxu0 0.0
    %11015 = vmatpush1.msra.mxu0 0.0
    %11016 = vmatprep.subr.mxu0 0.0
    %11017 = vmatpush1.msra.mxu0 0.0
    %11018 = vmatprep.subr.mxu0 0.0
    %11019 = vmatpush1.msra.mxu0 0.0
    %11020 = vmatprep.subr.mxu0 0.0
    %11021 = vmatpush1.msra.mxu0 0.0
    %11022 = vmatprep.subr.mxu0 0.0
    %11023 = vmatpush1.msra.mxu0 0.0
    %11024 = vmatprep.subr.mxu0 0.0
    %11025 = vmatpush1.msra.mxu0 0.0
    %11026 = vmatprep.subr.mxu0 0.0
    %11027 = vmatpush1.msra.mxu0 0.0
    %11028 = vmatprep.subr.mxu0 0.0
    %11029 = vmatpush1.msra.mxu0 0.0
    %11030 = vmatprep.subr.mxu0 0.0
    %11031 = vmatpush1.msra.mxu0 0.0
    %11032 = vmatprep.subr.mxu0 0.0
    %11033 = vmatpush1.msra.mxu0 0.0
    %11034 = vmatprep.subr.mxu0 0.0
    %11035 = vmatpush1.msra.mxu0 0.0
    %11036 = vmatprep.subr.mxu0 0.0
    %11037 = vmatpush1.msra.mxu0 0.0
    %11038 = vmatprep.subr.mxu0 0.0
    %11039 = vmatpush1.msra.mxu0 0.0
    %11040 = vmatprep.subr.mxu0 0.0
    %11041 = vmatpush1.msra.mxu0 0.0
    %11042 = vmatprep.subr.mxu0 0.0
    %11043 = vmatpush1.msra.mxu0 0.0
    %11044 = vmatprep.subr.mxu0 0.0
    %11045 = vmatpush1.msra.mxu0 0.0
    %11046 = vmatprep.subr.mxu0 0.0
    %11047 = vmatpush1.msra.mxu0 0.0
    %11048 = vmatprep.subr.mxu0 0.0
    %11049 = vmatpush1.msra.mxu0 0.0
    %11050 = vmatprep.subr.mxu0 0.0
    %11051 = vmatpush1.msra.mxu0 0.0
    %11052 = vmatprep.subr.mxu0 0.0
    %11053 = vmatpush1.msra.mxu0 0.0
    %11054 = vmatprep.subr.mxu0 0.0
    %11055 = vmatpush1.msra.mxu0 0.0
    %11056 = vmatprep.subr.mxu0 0.0
    %11057 = vmatpush1.msra.mxu0 0.0
    %11058 = vmatprep.mubr.f32.mxu0 0.0
    %11059 = vmatmul.mubr.f32.gmra.mrb[0].mxu0 %v10990
    %v11060 = vpop.f32.mrb[0].mxu0
    %v11061 = vadd.f32 0.0, %v11060
    %v11062 = vpop.f32.mrb[0].mxu0
    %11063 = vdwg.mxu0
    %11064 = vrot.lane.b32.xlu0 %v8656, 16
    %v11065 = vpop.permute.xlu0 %11064
    %11066 = vrot.lane.b32.xlu0 %v8658, 16
    %v11067 = vpop.permute.xlu0 %11066
    %v11068 = vsel %vm8736, %v11065, 0
    %v11070 = vsel %vm8736, %v11067, 0
    %11072 = vmatprep.subr.mxu0 0.0
    %11073 = vmatpush1.xpose.msra.mxu0 %v11070
    %11074 = vmatprep.subr.mxu0 0.0
    %11075 = vmatpush1.xpose.msra.mxu0 0.0
    %11076 = vmatprep.subr.mxu0 0.0
    %11077 = vmatpush1.xpose.msra.mxu0 0.0
    %11078 = vmatprep.subr.mxu0 0.0
    %11079 = vmatpush1.xpose.msra.mxu0 0.0
    %11080 = vmatprep.subr.mxu0 0.0
    %11081 = vmatpush1.xpose.msra.mxu0 0.0
    %11082 = vmatprep.subr.mxu0 0.0
    %11083 = vmatpush1.xpose.msra.mxu0 0.0
    %11084 = vmatprep.subr.mxu0 0.0
    %11085 = vmatpush1.xpose.msra.mxu0 0.0
    %11086 = vmatprep.subr.mxu0 0.0
    %11087 = vmatpush1.xpose.msra.mxu0 0.0
    %11088 = vmatprep.subr.mxu0 0.0
    %11089 = vmatpush1.xpose.msra.mxu0 0.0
    %11090 = vmatprep.subr.mxu0 0.0
    %11091 = vmatpush1.xpose.msra.mxu0 0.0
    %11092 = vmatprep.subr.mxu0 0.0
    %11093 = vmatpush1.xpose.msra.mxu0 0.0
    %11094 = vmatprep.subr.mxu0 0.0
    %11095 = vmatpush1.xpose.msra.mxu0 0.0
    %11096 = vmatprep.subr.mxu0 0.0
    %11097 = vmatpush1.xpose.msra.mxu0 0.0
    %11098 = vmatprep.subr.mxu0 0.0
    %11099 = vmatpush1.xpose.msra.mxu0 0.0
    %11100 = vmatprep.subr.mxu0 0.0
    %11101 = vmatpush1.xpose.msra.mxu0 0.0
    %11102 = vmatprep.subr.mxu0 0.0
    %11103 = vmatpush1.xpose.msra.mxu0 0.0
    %11104 = vmatprep.subr.mxu0 0.0
    %11105 = vmatpush1.xpose.msra.mxu0 0.0
    %11106 = vmatprep.subr.mxu0 0.0
    %11107 = vmatpush1.xpose.msra.mxu0 0.0
    %11108 = vmatprep.subr.mxu0 0.0
    %11109 = vmatpush1.xpose.msra.mxu0 0.0
    %11110 = vmatprep.subr.mxu0 0.0
    %11111 = vmatpush1.xpose.msra.mxu0 0.0
    %11112 = vmatprep.subr.mxu0 0.0
    %11113 = vmatpush1.xpose.msra.mxu0 0.0
    %11114 = vmatprep.subr.mxu0 0.0
    %11115 = vmatpush1.xpose.msra.mxu0 0.0
    %11116 = vmatprep.subr.mxu0 0.0
    %11117 = vmatpush1.xpose.msra.mxu0 0.0
    %11118 = vmatprep.subr.mxu0 0.0
    %11119 = vmatpush1.xpose.msra.mxu0 0.0
    %11120 = vmatprep.subr.mxu0 0.0
    %11121 = vmatpush1.xpose.msra.mxu0 0.0
    %11122 = vmatprep.subr.mxu0 0.0
    %11123 = vmatpush1.xpose.msra.mxu0 0.0
    %11124 = vmatprep.subr.mxu0 0.0
    %11125 = vmatpush1.xpose.msra.mxu0 0.0
    %11126 = vmatprep.subr.mxu0 0.0
    %11127 = vmatpush1.xpose.msra.mxu0 0.0
    %11128 = vmatprep.subr.mxu0 0.0
    %11129 = vmatpush1.xpose.msra.mxu0 0.0
    %11130 = vmatprep.subr.mxu0 0.0
    %11131 = vmatpush1.xpose.msra.mxu0 0.0
    %11132 = vmatprep.subr.mxu0 0.0
    %11133 = vmatpush1.xpose.msra.mxu0 0.0
    %11134 = vmatprep.subr.mxu0 0.0
    %11135 = vmatpush1.xpose.msra.mxu0 0.0
    %11136 = vmatprep.mubr.f32.mxu0 0.0
    %11137 = vmatmul.mubr.f32.gmra.mrb[0].mxu0 %v11068
    %v11138 = vpop.f32.mrb[0].mxu0
    %v11139 = vadd.f32 0.0, %v11138
    %v11140 = vpop.f32.mrb[0].mxu0
    %11141 = vdwg.mxu0
    %11142 = vrot.lane.b32.xlu0 %v8731, 16
    %v11143 = vpop.permute.xlu0 %11142
    %11144 = vrot.lane.b32.xlu0 %v8733, 16
    %v11145 = vpop.permute.xlu0 %11144
    %v11146 = vsel %vm8736, %v11143, 0
    %v11148 = vsel %vm8736, %v11145, 0
    %11150 = vmatprep.subr.mxu0 0.0
    %11151 = vmatpush1.xpose.msra.mxu0 %v11148
    %11152 = vmatprep.subr.mxu0 0.0
    %11153 = vmatpush1.xpose.msra.mxu0 0.0
    %11154 = vmatprep.subr.mxu0 0.0
    %11155 = vmatpush1.xpose.msra.mxu0 0.0
    %11156 = vmatprep.subr.mxu0 0.0
    %11157 = vmatpush1.xpose.msra.mxu0 0.0
    %11158 = vmatprep.subr.mxu0 0.0
    %11159 = vmatpush1.xpose.msra.mxu0 0.0
    %11160 = vmatprep.subr.mxu0 0.0
    %11161 = vmatpush1.xpose.msra.mxu0 0.0
    %11162 = vmatprep.subr.mxu0 0.0
    %11163 = vmatpush1.xpose.msra.mxu0 0.0
    %11164 = vmatprep.subr.mxu0 0.0
    %11165 = vmatpush1.xpose.msra.mxu0 0.0
    %11166 = vmatprep.subr.mxu0 0.0
    %11167 = vmatpush1.xpose.msra.mxu0 0.0
    %11168 = vmatprep.subr.mxu0 0.0
    %11169 = vmatpush1.xpose.msra.mxu0 0.0
    %11170 = vmatprep.subr.mxu0 0.0
    %11171 = vmatpush1.xpose.msra.mxu0 0.0
    %11172 = vmatprep.subr.mxu0 0.0
    %11173 = vmatpush1.xpose.msra.mxu0 0.0
    %11174 = vmatprep.subr.mxu0 0.0
    %11175 = vmatpush1.xpose.msra.mxu0 0.0
    %11176 = vmatprep.subr.mxu0 0.0
    %11177 = vmatpush1.xpose.msra.mxu0 0.0
    %11178 = vmatprep.subr.mxu0 0.0
    %11179 = vmatpush1.xpose.msra.mxu0 0.0
    %11180 = vmatprep.subr.mxu0 0.0
    %11181 = vmatpush1.xpose.msra.mxu0 0.0
    %11182 = vmatprep.subr.mxu0 0.0
    %11183 = vmatpush1.xpose.msra.mxu0 0.0
    %11184 = vmatprep.subr.mxu0 0.0
    %11185 = vmatpush1.xpose.msra.mxu0 0.0
    %11186 = vmatprep.subr.mxu0 0.0
    %11187 = vmatpush1.xpose.msra.mxu0 0.0
    %11188 = vmatprep.subr.mxu0 0.0
    %11189 = vmatpush1.xpose.msra.mxu0 0.0
    %11190 = vmatprep.subr.mxu0 0.0
    %11191 = vmatpush1.xpose.msra.mxu0 0.0
    %11192 = vmatprep.subr.mxu0 0.0
    %11193 = vmatpush1.xpose.msra.mxu0 0.0
    %11194 = vmatprep.subr.mxu0 0.0
    %11195 = vmatpush1.xpose.msra.mxu0 0.0
    %11196 = vmatprep.subr.mxu0 0.0
    %11197 = vmatpush1.xpose.msra.mxu0 0.0
    %11198 = vmatprep.subr.mxu0 0.0
    %11199 = vmatpush1.xpose.msra.mxu0 0.0
    %11200 = vmatprep.subr.mxu0 0.0
    %11201 = vmatpush1.xpose.msra.mxu0 0.0
    %11202 = vmatprep.subr.mxu0 0.0
    %11203 = vmatpush1.xpose.msra.mxu0 0.0
    %11204 = vmatprep.subr.mxu0 0.0
    %11205 = vmatpush1.xpose.msra.mxu0 0.0
    %11206 = vmatprep.subr.mxu0 0.0
    %11207 = vmatpush1.xpose.msra.mxu0 0.0
    %11208 = vmatprep.subr.mxu0 0.0
    %11209 = vmatpush1.xpose.msra.mxu0 0.0
    %11210 = vmatprep.subr.mxu0 0.0
    %11211 = vmatpush1.xpose.msra.mxu0 0.0
    %11212 = vmatprep.subr.mxu0 0.0
    %11213 = vmatpush1.xpose.msra.mxu0 0.0
    %11214 = vmatprep.mubr.f32.mxu0 0.0
    %11215 = vmatmul.mubr.f32.gmra.mrb[0].mxu0 %v11146
    %v11216 = vpop.f32.mrb[0].mxu0
    %v11217 = vadd.f32 0.0, %v11216
    %v11218 = vpop.f32.mrb[0].mxu0
    %11219 = vdwg.mxu0
    %v11220 = vmul.f32 %v11139, 0.25
    %v11221 = vmul.f32 %v11217, 0.25
    %v11222 = vsel %vm8887, %v11220, -inf
    %11223 = vmax.xlane.f32.xlu0 %v11222
    %v11224 = vpop.xlane.xlu0 %11223
    %v11225 = vsel %vm8887, %v11221, -inf
    %11226 = vmax.xlane.f32.xlu0 %v11225
    %v11227 = vpop.xlane.xlu0 %11226
    %v11228 = vsub.f32 %v11220, %v11224
    %v11229 = vsub.f32 %v11221, %v11227
    %v11230 = vmul.f32 %v11228, 1.442695
    %v11231 = vpow.pop %v11230
    %v11232 = vmul.f32 %v11229, 1.442695
    %v11233 = vpow.pop %v11232
    %v11234 = vsel %vm8887, %v11231, 0.0
    %11235 = vadd.xlane.f32.xlu0 %v11234
    %v11236 = vpop.xlane.xlu0 %11235
    %v11237 = vsel %vm8887, %v11233, 0.0
    %11238 = vadd.xlane.f32.xlu0 %v11237
    %v11239 = vpop.xlane.xlu0 %11238
    %v11240 = vrcp.pop %v11236
    %v11241 = vmul.f32 %v11231, %v11240
    %v11242 = vrcp.pop %v11239
    %v11243 = vmul.f32 %v11233, %v11242
    %11244 = vrot.lane.b32.xlu0 %v8727, 16
    %v11245 = vpop.permute.xlu0 %11244
    %v11247 = vsel %vm3177, %v11241, 0
    %v11249 = vsel %vm8394, %v11245, 0
    %11251 = vmatprep.subr.mxu0 0.0
    %11252 = vmatpush1.msra.mxu0 %v11249
    %11253 = vmatprep.subr.mxu0 0.0
    %11254 = vmatpush1.msra.mxu0 0.0
    %11255 = vmatprep.subr.mxu0 0.0
    %11256 = vmatpush1.msra.mxu0 0.0
    %11257 = vmatprep.subr.mxu0 0.0
    %11258 = vmatpush1.msra.mxu0 0.0
    %11259 = vmatprep.subr.mxu0 0.0
    %11260 = vmatpush1.msra.mxu0 0.0
    %11261 = vmatprep.subr.mxu0 0.0
    %11262 = vmatpush1.msra.mxu0 0.0
    %11263 = vmatprep.subr.mxu0 0.0
    %11264 = vmatpush1.msra.mxu0 0.0
    %11265 = vmatprep.subr.mxu0 0.0
    %11266 = vmatpush1.msra.mxu0 0.0
    %11267 = vmatprep.subr.mxu0 0.0
    %11268 = vmatpush1.msra.mxu0 0.0
    %11269 = vmatprep.subr.mxu0 0.0
    %11270 = vmatpush1.msra.mxu0 0.0
    %11271 = vmatprep.subr.mxu0 0.0
    %11272 = vmatpush1.msra.mxu0 0.0
    %11273 = vmatprep.subr.mxu0 0.0
    %11274 = vmatpush1.msra.mxu0 0.0
    %11275 = vmatprep.subr.mxu0 0.0
    %11276 = vmatpush1.msra.mxu0 0.0
    %11277 = vmatprep.subr.mxu0 0.0
    %11278 = vmatpush1.msra.mxu0 0.0
    %11279 = vmatprep.subr.mxu0 0.0
    %11280 = vmatpush1.msra.mxu0 0.0
    %11281 = vmatprep.subr.mxu0 0.0
    %11282 = vmatpush1.msra.mxu0 0.0
    %11283 = vmatprep.subr.mxu0 0.0
    %11284 = vmatpush1.msra.mxu0 0.0
    %11285 = vmatprep.subr.mxu0 0.0
    %11286 = vmatpush1.msra.mxu0 0.0
    %11287 = vmatprep.subr.mxu0 0.0
    %11288 = vmatpush1.msra.mxu0 0.0
    %11289 = vmatprep.subr.mxu0 0.0
    %11290 = vmatpush1.msra.mxu0 0.0
    %11291 = vmatprep.subr.mxu0 0.0
    %11292 = vmatpush1.msra.mxu0 0.0
    %11293 = vmatprep.subr.mxu0 0.0
    %11294 = vmatpush1.msra.mxu0 0.0
    %11295 = vmatprep.subr.mxu0 0.0
    %11296 = vmatpush1.msra.mxu0 0.0
    %11297 = vmatprep.subr.mxu0 0.0
    %11298 = vmatpush1.msra.mxu0 0.0
    %11299 = vmatprep.subr.mxu0 0.0
    %11300 = vmatpush1.msra.mxu0 0.0
    %11301 = vmatprep.subr.mxu0 0.0
    %11302 = vmatpush1.msra.mxu0 0.0
    %11303 = vmatprep.subr.mxu0 0.0
    %11304 = vmatpush1.msra.mxu0 0.0
    %11305 = vmatprep.subr.mxu0 0.0
    %11306 = vmatpush1.msra.mxu0 0.0
    %11307 = vmatprep.subr.mxu0 0.0
    %11308 = vmatpush1.msra.mxu0 0.0
    %11309 = vmatprep.subr.mxu0 0.0
    %11310 = vmatpush1.msra.mxu0 0.0
    %11311 = vmatprep.subr.mxu0 0.0
    %11312 = vmatpush1.msra.mxu0 0.0
    %11313 = vmatprep.subr.mxu0 0.0
    %11314 = vmatpush1.msra.mxu0 0.0
    %11315 = vmatprep.mubr.f32.mxu0 0.0
    %11316 = vmatmul.mubr.f32.gmra.mrb[0].mxu0 %v11247
    %v11317 = vpop.f32.mrb[0].mxu0
    %v11318 = vadd.f32 0.0, %v11317
    %v11319 = vpop.f32.mrb[0].mxu0
    %11320 = vdwg.mxu0
    %11321 = vrot.lane.b32.xlu0 %v8735, 16
    %v11322 = vpop.permute.xlu0 %11321
    %v11324 = vsel %vm3177, %v11243, 0
    %v11326 = vsel %vm8394, %v11322, 0
    %11328 = vmatprep.subr.mxu0 0.0
    %11329 = vmatpush1.msra.mxu0 %v11326
    %11330 = vmatprep.subr.mxu0 0.0
    %11331 = vmatpush1.msra.mxu0 0.0
    %11332 = vmatprep.subr.mxu0 0.0
    %11333 = vmatpush1.msra.mxu0 0.0
    %11334 = vmatprep.subr.mxu0 0.0
    %11335 = vmatpush1.msra.mxu0 0.0
    %11336 = vmatprep.subr.mxu0 0.0
    %11337 = vmatpush1.msra.mxu0 0.0
    %11338 = vmatprep.subr.mxu0 0.0
    %11339 = vmatpush1.msra.mxu0 0.0
    %11340 = vmatprep.subr.mxu0 0.0
    %11341 = vmatpush1.msra.mxu0 0.0
    %11342 = vmatprep.subr.mxu0 0.0
    %11343 = vmatpush1.msra.mxu0 0.0
    %11344 = vmatprep.subr.mxu0 0.0
    %11345 = vmatpush1.msra.mxu0 0.0
    %11346 = vmatprep.subr.mxu0 0.0
    %11347 = vmatpush1.msra.mxu0 0.0
    %11348 = vmatprep.subr.mxu0 0.0
    %11349 = vmatpush1.msra.mxu0 0.0
    %11350 = vmatprep.subr.mxu0 0.0
    %11351 = vmatpush1.msra.mxu0 0.0
    %11352 = vmatprep.subr.mxu0 0.0
    %11353 = vmatpush1.msra.mxu0 0.0
    %11354 = vmatprep.subr.mxu0 0.0
    %11355 = vmatpush1.msra.mxu0 0.0
    %11356 = vmatprep.subr.mxu0 0.0
    %11357 = vmatpush1.msra.mxu0 0.0
    %11358 = vmatprep.subr.mxu0 0.0
    %11359 = vmatpush1.msra.mxu0 0.0
    %11360 = vmatprep.subr.mxu0 0.0
    %11361 = vmatpush1.msra.mxu0 0.0
    %11362 = vmatprep.subr.mxu0 0.0
    %11363 = vmatpush1.msra.mxu0 0.0
    %11364 = vmatprep.subr.mxu0 0.0
    %11365 = vmatpush1.msra.mxu0 0.0
    %11366 = vmatprep.subr.mxu0 0.0
    %11367 = vmatpush1.msra.mxu0 0.0
    %11368 = vmatprep.subr.mxu0 0.0
    %11369 = vmatpush1.msra.mxu0 0.0
    %11370 = vmatprep.subr.mxu0 0.0
    %11371 = vmatpush1.msra.mxu0 0.0
    %11372 = vmatprep.subr.mxu0 0.0
    %11373 = vmatpush1.msra.mxu0 0.0
    %11374 = vmatprep.subr.mxu0 0.0
    %11375 = vmatpush1.msra.mxu0 0.0
    %11376 = vmatprep.subr.mxu0 0.0
    %11377 = vmatpush1.msra.mxu0 0.0
    %11378 = vmatprep.subr.mxu0 0.0
    %11379 = vmatpush1.msra.mxu0 0.0
    %11380 = vmatprep.subr.mxu0 0.0
    %11381 = vmatpush1.msra.mxu0 0.0
    %11382 = vmatprep.subr.mxu0 0.0
    %11383 = vmatpush1.msra.mxu0 0.0
    %11384 = vmatprep.subr.mxu0 0.0
    %11385 = vmatpush1.msra.mxu0 0.0
    %11386 = vmatprep.subr.mxu0 0.0
    %11387 = vmatpush1.msra.mxu0 0.0
    %11388 = vmatprep.subr.mxu0 0.0
    %11389 = vmatpush1.msra.mxu0 0.0
    %11390 = vmatprep.subr.mxu0 0.0
    %11391 = vmatpush1.msra.mxu0 0.0
    %11392 = vmatprep.mubr.f32.mxu0 0.0
    %11393 = vmatmul.mubr.f32.gmra.mrb[0].mxu0 %v11324
    %v11394 = vpop.f32.mrb[0].mxu0
    %v11395 = vadd.f32 0.0, %v11394
    %v11396 = vpop.f32.mrb[0].mxu0
    %11397 = vdwg.mxu0
    %11400 = vrot.lane.b32.xlu0 %v9314, 16
    %v11401 = vpop.permute.xlu0 %11400
    %11402 = vrot.lane.b32.xlu0 %v9391, 16
    %v11403 = vpop.permute.xlu0 %11402
    %11408 = vrot.lane.b32.xlu0 %v9648, 32
    %v11409 = vpop.permute.xlu0 %11408
    %11410 = vrot.lane.b32.xlu0 %v9725, 32
    %v11411 = vpop.permute.xlu0 %11410
    %11416 = vrot.lane.b32.xlu0 %v9982, 48
    %v11417 = vpop.permute.xlu0 %11416
    %11418 = vrot.lane.b32.xlu0 %v10059, 48
    %v11419 = vpop.permute.xlu0 %11418
    %11424 = vrot.lane.b32.xlu0 %v10316, 64
    %v11425 = vpop.permute.xlu0 %11424
    %11426 = vrot.lane.b32.xlu0 %v10393, 64
    %v11427 = vpop.permute.xlu0 %11426
    %11432 = vrot.lane.b32.xlu0 %v10650, 80
    %v11433 = vpop.permute.xlu0 %11432
    %11434 = vrot.lane.b32.xlu0 %v10727, 80
    %v11435 = vpop.permute.xlu0 %11434
    %11440 = vrot.lane.b32.xlu0 %v10984, 96
    %v11441 = vpop.permute.xlu0 %11440
    %11442 = vrot.lane.b32.xlu0 %v11061, 96
    %v11443 = vpop.permute.xlu0 %11442
    %11448 = vrot.lane.b32.xlu0 %v11318, 112
    %v11449 = vpop.permute.xlu0 %11448
    %11450 = vrot.lane.b32.xlu0 %v11395, 112
    %v11451 = vpop.permute.xlu0 %11450
    %v11454 = vsel %vm8736, %v8982, %v11401
    %v11455 = vsel %vm8736, %v9057, %v11403
    %v11456 = vsel %vm4157, %v11454, %v11409
    %v11457 = vsel %vm4157, %v11455, %v11411
    %vm11458 = vcmask 392192
    %v11459 = vsel %vm11458, %v11456, %v11417
    %v11460 = vsel %vm11458, %v11457, %v11419
    %v11461 = vsel %vm6720, %v11459, %v11425
    %v11462 = vsel %vm6720, %v11460, %v11427
    %vm11463 = vcmask 654336
    %v11464 = vsel %vm11463, %v11461, %v11433
    %v11465 = vsel %vm11463, %v11462, %v11435
    %v11466 = vsel %vm6737, %v11464, %v11441
    %v11467 = vsel %vm6737, %v11465, %v11443
    %vm11468 = vcmask 916480
    %v11469 = vsel %vm11468, %v11466, %v11449
    %v11470 = vsel %vm11468, %v11467, %v11451
    %v11471 = vld [vmem:[#allocation11] sm:$0xff]
    %v11472 = vld [vmem:[#allocation11 + $0x8] sm:$0xff]
    %v11473 = vld [vmem:[#allocation11 + $0x10] sm:$0xff]
    %v11474 = vld [vmem:[#allocation11 + $0x18] sm:$0xff]
    %v11475 = vld [vmem:[#allocation11 + $0x20] sm:$0xff]
    %v11476 = vld [vmem:[#allocation11 + $0x28] sm:$0xff]
    %v11477 = vld [vmem:[#allocation11 + $0x30] sm:$0xff]
    %v11478 = vld [vmem:[#allocation11 + $0x38] sm:$0xff]
    %v11479 = vld [vmem:[#allocation11 + $0x40] sm:$0xff]
    %v11480 = vld [vmem:[#allocation11 + $0x48] sm:$0xff]
    %v11481 = vld [vmem:[#allocation11 + $0x50] sm:$0xff]
    %v11482 = vld [vmem:[#allocation11 + $0x58] sm:$0xff]
    %v11483 = vld [vmem:[#allocation11 + $0x60] sm:$0xff]
    %v11484 = vld [vmem:[#allocation11 + $0x68] sm:$0xff]
    %v11485 = vld [vmem:[#allocation11 + $0x70] sm:$0xff]
    %v11486 = vld [vmem:[#allocation11 + $0x78] sm:$0xff]
    %v11487 = vld [vmem:[#allocation13] sm:$0x1]
    %v11489 = vlaneseq
    %v11490 = vshrl.u32 %v11489, 7
    %v11491 = vsub.s32 0, %v11490
    %v11492 = vrot.slane %v11487, %v11491
    %v11496 = vcombine.low %v11469, %v11470
    %11498 = vmatprep.subr.mxu0 0.0
    %11499 = vmatpush1.msra.mxu0 %v11471
    %11500 = vmatprep.subr.mxu0 0.0
    %11501 = vmatpush1.msra.mxu0 %v11472
    %11502 = vmatprep.subr.mxu0 0.0
    %11503 = vmatpush1.msra.mxu0 %v11473
    %11504 = vmatprep.subr.mxu0 0.0
    %11505 = vmatpush1.msra.mxu0 %v11474
    %11506 = vmatprep.subr.mxu0 0.0
    %11507 = vmatpush1.msra.mxu0 %v11475
    %11508 = vmatprep.subr.mxu0 0.0
    %11509 = vmatpush1.msra.mxu0 %v11476
    %11510 = vmatprep.subr.mxu0 0.0
    %11511 = vmatpush1.msra.mxu0 %v11477
    %11512 = vmatprep.subr.mxu0 0.0
    %11513 = vmatpush1.msra.mxu0 %v11478
    %11514 = vmatprep.subr.mxu0 0.0
    %11515 = vmatpush1.msra.mxu0 %v11479
    %11516 = vmatprep.subr.mxu0 0.0
    %11517 = vmatpush1.msra.mxu0 %v11480
    %11518 = vmatprep.subr.mxu0 0.0
    %11519 = vmatpush1.msra.mxu0 %v11481
    %11520 = vmatprep.subr.mxu0 0.0
    %11521 = vmatpush1.msra.mxu0 %v11482
    %11522 = vmatprep.subr.mxu0 0.0
    %11523 = vmatpush1.msra.mxu0 %v11483
    %11524 = vmatprep.subr.mxu0 0.0
    %11525 = vmatpush1.msra.mxu0 %v11484
    %11526 = vmatprep.subr.mxu0 0.0
    %11527 = vmatpush1.msra.mxu0 %v11485
    %11528 = vmatprep.subr.mxu0 0.0
    %11529 = vmatpush1.msra.mxu0 %v11486
    %11530 = vmatprep.subr.mxu0 0.0
    %11531 = vmatpush1.msra.mxu0 0.0
    %11532 = vmatprep.subr.mxu0 0.0
    %11533 = vmatpush1.msra.mxu0 0.0
    %11534 = vmatprep.subr.mxu0 0.0
    %11535 = vmatpush1.msra.mxu0 0.0
    %11536 = vmatprep.subr.mxu0 0.0
    %11537 = vmatpush1.msra.mxu0 0.0
    %11538 = vmatprep.subr.mxu0 0.0
    %11539 = vmatpush1.msra.mxu0 0.0
    %11540 = vmatprep.subr.mxu0 0.0
    %11541 = vmatpush1.msra.mxu0 0.0
    %11542 = vmatprep.subr.mxu0 0.0
    %11543 = vmatpush1.msra.mxu0 0.0
    %11544 = vmatprep.subr.mxu0 0.0
    %11545 = vmatpush1.msra.mxu0 0.0
    %11546 = vmatprep.subr.mxu0 0.0
    %11547 = vmatpush1.msra.mxu0 0.0
    %11548 = vmatprep.subr.mxu0 0.0
    %11549 = vmatpush1.msra.mxu0 0.0
    %11550 = vmatprep.subr.mxu0 0.0
    %11551 = vmatpush1.msra.mxu0 0.0
    %11552 = vmatprep.subr.mxu0 0.0
    %11553 = vmatpush1.msra.mxu0 0.0
    %11554 = vmatprep.subr.mxu0 0.0
    %11555 = vmatpush1.msra.mxu0 0.0
    %11556 = vmatprep.subr.mxu0 0.0
    %11557 = vmatpush1.msra.mxu0 0.0
    %11558 = vmatprep.subr.mxu0 0.0
    %11559 = vmatpush1.msra.mxu0 0.0
    %11560 = vmatprep.subr.mxu0 0.0
    %11561 = vmatpush1.msra.mxu0 0.0
    %11562 = vmatprep.mubr.f32.mxu0 0.0
    %11563 = vmatmul.mubr.f32.gmra.mrb[0].mxu0 %v11496
    %v11564 = vpop.f32.mrb[0].mxu0
    %v11565 = vadd.f32 %v11492, %v11564
    %v11566 = vpop.f32.mrb[0].mxu0
    %11567 = vdwg.mxu0
    %v11568 = vadd.f32 %v11565, %v8587
    %11569 = vadd.xlane.f32.xlu0 %v11568
    %v11570 = vpop.xlane.xlu0 %11569
    %v11571 = vrcp.pop 128.0
    %v11572 = vmul.f32 %v11570, %v11571
    %v11573 = vsub.f32 %v11568, %v11572
    %v11574 = vmul.f32 %v11573, %v11573
    %11575 = vadd.xlane.f32.xlu0 %v11574
    %v11576 = vpop.xlane.xlu0 %11575
    %v11577 = vmul.f32 %v11576, %v11571
    %v11578 = vadd.f32 %v11577, 1e-05
    %v11579 = vrsqrt.pop %v11578
    %v11580 = vmul.f32 %v11573, %v11579
    %v11581 = vld [vmem:[%s11] sm:$0x1]
    %v11583 = vlaneseq
    %v11584 = vshrl.u32 %v11583, 7
    %v11585 = vsub.s32 0, %v11584
    %v11586 = vrot.slane %v11581, %v11585
    %v11588 = vmul.f32 %v11580, %v11586
    %v11589 = vld [vmem:[%s12] sm:$0x1]
    %v11591 = vlaneseq
    %v11592 = vshrl.u32 %v11591, 7
    %v11593 = vsub.s32 0, %v11592
    %v11594 = vrot.slane %v11589, %v11593
    %v11596 = vadd.f32 %v11588, %v11594
    %v11598 = vcombine.high %v11596, %v11596
    %v11600 = vsel %vm8394, %v11596, 0.0
    %v11601 = vrot.slane %v11600, 4
    %v11602 = vadd.f32 %v11600, %v11601
    %v11603 = vrot.slane %v11602, 2
    %v11604 = vadd.f32 %v11602, %v11603
    %v11605 = vrot.slane %v11604, 1
    %v11606 = vadd.f32 %v11604, %v11605
    %v11607 = vsel %vm8394, %v11598, 0.0
    %v11608 = vrot.slane %v11607, 4
    %v11609 = vadd.f32 %v11607, %v11608
    %v11610 = vrot.slane %v11609, 2
    %v11611 = vadd.f32 %v11609, %v11610
    %v11612 = vrot.slane %v11611, 1
    %v11613 = vadd.f32 %v11611, %v11612
    %v11614 = vrcp.pop 4.0
    %v11615 = vmul.f32 %v11606, %v11614
    %v11616 = vmul.f32 %v11613, %v11614
    %v11617 = vld [vmem:[%s13] sm:$0xff]
    %v11618 = vld [vmem:[%s13 + $0x8] sm:$0xff]
    %v11619 = vld [vmem:[%s13 + $0x10] sm:$0xff]
    %v11620 = vld [vmem:[%s13 + $0x18] sm:$0xff]
    %v11621 = vld [vmem:[%s13 + $0x20] sm:$0xff]
    %v11622 = vld [vmem:[%s13 + $0x28] sm:$0xff]
    %v11623 = vld [vmem:[%s13 + $0x30] sm:$0xff]
    %v11624 = vld [vmem:[%s13 + $0x38] sm:$0xff]
    %v11625 = vld [vmem:[%s13 + $0x40] sm:$0xff]
    %v11626 = vld [vmem:[%s13 + $0x48] sm:$0xff]
    %v11627 = vld [vmem:[%s13 + $0x50] sm:$0xff]
    %v11628 = vld [vmem:[%s13 + $0x58] sm:$0xff]
    %v11629 = vld [vmem:[%s13 + $0x60] sm:$0xff]
    %v11630 = vld [vmem:[%s13 + $0x68] sm:$0xff]
    %v11631 = vld [vmem:[%s13 + $0x70] sm:$0xff]
    %v11632 = vld [vmem:[%s13 + $0x78] sm:$0xff]
    %v11633 = vld [vmem:[%s13 + $0x80] sm:$0xff]
    %v11634 = vld [vmem:[%s13 + $0x88] sm:$0xff]
    %v11635 = vld [vmem:[%s13 + $0x90] sm:$0xff]
    %v11636 = vld [vmem:[%s13 + $0x98] sm:$0xff]
    %v11637 = vld [vmem:[%s13 + $0xa0] sm:$0xff]
    %v11638 = vld [vmem:[%s13 + $0xa8] sm:$0xff]
    %v11639 = vld [vmem:[%s13 + $0xb0] sm:$0xff]
    %v11640 = vld [vmem:[%s13 + $0xb8] sm:$0xff]
    %v11641 = vld [vmem:[%s13 + $0xc0] sm:$0xff]
    %v11642 = vld [vmem:[%s13 + $0xc8] sm:$0xff]
    %v11643 = vld [vmem:[%s13 + $0xd0] sm:$0xff]
    %v11644 = vld [vmem:[%s13 + $0xd8] sm:$0xff]
    %v11645 = vld [vmem:[%s13 + $0xe0] sm:$0xff]
    %v11646 = vld [vmem:[%s13 + $0xe8] sm:$0xff]
    %v11647 = vld [vmem:[%s13 + $0xf0] sm:$0xff]
    %v11648 = vld [vmem:[%s13 + $0xf8] sm:$0xff]
    %v11649 = vld [vmem:[%s14] sm:$0x3]
    %v11651 = vlaneseq
    %v11652 = vshrl.u32 %v11651, 7
    %v11653 = vsub.s32 0, %v11652
    %v11654 = vrot.slane %v11649, %v11653
    %v11655 = vlaneseq
    %v11656 = vshrl.u32 %v11655, 7
    %v11657 = vsub.s32 1, %v11656
    %v11658 = vrot.slane %v11649, %v11657
    %v11663 = vsel %vm6023, %v11616, %v11615
    %11665 = vmatprep.subr.mxu0 %v11618
    %11666 = vmatpush1.msra.mxu0 %v11617
    %11667 = vmatprep.subr.mxu0 %v11620
    %11668 = vmatpush1.msra.mxu0 %v11619
    %11669 = vmatprep.subr.mxu0 %v11622
    %11670 = vmatpush1.msra.mxu0 %v11621
    %11671 = vmatprep.subr.mxu0 %v11624
    %11672 = vmatpush1.msra.mxu0 %v11623
    %11673 = vmatprep.subr.mxu0 %v11626
    %11674 = vmatpush1.msra.mxu0 %v11625
    %11675 = vmatprep.subr.mxu0 %v11628
    %11676 = vmatpush1.msra.mxu0 %v11627
    %11677 = vmatprep.subr.mxu0 %v11630
    %11678 = vmatpush1.msra.mxu0 %v11629
    %11679 = vmatprep.subr.mxu0 %v11632
    %11680 = vmatpush1.msra.mxu0 %v11631
    %11681 = vmatprep.subr.mxu0 %v11634
    %11682 = vmatpush1.msra.mxu0 %v11633
    %11683 = vmatprep.subr.mxu0 %v11636
    %11684 = vmatpush1.msra.mxu0 %v11635
    %11685 = vmatprep.subr.mxu0 %v11638
    %11686 = vmatpush1.msra.mxu0 %v11637
    %11687 = vmatprep.subr.mxu0 %v11640
    %11688 = vmatpush1.msra.mxu0 %v11639
    %11689 = vmatprep.subr.mxu0 %v11642
    %11690 = vmatpush1.msra.mxu0 %v11641
    %11691 = vmatprep.subr.mxu0 %v11644
    %11692 = vmatpush1.msra.mxu0 %v11643
    %11693 = vmatprep.subr.mxu0 %v11646
    %11694 = vmatpush1.msra.mxu0 %v11645
    %11695 = vmatprep.subr.mxu0 %v11648
    %11696 = vmatpush1.msra.mxu0 %v11647
    %11697 = vmatprep.subr.mxu0 0.0
    %11698 = vmatpush1.msra.mxu0 0.0
    %11699 = vmatprep.subr.mxu0 0.0
    %11700 = vmatpush1.msra.mxu0 0.0
    %11701 = vmatprep.subr.mxu0 0.0
    %11702 = vmatpush1.msra.mxu0 0.0
    %11703 = vmatprep.subr.mxu0 0.0
    %11704 = vmatpush1.msra.mxu0 0.0
    %11705 = vmatprep.subr.mxu0 0.0
    %11706 = vmatpush1.msra.mxu0 0.0
    %11707 = vmatprep.subr.mxu0 0.0
    %11708 = vmatpush1.msra.mxu0 0.0
    %11709 = vmatprep.subr.mxu0 0.0
    %11710 = vmatpush1.msra.mxu0 0.0
    %11711 = vmatprep.subr.mxu0 0.0
    %11712 = vmatpush1.msra.mxu0 0.0
    %11713 = vmatprep.subr.mxu0 0.0
    %11714 = vmatpush1.msra.mxu0 0.0
    %11715 = vmatprep.subr.mxu0 0.0
    %11716 = vmatpush1.msra.mxu0 0.0
    %11717 = vmatprep.subr.mxu0 0.0
    %11718 = vmatpush1.msra.mxu0 0.0
    %11719 = vmatprep.subr.mxu0 0.0
    %11720 = vmatpush1.msra.mxu0 0.0
    %11721 = vmatprep.subr.mxu0 0.0
    %11722 = vmatpush1.msra.mxu0 0.0
    %11723 = vmatprep.subr.mxu0 0.0
    %11724 = vmatpush1.msra.mxu0 0.0
    %11725 = vmatprep.subr.mxu0 0.0
    %11726 = vmatpush1.msra.mxu0 0.0
    %11727 = vmatprep.subr.mxu0 0.0
    %11728 = vmatpush1.msra.mxu0 0.0
    %11729 = vmatprep.mubr.f32.mxu0 0.0
    %11730 = vmatmul.mubr.f32.gmra.mrb[0].mxu0 %v11663
    %v11731 = vpop.f32.mrb[0].mxu0
    %v11732 = vadd.f32 %v11654, %v11731
    %v11733 = vpop.f32.mrb[0].mxu0
    %v11734 = vadd.f32 %v11658, %v11733
    %11735 = vdwg.mxu0
    %v11736 = vmax.f32 %v11732, 0.0
    %v11737 = vmax.f32 %v11734, 0.0
    %v11738 = vld [vmem:[%s15] sm:$0xff]
    %v11739 = vld [vmem:[%s15 + $0x8] sm:$0xff]
    %v11740 = vld [vmem:[%s15 + $0x10] sm:$0xff]
    %v11741 = vld [vmem:[%s15 + $0x18] sm:$0xff]
    %v11742 = vld [vmem:[%s15 + $0x20] sm:$0xff]
    %v11743 = vld [vmem:[%s15 + $0x28] sm:$0xff]
    %v11744 = vld [vmem:[%s15 + $0x30] sm:$0xff]
    %v11745 = vld [vmem:[%s15 + $0x38] sm:$0xff]
    %v11746 = vld [vmem:[%s15 + $0x40] sm:$0xff]
    %v11747 = vld [vmem:[%s15 + $0x48] sm:$0xff]
    %v11748 = vld [vmem:[%s15 + $0x50] sm:$0xff]
    %v11749 = vld [vmem:[%s15 + $0x58] sm:$0xff]
    %v11750 = vld [vmem:[%s15 + $0x60] sm:$0xff]
    %v11751 = vld [vmem:[%s15 + $0x68] sm:$0xff]
    %v11752 = vld [vmem:[%s15 + $0x70] sm:$0xff]
    %v11753 = vld [vmem:[%s15 + $0x78] sm:$0xff]
    %v11754 = vld [vmem:[%s15 + $0x80] sm:$0xff]
    %v11755 = vld [vmem:[%s15 + $0x88] sm:$0xff]
    %v11756 = vld [vmem:[%s15 + $0x90] sm:$0xff]
    %v11757 = vld [vmem:[%s15 + $0x98] sm:$0xff]
    %v11758 = vld [vmem:[%s15 + $0xa0] sm:$0xff]
    %v11759 = vld [vmem:[%s15 + $0xa8] sm:$0xff]
    %v11760 = vld [vmem:[%s15 + $0xb0] sm:$0xff]
    %v11761 = vld [vmem:[%s15 + $0xb8] sm:$0xff]
    %v11762 = vld [vmem:[%s15 + $0xc0] sm:$0xff]
    %v11763 = vld [vmem:[%s15 + $0xc8] sm:$0xff]
    %v11764 = vld [vmem:[%s15 + $0xd0] sm:$0xff]
    %v11765 = vld [vmem:[%s15 + $0xd8] sm:$0xff]
    %v11766 = vld [vmem:[%s15 + $0xe0] sm:$0xff]
    %v11767 = vld [vmem:[%s15 + $0xe8] sm:$0xff]
    %v11768 = vld [vmem:[%s15 + $0xf0] sm:$0xff]
    %v11769 = vld [vmem:[%s15 + $0xf8] sm:$0xff]
    %v11770 = vld [vmem:[%s16] sm:$0x1]
    %v11772 = vlaneseq
    %v11773 = vshrl.u32 %v11772, 7
    %v11774 = vsub.s32 0, %v11773
    %v11775 = vrot.slane %v11770, %v11774
    %11777 = vmatprep.subr.mxu0 0.0
    %11778 = vmatpush1.msra.mxu0 %v11738
    %11779 = vmatprep.subr.mxu0 0.0
    %11780 = vmatpush1.msra.mxu0 %v11739
    %11781 = vmatprep.subr.mxu0 0.0
    %11782 = vmatpush1.msra.mxu0 %v11740
    %11783 = vmatprep.subr.mxu0 0.0
    %11784 = vmatpush1.msra.mxu0 %v11741
    %11785 = vmatprep.subr.mxu0 0.0
    %11786 = vmatpush1.msra.mxu0 %v11742
    %11787 = vmatprep.subr.mxu0 0.0
    %11788 = vmatpush1.msra.mxu0 %v11743
    %11789 = vmatprep.subr.mxu0 0.0
    %11790 = vmatpush1.msra.mxu0 %v11744
    %11791 = vmatprep.subr.mxu0 0.0
    %11792 = vmatpush1.msra.mxu0 %v11745
    %11793 = vmatprep.subr.mxu0 0.0
    %11794 = vmatpush1.msra.mxu0 %v11746
    %11795 = vmatprep.subr.mxu0 0.0
    %11796 = vmatpush1.msra.mxu0 %v11747
    %11797 = vmatprep.subr.mxu0 0.0
    %11798 = vmatpush1.msra.mxu0 %v11748
    %11799 = vmatprep.subr.mxu0 0.0
    %11800 = vmatpush1.msra.mxu0 %v11749
    %11801 = vmatprep.subr.mxu0 0.0
    %11802 = vmatpush1.msra.mxu0 %v11750
    %11803 = vmatprep.subr.mxu0 0.0
    %11804 = vmatpush1.msra.mxu0 %v11751
    %11805 = vmatprep.subr.mxu0 0.0
    %11806 = vmatpush1.msra.mxu0 %v11752
    %11807 = vmatprep.subr.mxu0 0.0
    %11808 = vmatpush1.msra.mxu0 %v11753
    %11809 = vmatprep.subr.mxu0 0.0
    %11810 = vmatpush1.msra.mxu0 %v11754
    %11811 = vmatprep.subr.mxu0 0.0
    %11812 = vmatpush1.msra.mxu0 %v11755
    %11813 = vmatprep.subr.mxu0 0.0
    %11814 = vmatpush1.msra.mxu0 %v11756
    %11815 = vmatprep.subr.mxu0 0.0
    %11816 = vmatpush1.msra.mxu0 %v11757
    %11817 = vmatprep.subr.mxu0 0.0
    %11818 = vmatpush1.msra.mxu0 %v11758
    %11819 = vmatprep.subr.mxu0 0.0
    %11820 = vmatpush1.msra.mxu0 %v11759
    %11821 = vmatprep.subr.mxu0 0.0
    %11822 = vmatpush1.msra.mxu0 %v11760
    %11823 = vmatprep.subr.mxu0 0.0
    %11824 = vmatpush1.msra.mxu0 %v11761
    %11825 = vmatprep.subr.mxu0 0.0
    %11826 = vmatpush1.msra.mxu0 %v11762
    %11827 = vmatprep.subr.mxu0 0.0
    %11828 = vmatpush1.msra.mxu0 %v11763
    %11829 = vmatprep.subr.mxu0 0.0
    %11830 = vmatpush1.msra.mxu0 %v11764
    %11831 = vmatprep.subr.mxu0 0.0
    %11832 = vmatpush1.msra.mxu0 %v11765
    %11833 = vmatprep.subr.mxu0 0.0
    %11834 = vmatpush1.msra.mxu0 %v11766
    %11835 = vmatprep.subr.mxu0 0.0
    %11836 = vmatpush1.msra.mxu0 %v11767
    %11837 = vmatprep.subr.mxu0 0.0
    %11838 = vmatpush1.msra.mxu0 %v11768
    %11839 = vmatprep.subr.mxu0 0.0
    %11840 = vmatpush1.msra.mxu0 %v11769
    %11841 = vmatprep.mubr.f32.mxu0 %v11737
    %11842 = vmatmul.mubr.f32.gmra.mrb[0].mxu0 %v11736
    %v11843 = vpop.f32.mrb[0].mxu0
    %v11844 = vadd.f32 %v11775, %v11843
    %v11845 = vpop.f32.mrb[0].mxu0
    %11846 = vdwg.mxu0
    %v11849 = vunpack.c.l.s4 1966171168
    %v11850 = vunpack.c.0.s8 %v11849
    %v11851 = vlaneseq
    %v11852 = vshrl.u32 %v11851, 7
    %v11853 = vsub.s32 %v11850, %v11852
    %v11854 = vrot.slane %v11844, %v11853
    %v11855 = vcombine.high %v11854, %v11854
    %v11857 = vunpack.c.l.s4 1966171168
    %v11858 = vunpack.c.0.s8 %v11857
    %v11859 = vlaneseq
    %v11860 = vshrl.u32 %v11859, 7
    %v11861 = vsub.s32 %v11858, %v11860
    %v11862 = vrot.slane %v11854, %v11861
    %v11864 = vunpack.c.l.s4 1966171168
    %v11865 = vunpack.c.0.s8 %v11864
    %v11866 = vlaneseq
    %v11867 = vshrl.u32 %v11866, 7
    %v11868 = vsub.s32 %v11865, %v11867
    %v11869 = vrot.slane %v11855, %v11868
    %vm11872 = vcmask 401408
    %11873 = vst.msk [vmem:[#allocation14] sm:$0x1] %vm11872, %v11862
    %11874 = vst.msk [vmem:[#allocation14 + $0x1] sm:$0x1] %vm11872, %v11869
    // Predicated region
    $region90: #{attention_cnn_forward.1} parent=1 // pred_check
      _
    $region91: #{attention_cnn_forward.1} parent=1 // pred_check_branch
      %11876 = sbr.rel (0) target = $region93
    $region92: #{attention_cnn_forward.1} parent=1 // pred_region
      %s11878 = ssub.s32 32, 32
      %11879 = vsyncadd [#allocation7], %s11878
      %s11880 = sshll.u32 [#allocation14], 4
      %s11881 = int_to_ptr.vmem [resolvable:$true] %s11880
      %11886 = dma.vmem_to_hbm [thread:$0]  %s11881, 32, %s17, [#allocation7], 16, 16, 1
    $region93: #{attention_cnn_forward.1} parent=1 // pred_fallthru
      _
    // Predicated region
    $region94: #{attention_cnn_forward.1} parent=1 // pred_check
      _
    $region95: #{attention_cnn_forward.1} parent=1 // pred_check_branch
      %11888 = sbr.rel (0) target = $region97
    $region96: #{attention_cnn_forward.1} parent=1 // pred_region
      %11889 = dma.done [#allocation7], 32
    $region97: #{attention_cnn_forward.1} parent=1 // pred_fallthru
      _
    %11890 = vsyncpa [#allocation6], 1
    %11891 = vsyncpa [#allocation9], 1
    %11892 = vsyncpa [#allocation12], 1
    %11893 = vsyncpa [#allocation7], 1

</llo_original>
